<compile_context>
chip_gen: v6e
topology: v6e:2x2x1
jax: 0.10.0
libtpu: 0.0.40
codegen_flags: <defaults>
</compile_context>

<pallas_src>
import functools

import jax
import jax.numpy as jnp
from jax.experimental import pallas as pl
from jax.experimental.pallas import tpu as pltpu


def sign_kernel(xs_ref, w1_ref, b1_ref, w2_ref, b2_ref,
                w3_ref, b3_ref, w4_ref, b4_ref, out_ref, cat_ref,
                *, num_hops, hidden):
    """One grid step: a tile of node rows through the full SIGN MLP.

    xs_ref:  (num_hops, tile, in_ch)            f32 (cast to bf16 in-kernel)
    w1_ref:  (num_hops, in_ch, hidden)          bf16
    w2_ref:  (num_hops, hidden, hidden)         bf16
    w3_ref:  (num_hops*hidden, hidden)          bf16
    w4_ref:  (hidden, out_ch)                   bf16
    b*_ref:  f32 biases
    out_ref: (tile, out_ch)                     f32
    cat_ref: (tile, num_hops*hidden)            bf16 VMEM scratch (lane concat)
    """
    for h in range(num_hops):                    # static, small unroll
        x = xs_ref[h].astype(jnp.bfloat16)       # cast in-kernel (single f32 HBM read)
        # Layer 1: bf16 x bf16 -> f32 accumulate, bias/ReLU in f32.
        z = jnp.dot(x, w1_ref[h], preferred_element_type=jnp.float32)
        z = jnp.maximum(z + b1_ref[h], 0.0)
        # Layer 2.
        z = jnp.dot(z.astype(jnp.bfloat16), w2_ref[h],
                    preferred_element_type=jnp.float32)
        z = jnp.maximum(z + b2_ref[h], 0.0)
        # Lane-concatenate into the bf16 scratch (offset h*hidden).
        cat_ref[:, h * hidden:(h + 1) * hidden] = z.astype(jnp.bfloat16)
    # One wide matmul: K = num_hops*hidden against the original W3.
    z = jnp.dot(cat_ref[...], w3_ref[...], preferred_element_type=jnp.float32)
    # Dropout(p) -> identity in eval mode.
    z = jnp.maximum(z + b3_ref[...], 0.0)
    y = jnp.dot(z.astype(jnp.bfloat16), w4_ref[...],
                preferred_element_type=jnp.float32) + b4_ref[...]
    out_ref[...] = y.astype(out_ref.dtype)


def _round_up(x, m):
    return ((x + m - 1) // m) * m


def _num_tensorcores():
    """Best-effort detection of TensorCores per chip (v7x = 2, v5e/v6e = 1)."""
    try:
        kind = (getattr(jax.devices()[0], "device_kind", "") or "")
        if "7" in kind:
            return 2
    except Exception:
        pass
    return 1


def _vmem_estimate(tile, num_hops, in_ch, hidden, out_ch):
    """Honest per-step VMEM estimate: double-buffered blocks, double-buffered
    grid-invariant weights/biases, bf16 concat scratch, f32 temporaries."""
    xs_blocks = 2 * num_hops * tile * in_ch * 4          # f32 xs tile, x2
    out_blocks = 2 * tile * out_ch * 4                   # f32 out tile, x2
    weights = 2 * 2 * (num_hops * in_ch * hidden
                       + 2 * num_hops * hidden * hidden
                       + hidden * out_ch)                 # bf16 weights, x2
    biases = 2 * 4 * (2 * num_hops * hidden + hidden + out_ch)
    scratch = tile * (num_hops * hidden * 2               # bf16 concat scratch
                      + 6 * hidden * 4)                   # f32 temporaries (rough)
    return xs_blocks + out_blocks + weights + biases + scratch


def _choose_tile_rows(n_rows, num_hops, in_ch, hidden, out_ch, *,
                      num_cores=1, vmem_budget_bytes=20 << 20, max_tile=2048):
    """Largest row tile that fits a conservative VMEM budget (safe on v7x's
    64 MiB).  Single grid step allowed on 1-TC chips; >=2 even steps on v7x."""
    per_row = (2 * num_hops * in_ch * 4      # xs blocks (f32, x2)
               + 2 * out_ch * 4              # out blocks (f32, x2)
               + num_hops * hidden * 2       # bf16 concat scratch
               + 6 * hidden * 4)             # f32 temporaries
    weight_bytes = (2 * 2 * (num_hops * in_ch * hidden
                             + 2 * num_hops * hidden * hidden
                             + hidden * out_ch)
                    + 2 * 4 * (2 * num_hops * hidden + hidden + out_ch))
    avail = max(0, vmem_budget_bytes - weight_bytes)
    cap = max(16, avail // per_row)
    tile = min(max_tile, max(n_rows, 16), cap)
    if num_cores > 1 and n_rows > 16:
        # v7x megacore: keep >= 2 and even grid steps so both TCs get equal work.
        steps = max(2, pl.cdiv(n_rows, tile))
        if steps % 2:
            steps += 1
        tile = pl.cdiv(n_rows, steps)
    # Round UP to the sublane multiple (16); M needs no 128/256 MXU alignment.
    return _round_up(max(int(tile), 16), 16)


def prepare_params(params):
    """One-time parameter prep, hoisted out of the per-call hot path:
    bf16 matmul operands, f32 biases."""
    w1, b1, w2, b2, w3, b3, w4, b4 = params
    bf = lambda a: a.astype(jnp.bfloat16)
    f32 = lambda a: a.astype(jnp.float32)
    return (bf(w1), f32(b1), bf(w2), f32(b2), bf(w3), f32(b3), bf(w4), f32(b4))


def sign_forward(xs, prepped_params, *, tile_rows=None):
    """xs: [num_hops, N, in_channels] float32. Returns [N, out_channels] f32."""
    w1, b1, w2, b2, w3, b3, w4, b4 = prepped_params
    num_hops, n_rows, in_ch = xs.shape
    hidden = w1.shape[-1]
    out_ch = w4.shape[-1]

    if tile_rows is None:
        tile_rows = _choose_tile_rows(n_rows, num_hops, in_ch, hidden, out_ch,
                                      num_cores=_num_tensorcores())

    # Ragged N: zero-pad rows up to a multiple of tile_rows.
    n_pad = pl.cdiv(n_rows, tile_rows) * tile_rows
    if n_pad != n_rows:
        xs = jnp.pad(xs, ((0, 0), (0, n_pad - n_rows), (0, 0)))

    grid = (n_pad // tile_rows,)
    kernel = functools.partial(sign_kernel, num_hops=num_hops, hidden=hidden)

    def full(shape):
        return pl.BlockSpec(shape, lambda i: (0,) * len(shape))

    # Advisory cost estimate for XLA scheduling.
    flops = 2 * n_pad * (num_hops * (in_ch * hidden + 2 * hidden * hidden)
                         + hidden * out_ch)
    bytes_accessed = int(
        n_pad * num_hops * in_ch * 4
        + sum(int(a.size) * a.dtype.itemsize
              for a in (w1, b1, w2, b2, w3, b3, w4, b4))
        + n_pad * out_ch * 4)
    cost = pl.CostEstimate(flops=int(flops), transcendentals=0,
                           bytes_accessed=bytes_accessed)

    # Enforce the (honest) VMEM budget, with headroom, capped well under v7x's
    # 64 MiB physical VMEM.
    vmem_limit = int(min(
        48 << 20,
        max(8 << 20,
            2 * _vmem_estimate(tile_rows, num_hops, in_ch, hidden, out_ch)
            + (4 << 20))))

    out = pl.pallas_call(
        kernel,
        out_shape=jax.ShapeDtypeStruct((n_pad, out_ch), jnp.float32),
        grid_spec=pltpu.PrefetchScalarGridSpec(
            num_scalar_prefetch=0,
            grid=grid,
            in_specs=[
                # xs: tile over rows, keep hops + features whole (f32 in HBM).
                pl.BlockSpec((num_hops, tile_rows, in_ch), lambda i: (0, i, 0)),
                # Weights/biases: whole arrays, grid-invariant index maps
                # (Pallas skips the redundant re-DMA across grid steps).
                full(w1.shape), full(b1.shape),
                full(w2.shape), full(b2.shape),
                full(w3.shape), full(b3.shape),
                full(w4.shape), full(b4.shape),
            ],
            # Unpadded f32 output block (block == full out_ch dim): 4x less
            # output HBM traffic than a 128-lane-padded f32 store.
            out_specs=pl.BlockSpec((tile_rows, out_ch), lambda i: (i, 0)),
            scratch_shapes=[
                pltpu.VMEM((tile_rows, num_hops * hidden), jnp.bfloat16)],
        ),
        compiler_params=pltpu.CompilerParams(
            dimension_semantics=("parallel",),
            vmem_limit_bytes=vmem_limit),
        cost_estimate=cost,
    )(xs, w1, b1, w2, b2, w3, b3, w4, b4)

    return out[:n_rows]


def sign_reference_f32(xs, params):
    """Pure-f32 JAX reference of the same forward pass (eval mode)."""
    w1, b1, w2, b2, w3, b3, w4, b4 = params
    num_hops = xs.shape[0]
    outs = []
    for h in range(num_hops):
        z = jnp.maximum(xs[h] @ w1[h] + b1[h], 0.0)
        z = jnp.maximum(z @ w2[h] + b2[h], 0.0)
        outs.append(z)
    cat = jnp.concatenate(outs, axis=-1)
    z = jnp.maximum(cat @ w3 + b3, 0.0)
    return z @ w4 + b4


def sign_reference_bf16(xs, params):
    """Reference with the same bf16-operand / f32-accumulate matmuls as the kernel."""
    w1, b1, w2, b2, w3, b3, w4, b4 = params
    num_hops = xs.shape[0]
    bf = lambda a: a.astype(jnp.bfloat16)
    dot = lambda a, b: jnp.dot(bf(a), bf(b), preferred_element_type=jnp.float32)
    outs = []
    for h in range(num_hops):
        z = jnp.maximum(dot(xs[h], w1[h]) + b1[h], 0.0)
        z = jnp.maximum(dot(z, w2[h]) + b2[h], 0.0)
        outs.append(z)
    cat = jnp.concatenate(outs, axis=-1)
    z = jnp.maximum(dot(cat, w3) + b3, 0.0)
    return dot(z, w4) + b4


def init_params(key, num_hops, in_ch, hidden, out_ch):
    ks = jax.random.split(key, 8)
    scale = lambda fan_in: 1.0 / jnp.sqrt(fan_in)
    w1 = jax.random.normal(ks[0], (num_hops, in_ch, hidden), jnp.float32) * scale(in_ch)
    b1 = jax.random.normal(ks[1], (num_hops, 1, hidden), jnp.float32) * 0.01
    w2 = jax.random.normal(ks[2], (num_hops, hidden, hidden), jnp.float32) * scale(hidden)
    b2 = jax.random.normal(ks[3], (num_hops, 1, hidden), jnp.float32) * 0.01
    w3 = jax.random.normal(ks[4], (num_hops * hidden, hidden), jnp.float32) * scale(num_hops * hidden)
    b3 = jax.random.normal(ks[5], (1, hidden), jnp.float32) * 0.01
    w4 = jax.random.normal(ks[6], (hidden, out_ch), jnp.float32) * scale(hidden)
    b4 = jax.random.normal(ks[7], (1, out_ch), jnp.float32) * 0.01
    return (w1, b1, w2, b2, w3, b3, w4, b4)


if __name__ == "__main__":
    # Small, SIGN-consistent shapes (NARS example uses num_hops=5, 128 features).
    num_hops = 5
    n_rows = 500          # number of nodes (deliberately ragged vs. tile size)
    in_ch = 128
    hidden = 64
    out_ch = 32

    key = jax.random.PRNGKey(0)
    k_x, k_p = jax.random.split(key)
    xs = jax.random.normal(k_x, (num_hops, n_rows, in_ch), jnp.float32)
    params = init_params(k_p, num_hops, in_ch, hidden, out_ch)
    prepped = prepare_params(params)   # one-time bf16/f32 param prep

    out = sign_forward(xs, prepped)
    out = jax.block_until_ready(out)
    assert out.shape == (n_rows, out_ch)

    # Tight check vs. a reference that uses the same bf16-in / f32-acc matmuls.
    ref_bf = sign_reference_bf16(xs, params)
    err_bf = float(jnp.max(jnp.abs(out - ref_bf)))
    assert err_bf < 1e-2, f"mismatch vs bf16 reference: max abs err {err_bf}"

    # Loose check vs. the pure-f32 spec (bf16 operand rounding tolerance).
    ref_f32 = sign_reference_f32(xs, params)
    err_f32 = float(jnp.max(jnp.abs(out - ref_f32)))
    assert err_f32 < 0.25, f"mismatch vs f32 reference: max abs err {err_f32}"

    print("KERNEL_OK")
</pallas_src>

<mosaic_0001>
module attributes {stable_mosaic.version = 11 : i64} {
  func.func @sign_kernel(%arg0: i32, %arg1: memref<5x512x128xf32, #tpu.memory_space<vmem>>, %arg2: memref<5x128x64xbf16, #tpu.memory_space<vmem>>, %arg3: memref<5x1x64xf32, #tpu.memory_space<vmem>>, %arg4: memref<5x64x64xbf16, #tpu.memory_space<vmem>>, %arg5: memref<5x1x64xf32, #tpu.memory_space<vmem>>, %arg6: memref<320x64xbf16, #tpu.memory_space<vmem>>, %arg7: memref<1x64xf32, #tpu.memory_space<vmem>>, %arg8: memref<64x32xbf16, #tpu.memory_space<vmem>>, %arg9: memref<1x32xf32, #tpu.memory_space<vmem>>, %arg10: memref<512x32xf32, #tpu.memory_space<vmem>>, %arg11: memref<512x320xbf16, #tpu.memory_space<vmem>>) attributes {dimension_semantics = [#tpu.dimension_semantics<parallel>], iteration_bounds = array<i64: 1>, scalar_prefetch = 0 : i64, scratch_operands = 1 : i64, tpu.core_type = #tpu.core_type<tc>, window_params = [{transform_indices = @transform_0, window_bounds = array<i64: 5, 512, 128>}, {pipeline_mode = #tpu.pipeline_mode<synchronous>, transform_indices = @transform_1, window_bounds = array<i64: 5, 128, 64>}, {pipeline_mode = #tpu.pipeline_mode<synchronous>, transform_indices = @transform_2, window_bounds = array<i64: 5, 1, 64>}, {pipeline_mode = #tpu.pipeline_mode<synchronous>, transform_indices = @transform_3, window_bounds = array<i64: 5, 64, 64>}, {pipeline_mode = #tpu.pipeline_mode<synchronous>, transform_indices = @transform_4, window_bounds = array<i64: 5, 1, 64>}, {pipeline_mode = #tpu.pipeline_mode<synchronous>, transform_indices = @transform_5, window_bounds = array<i64: 320, 64>}, {pipeline_mode = #tpu.pipeline_mode<synchronous>, transform_indices = @transform_6, window_bounds = array<i64: 1, 64>}, {pipeline_mode = #tpu.pipeline_mode<synchronous>, transform_indices = @transform_7, window_bounds = array<i64: 64, 32>}, {pipeline_mode = #tpu.pipeline_mode<synchronous>, transform_indices = @transform_8, window_bounds = array<i64: 1, 32>}, {transform_indices = @transform_9, window_bounds = array<i64: 512, 32>}]} {
    %c0 = arith.constant 0 : index
    %c0_0 = arith.constant 0 : index
    %c0_1 = arith.constant 0 : index
    %0 = vector.load %arg1[%c0, %c0_0, %c0_1] : memref<5x512x128xf32, #tpu.memory_space<vmem>>, vector<1x512x128xf32>
    %1 = vector.shape_cast %0 : vector<1x512x128xf32> to vector<512x128xf32>
    %2 = arith.truncf %1 : vector<512x128xf32> to vector<512x128xbf16>
    %c0_2 = arith.constant 0 : index
    %c0_3 = arith.constant 0 : index
    %c0_4 = arith.constant 0 : index
    %3 = vector.load %arg2[%c0_2, %c0_3, %c0_4] : memref<5x128x64xbf16, #tpu.memory_space<vmem>>, vector<1x128x64xbf16>
    %4 = vector.shape_cast %3 : vector<1x128x64xbf16> to vector<128x64xbf16>
    %cst = arith.constant dense<0.000000e+00> : vector<512x64xf32>
    %5 = tpu.matmul %2, %4, %cst {dimension_numbers = #tpu.dot_dimension_numbers<[1], [0], [0], [1], [0, 0, 1, 1], [], []>} : vector<512x128xbf16>, vector<128x64xbf16>, vector<512x64xf32> -> vector<512x64xf32>
    %c0_5 = arith.constant 0 : index
    %c0_6 = arith.constant 0 : index
    %c0_7 = arith.constant 0 : index
    %6 = vector.load %arg3[%c0_5, %c0_6, %c0_7] : memref<5x1x64xf32, #tpu.memory_space<vmem>>, vector<1x1x64xf32>
    %7 = vector.shape_cast %6 : vector<1x1x64xf32> to vector<1x64xf32>
    %8 = vector.broadcast %7 : vector<1x64xf32> to vector<512x64xf32>
    %9 = arith.addf %5, %8 : vector<512x64xf32>
    %cst_8 = arith.constant 0.000000e+00 : f32
    %10 = vector.broadcast %cst_8 : f32 to vector<512x64xf32>
    %11 = arith.maximumf %9, %10 : vector<512x64xf32>
    %12 = arith.truncf %11 : vector<512x64xf32> to vector<512x64xbf16>
    %c0_9 = arith.constant 0 : index
    %c0_10 = arith.constant 0 : index
    %c0_11 = arith.constant 0 : index
    %13 = vector.load %arg4[%c0_9, %c0_10, %c0_11] : memref<5x64x64xbf16, #tpu.memory_space<vmem>>, vector<1x64x64xbf16>
    %14 = vector.shape_cast %13 : vector<1x64x64xbf16> to vector<64x64xbf16>
    %cst_12 = arith.constant dense<0.000000e+00> : vector<512x64xf32>
    %15 = tpu.matmul %12, %14, %cst_12 {dimension_numbers = #tpu.dot_dimension_numbers<[1], [0], [0], [1], [0, 0, 1, 1], [], []>} : vector<512x64xbf16>, vector<64x64xbf16>, vector<512x64xf32> -> vector<512x64xf32>
    %c0_13 = arith.constant 0 : index
    %c0_14 = arith.constant 0 : index
    %c0_15 = arith.constant 0 : index
    %16 = vector.load %arg5[%c0_13, %c0_14, %c0_15] : memref<5x1x64xf32, #tpu.memory_space<vmem>>, vector<1x1x64xf32>
    %17 = vector.shape_cast %16 : vector<1x1x64xf32> to vector<1x64xf32>
    %18 = vector.broadcast %17 : vector<1x64xf32> to vector<512x64xf32>
    %19 = arith.addf %15, %18 : vector<512x64xf32>
    %cst_16 = arith.constant 0.000000e+00 : f32
    %20 = vector.broadcast %cst_16 : f32 to vector<512x64xf32>
    %21 = arith.maximumf %19, %20 : vector<512x64xf32>
    %22 = arith.truncf %21 : vector<512x64xf32> to vector<512x64xbf16>
    %c0_17 = arith.constant 0 : index
    %c0_18 = arith.constant 0 : index
    %23 = vector.load %arg11[%c0_17, %c0_18] : memref<512x320xbf16, #tpu.memory_space<vmem>>, vector<512x64xbf16>
    tpu.vector_store %arg11[%c0_17, %c0_18], %22 {strides = array<i32>} : memref<512x320xbf16, #tpu.memory_space<vmem>>, vector<512x64xbf16>,
    %c1 = arith.constant 1 : index
    %c0_19 = arith.constant 0 : index
    %c0_20 = arith.constant 0 : index
    %24 = vector.load %arg1[%c1, %c0_19, %c0_20] : memref<5x512x128xf32, #tpu.memory_space<vmem>>, vector<1x512x128xf32>
    %25 = vector.shape_cast %24 : vector<1x512x128xf32> to vector<512x128xf32>
    %26 = arith.truncf %25 : vector<512x128xf32> to vector<512x128xbf16>
    %c1_21 = arith.constant 1 : index
    %c0_22 = arith.constant 0 : index
    %c0_23 = arith.constant 0 : index
    %27 = vector.load %arg2[%c1_21, %c0_22, %c0_23] : memref<5x128x64xbf16, #tpu.memory_space<vmem>>, vector<1x128x64xbf16>
    %28 = vector.shape_cast %27 : vector<1x128x64xbf16> to vector<128x64xbf16>
    %cst_24 = arith.constant dense<0.000000e+00> : vector<512x64xf32>
    %29 = tpu.matmul %26, %28, %cst_24 {dimension_numbers = #tpu.dot_dimension_numbers<[1], [0], [0], [1], [0, 0, 1, 1], [], []>} : vector<512x128xbf16>, vector<128x64xbf16>, vector<512x64xf32> -> vector<512x64xf32>
    %c1_25 = arith.constant 1 : index
    %c0_26 = arith.constant 0 : index
    %c0_27 = arith.constant 0 : index
    %30 = vector.load %arg3[%c1_25, %c0_26, %c0_27] : memref<5x1x64xf32, #tpu.memory_space<vmem>>, vector<1x1x64xf32>
    %31 = vector.shape_cast %30 : vector<1x1x64xf32> to vector<1x64xf32>
    %32 = vector.broadcast %31 : vector<1x64xf32> to vector<512x64xf32>
    %33 = arith.addf %29, %32 : vector<512x64xf32>
    %cst_28 = arith.constant 0.000000e+00 : f32
    %34 = vector.broadcast %cst_28 : f32 to vector<512x64xf32>
    %35 = arith.maximumf %33, %34 : vector<512x64xf32>
    %36 = arith.truncf %35 : vector<512x64xf32> to vector<512x64xbf16>
    %c1_29 = arith.constant 1 : index
    %c0_30 = arith.constant 0 : index
    %c0_31 = arith.constant 0 : index
    %37 = vector.load %arg4[%c1_29, %c0_30, %c0_31] : memref<5x64x64xbf16, #tpu.memory_space<vmem>>, vector<1x64x64xbf16>
    %38 = vector.shape_cast %37 : vector<1x64x64xbf16> to vector<64x64xbf16>
    %cst_32 = arith.constant dense<0.000000e+00> : vector<512x64xf32>
    %39 = tpu.matmul %36, %38, %cst_32 {dimension_numbers = #tpu.dot_dimension_numbers<[1], [0], [0], [1], [0, 0, 1, 1], [], []>} : vector<512x64xbf16>, vector<64x64xbf16>, vector<512x64xf32> -> vector<512x64xf32>
    %c1_33 = arith.constant 1 : index
    %c0_34 = arith.constant 0 : index
    %c0_35 = arith.constant 0 : index
    %40 = vector.load %arg5[%c1_33, %c0_34, %c0_35] : memref<5x1x64xf32, #tpu.memory_space<vmem>>, vector<1x1x64xf32>
    %41 = vector.shape_cast %40 : vector<1x1x64xf32> to vector<1x64xf32>
    %42 = vector.broadcast %41 : vector<1x64xf32> to vector<512x64xf32>
    %43 = arith.addf %39, %42 : vector<512x64xf32>
    %cst_36 = arith.constant 0.000000e+00 : f32
    %44 = vector.broadcast %cst_36 : f32 to vector<512x64xf32>
    %45 = arith.maximumf %43, %44 : vector<512x64xf32>
    %46 = arith.truncf %45 : vector<512x64xf32> to vector<512x64xbf16>
    %c0_37 = arith.constant 0 : index
    %c64 = arith.constant 64 : index
    %47 = vector.load %arg11[%c0_37, %c64] : memref<512x320xbf16, #tpu.memory_space<vmem>>, vector<512x64xbf16>
    tpu.vector_store %arg11[%c0_37, %c64], %46 {strides = array<i32>} : memref<512x320xbf16, #tpu.memory_space<vmem>>, vector<512x64xbf16>,
    %c2 = arith.constant 2 : index
    %c0_38 = arith.constant 0 : index
    %c0_39 = arith.constant 0 : index
    %48 = vector.load %arg1[%c2, %c0_38, %c0_39] : memref<5x512x128xf32, #tpu.memory_space<vmem>>, vector<1x512x128xf32>
    %49 = vector.shape_cast %48 : vector<1x512x128xf32> to vector<512x128xf32>
    %50 = arith.truncf %49 : vector<512x128xf32> to vector<512x128xbf16>
    %c2_40 = arith.constant 2 : index
    %c0_41 = arith.constant 0 : index
    %c0_42 = arith.constant 0 : index
    %51 = vector.load %arg2[%c2_40, %c0_41, %c0_42] : memref<5x128x64xbf16, #tpu.memory_space<vmem>>, vector<1x128x64xbf16>
    %52 = vector.shape_cast %51 : vector<1x128x64xbf16> to vector<128x64xbf16>
    %cst_43 = arith.constant dense<0.000000e+00> : vector<512x64xf32>
    %53 = tpu.matmul %50, %52, %cst_43 {dimension_numbers = #tpu.dot_dimension_numbers<[1], [0], [0], [1], [0, 0, 1, 1], [], []>} : vector<512x128xbf16>, vector<128x64xbf16>, vector<512x64xf32> -> vector<512x64xf32>
    %c2_44 = arith.constant 2 : index
    %c0_45 = arith.constant 0 : index
    %c0_46 = arith.constant 0 : index
    %54 = vector.load %arg3[%c2_44, %c0_45, %c0_46] : memref<5x1x64xf32, #tpu.memory_space<vmem>>, vector<1x1x64xf32>
    %55 = vector.shape_cast %54 : vector<1x1x64xf32> to vector<1x64xf32>
    %56 = vector.broadcast %55 : vector<1x64xf32> to vector<512x64xf32>
    %57 = arith.addf %53, %56 : vector<512x64xf32>
    %cst_47 = arith.constant 0.000000e+00 : f32
    %58 = vector.broadcast %cst_47 : f32 to vector<512x64xf32>
    %59 = arith.maximumf %57, %58 : vector<512x64xf32>
    %60 = arith.truncf %59 : vector<512x64xf32> to vector<512x64xbf16>
    %c2_48 = arith.constant 2 : index
    %c0_49 = arith.constant 0 : index
    %c0_50 = arith.constant 0 : index
    %61 = vector.load %arg4[%c2_48, %c0_49, %c0_50] : memref<5x64x64xbf16, #tpu.memory_space<vmem>>, vector<1x64x64xbf16>
    %62 = vector.shape_cast %61 : vector<1x64x64xbf16> to vector<64x64xbf16>
    %cst_51 = arith.constant dense<0.000000e+00> : vector<512x64xf32>
    %63 = tpu.matmul %60, %62, %cst_51 {dimension_numbers = #tpu.dot_dimension_numbers<[1], [0], [0], [1], [0, 0, 1, 1], [], []>} : vector<512x64xbf16>, vector<64x64xbf16>, vector<512x64xf32> -> vector<512x64xf32>
    %c2_52 = arith.constant 2 : index
    %c0_53 = arith.constant 0 : index
    %c0_54 = arith.constant 0 : index
    %64 = vector.load %arg5[%c2_52, %c0_53, %c0_54] : memref<5x1x64xf32, #tpu.memory_space<vmem>>, vector<1x1x64xf32>
    %65 = vector.shape_cast %64 : vector<1x1x64xf32> to vector<1x64xf32>
    %66 = vector.broadcast %65 : vector<1x64xf32> to vector<512x64xf32>
    %67 = arith.addf %63, %66 : vector<512x64xf32>
    %cst_55 = arith.constant 0.000000e+00 : f32
    %68 = vector.broadcast %cst_55 : f32 to vector<512x64xf32>
    %69 = arith.maximumf %67, %68 : vector<512x64xf32>
    %70 = arith.truncf %69 : vector<512x64xf32> to vector<512x64xbf16>
    %c0_56 = arith.constant 0 : index
    %c128 = arith.constant 128 : index
    %71 = vector.load %arg11[%c0_56, %c128] : memref<512x320xbf16, #tpu.memory_space<vmem>>, vector<512x64xbf16>
    tpu.vector_store %arg11[%c0_56, %c128], %70 {strides = array<i32>} : memref<512x320xbf16, #tpu.memory_space<vmem>>, vector<512x64xbf16>,
    %c3 = arith.constant 3 : index
    %c0_57 = arith.constant 0 : index
    %c0_58 = arith.constant 0 : index
    %72 = vector.load %arg1[%c3, %c0_57, %c0_58] : memref<5x512x128xf32, #tpu.memory_space<vmem>>, vector<1x512x128xf32>
    %73 = vector.shape_cast %72 : vector<1x512x128xf32> to vector<512x128xf32>
    %74 = arith.truncf %73 : vector<512x128xf32> to vector<512x128xbf16>
    %c3_59 = arith.constant 3 : index
    %c0_60 = arith.constant 0 : index
    %c0_61 = arith.constant 0 : index
    %75 = vector.load %arg2[%c3_59, %c0_60, %c0_61] : memref<5x128x64xbf16, #tpu.memory_space<vmem>>, vector<1x128x64xbf16>
    %76 = vector.shape_cast %75 : vector<1x128x64xbf16> to vector<128x64xbf16>
    %cst_62 = arith.constant dense<0.000000e+00> : vector<512x64xf32>
    %77 = tpu.matmul %74, %76, %cst_62 {dimension_numbers = #tpu.dot_dimension_numbers<[1], [0], [0], [1], [0, 0, 1, 1], [], []>} : vector<512x128xbf16>, vector<128x64xbf16>, vector<512x64xf32> -> vector<512x64xf32>
    %c3_63 = arith.constant 3 : index
    %c0_64 = arith.constant 0 : index
    %c0_65 = arith.constant 0 : index
    %78 = vector.load %arg3[%c3_63, %c0_64, %c0_65] : memref<5x1x64xf32, #tpu.memory_space<vmem>>, vector<1x1x64xf32>
    %79 = vector.shape_cast %78 : vector<1x1x64xf32> to vector<1x64xf32>
    %80 = vector.broadcast %79 : vector<1x64xf32> to vector<512x64xf32>
    %81 = arith.addf %77, %80 : vector<512x64xf32>
    %cst_66 = arith.constant 0.000000e+00 : f32
    %82 = vector.broadcast %cst_66 : f32 to vector<512x64xf32>
    %83 = arith.maximumf %81, %82 : vector<512x64xf32>
    %84 = arith.truncf %83 : vector<512x64xf32> to vector<512x64xbf16>
    %c3_67 = arith.constant 3 : index
    %c0_68 = arith.constant 0 : index
    %c0_69 = arith.constant 0 : index
    %85 = vector.load %arg4[%c3_67, %c0_68, %c0_69] : memref<5x64x64xbf16, #tpu.memory_space<vmem>>, vector<1x64x64xbf16>
    %86 = vector.shape_cast %85 : vector<1x64x64xbf16> to vector<64x64xbf16>
    %cst_70 = arith.constant dense<0.000000e+00> : vector<512x64xf32>
    %87 = tpu.matmul %84, %86, %cst_70 {dimension_numbers = #tpu.dot_dimension_numbers<[1], [0], [0], [1], [0, 0, 1, 1], [], []>} : vector<512x64xbf16>, vector<64x64xbf16>, vector<512x64xf32> -> vector<512x64xf32>
    %c3_71 = arith.constant 3 : index
    %c0_72 = arith.constant 0 : index
    %c0_73 = arith.constant 0 : index
    %88 = vector.load %arg5[%c3_71, %c0_72, %c0_73] : memref<5x1x64xf32, #tpu.memory_space<vmem>>, vector<1x1x64xf32>
    %89 = vector.shape_cast %88 : vector<1x1x64xf32> to vector<1x64xf32>
    %90 = vector.broadcast %89 : vector<1x64xf32> to vector<512x64xf32>
    %91 = arith.addf %87, %90 : vector<512x64xf32>
    %cst_74 = arith.constant 0.000000e+00 : f32
    %92 = vector.broadcast %cst_74 : f32 to vector<512x64xf32>
    %93 = arith.maximumf %91, %92 : vector<512x64xf32>
    %94 = arith.truncf %93 : vector<512x64xf32> to vector<512x64xbf16>
    %c0_75 = arith.constant 0 : index
    %c192 = arith.constant 192 : index
    %95 = vector.load %arg11[%c0_75, %c192] : memref<512x320xbf16, #tpu.memory_space<vmem>>, vector<512x64xbf16>
    tpu.vector_store %arg11[%c0_75, %c192], %94 {strides = array<i32>} : memref<512x320xbf16, #tpu.memory_space<vmem>>, vector<512x64xbf16>,
    %c4 = arith.constant 4 : index
    %c0_76 = arith.constant 0 : index
    %c0_77 = arith.constant 0 : index
    %96 = vector.load %arg1[%c4, %c0_76, %c0_77] : memref<5x512x128xf32, #tpu.memory_space<vmem>>, vector<1x512x128xf32>
    %97 = vector.shape_cast %96 : vector<1x512x128xf32> to vector<512x128xf32>
    %98 = arith.truncf %97 : vector<512x128xf32> to vector<512x128xbf16>
    %c4_78 = arith.constant 4 : index
    %c0_79 = arith.constant 0 : index
    %c0_80 = arith.constant 0 : index
    %99 = vector.load %arg2[%c4_78, %c0_79, %c0_80] : memref<5x128x64xbf16, #tpu.memory_space<vmem>>, vector<1x128x64xbf16>
    %100 = vector.shape_cast %99 : vector<1x128x64xbf16> to vector<128x64xbf16>
    %cst_81 = arith.constant dense<0.000000e+00> : vector<512x64xf32>
    %101 = tpu.matmul %98, %100, %cst_81 {dimension_numbers = #tpu.dot_dimension_numbers<[1], [0], [0], [1], [0, 0, 1, 1], [], []>} : vector<512x128xbf16>, vector<128x64xbf16>, vector<512x64xf32> -> vector<512x64xf32>
    %c4_82 = arith.constant 4 : index
    %c0_83 = arith.constant 0 : index
    %c0_84 = arith.constant 0 : index
    %102 = vector.load %arg3[%c4_82, %c0_83, %c0_84] : memref<5x1x64xf32, #tpu.memory_space<vmem>>, vector<1x1x64xf32>
    %103 = vector.shape_cast %102 : vector<1x1x64xf32> to vector<1x64xf32>
    %104 = vector.broadcast %103 : vector<1x64xf32> to vector<512x64xf32>
    %105 = arith.addf %101, %104 : vector<512x64xf32>
    %cst_85 = arith.constant 0.000000e+00 : f32
    %106 = vector.broadcast %cst_85 : f32 to vector<512x64xf32>
    %107 = arith.maximumf %105, %106 : vector<512x64xf32>
    %108 = arith.truncf %107 : vector<512x64xf32> to vector<512x64xbf16>
    %c4_86 = arith.constant 4 : index
    %c0_87 = arith.constant 0 : index
    %c0_88 = arith.constant 0 : index
    %109 = vector.load %arg4[%c4_86, %c0_87, %c0_88] : memref<5x64x64xbf16, #tpu.memory_space<vmem>>, vector<1x64x64xbf16>
    %110 = vector.shape_cast %109 : vector<1x64x64xbf16> to vector<64x64xbf16>
    %cst_89 = arith.constant dense<0.000000e+00> : vector<512x64xf32>
    %111 = tpu.matmul %108, %110, %cst_89 {dimension_numbers = #tpu.dot_dimension_numbers<[1], [0], [0], [1], [0, 0, 1, 1], [], []>} : vector<512x64xbf16>, vector<64x64xbf16>, vector<512x64xf32> -> vector<512x64xf32>
    %c4_90 = arith.constant 4 : index
    %c0_91 = arith.constant 0 : index
    %c0_92 = arith.constant 0 : index
    %112 = vector.load %arg5[%c4_90, %c0_91, %c0_92] : memref<5x1x64xf32, #tpu.memory_space<vmem>>, vector<1x1x64xf32>
    %113 = vector.shape_cast %112 : vector<1x1x64xf32> to vector<1x64xf32>
    %114 = vector.broadcast %113 : vector<1x64xf32> to vector<512x64xf32>
    %115 = arith.addf %111, %114 : vector<512x64xf32>
    %cst_93 = arith.constant 0.000000e+00 : f32
    %116 = vector.broadcast %cst_93 : f32 to vector<512x64xf32>
    %117 = arith.maximumf %115, %116 : vector<512x64xf32>
    %118 = arith.truncf %117 : vector<512x64xf32> to vector<512x64xbf16>
    %c0_94 = arith.constant 0 : index
    %c256 = arith.constant 256 : index
    %119 = vector.load %arg11[%c0_94, %c256] : memref<512x320xbf16, #tpu.memory_space<vmem>>, vector<512x64xbf16>
    tpu.vector_store %arg11[%c0_94, %c256], %118 {strides = array<i32>} : memref<512x320xbf16, #tpu.memory_space<vmem>>, vector<512x64xbf16>,
    %c0_95 = arith.constant 0 : index
    %c0_96 = arith.constant 0 : index
    %120 = vector.load %arg11[%c0_95, %c0_96] : memref<512x320xbf16, #tpu.memory_space<vmem>>, vector<512x320xbf16>
    %c0_97 = arith.constant 0 : index
    %c0_98 = arith.constant 0 : index
    %121 = vector.load %arg6[%c0_97, %c0_98] : memref<320x64xbf16, #tpu.memory_space<vmem>>, vector<320x64xbf16>
    %cst_99 = arith.constant dense<0.000000e+00> : vector<512x64xf32>
    %122 = tpu.matmul %120, %121, %cst_99 {dimension_numbers = #tpu.dot_dimension_numbers<[1], [0], [0], [1], [0, 0, 1, 1], [], []>} : vector<512x320xbf16>, vector<320x64xbf16>, vector<512x64xf32> -> vector<512x64xf32>
    %c0_100 = arith.constant 0 : index
    %c0_101 = arith.constant 0 : index
    %123 = vector.load %arg7[%c0_100, %c0_101] : memref<1x64xf32, #tpu.memory_space<vmem>>, vector<1x64xf32>
    %124 = vector.broadcast %123 : vector<1x64xf32> to vector<512x64xf32>
    %125 = arith.addf %122, %124 : vector<512x64xf32>
    %cst_102 = arith.constant 0.000000e+00 : f32
    %126 = vector.broadcast %cst_102 : f32 to vector<512x64xf32>
    %127 = arith.maximumf %125, %126 : vector<512x64xf32>
    %128 = arith.truncf %127 : vector<512x64xf32> to vector<512x64xbf16>
    %c0_103 = arith.constant 0 : index
    %c0_104 = arith.constant 0 : index
    %129 = vector.load %arg8[%c0_103, %c0_104] : memref<64x32xbf16, #tpu.memory_space<vmem>>, vector<64x32xbf16>
    %cst_105 = arith.constant dense<0.000000e+00> : vector<512x32xf32>
    %130 = tpu.matmul %128, %129, %cst_105 {dimension_numbers = #tpu.dot_dimension_numbers<[1], [0], [0], [1], [0, 0, 1, 1], [], []>} : vector<512x64xbf16>, vector<64x32xbf16>, vector<512x32xf32> -> vector<512x32xf32>
    %c0_106 = arith.constant 0 : index
    %c0_107 = arith.constant 0 : index
    %131 = vector.load %arg9[%c0_106, %c0_107] : memref<1x32xf32, #tpu.memory_space<vmem>>, vector<1x32xf32>
    %132 = vector.broadcast %131 : vector<1x32xf32> to vector<512x32xf32>
    %133 = arith.addf %130, %132 : vector<512x32xf32>
    %c0_108 = arith.constant 0 : index
    %c0_109 = arith.constant 0 : index
    %134 = vector.load %arg10[%c0_108, %c0_109] : memref<512x32xf32, #tpu.memory_space<vmem>>, vector<512x32xf32>
    tpu.vector_store %arg10[%c0_108, %c0_109], %133 {strides = array<i32>} : memref<512x32xf32, #tpu.memory_space<vmem>>, vector<512x32xf32>,
    return
  }
  func.func @transform_0(%arg0: i32) -> (i32, i32, i32) {
    %c0_i32 = arith.constant 0 : i32
    %c0_i32_0 = arith.constant 0 : i32
    %c0_i32_1 = arith.constant 0 : i32
    return %c0_i32, %arg0, %c0_i32_0 : i32, i32, i32
  }
  func.func @transform_1(%arg0: i32) -> (i32, i32, i32) {
    %c0_i32 = arith.constant 0 : i32
    %c0_i32_0 = arith.constant 0 : i32
    %c0_i32_1 = arith.constant 0 : i32
    %c0_i32_2 = arith.constant 0 : i32
    return %c0_i32, %c0_i32_0, %c0_i32_1 : i32, i32, i32
  }
  func.func @transform_2(%arg0: i32) -> (i32, i32, i32) {
    %c0_i32 = arith.constant 0 : i32
    %c0_i32_0 = arith.constant 0 : i32
    %c0_i32_1 = arith.constant 0 : i32
    %c0_i32_2 = arith.constant 0 : i32
    return %c0_i32, %c0_i32_0, %c0_i32_1 : i32, i32, i32
  }
  func.func @transform_3(%arg0: i32) -> (i32, i32, i32) {
    %c0_i32 = arith.constant 0 : i32
    %c0_i32_0 = arith.constant 0 : i32
    %c0_i32_1 = arith.constant 0 : i32
    %c0_i32_2 = arith.constant 0 : i32
    return %c0_i32, %c0_i32_0, %c0_i32_1 : i32, i32, i32
  }
  func.func @transform_4(%arg0: i32) -> (i32, i32, i32) {
    %c0_i32 = arith.constant 0 : i32
    %c0_i32_0 = arith.constant 0 : i32
    %c0_i32_1 = arith.constant 0 : i32
    %c0_i32_2 = arith.constant 0 : i32
    return %c0_i32, %c0_i32_0, %c0_i32_1 : i32, i32, i32
  }
  func.func @transform_5(%arg0: i32) -> (i32, i32) {
    %c0_i32 = arith.constant 0 : i32
    %c0_i32_0 = arith.constant 0 : i32
    %c0_i32_1 = arith.constant 0 : i32
    return %c0_i32, %c0_i32_0 : i32, i32
  }
  func.func @transform_6(%arg0: i32) -> (i32, i32) {
    %c0_i32 = arith.constant 0 : i32
    %c0_i32_0 = arith.constant 0 : i32
    %c0_i32_1 = arith.constant 0 : i32
    return %c0_i32, %c0_i32_0 : i32, i32
  }
  func.func @transform_7(%arg0: i32) -> (i32, i32) {
    %c0_i32 = arith.constant 0 : i32
    %c0_i32_0 = arith.constant 0 : i32
    %c0_i32_1 = arith.constant 0 : i32
    return %c0_i32, %c0_i32_0 : i32, i32
  }
  func.func @transform_8(%arg0: i32) -> (i32, i32) {
    %c0_i32 = arith.constant 0 : i32
    %c0_i32_0 = arith.constant 0 : i32
    %c0_i32_1 = arith.constant 0 : i32
    return %c0_i32, %c0_i32_0 : i32, i32
  }
  func.func @transform_9(%arg0: i32) -> (i32, i32) {
    %c0_i32 = arith.constant 0 : i32
    %c0_i32_0 = arith.constant 0 : i32
    return %arg0, %c0_i32 : i32, i32
  }
}

</mosaic_0001>

<llo_original>
// kernel: tpu_custom_call.1
$region0: #{tpu_custom_call.1}
  #allocation0 [shape = 'u32[]', space=smem, size = 0x4, offset = 0x4, fixed_abs, tag = 'smem constant byte address 0x4 - core index']
  #allocation1 [shape = 'u32[144,128]{1,0:T(1,128)}', space=vmem, size = 0x12000, scoped, tag = 'internal scratch']
  #allocation2 [shape = 'bf16[512,320]{1,0:T(8,128)(2,1)}', space=vmem, size = 0x60000, scoped, tag = 'scratch operand']
  %s0 = inlined_call_operand.hbm [shape: f32[5,512,128], index: 0, kind: input, shape index: {}]
  %s1 = inlined_call_operand.vmem [shape: bf16[5,128,64], index: 1, kind: input, shape index: {}]
  %s2 = inlined_call_operand.hbm [shape: f32[5,1,64], index: 2, kind: input, shape index: {}]
  %s3 = inlined_call_operand.hbm [shape: bf16[5,64,64], index: 3, kind: input, shape index: {}]
  %s4 = inlined_call_operand.hbm [shape: f32[5,1,64], index: 4, kind: input, shape index: {}]
  %s5 = inlined_call_operand.vmem [shape: bf16[320,64], index: 5, kind: input, shape index: {}]
  %s6 = inlined_call_operand.hbm [shape: f32[1,64], index: 6, kind: input, shape index: {}]
  %s7 = inlined_call_operand.vmem [shape: bf16[64,32], index: 7, kind: input, shape index: {}]
  %s8 = inlined_call_operand.hbm [shape: f32[1,32], index: 8, kind: input, shape index: {}]
  %s9 = inlined_call_operand.vmem [shape: f32[512,32], index: 9, kind: output, shape index: {}]
  %s10 = sld [smem:[#allocation0]]
  $region70: #{tpu_custom_call.1} parent=0
    _
  %s12 = ssub.s32 1, %s10
  %s13 = scalar_select 0, %s12, %s10
  $region1: #{tpu_custom_call.1} parent=0
    #allocation3 [shape = 'u8[1310720]{0}', space=vmem, size = 0x140000, scoped, tag = 'input window, operand 0, single buffered']
    #allocation4 [shape = 's32[1]{0}', space=sflag, size = 0x4, scoped, tag = 'scoped memory for tpu_custom_call.1']
    #allocation5 [shape = 'u8[2560]{0}', space=vmem, size = 0xc00, scoped, tag = 'input window, operand 2, single buffered']
    #allocation6 [shape = 's32[1]{0}', space=sflag, size = 0x4, scoped, tag = 'scoped memory for tpu_custom_call.1']
    #allocation7 [shape = 'u8[81920]{0}', space=vmem, size = 0x14000, scoped, tag = 'input window, operand 3, single buffered']
    #allocation8 [shape = 'u8[2560]{0}', space=vmem, size = 0xc00, scoped, tag = 'input window, operand 4, single buffered']
    #allocation9 [shape = 's32[1]{0}', space=sflag, size = 0x4, scoped, tag = 'scoped memory for tpu_custom_call.1']
    #allocation10 [shape = 'u8[512]{0}', space=vmem, size = 0x400, scoped, tag = 'input window, operand 6, single buffered']
    #allocation11 [shape = 'u8[512]{0}', space=vmem, size = 0x400, scoped, tag = 'input window, operand 8, single buffered']
    #allocation12 [shape = 's32[1]{0}', space=sflag, size = 0x4, scoped, tag = 'scoped memory for tpu_custom_call.1']
    %14 = vsyncpa [#allocation4], 0
    %15 = vsyncpa [#allocation6], 0
    %16 = vsyncpa [#allocation9], 0
    %17 = vsyncpa [#allocation12], 0
    // Predicated region
    $region2: #{tpu_custom_call.1} parent=1 // pred_check
      _
    $region3: #{tpu_custom_call.1} parent=1 // pred_check_branch
      %19 = sbr.rel (0) target = $region5
    $region4: #{tpu_custom_call.1} parent=1 // pred_region
      %s21 = ssub.s32 40960, 40960
      %22 = vsyncadd [#allocation4], %s21
      %s23 = sshll.u32 [#allocation3], 4
      %s24 = int_to_ptr.vmem [resolvable:$true] %s23
      %29 = dma.hbm_to_vmem [thread:$0]  %s0, 40960, %s24, [#allocation4], 128, 128, 8
    $region5: #{tpu_custom_call.1} parent=1 // pred_fallthru
      _
    // Predicated region
    $region6: #{tpu_custom_call.1} parent=1 // pred_check
      _
    $region7: #{tpu_custom_call.1} parent=1 // pred_check_branch
      %31 = sbr.rel (0) target = $region9
    $region8: #{tpu_custom_call.1} parent=1 // pred_region
      _
    $region9: #{tpu_custom_call.1} parent=1 // pred_fallthru
      _
    // Predicated region
    $region10: #{tpu_custom_call.1} parent=1 // pred_check
      _
    $region11: #{tpu_custom_call.1} parent=1 // pred_check_branch
      %33 = sbr.rel (0) target = $region13
    $region12: #{tpu_custom_call.1} parent=1 // pred_region
      %s35 = ssub.s32 80, 80
      %36 = vsyncadd [#allocation6], %s35
      %s37 = sshll.u32 [#allocation5], 4
      %s38 = int_to_ptr.vmem [resolvable:$true] %s37
      %43 = dma.hbm_to_vmem [thread:$0]  %s2, 80, %s38, [#allocation6], 16, 16, 1
    $region13: #{tpu_custom_call.1} parent=1 // pred_fallthru
      _
    // Predicated region
    $region14: #{tpu_custom_call.1} parent=1 // pred_check
      _
    $region15: #{tpu_custom_call.1} parent=1 // pred_check_branch
      %45 = sbr.rel (0) target = $region17
    $region16: #{tpu_custom_call.1} parent=1 // pred_region
      %s47 = ssub.s32 2560, 2560
      %48 = vsyncadd [#allocation6], %s47
      %s49 = sshll.u32 [#allocation7], 4
      %s50 = int_to_ptr.vmem [resolvable:$true] %s49
      %55 = dma.hbm_to_vmem [thread:$0]  %s3, 2560, %s50, [#allocation6], 64, 64, 4
    $region17: #{tpu_custom_call.1} parent=1 // pred_fallthru
      _
    // Predicated region
    $region18: #{tpu_custom_call.1} parent=1 // pred_check
      _
    $region19: #{tpu_custom_call.1} parent=1 // pred_check_branch
      %57 = sbr.rel (0) target = $region21
    $region20: #{tpu_custom_call.1} parent=1 // pred_region
      %s59 = ssub.s32 80, 80
      %60 = vsyncadd [#allocation9], %s59
      %s61 = sshll.u32 [#allocation8], 4
      %s62 = int_to_ptr.vmem [resolvable:$true] %s61
      %67 = dma.hbm_to_vmem [thread:$0]  %s4, 80, %s62, [#allocation9], 16, 16, 1
    $region21: #{tpu_custom_call.1} parent=1 // pred_fallthru
      _
    // Predicated region
    $region22: #{tpu_custom_call.1} parent=1 // pred_check
      _
    $region23: #{tpu_custom_call.1} parent=1 // pred_check_branch
      %69 = sbr.rel (0) target = $region25
    $region24: #{tpu_custom_call.1} parent=1 // pred_region
      _
    $region25: #{tpu_custom_call.1} parent=1 // pred_fallthru
      _
    // Predicated region
    $region26: #{tpu_custom_call.1} parent=1 // pred_check
      _
    $region27: #{tpu_custom_call.1} parent=1 // pred_check_branch
      %71 = sbr.rel (0) target = $region29
    $region28: #{tpu_custom_call.1} parent=1 // pred_region
      %s73 = ssub.s32 16, 16
      %74 = vsyncadd [#allocation9], %s73
      %s76 = sshll.u32 [#allocation10], 4
      %s77 = int_to_ptr.vmem [resolvable:$true] %s76
      %79 = dma.hbm_to_vmem [thread:$0]  %s6, 16, %s77, [#allocation9]
    $region29: #{tpu_custom_call.1} parent=1 // pred_fallthru
      _
    // Predicated region
    $region30: #{tpu_custom_call.1} parent=1 // pred_check
      _
    $region31: #{tpu_custom_call.1} parent=1 // pred_check_branch
      %81 = sbr.rel (0) target = $region33
    $region32: #{tpu_custom_call.1} parent=1 // pred_region
      _
    $region33: #{tpu_custom_call.1} parent=1 // pred_fallthru
      _
    // Predicated region
    $region34: #{tpu_custom_call.1} parent=1 // pred_check
      _
    $region35: #{tpu_custom_call.1} parent=1 // pred_check_branch
      %83 = sbr.rel (0) target = $region37
    $region36: #{tpu_custom_call.1} parent=1 // pred_region
      %s85 = ssub.s32 16, 16
      %86 = vsyncadd [#allocation12], %s85
      %s88 = sshll.u32 [#allocation11], 4
      %s89 = int_to_ptr.vmem [resolvable:$true] %s88
      %91 = dma.hbm_to_vmem [thread:$0]  %s8, 16, %s89, [#allocation12]
    $region37: #{tpu_custom_call.1} parent=1 // pred_fallthru
      _
    // Predicated region
    $region38: #{tpu_custom_call.1} parent=1 // pred_check
      _
    $region39: #{tpu_custom_call.1} parent=1 // pred_check_branch
      %93 = sbr.rel (0) target = $region41
    $region40: #{tpu_custom_call.1} parent=1 // pred_region
      %94 = dma.done [#allocation4], 40960
    $region41: #{tpu_custom_call.1} parent=1 // pred_fallthru
      _
    // Predicated region
    $region42: #{tpu_custom_call.1} parent=1 // pred_check
      _
    $region43: #{tpu_custom_call.1} parent=1 // pred_check_branch
      %96 = sbr.rel (0) target = $region45
    $region44: #{tpu_custom_call.1} parent=1 // pred_region
      %97 = dma.done [#allocation6], 80
    $region45: #{tpu_custom_call.1} parent=1 // pred_fallthru
      _
    // Predicated region
    $region46: #{tpu_custom_call.1} parent=1 // pred_check
      _
    $region47: #{tpu_custom_call.1} parent=1 // pred_check_branch
      %99 = sbr.rel (0) target = $region49
    $region48: #{tpu_custom_call.1} parent=1 // pred_region
      %100 = dma.done [#allocation6], 2560
    $region49: #{tpu_custom_call.1} parent=1 // pred_fallthru
      _
    // Predicated region
    $region50: #{tpu_custom_call.1} parent=1 // pred_check
      _
    $region51: #{tpu_custom_call.1} parent=1 // pred_check_branch
      %102 = sbr.rel (0) target = $region53
    $region52: #{tpu_custom_call.1} parent=1 // pred_region
      %103 = dma.done [#allocation9], 80
    $region53: #{tpu_custom_call.1} parent=1 // pred_fallthru
      _
    // Predicated region
    $region54: #{tpu_custom_call.1} parent=1 // pred_check
      _
    $region55: #{tpu_custom_call.1} parent=1 // pred_check_branch
      %105 = sbr.rel (0) target = $region57
    $region56: #{tpu_custom_call.1} parent=1 // pred_region
      %106 = dma.done [#allocation9], 16
    $region57: #{tpu_custom_call.1} parent=1 // pred_fallthru
      _
    // Predicated region
    $region58: #{tpu_custom_call.1} parent=1 // pred_check
      _
    $region59: #{tpu_custom_call.1} parent=1 // pred_check_branch
      %108 = sbr.rel (0) target = $region61
    $region60: #{tpu_custom_call.1} parent=1 // pred_region
      %109 = dma.done [#allocation12], 16
    $region61: #{tpu_custom_call.1} parent=1 // pred_fallthru
      _
    %v111 = vld [vmem:[#allocation3] sm:$0xff]
    %v112 = vld [vmem:[#allocation3 + $0x8] sm:$0xff]
    %v113 = vld [vmem:[#allocation3 + $0x10] sm:$0xff]
    %v114 = vld [vmem:[#allocation3 + $0x18] sm:$0xff]
    %v115 = vld [vmem:[#allocation3 + $0x20] sm:$0xff]
    %v116 = vld [vmem:[#allocation3 + $0x28] sm:$0xff]
    %v117 = vld [vmem:[#allocation3 + $0x30] sm:$0xff]
    %v118 = vld [vmem:[#allocation3 + $0x38] sm:$0xff]
    %v119 = vld [vmem:[#allocation3 + $0x40] sm:$0xff]
    %v120 = vld [vmem:[#allocation3 + $0x48] sm:$0xff]
    %v121 = vld [vmem:[#allocation3 + $0x50] sm:$0xff]
    %v122 = vld [vmem:[#allocation3 + $0x58] sm:$0xff]
    %v123 = vld [vmem:[#allocation3 + $0x60] sm:$0xff]
    %v124 = vld [vmem:[#allocation3 + $0x68] sm:$0xff]
    %v125 = vld [vmem:[#allocation3 + $0x70] sm:$0xff]
    %v126 = vld [vmem:[#allocation3 + $0x78] sm:$0xff]
    %v127 = vld [vmem:[#allocation3 + $0x80] sm:$0xff]
    %v128 = vld [vmem:[#allocation3 + $0x88] sm:$0xff]
    %v129 = vld [vmem:[#allocation3 + $0x90] sm:$0xff]
    %v130 = vld [vmem:[#allocation3 + $0x98] sm:$0xff]
    %v131 = vld [vmem:[#allocation3 + $0xa0] sm:$0xff]
    %v132 = vld [vmem:[#allocation3 + $0xa8] sm:$0xff]
    %v133 = vld [vmem:[#allocation3 + $0xb0] sm:$0xff]
    %v134 = vld [vmem:[#allocation3 + $0xb8] sm:$0xff]
    %v135 = vld [vmem:[#allocation3 + $0xc0] sm:$0xff]
    %v136 = vld [vmem:[#allocation3 + $0xc8] sm:$0xff]
    %v137 = vld [vmem:[#allocation3 + $0xd0] sm:$0xff]
    %v138 = vld [vmem:[#allocation3 + $0xd8] sm:$0xff]
    %v139 = vld [vmem:[#allocation3 + $0xe0] sm:$0xff]
    %v140 = vld [vmem:[#allocation3 + $0xe8] sm:$0xff]
    %v141 = vld [vmem:[#allocation3 + $0xf0] sm:$0xff]
    %v142 = vld [vmem:[#allocation3 + $0xf8] sm:$0xff]
    %v143 = vld [vmem:[#allocation3 + $0x100] sm:$0xff]
    %v144 = vld [vmem:[#allocation3 + $0x108] sm:$0xff]
    %v145 = vld [vmem:[#allocation3 + $0x110] sm:$0xff]
    %v146 = vld [vmem:[#allocation3 + $0x118] sm:$0xff]
    %v147 = vld [vmem:[#allocation3 + $0x120] sm:$0xff]
    %v148 = vld [vmem:[#allocation3 + $0x128] sm:$0xff]
    %v149 = vld [vmem:[#allocation3 + $0x130] sm:$0xff]
    %v150 = vld [vmem:[#allocation3 + $0x138] sm:$0xff]
    %v151 = vld [vmem:[#allocation3 + $0x140] sm:$0xff]
    %v152 = vld [vmem:[#allocation3 + $0x148] sm:$0xff]
    %v153 = vld [vmem:[#allocation3 + $0x150] sm:$0xff]
    %v154 = vld [vmem:[#allocation3 + $0x158] sm:$0xff]
    %v155 = vld [vmem:[#allocation3 + $0x160] sm:$0xff]
    %v156 = vld [vmem:[#allocation3 + $0x168] sm:$0xff]
    %v157 = vld [vmem:[#allocation3 + $0x170] sm:$0xff]
    %v158 = vld [vmem:[#allocation3 + $0x178] sm:$0xff]
    %v159 = vld [vmem:[#allocation3 + $0x180] sm:$0xff]
    %v160 = vld [vmem:[#allocation3 + $0x188] sm:$0xff]
    %v161 = vld [vmem:[#allocation3 + $0x190] sm:$0xff]
    %v162 = vld [vmem:[#allocation3 + $0x198] sm:$0xff]
    %v163 = vld [vmem:[#allocation3 + $0x1a0] sm:$0xff]
    %v164 = vld [vmem:[#allocation3 + $0x1a8] sm:$0xff]
    %v165 = vld [vmem:[#allocation3 + $0x1b0] sm:$0xff]
    %v166 = vld [vmem:[#allocation3 + $0x1b8] sm:$0xff]
    %v167 = vld [vmem:[#allocation3 + $0x1c0] sm:$0xff]
    %v168 = vld [vmem:[#allocation3 + $0x1c8] sm:$0xff]
    %v169 = vld [vmem:[#allocation3 + $0x1d0] sm:$0xff]
    %v170 = vld [vmem:[#allocation3 + $0x1d8] sm:$0xff]
    %v171 = vld [vmem:[#allocation3 + $0x1e0] sm:$0xff]
    %v172 = vld [vmem:[#allocation3 + $0x1e8] sm:$0xff]
    %v173 = vld [vmem:[#allocation3 + $0x1f0] sm:$0xff]
    %v174 = vld [vmem:[#allocation3 + $0x1f8] sm:$0xff]
    %v175 = vpack.c.bf16 %v112, %v111
    %v176 = vpack.c.bf16 %v114, %v113
    %v177 = vpack.c.bf16 %v116, %v115
    %v178 = vpack.c.bf16 %v118, %v117
    %v179 = vpack.c.bf16 %v120, %v119
    %v180 = vpack.c.bf16 %v122, %v121
    %v181 = vpack.c.bf16 %v124, %v123
    %v182 = vpack.c.bf16 %v126, %v125
    %v183 = vpack.c.bf16 %v128, %v127
    %v184 = vpack.c.bf16 %v130, %v129
    %v185 = vpack.c.bf16 %v132, %v131
    %v186 = vpack.c.bf16 %v134, %v133
    %v187 = vpack.c.bf16 %v136, %v135
    %v188 = vpack.c.bf16 %v138, %v137
    %v189 = vpack.c.bf16 %v140, %v139
    %v190 = vpack.c.bf16 %v142, %v141
    %v191 = vpack.c.bf16 %v144, %v143
    %v192 = vpack.c.bf16 %v146, %v145
    %v193 = vpack.c.bf16 %v148, %v147
    %v194 = vpack.c.bf16 %v150, %v149
    %v195 = vpack.c.bf16 %v152, %v151
    %v196 = vpack.c.bf16 %v154, %v153
    %v197 = vpack.c.bf16 %v156, %v155
    %v198 = vpack.c.bf16 %v158, %v157
    %v199 = vpack.c.bf16 %v160, %v159
    %v200 = vpack.c.bf16 %v162, %v161
    %v201 = vpack.c.bf16 %v164, %v163
    %v202 = vpack.c.bf16 %v166, %v165
    %v203 = vpack.c.bf16 %v168, %v167
    %v204 = vpack.c.bf16 %v170, %v169
    %v205 = vpack.c.bf16 %v172, %v171
    %v206 = vpack.c.bf16 %v174, %v173
    %v207 = vld [vmem:[%s1] sm:$0xf]
    %v208 = vld [vmem:[%s1 + $0x4] sm:$0xf]
    %v209 = vld [vmem:[%s1 + $0x8] sm:$0xf]
    %v210 = vld [vmem:[%s1 + $0xc] sm:$0xf]
    %v211 = vld [vmem:[%s1 + $0x10] sm:$0xf]
    %v212 = vld [vmem:[%s1 + $0x14] sm:$0xf]
    %v213 = vld [vmem:[%s1 + $0x18] sm:$0xf]
    %v214 = vld [vmem:[%s1 + $0x1c] sm:$0xf]
    %v215 = vld [vmem:[%s1 + $0x20] sm:$0xf]
    %v216 = vld [vmem:[%s1 + $0x24] sm:$0xf]
    %v217 = vld [vmem:[%s1 + $0x28] sm:$0xf]
    %v218 = vld [vmem:[%s1 + $0x2c] sm:$0xf]
    %v219 = vld [vmem:[%s1 + $0x30] sm:$0xf]
    %v220 = vld [vmem:[%s1 + $0x34] sm:$0xf]
    %v221 = vld [vmem:[%s1 + $0x38] sm:$0xf]
    %v222 = vld [vmem:[%s1 + $0x3c] sm:$0xf]
    %v223 = vld [vmem:[#allocation5] sm:$0x1]
    %v225 = vlaneseq
    %v226 = vshrl.u32 %v225, 7
    %v227 = vsub.s32 0, %v226
    %v228 = vrot.slane %v223, %v227
    %v246 = vunpack.c.l.b16 %v207
    %v247 = vunpack.c.l.b16 %v208
    %v248 = vunpack.c.l.b16 %v209
    %v249 = vunpack.c.l.b16 %v210
    %v250 = vunpack.c.l.b16 %v211
    %v251 = vunpack.c.l.b16 %v212
    %v252 = vunpack.c.l.b16 %v213
    %v253 = vunpack.c.l.b16 %v214
    %v254 = vunpack.c.l.b16 %v215
    %v255 = vunpack.c.l.b16 %v216
    %v256 = vunpack.c.l.b16 %v217
    %v257 = vunpack.c.l.b16 %v218
    %v258 = vunpack.c.l.b16 %v219
    %v259 = vunpack.c.l.b16 %v220
    %v260 = vunpack.c.l.b16 %v221
    %v261 = vunpack.c.l.b16 %v222
    %v262 = vpack.c.b16 %v247, %v246
    %v263 = vpack.c.b16 %v249, %v248
    %v264 = vpack.c.b16 %v251, %v250
    %v265 = vpack.c.b16 %v253, %v252
    %v266 = vpack.c.b16 %v255, %v254
    %v267 = vpack.c.b16 %v257, %v256
    %v268 = vpack.c.b16 %v259, %v258
    %v269 = vpack.c.b16 %v261, %v260
    %278 = vmatprep.subr.bf16.mxu0 0
    %279 = vmatpush1.bf16.msra.mxu0 %v269
    %280 = vmatprep.subr.bf16.mxu0 0
    %281 = vmatpush1.bf16.msra.mxu0 %v268
    %282 = vmatprep.subr.bf16.mxu0 0
    %283 = vmatpush1.bf16.msra.mxu0 %v267
    %284 = vmatprep.subr.bf16.mxu0 0
    %285 = vmatpush1.bf16.msra.mxu0 %v266
    %286 = vmatprep.subr.bf16.mxu0 0
    %287 = vmatpush1.bf16.msra.mxu0 %v265
    %288 = vmatprep.subr.bf16.mxu0 0
    %289 = vmatpush1.bf16.msra.mxu0 %v264
    %290 = vmatprep.subr.bf16.mxu0 0
    %291 = vmatpush1.bf16.msra.mxu0 %v263
    %292 = vmatprep.subr.bf16.mxu0 0
    %293 = vmatpush1.bf16.msra.mxu0 %v262
    %294 = vmatprep.subr.bf16.mxu0 0
    %295 = vmatpush2.bf16.msra.mxu0 0
    %296 = vmatprep.subr.bf16.mxu0 0
    %297 = vmatpush2.bf16.msra.mxu0 0
    %298 = vmatprep.subr.bf16.mxu0 0
    %299 = vmatpush2.bf16.msra.mxu0 0
    %300 = vmatprep.subr.bf16.mxu0 0
    %301 = vmatpush2.bf16.msra.mxu0 0
    %302 = vmatprep.subr.bf16.mxu0 0
    %303 = vmatpush2.bf16.msra.mxu0 0
    %304 = vmatprep.subr.bf16.mxu0 0
    %305 = vmatpush2.bf16.msra.mxu0 0
    %306 = vmatprep.subr.bf16.mxu0 0
    %307 = vmatpush2.bf16.msra.mxu0 0
    %308 = vmatprep.subr.bf16.mxu0 0
    %309 = vmatpush2.bf16.msra.mxu0 0
    %310 = vmatprep.mubr.bf16.mxu0 0
    %311 = vmatmul.mubr.bf16.gmra.mxu0 %v175
    %v312 = vpop.f32.mrf.mxu0
    %v313 = vadd.f32 %v228, %v312
    %v314 = vpop.f32.mrf.mxu0
    %v315 = vpop.f32.mrf.mxu0
    %v316 = vadd.f32 %v228, %v315
    %v317 = vpop.f32.mrf.mxu0
    %318 = vmatprep.mubr.bf16.mxu0 0
    %319 = vmatmul.mubr.bf16.gmra.mxu0 %v176
    %v320 = vpop.f32.mrf.mxu0
    %v321 = vadd.f32 %v228, %v320
    %v322 = vpop.f32.mrf.mxu0
    %v323 = vpop.f32.mrf.mxu0
    %v324 = vadd.f32 %v228, %v323
    %v325 = vpop.f32.mrf.mxu0
    %326 = vmatprep.mubr.bf16.mxu0 0
    %327 = vmatmul.mubr.bf16.gmra.mxu0 %v177
    %v328 = vpop.f32.mrf.mxu0
    %v329 = vadd.f32 %v228, %v328
    %v330 = vpop.f32.mrf.mxu0
    %v331 = vpop.f32.mrf.mxu0
    %v332 = vadd.f32 %v228, %v331
    %v333 = vpop.f32.mrf.mxu0
    %334 = vmatprep.mubr.bf16.mxu0 0
    %335 = vmatmul.mubr.bf16.gmra.mxu0 %v178
    %v336 = vpop.f32.mrf.mxu0
    %v337 = vadd.f32 %v228, %v336
    %v338 = vpop.f32.mrf.mxu0
    %v339 = vpop.f32.mrf.mxu0
    %v340 = vadd.f32 %v228, %v339
    %v341 = vpop.f32.mrf.mxu0
    %342 = vmatprep.mubr.bf16.mxu0 0
    %343 = vmatmul.mubr.bf16.gmra.mxu0 %v179
    %v344 = vpop.f32.mrf.mxu0
    %v345 = vadd.f32 %v228, %v344
    %v346 = vpop.f32.mrf.mxu0
    %v347 = vpop.f32.mrf.mxu0
    %v348 = vadd.f32 %v228, %v347
    %v349 = vpop.f32.mrf.mxu0
    %350 = vmatprep.mubr.bf16.mxu0 0
    %351 = vmatmul.mubr.bf16.gmra.mxu0 %v180
    %v352 = vpop.f32.mrf.mxu0
    %v353 = vadd.f32 %v228, %v352
    %v354 = vpop.f32.mrf.mxu0
    %v355 = vpop.f32.mrf.mxu0
    %v356 = vadd.f32 %v228, %v355
    %v357 = vpop.f32.mrf.mxu0
    %358 = vmatprep.mubr.bf16.mxu0 0
    %359 = vmatmul.mubr.bf16.gmra.mxu0 %v181
    %v360 = vpop.f32.mrf.mxu0
    %v361 = vadd.f32 %v228, %v360
    %v362 = vpop.f32.mrf.mxu0
    %v363 = vpop.f32.mrf.mxu0
    %v364 = vadd.f32 %v228, %v363
    %v365 = vpop.f32.mrf.mxu0
    %366 = vmatprep.mubr.bf16.mxu0 0
    %367 = vmatmul.mubr.bf16.gmra.mxu0 %v182
    %v368 = vpop.f32.mrf.mxu0
    %v369 = vadd.f32 %v228, %v368
    %v370 = vpop.f32.mrf.mxu0
    %v371 = vpop.f32.mrf.mxu0
    %v372 = vadd.f32 %v228, %v371
    %v373 = vpop.f32.mrf.mxu0
    %374 = vmatprep.mubr.bf16.mxu0 0
    %375 = vmatmul.mubr.bf16.gmra.mxu0 %v183
    %v376 = vpop.f32.mrf.mxu0
    %v377 = vadd.f32 %v228, %v376
    %v378 = vpop.f32.mrf.mxu0
    %v379 = vpop.f32.mrf.mxu0
    %v380 = vadd.f32 %v228, %v379
    %v381 = vpop.f32.mrf.mxu0
    %382 = vmatprep.mubr.bf16.mxu0 0
    %383 = vmatmul.mubr.bf16.gmra.mxu0 %v184
    %v384 = vpop.f32.mrf.mxu0
    %v385 = vadd.f32 %v228, %v384
    %v386 = vpop.f32.mrf.mxu0
    %v387 = vpop.f32.mrf.mxu0
    %v388 = vadd.f32 %v228, %v387
    %v389 = vpop.f32.mrf.mxu0
    %390 = vmatprep.mubr.bf16.mxu0 0
    %391 = vmatmul.mubr.bf16.gmra.mxu0 %v185
    %v392 = vpop.f32.mrf.mxu0
    %v393 = vadd.f32 %v228, %v392
    %v394 = vpop.f32.mrf.mxu0
    %v395 = vpop.f32.mrf.mxu0
    %v396 = vadd.f32 %v228, %v395
    %v397 = vpop.f32.mrf.mxu0
    %398 = vmatprep.mubr.bf16.mxu0 0
    %399 = vmatmul.mubr.bf16.gmra.mxu0 %v186
    %v400 = vpop.f32.mrf.mxu0
    %v401 = vadd.f32 %v228, %v400
    %v402 = vpop.f32.mrf.mxu0
    %v403 = vpop.f32.mrf.mxu0
    %v404 = vadd.f32 %v228, %v403
    %v405 = vpop.f32.mrf.mxu0
    %406 = vmatprep.mubr.bf16.mxu0 0
    %407 = vmatmul.mubr.bf16.gmra.mxu0 %v187
    %v408 = vpop.f32.mrf.mxu0
    %v409 = vadd.f32 %v228, %v408
    %v410 = vpop.f32.mrf.mxu0
    %v411 = vpop.f32.mrf.mxu0
    %v412 = vadd.f32 %v228, %v411
    %v413 = vpop.f32.mrf.mxu0
    %414 = vmatprep.mubr.bf16.mxu0 0
    %415 = vmatmul.mubr.bf16.gmra.mxu0 %v188
    %v416 = vpop.f32.mrf.mxu0
    %v417 = vadd.f32 %v228, %v416
    %v418 = vpop.f32.mrf.mxu0
    %v419 = vpop.f32.mrf.mxu0
    %v420 = vadd.f32 %v228, %v419
    %v421 = vpop.f32.mrf.mxu0
    %422 = vmatprep.mubr.bf16.mxu0 0
    %423 = vmatmul.mubr.bf16.gmra.mxu0 %v189
    %v424 = vpop.f32.mrf.mxu0
    %v425 = vadd.f32 %v228, %v424
    %v426 = vpop.f32.mrf.mxu0
    %v427 = vpop.f32.mrf.mxu0
    %v428 = vadd.f32 %v228, %v427
    %v429 = vpop.f32.mrf.mxu0
    %430 = vmatprep.mubr.bf16.mxu0 0
    %431 = vmatmul.mubr.bf16.gmra.mxu0 %v190
    %v432 = vpop.f32.mrf.mxu0
    %v433 = vadd.f32 %v228, %v432
    %v434 = vpop.f32.mrf.mxu0
    %v435 = vpop.f32.mrf.mxu0
    %v436 = vadd.f32 %v228, %v435
    %v437 = vpop.f32.mrf.mxu0
    %438 = vmatprep.mubr.bf16.mxu0 0
    %439 = vmatmul.mubr.bf16.gmra.mxu0 %v191
    %v440 = vpop.f32.mrf.mxu0
    %v441 = vadd.f32 %v228, %v440
    %v442 = vpop.f32.mrf.mxu0
    %v443 = vpop.f32.mrf.mxu0
    %v444 = vadd.f32 %v228, %v443
    %v445 = vpop.f32.mrf.mxu0
    %446 = vmatprep.mubr.bf16.mxu0 0
    %447 = vmatmul.mubr.bf16.gmra.mxu0 %v192
    %v448 = vpop.f32.mrf.mxu0
    %v449 = vadd.f32 %v228, %v448
    %v450 = vpop.f32.mrf.mxu0
    %v451 = vpop.f32.mrf.mxu0
    %v452 = vadd.f32 %v228, %v451
    %v453 = vpop.f32.mrf.mxu0
    %454 = vmatprep.mubr.bf16.mxu0 0
    %455 = vmatmul.mubr.bf16.gmra.mxu0 %v193
    %v456 = vpop.f32.mrf.mxu0
    %v457 = vadd.f32 %v228, %v456
    %v458 = vpop.f32.mrf.mxu0
    %v459 = vpop.f32.mrf.mxu0
    %v460 = vadd.f32 %v228, %v459
    %v461 = vpop.f32.mrf.mxu0
    %462 = vmatprep.mubr.bf16.mxu0 0
    %463 = vmatmul.mubr.bf16.gmra.mxu0 %v194
    %v464 = vpop.f32.mrf.mxu0
    %v465 = vadd.f32 %v228, %v464
    %v466 = vpop.f32.mrf.mxu0
    %v467 = vpop.f32.mrf.mxu0
    %v468 = vadd.f32 %v228, %v467
    %v469 = vpop.f32.mrf.mxu0
    %470 = vmatprep.mubr.bf16.mxu0 0
    %471 = vmatmul.mubr.bf16.gmra.mxu0 %v195
    %v472 = vpop.f32.mrf.mxu0
    %v473 = vadd.f32 %v228, %v472
    %v474 = vpop.f32.mrf.mxu0
    %v475 = vpop.f32.mrf.mxu0
    %v476 = vadd.f32 %v228, %v475
    %v477 = vpop.f32.mrf.mxu0
    %478 = vmatprep.mubr.bf16.mxu0 0
    %479 = vmatmul.mubr.bf16.gmra.mxu0 %v196
    %v480 = vpop.f32.mrf.mxu0
    %v481 = vadd.f32 %v228, %v480
    %v482 = vpop.f32.mrf.mxu0
    %v483 = vpop.f32.mrf.mxu0
    %v484 = vadd.f32 %v228, %v483
    %v485 = vpop.f32.mrf.mxu0
    %486 = vmatprep.mubr.bf16.mxu0 0
    %487 = vmatmul.mubr.bf16.gmra.mxu0 %v197
    %v488 = vpop.f32.mrf.mxu0
    %v489 = vadd.f32 %v228, %v488
    %v490 = vpop.f32.mrf.mxu0
    %v491 = vpop.f32.mrf.mxu0
    %v492 = vadd.f32 %v228, %v491
    %v493 = vpop.f32.mrf.mxu0
    %494 = vmatprep.mubr.bf16.mxu0 0
    %495 = vmatmul.mubr.bf16.gmra.mxu0 %v198
    %v496 = vpop.f32.mrf.mxu0
    %v497 = vadd.f32 %v228, %v496
    %v498 = vpop.f32.mrf.mxu0
    %v499 = vpop.f32.mrf.mxu0
    %v500 = vadd.f32 %v228, %v499
    %v501 = vpop.f32.mrf.mxu0
    %502 = vmatprep.mubr.bf16.mxu0 0
    %503 = vmatmul.mubr.bf16.gmra.mxu0 %v199
    %v504 = vpop.f32.mrf.mxu0
    %v505 = vadd.f32 %v228, %v504
    %v506 = vpop.f32.mrf.mxu0
    %v507 = vpop.f32.mrf.mxu0
    %v508 = vadd.f32 %v228, %v507
    %v509 = vpop.f32.mrf.mxu0
    %510 = vmatprep.mubr.bf16.mxu0 0
    %511 = vmatmul.mubr.bf16.gmra.mxu0 %v200
    %v512 = vpop.f32.mrf.mxu0
    %v513 = vadd.f32 %v228, %v512
    %v514 = vpop.f32.mrf.mxu0
    %v515 = vpop.f32.mrf.mxu0
    %v516 = vadd.f32 %v228, %v515
    %v517 = vpop.f32.mrf.mxu0
    %518 = vmatprep.mubr.bf16.mxu0 0
    %519 = vmatmul.mubr.bf16.gmra.mxu0 %v201
    %v520 = vpop.f32.mrf.mxu0
    %v521 = vadd.f32 %v228, %v520
    %v522 = vpop.f32.mrf.mxu0
    %v523 = vpop.f32.mrf.mxu0
    %v524 = vadd.f32 %v228, %v523
    %v525 = vpop.f32.mrf.mxu0
    %526 = vmatprep.mubr.bf16.mxu0 0
    %527 = vmatmul.mubr.bf16.gmra.mxu0 %v202
    %v528 = vpop.f32.mrf.mxu0
    %v529 = vadd.f32 %v228, %v528
    %v530 = vpop.f32.mrf.mxu0
    %v531 = vpop.f32.mrf.mxu0
    %v532 = vadd.f32 %v228, %v531
    %v533 = vpop.f32.mrf.mxu0
    %534 = vmatprep.mubr.bf16.mxu0 0
    %535 = vmatmul.mubr.bf16.gmra.mxu0 %v203
    %v536 = vpop.f32.mrf.mxu0
    %v537 = vadd.f32 %v228, %v536
    %v538 = vpop.f32.mrf.mxu0
    %v539 = vpop.f32.mrf.mxu0
    %v540 = vadd.f32 %v228, %v539
    %v541 = vpop.f32.mrf.mxu0
    %542 = vmatprep.mubr.bf16.mxu0 0
    %543 = vmatmul.mubr.bf16.gmra.mxu0 %v204
    %v544 = vpop.f32.mrf.mxu0
    %v545 = vadd.f32 %v228, %v544
    %v546 = vpop.f32.mrf.mxu0
    %v547 = vpop.f32.mrf.mxu0
    %v548 = vadd.f32 %v228, %v547
    %v549 = vpop.f32.mrf.mxu0
    %550 = vmatprep.mubr.bf16.mxu0 0
    %551 = vmatmul.mubr.bf16.gmra.mxu0 %v205
    %v552 = vpop.f32.mrf.mxu0
    %v553 = vadd.f32 %v228, %v552
    %v554 = vpop.f32.mrf.mxu0
    %v555 = vpop.f32.mrf.mxu0
    %v556 = vadd.f32 %v228, %v555
    %v557 = vpop.f32.mrf.mxu0
    %558 = vmatprep.mubr.bf16.mxu0 0
    %559 = vmatmul.mubr.bf16.gmra.mxu0 %v206
    %v560 = vpop.f32.mrf.mxu0
    %v561 = vadd.f32 %v228, %v560
    %v562 = vpop.f32.mrf.mxu0
    %v563 = vpop.f32.mrf.mxu0
    %v564 = vadd.f32 %v228, %v563
    %v565 = vpop.f32.mrf.mxu0
    %566 = vdwg.mxu0
    %v567 = vmax.f32 %v313, 0.0
    %v568 = vmax.f32 %v316, 0.0
    %v569 = vmax.f32 %v321, 0.0
    %v570 = vmax.f32 %v324, 0.0
    %v571 = vmax.f32 %v329, 0.0
    %v572 = vmax.f32 %v332, 0.0
    %v573 = vmax.f32 %v337, 0.0
    %v574 = vmax.f32 %v340, 0.0
    %v575 = vmax.f32 %v345, 0.0
    %v576 = vmax.f32 %v348, 0.0
    %v577 = vmax.f32 %v353, 0.0
    %v578 = vmax.f32 %v356, 0.0
    %v579 = vmax.f32 %v361, 0.0
    %v580 = vmax.f32 %v364, 0.0
    %v581 = vmax.f32 %v369, 0.0
    %v582 = vmax.f32 %v372, 0.0
    %v583 = vmax.f32 %v377, 0.0
    %v584 = vmax.f32 %v380, 0.0
    %v585 = vmax.f32 %v385, 0.0
    %v586 = vmax.f32 %v388, 0.0
    %v587 = vmax.f32 %v393, 0.0
    %v588 = vmax.f32 %v396, 0.0
    %v589 = vmax.f32 %v401, 0.0
    %v590 = vmax.f32 %v404, 0.0
    %v591 = vmax.f32 %v409, 0.0
    %v592 = vmax.f32 %v412, 0.0
    %v593 = vmax.f32 %v417, 0.0
    %v594 = vmax.f32 %v420, 0.0
    %v595 = vmax.f32 %v425, 0.0
    %v596 = vmax.f32 %v428, 0.0
    %v597 = vmax.f32 %v433, 0.0
    %v598 = vmax.f32 %v436, 0.0
    %v599 = vmax.f32 %v441, 0.0
    %v600 = vmax.f32 %v444, 0.0
    %v601 = vmax.f32 %v449, 0.0
    %v602 = vmax.f32 %v452, 0.0
    %v603 = vmax.f32 %v457, 0.0
    %v604 = vmax.f32 %v460, 0.0
    %v605 = vmax.f32 %v465, 0.0
    %v606 = vmax.f32 %v468, 0.0
    %v607 = vmax.f32 %v473, 0.0
    %v608 = vmax.f32 %v476, 0.0
    %v609 = vmax.f32 %v481, 0.0
    %v610 = vmax.f32 %v484, 0.0
    %v611 = vmax.f32 %v489, 0.0
    %v612 = vmax.f32 %v492, 0.0
    %v613 = vmax.f32 %v497, 0.0
    %v614 = vmax.f32 %v500, 0.0
    %v615 = vmax.f32 %v505, 0.0
    %v616 = vmax.f32 %v508, 0.0
    %v617 = vmax.f32 %v513, 0.0
    %v618 = vmax.f32 %v516, 0.0
    %v619 = vmax.f32 %v521, 0.0
    %v620 = vmax.f32 %v524, 0.0
    %v621 = vmax.f32 %v529, 0.0
    %v622 = vmax.f32 %v532, 0.0
    %v623 = vmax.f32 %v537, 0.0
    %v624 = vmax.f32 %v540, 0.0
    %v625 = vmax.f32 %v545, 0.0
    %v626 = vmax.f32 %v548, 0.0
    %v627 = vmax.f32 %v553, 0.0
    %v628 = vmax.f32 %v556, 0.0
    %v629 = vmax.f32 %v561, 0.0
    %v630 = vmax.f32 %v564, 0.0
    %v631 = vpack.c.bf16 %v568, %v567
    %v632 = vpack.c.bf16 %v570, %v569
    %v633 = vpack.c.bf16 %v572, %v571
    %v634 = vpack.c.bf16 %v574, %v573
    %v635 = vpack.c.bf16 %v576, %v575
    %v636 = vpack.c.bf16 %v578, %v577
    %v637 = vpack.c.bf16 %v580, %v579
    %v638 = vpack.c.bf16 %v582, %v581
    %v639 = vpack.c.bf16 %v584, %v583
    %v640 = vpack.c.bf16 %v586, %v585
    %v641 = vpack.c.bf16 %v588, %v587
    %v642 = vpack.c.bf16 %v590, %v589
    %v643 = vpack.c.bf16 %v592, %v591
    %v644 = vpack.c.bf16 %v594, %v593
    %v645 = vpack.c.bf16 %v596, %v595
    %v646 = vpack.c.bf16 %v598, %v597
    %v647 = vpack.c.bf16 %v600, %v599
    %v648 = vpack.c.bf16 %v602, %v601
    %v649 = vpack.c.bf16 %v604, %v603
    %v650 = vpack.c.bf16 %v606, %v605
    %v651 = vpack.c.bf16 %v608, %v607
    %v652 = vpack.c.bf16 %v610, %v609
    %v653 = vpack.c.bf16 %v612, %v611
    %v654 = vpack.c.bf16 %v614, %v613
    %v655 = vpack.c.bf16 %v616, %v615
    %v656 = vpack.c.bf16 %v618, %v617
    %v657 = vpack.c.bf16 %v620, %v619
    %v658 = vpack.c.bf16 %v622, %v621
    %v659 = vpack.c.bf16 %v624, %v623
    %v660 = vpack.c.bf16 %v626, %v625
    %v661 = vpack.c.bf16 %v628, %v627
    %v662 = vpack.c.bf16 %v630, %v629
    %v663 = vld [vmem:[#allocation7] sm:$0xf]
    %v664 = vld [vmem:[#allocation7 + $0x4] sm:$0xf]
    %v665 = vld [vmem:[#allocation7 + $0x8] sm:$0xf]
    %v666 = vld [vmem:[#allocation7 + $0xc] sm:$0xf]
    %v667 = vld [vmem:[#allocation7 + $0x10] sm:$0xf]
    %v668 = vld [vmem:[#allocation7 + $0x14] sm:$0xf]
    %v669 = vld [vmem:[#allocation7 + $0x18] sm:$0xf]
    %v670 = vld [vmem:[#allocation7 + $0x1c] sm:$0xf]
    %v671 = vld [vmem:[#allocation8] sm:$0x1]
    %v673 = vlaneseq
    %v674 = vshrl.u32 %v673, 7
    %v675 = vsub.s32 0, %v674
    %v676 = vrot.slane %v671, %v675
    %v686 = vunpack.c.l.b16 %v663
    %v687 = vunpack.c.l.b16 %v664
    %v688 = vunpack.c.l.b16 %v665
    %v689 = vunpack.c.l.b16 %v666
    %v690 = vunpack.c.l.b16 %v667
    %v691 = vunpack.c.l.b16 %v668
    %v692 = vunpack.c.l.b16 %v669
    %v693 = vunpack.c.l.b16 %v670
    %v694 = vpack.c.b16 %v687, %v686
    %v695 = vpack.c.b16 %v689, %v688
    %v696 = vpack.c.b16 %v691, %v690
    %v697 = vpack.c.b16 %v693, %v692
    %vm702 = vcmask 523264
    %v704 = vsel %vm702, %v631, 0
    %v707 = vsel %vm702, %v632, 0
    %v710 = vsel %vm702, %v633, 0
    %v713 = vsel %vm702, %v634, 0
    %v716 = vsel %vm702, %v635, 0
    %v719 = vsel %vm702, %v636, 0
    %v722 = vsel %vm702, %v637, 0
    %v725 = vsel %vm702, %v638, 0
    %v728 = vsel %vm702, %v639, 0
    %v731 = vsel %vm702, %v640, 0
    %v734 = vsel %vm702, %v641, 0
    %v737 = vsel %vm702, %v642, 0
    %v740 = vsel %vm702, %v643, 0
    %v743 = vsel %vm702, %v644, 0
    %v746 = vsel %vm702, %v645, 0
    %v749 = vsel %vm702, %v646, 0
    %v752 = vsel %vm702, %v647, 0
    %v755 = vsel %vm702, %v648, 0
    %v758 = vsel %vm702, %v649, 0
    %v761 = vsel %vm702, %v650, 0
    %v764 = vsel %vm702, %v651, 0
    %v767 = vsel %vm702, %v652, 0
    %v770 = vsel %vm702, %v653, 0
    %v773 = vsel %vm702, %v654, 0
    %v776 = vsel %vm702, %v655, 0
    %v779 = vsel %vm702, %v656, 0
    %v782 = vsel %vm702, %v657, 0
    %v785 = vsel %vm702, %v658, 0
    %v788 = vsel %vm702, %v659, 0
    %v791 = vsel %vm702, %v660, 0
    %v794 = vsel %vm702, %v661, 0
    %v797 = vsel %vm702, %v662, 0
    %799 = vmatprep.subr.bf16.mxu0 0
    %800 = vmatpush1.bf16.msra.mxu0 0
    %801 = vmatprep.subr.bf16.mxu0 0
    %802 = vmatpush1.bf16.msra.mxu0 0
    %803 = vmatprep.subr.bf16.mxu0 0
    %804 = vmatpush1.bf16.msra.mxu0 0
    %805 = vmatprep.subr.bf16.mxu0 0
    %806 = vmatpush1.bf16.msra.mxu0 0
    %807 = vmatprep.subr.bf16.mxu0 0
    %808 = vmatpush1.bf16.msra.mxu0 %v697
    %809 = vmatprep.subr.bf16.mxu0 0
    %810 = vmatpush1.bf16.msra.mxu0 %v696
    %811 = vmatprep.subr.bf16.mxu0 0
    %812 = vmatpush1.bf16.msra.mxu0 %v695
    %813 = vmatprep.subr.bf16.mxu0 0
    %814 = vmatpush1.bf16.msra.mxu0 %v694
    %815 = vmatprep.subr.bf16.mxu0 0
    %816 = vmatpush2.bf16.msra.mxu0 0
    %817 = vmatprep.subr.bf16.mxu0 0
    %818 = vmatpush2.bf16.msra.mxu0 0
    %819 = vmatprep.subr.bf16.mxu0 0
    %820 = vmatpush2.bf16.msra.mxu0 0
    %821 = vmatprep.subr.bf16.mxu0 0
    %822 = vmatpush2.bf16.msra.mxu0 0
    %823 = vmatprep.subr.bf16.mxu0 0
    %824 = vmatpush2.bf16.msra.mxu0 0
    %825 = vmatprep.subr.bf16.mxu0 0
    %826 = vmatpush2.bf16.msra.mxu0 0
    %827 = vmatprep.subr.bf16.mxu0 0
    %828 = vmatpush2.bf16.msra.mxu0 0
    %829 = vmatprep.subr.bf16.mxu0 0
    %830 = vmatpush2.bf16.msra.mxu0 0
    %831 = vmatprep.mubr.bf16.mxu0 0
    %832 = vmatmul.mubr.bf16.gmra.mxu0 %v704
    %v833 = vpop.f32.mrf.mxu0
    %v834 = vadd.f32 %v676, %v833
    %v835 = vpop.f32.mrf.mxu0
    %v836 = vpop.f32.mrf.mxu0
    %v837 = vadd.f32 %v676, %v836
    %v838 = vpop.f32.mrf.mxu0
    %839 = vmatprep.mubr.bf16.mxu0 0
    %840 = vmatmul.mubr.bf16.gmra.mxu0 %v707
    %v841 = vpop.f32.mrf.mxu0
    %v842 = vadd.f32 %v676, %v841
    %v843 = vpop.f32.mrf.mxu0
    %v844 = vpop.f32.mrf.mxu0
    %v845 = vadd.f32 %v676, %v844
    %v846 = vpop.f32.mrf.mxu0
    %847 = vmatprep.mubr.bf16.mxu0 0
    %848 = vmatmul.mubr.bf16.gmra.mxu0 %v710
    %v849 = vpop.f32.mrf.mxu0
    %v850 = vadd.f32 %v676, %v849
    %v851 = vpop.f32.mrf.mxu0
    %v852 = vpop.f32.mrf.mxu0
    %v853 = vadd.f32 %v676, %v852
    %v854 = vpop.f32.mrf.mxu0
    %855 = vmatprep.mubr.bf16.mxu0 0
    %856 = vmatmul.mubr.bf16.gmra.mxu0 %v713
    %v857 = vpop.f32.mrf.mxu0
    %v858 = vadd.f32 %v676, %v857
    %v859 = vpop.f32.mrf.mxu0
    %v860 = vpop.f32.mrf.mxu0
    %v861 = vadd.f32 %v676, %v860
    %v862 = vpop.f32.mrf.mxu0
    %863 = vmatprep.mubr.bf16.mxu0 0
    %864 = vmatmul.mubr.bf16.gmra.mxu0 %v716
    %v865 = vpop.f32.mrf.mxu0
    %v866 = vadd.f32 %v676, %v865
    %v867 = vpop.f32.mrf.mxu0
    %v868 = vpop.f32.mrf.mxu0
    %v869 = vadd.f32 %v676, %v868
    %v870 = vpop.f32.mrf.mxu0
    %871 = vmatprep.mubr.bf16.mxu0 0
    %872 = vmatmul.mubr.bf16.gmra.mxu0 %v719
    %v873 = vpop.f32.mrf.mxu0
    %v874 = vadd.f32 %v676, %v873
    %v875 = vpop.f32.mrf.mxu0
    %v876 = vpop.f32.mrf.mxu0
    %v877 = vadd.f32 %v676, %v876
    %v878 = vpop.f32.mrf.mxu0
    %879 = vmatprep.mubr.bf16.mxu0 0
    %880 = vmatmul.mubr.bf16.gmra.mxu0 %v722
    %v881 = vpop.f32.mrf.mxu0
    %v882 = vadd.f32 %v676, %v881
    %v883 = vpop.f32.mrf.mxu0
    %v884 = vpop.f32.mrf.mxu0
    %v885 = vadd.f32 %v676, %v884
    %v886 = vpop.f32.mrf.mxu0
    %887 = vmatprep.mubr.bf16.mxu0 0
    %888 = vmatmul.mubr.bf16.gmra.mxu0 %v725
    %v889 = vpop.f32.mrf.mxu0
    %v890 = vadd.f32 %v676, %v889
    %v891 = vpop.f32.mrf.mxu0
    %v892 = vpop.f32.mrf.mxu0
    %v893 = vadd.f32 %v676, %v892
    %v894 = vpop.f32.mrf.mxu0
    %895 = vmatprep.mubr.bf16.mxu0 0
    %896 = vmatmul.mubr.bf16.gmra.mxu0 %v728
    %v897 = vpop.f32.mrf.mxu0
    %v898 = vadd.f32 %v676, %v897
    %v899 = vpop.f32.mrf.mxu0
    %v900 = vpop.f32.mrf.mxu0
    %v901 = vadd.f32 %v676, %v900
    %v902 = vpop.f32.mrf.mxu0
    %903 = vmatprep.mubr.bf16.mxu0 0
    %904 = vmatmul.mubr.bf16.gmra.mxu0 %v731
    %v905 = vpop.f32.mrf.mxu0
    %v906 = vadd.f32 %v676, %v905
    %v907 = vpop.f32.mrf.mxu0
    %v908 = vpop.f32.mrf.mxu0
    %v909 = vadd.f32 %v676, %v908
    %v910 = vpop.f32.mrf.mxu0
    %911 = vmatprep.mubr.bf16.mxu0 0
    %912 = vmatmul.mubr.bf16.gmra.mxu0 %v734
    %v913 = vpop.f32.mrf.mxu0
    %v914 = vadd.f32 %v676, %v913
    %v915 = vpop.f32.mrf.mxu0
    %v916 = vpop.f32.mrf.mxu0
    %v917 = vadd.f32 %v676, %v916
    %v918 = vpop.f32.mrf.mxu0
    %919 = vmatprep.mubr.bf16.mxu0 0
    %920 = vmatmul.mubr.bf16.gmra.mxu0 %v737
    %v921 = vpop.f32.mrf.mxu0
    %v922 = vadd.f32 %v676, %v921
    %v923 = vpop.f32.mrf.mxu0
    %v924 = vpop.f32.mrf.mxu0
    %v925 = vadd.f32 %v676, %v924
    %v926 = vpop.f32.mrf.mxu0
    %927 = vmatprep.mubr.bf16.mxu0 0
    %928 = vmatmul.mubr.bf16.gmra.mxu0 %v740
    %v929 = vpop.f32.mrf.mxu0
    %v930 = vadd.f32 %v676, %v929
    %v931 = vpop.f32.mrf.mxu0
    %v932 = vpop.f32.mrf.mxu0
    %v933 = vadd.f32 %v676, %v932
    %v934 = vpop.f32.mrf.mxu0
    %935 = vmatprep.mubr.bf16.mxu0 0
    %936 = vmatmul.mubr.bf16.gmra.mxu0 %v743
    %v937 = vpop.f32.mrf.mxu0
    %v938 = vadd.f32 %v676, %v937
    %v939 = vpop.f32.mrf.mxu0
    %v940 = vpop.f32.mrf.mxu0
    %v941 = vadd.f32 %v676, %v940
    %v942 = vpop.f32.mrf.mxu0
    %943 = vmatprep.mubr.bf16.mxu0 0
    %944 = vmatmul.mubr.bf16.gmra.mxu0 %v746
    %v945 = vpop.f32.mrf.mxu0
    %v946 = vadd.f32 %v676, %v945
    %v947 = vpop.f32.mrf.mxu0
    %v948 = vpop.f32.mrf.mxu0
    %v949 = vadd.f32 %v676, %v948
    %v950 = vpop.f32.mrf.mxu0
    %951 = vmatprep.mubr.bf16.mxu0 0
    %952 = vmatmul.mubr.bf16.gmra.mxu0 %v749
    %v953 = vpop.f32.mrf.mxu0
    %v954 = vadd.f32 %v676, %v953
    %v955 = vpop.f32.mrf.mxu0
    %v956 = vpop.f32.mrf.mxu0
    %v957 = vadd.f32 %v676, %v956
    %v958 = vpop.f32.mrf.mxu0
    %959 = vmatprep.mubr.bf16.mxu0 0
    %960 = vmatmul.mubr.bf16.gmra.mxu0 %v752
    %v961 = vpop.f32.mrf.mxu0
    %v962 = vadd.f32 %v676, %v961
    %v963 = vpop.f32.mrf.mxu0
    %v964 = vpop.f32.mrf.mxu0
    %v965 = vadd.f32 %v676, %v964
    %v966 = vpop.f32.mrf.mxu0
    %967 = vmatprep.mubr.bf16.mxu0 0
    %968 = vmatmul.mubr.bf16.gmra.mxu0 %v755
    %v969 = vpop.f32.mrf.mxu0
    %v970 = vadd.f32 %v676, %v969
    %v971 = vpop.f32.mrf.mxu0
    %v972 = vpop.f32.mrf.mxu0
    %v973 = vadd.f32 %v676, %v972
    %v974 = vpop.f32.mrf.mxu0
    %975 = vmatprep.mubr.bf16.mxu0 0
    %976 = vmatmul.mubr.bf16.gmra.mxu0 %v758
    %v977 = vpop.f32.mrf.mxu0
    %v978 = vadd.f32 %v676, %v977
    %v979 = vpop.f32.mrf.mxu0
    %v980 = vpop.f32.mrf.mxu0
    %v981 = vadd.f32 %v676, %v980
    %v982 = vpop.f32.mrf.mxu0
    %983 = vmatprep.mubr.bf16.mxu0 0
    %984 = vmatmul.mubr.bf16.gmra.mxu0 %v761
    %v985 = vpop.f32.mrf.mxu0
    %v986 = vadd.f32 %v676, %v985
    %v987 = vpop.f32.mrf.mxu0
    %v988 = vpop.f32.mrf.mxu0
    %v989 = vadd.f32 %v676, %v988
    %v990 = vpop.f32.mrf.mxu0
    %991 = vmatprep.mubr.bf16.mxu0 0
    %992 = vmatmul.mubr.bf16.gmra.mxu0 %v764
    %v993 = vpop.f32.mrf.mxu0
    %v994 = vadd.f32 %v676, %v993
    %v995 = vpop.f32.mrf.mxu0
    %v996 = vpop.f32.mrf.mxu0
    %v997 = vadd.f32 %v676, %v996
    %v998 = vpop.f32.mrf.mxu0
    %999 = vmatprep.mubr.bf16.mxu0 0
    %1000 = vmatmul.mubr.bf16.gmra.mxu0 %v767
    %v1001 = vpop.f32.mrf.mxu0
    %v1002 = vadd.f32 %v676, %v1001
    %v1003 = vpop.f32.mrf.mxu0
    %v1004 = vpop.f32.mrf.mxu0
    %v1005 = vadd.f32 %v676, %v1004
    %v1006 = vpop.f32.mrf.mxu0
    %1007 = vmatprep.mubr.bf16.mxu0 0
    %1008 = vmatmul.mubr.bf16.gmra.mxu0 %v770
    %v1009 = vpop.f32.mrf.mxu0
    %v1010 = vadd.f32 %v676, %v1009
    %v1011 = vpop.f32.mrf.mxu0
    %v1012 = vpop.f32.mrf.mxu0
    %v1013 = vadd.f32 %v676, %v1012
    %v1014 = vpop.f32.mrf.mxu0
    %1015 = vmatprep.mubr.bf16.mxu0 0
    %1016 = vmatmul.mubr.bf16.gmra.mxu0 %v773
    %v1017 = vpop.f32.mrf.mxu0
    %v1018 = vadd.f32 %v676, %v1017
    %v1019 = vpop.f32.mrf.mxu0
    %v1020 = vpop.f32.mrf.mxu0
    %v1021 = vadd.f32 %v676, %v1020
    %v1022 = vpop.f32.mrf.mxu0
    %1023 = vmatprep.mubr.bf16.mxu0 0
    %1024 = vmatmul.mubr.bf16.gmra.mxu0 %v776
    %v1025 = vpop.f32.mrf.mxu0
    %v1026 = vadd.f32 %v676, %v1025
    %v1027 = vpop.f32.mrf.mxu0
    %v1028 = vpop.f32.mrf.mxu0
    %v1029 = vadd.f32 %v676, %v1028
    %v1030 = vpop.f32.mrf.mxu0
    %1031 = vmatprep.mubr.bf16.mxu0 0
    %1032 = vmatmul.mubr.bf16.gmra.mxu0 %v779
    %v1033 = vpop.f32.mrf.mxu0
    %v1034 = vadd.f32 %v676, %v1033
    %v1035 = vpop.f32.mrf.mxu0
    %v1036 = vpop.f32.mrf.mxu0
    %v1037 = vadd.f32 %v676, %v1036
    %v1038 = vpop.f32.mrf.mxu0
    %1039 = vmatprep.mubr.bf16.mxu0 0
    %1040 = vmatmul.mubr.bf16.gmra.mxu0 %v782
    %v1041 = vpop.f32.mrf.mxu0
    %v1042 = vadd.f32 %v676, %v1041
    %v1043 = vpop.f32.mrf.mxu0
    %v1044 = vpop.f32.mrf.mxu0
    %v1045 = vadd.f32 %v676, %v1044
    %v1046 = vpop.f32.mrf.mxu0
    %1047 = vmatprep.mubr.bf16.mxu0 0
    %1048 = vmatmul.mubr.bf16.gmra.mxu0 %v785
    %v1049 = vpop.f32.mrf.mxu0
    %v1050 = vadd.f32 %v676, %v1049
    %v1051 = vpop.f32.mrf.mxu0
    %v1052 = vpop.f32.mrf.mxu0
    %v1053 = vadd.f32 %v676, %v1052
    %v1054 = vpop.f32.mrf.mxu0
    %1055 = vmatprep.mubr.bf16.mxu0 0
    %1056 = vmatmul.mubr.bf16.gmra.mxu0 %v788
    %v1057 = vpop.f32.mrf.mxu0
    %v1058 = vadd.f32 %v676, %v1057
    %v1059 = vpop.f32.mrf.mxu0
    %v1060 = vpop.f32.mrf.mxu0
    %v1061 = vadd.f32 %v676, %v1060
    %v1062 = vpop.f32.mrf.mxu0
    %1063 = vmatprep.mubr.bf16.mxu0 0
    %1064 = vmatmul.mubr.bf16.gmra.mxu0 %v791
    %v1065 = vpop.f32.mrf.mxu0
    %v1066 = vadd.f32 %v676, %v1065
    %v1067 = vpop.f32.mrf.mxu0
    %v1068 = vpop.f32.mrf.mxu0
    %v1069 = vadd.f32 %v676, %v1068
    %v1070 = vpop.f32.mrf.mxu0
    %1071 = vmatprep.mubr.bf16.mxu0 0
    %1072 = vmatmul.mubr.bf16.gmra.mxu0 %v794
    %v1073 = vpop.f32.mrf.mxu0
    %v1074 = vadd.f32 %v676, %v1073
    %v1075 = vpop.f32.mrf.mxu0
    %v1076 = vpop.f32.mrf.mxu0
    %v1077 = vadd.f32 %v676, %v1076
    %v1078 = vpop.f32.mrf.mxu0
    %1079 = vmatprep.mubr.bf16.mxu0 0
    %1080 = vmatmul.mubr.bf16.gmra.mxu0 %v797
    %v1081 = vpop.f32.mrf.mxu0
    %v1082 = vadd.f32 %v676, %v1081
    %v1083 = vpop.f32.mrf.mxu0
    %v1084 = vpop.f32.mrf.mxu0
    %v1085 = vadd.f32 %v676, %v1084
    %v1086 = vpop.f32.mrf.mxu0
    %1087 = vdwg.mxu0
    %v1088 = vmax.f32 %v834, 0.0
    %v1089 = vmax.f32 %v837, 0.0
    %v1090 = vmax.f32 %v842, 0.0
    %v1091 = vmax.f32 %v845, 0.0
    %v1092 = vmax.f32 %v850, 0.0
    %v1093 = vmax.f32 %v853, 0.0
    %v1094 = vmax.f32 %v858, 0.0
    %v1095 = vmax.f32 %v861, 0.0
    %v1096 = vmax.f32 %v866, 0.0
    %v1097 = vmax.f32 %v869, 0.0
    %v1098 = vmax.f32 %v874, 0.0
    %v1099 = vmax.f32 %v877, 0.0
    %v1100 = vmax.f32 %v882, 0.0
    %v1101 = vmax.f32 %v885, 0.0
    %v1102 = vmax.f32 %v890, 0.0
    %v1103 = vmax.f32 %v893, 0.0
    %v1104 = vmax.f32 %v898, 0.0
    %v1105 = vmax.f32 %v901, 0.0
    %v1106 = vmax.f32 %v906, 0.0
    %v1107 = vmax.f32 %v909, 0.0
    %v1108 = vmax.f32 %v914, 0.0
    %v1109 = vmax.f32 %v917, 0.0
    %v1110 = vmax.f32 %v922, 0.0
    %v1111 = vmax.f32 %v925, 0.0
    %v1112 = vmax.f32 %v930, 0.0
    %v1113 = vmax.f32 %v933, 0.0
    %v1114 = vmax.f32 %v938, 0.0
    %v1115 = vmax.f32 %v941, 0.0
    %v1116 = vmax.f32 %v946, 0.0
    %v1117 = vmax.f32 %v949, 0.0
    %v1118 = vmax.f32 %v954, 0.0
    %v1119 = vmax.f32 %v957, 0.0
    %v1120 = vmax.f32 %v962, 0.0
    %v1121 = vmax.f32 %v965, 0.0
    %v1122 = vmax.f32 %v970, 0.0
    %v1123 = vmax.f32 %v973, 0.0
    %v1124 = vmax.f32 %v978, 0.0
    %v1125 = vmax.f32 %v981, 0.0
    %v1126 = vmax.f32 %v986, 0.0
    %v1127 = vmax.f32 %v989, 0.0
    %v1128 = vmax.f32 %v994, 0.0
    %v1129 = vmax.f32 %v997, 0.0
    %v1130 = vmax.f32 %v1002, 0.0
    %v1131 = vmax.f32 %v1005, 0.0
    %v1132 = vmax.f32 %v1010, 0.0
    %v1133 = vmax.f32 %v1013, 0.0
    %v1134 = vmax.f32 %v1018, 0.0
    %v1135 = vmax.f32 %v1021, 0.0
    %v1136 = vmax.f32 %v1026, 0.0
    %v1137 = vmax.f32 %v1029, 0.0
    %v1138 = vmax.f32 %v1034, 0.0
    %v1139 = vmax.f32 %v1037, 0.0
    %v1140 = vmax.f32 %v1042, 0.0
    %v1141 = vmax.f32 %v1045, 0.0
    %v1142 = vmax.f32 %v1050, 0.0
    %v1143 = vmax.f32 %v1053, 0.0
    %v1144 = vmax.f32 %v1058, 0.0
    %v1145 = vmax.f32 %v1061, 0.0
    %v1146 = vmax.f32 %v1066, 0.0
    %v1147 = vmax.f32 %v1069, 0.0
    %v1148 = vmax.f32 %v1074, 0.0
    %v1149 = vmax.f32 %v1077, 0.0
    %v1150 = vmax.f32 %v1082, 0.0
    %v1151 = vmax.f32 %v1085, 0.0
    %v1152 = vpack.c.bf16 %v1089, %v1088
    %v1153 = vpack.c.bf16 %v1091, %v1090
    %v1154 = vpack.c.bf16 %v1093, %v1092
    %v1155 = vpack.c.bf16 %v1095, %v1094
    %v1156 = vpack.c.bf16 %v1097, %v1096
    %v1157 = vpack.c.bf16 %v1099, %v1098
    %v1158 = vpack.c.bf16 %v1101, %v1100
    %v1159 = vpack.c.bf16 %v1103, %v1102
    %v1160 = vpack.c.bf16 %v1105, %v1104
    %v1161 = vpack.c.bf16 %v1107, %v1106
    %v1162 = vpack.c.bf16 %v1109, %v1108
    %v1163 = vpack.c.bf16 %v1111, %v1110
    %v1164 = vpack.c.bf16 %v1113, %v1112
    %v1165 = vpack.c.bf16 %v1115, %v1114
    %v1166 = vpack.c.bf16 %v1117, %v1116
    %v1167 = vpack.c.bf16 %v1119, %v1118
    %v1168 = vpack.c.bf16 %v1121, %v1120
    %v1169 = vpack.c.bf16 %v1123, %v1122
    %v1170 = vpack.c.bf16 %v1125, %v1124
    %v1171 = vpack.c.bf16 %v1127, %v1126
    %v1172 = vpack.c.bf16 %v1129, %v1128
    %v1173 = vpack.c.bf16 %v1131, %v1130
    %v1174 = vpack.c.bf16 %v1133, %v1132
    %v1175 = vpack.c.bf16 %v1135, %v1134
    %v1176 = vpack.c.bf16 %v1137, %v1136
    %v1177 = vpack.c.bf16 %v1139, %v1138
    %v1178 = vpack.c.bf16 %v1141, %v1140
    %v1179 = vpack.c.bf16 %v1143, %v1142
    %v1180 = vpack.c.bf16 %v1145, %v1144
    %v1181 = vpack.c.bf16 %v1147, %v1146
    %v1182 = vpack.c.bf16 %v1149, %v1148
    %v1183 = vpack.c.bf16 %v1151, %v1150
    %v1216 = vunpack.c.l.b16 %v1152
    %v1217 = vunpack.c.h.b16 %v1152
    %v1218 = vunpack.c.l.b16 %v1153
    %v1219 = vunpack.c.h.b16 %v1153
    %v1220 = vunpack.c.l.b16 %v1154
    %v1221 = vunpack.c.h.b16 %v1154
    %v1222 = vunpack.c.l.b16 %v1155
    %v1223 = vunpack.c.h.b16 %v1155
    %v1224 = vunpack.c.l.b16 %v1156
    %v1225 = vunpack.c.h.b16 %v1156
    %v1226 = vunpack.c.l.b16 %v1157
    %v1227 = vunpack.c.h.b16 %v1157
    %v1228 = vunpack.c.l.b16 %v1158
    %v1229 = vunpack.c.h.b16 %v1158
    %v1230 = vunpack.c.l.b16 %v1159
    %v1231 = vunpack.c.h.b16 %v1159
    %v1232 = vunpack.c.l.b16 %v1160
    %v1233 = vunpack.c.h.b16 %v1160
    %v1234 = vunpack.c.l.b16 %v1161
    %v1235 = vunpack.c.h.b16 %v1161
    %v1236 = vunpack.c.l.b16 %v1162
    %v1237 = vunpack.c.h.b16 %v1162
    %v1238 = vunpack.c.l.b16 %v1163
    %v1239 = vunpack.c.h.b16 %v1163
    %v1240 = vunpack.c.l.b16 %v1164
    %v1241 = vunpack.c.h.b16 %v1164
    %v1242 = vunpack.c.l.b16 %v1165
    %v1243 = vunpack.c.h.b16 %v1165
    %v1244 = vunpack.c.l.b16 %v1166
    %v1245 = vunpack.c.h.b16 %v1166
    %v1246 = vunpack.c.l.b16 %v1167
    %v1247 = vunpack.c.h.b16 %v1167
    %v1248 = vunpack.c.l.b16 %v1168
    %v1249 = vunpack.c.h.b16 %v1168
    %v1250 = vunpack.c.l.b16 %v1169
    %v1251 = vunpack.c.h.b16 %v1169
    %v1252 = vunpack.c.l.b16 %v1170
    %v1253 = vunpack.c.h.b16 %v1170
    %v1254 = vunpack.c.l.b16 %v1171
    %v1255 = vunpack.c.h.b16 %v1171
    %v1256 = vunpack.c.l.b16 %v1172
    %v1257 = vunpack.c.h.b16 %v1172
    %v1258 = vunpack.c.l.b16 %v1173
    %v1259 = vunpack.c.h.b16 %v1173
    %v1260 = vunpack.c.l.b16 %v1174
    %v1261 = vunpack.c.h.b16 %v1174
    %v1262 = vunpack.c.l.b16 %v1175
    %v1263 = vunpack.c.h.b16 %v1175
    %v1264 = vunpack.c.l.b16 %v1176
    %v1265 = vunpack.c.h.b16 %v1176
    %v1266 = vunpack.c.l.b16 %v1177
    %v1267 = vunpack.c.h.b16 %v1177
    %v1268 = vunpack.c.l.b16 %v1178
    %v1269 = vunpack.c.h.b16 %v1178
    %v1270 = vunpack.c.l.b16 %v1179
    %v1271 = vunpack.c.h.b16 %v1179
    %v1272 = vunpack.c.l.b16 %v1180
    %v1273 = vunpack.c.h.b16 %v1180
    %v1274 = vunpack.c.l.b16 %v1181
    %v1275 = vunpack.c.h.b16 %v1181
    %v1276 = vunpack.c.l.b16 %v1182
    %v1277 = vunpack.c.h.b16 %v1182
    %v1278 = vunpack.c.l.b16 %v1183
    %v1279 = vunpack.c.h.b16 %v1183
    %v1280 = vpack.c.b16 %v1216, %v1216
    %v1281 = vpack.c.b16 %v1217, %v1217
    %v1282 = vpack.c.b16 %v1218, %v1218
    %v1283 = vpack.c.b16 %v1219, %v1219
    %v1284 = vpack.c.b16 %v1220, %v1220
    %v1285 = vpack.c.b16 %v1221, %v1221
    %v1286 = vpack.c.b16 %v1222, %v1222
    %v1287 = vpack.c.b16 %v1223, %v1223
    %v1288 = vpack.c.b16 %v1224, %v1224
    %v1289 = vpack.c.b16 %v1225, %v1225
    %v1290 = vpack.c.b16 %v1226, %v1226
    %v1291 = vpack.c.b16 %v1227, %v1227
    %v1292 = vpack.c.b16 %v1228, %v1228
    %v1293 = vpack.c.b16 %v1229, %v1229
    %v1294 = vpack.c.b16 %v1230, %v1230
    %v1295 = vpack.c.b16 %v1231, %v1231
    %v1296 = vpack.c.b16 %v1232, %v1232
    %v1297 = vpack.c.b16 %v1233, %v1233
    %v1298 = vpack.c.b16 %v1234, %v1234
    %v1299 = vpack.c.b16 %v1235, %v1235
    %v1300 = vpack.c.b16 %v1236, %v1236
    %v1301 = vpack.c.b16 %v1237, %v1237
    %v1302 = vpack.c.b16 %v1238, %v1238
    %v1303 = vpack.c.b16 %v1239, %v1239
    %v1304 = vpack.c.b16 %v1240, %v1240
    %v1305 = vpack.c.b16 %v1241, %v1241
    %v1306 = vpack.c.b16 %v1242, %v1242
    %v1307 = vpack.c.b16 %v1243, %v1243
    %v1308 = vpack.c.b16 %v1244, %v1244
    %v1309 = vpack.c.b16 %v1245, %v1245
    %v1310 = vpack.c.b16 %v1246, %v1246
    %v1311 = vpack.c.b16 %v1247, %v1247
    %v1312 = vpack.c.b16 %v1248, %v1248
    %v1313 = vpack.c.b16 %v1249, %v1249
    %v1314 = vpack.c.b16 %v1250, %v1250
    %v1315 = vpack.c.b16 %v1251, %v1251
    %v1316 = vpack.c.b16 %v1252, %v1252
    %v1317 = vpack.c.b16 %v1253, %v1253
    %v1318 = vpack.c.b16 %v1254, %v1254
    %v1319 = vpack.c.b16 %v1255, %v1255
    %v1320 = vpack.c.b16 %v1256, %v1256
    %v1321 = vpack.c.b16 %v1257, %v1257
    %v1322 = vpack.c.b16 %v1258, %v1258
    %v1323 = vpack.c.b16 %v1259, %v1259
    %v1324 = vpack.c.b16 %v1260, %v1260
    %v1325 = vpack.c.b16 %v1261, %v1261
    %v1326 = vpack.c.b16 %v1262, %v1262
    %v1327 = vpack.c.b16 %v1263, %v1263
    %v1328 = vpack.c.b16 %v1264, %v1264
    %v1329 = vpack.c.b16 %v1265, %v1265
    %v1330 = vpack.c.b16 %v1266, %v1266
    %v1331 = vpack.c.b16 %v1267, %v1267
    %v1332 = vpack.c.b16 %v1268, %v1268
    %v1333 = vpack.c.b16 %v1269, %v1269
    %v1334 = vpack.c.b16 %v1270, %v1270
    %v1335 = vpack.c.b16 %v1271, %v1271
    %v1336 = vpack.c.b16 %v1272, %v1272
    %v1337 = vpack.c.b16 %v1273, %v1273
    %v1338 = vpack.c.b16 %v1274, %v1274
    %v1339 = vpack.c.b16 %v1275, %v1275
    %v1340 = vpack.c.b16 %v1276, %v1276
    %v1341 = vpack.c.b16 %v1277, %v1277
    %v1342 = vpack.c.b16 %v1278, %v1278
    %v1343 = vpack.c.b16 %v1279, %v1279
    %vm1408 = vcmask 519168
    %1409 = vst.msk [vmem:[#allocation2] sm:$0xf] %vm1408, %v1280
    %1410 = vst.msk [vmem:[#allocation2 + $0xc] sm:$0xf] %vm1408, %v1281
    %1411 = vst.msk [vmem:[#allocation2 + $0x18] sm:$0xf] %vm1408, %v1282
    %1412 = vst.msk [vmem:[#allocation2 + $0x24] sm:$0xf] %vm1408, %v1283
    %1413 = vst.msk [vmem:[#allocation2 + $0x30] sm:$0xf] %vm1408, %v1284
    %1414 = vst.msk [vmem:[#allocation2 + $0x3c] sm:$0xf] %vm1408, %v1285
    %1415 = vst.msk [vmem:[#allocation2 + $0x48] sm:$0xf] %vm1408, %v1286
    %1416 = vst.msk [vmem:[#allocation2 + $0x54] sm:$0xf] %vm1408, %v1287
    %1417 = vst.msk [vmem:[#allocation2 + $0x60] sm:$0xf] %vm1408, %v1288
    %1418 = vst.msk [vmem:[#allocation2 + $0x6c] sm:$0xf] %vm1408, %v1289
    %1419 = vst.msk [vmem:[#allocation2 + $0x78] sm:$0xf] %vm1408, %v1290
    %1420 = vst.msk [vmem:[#allocation2 + $0x84] sm:$0xf] %vm1408, %v1291
    %1421 = vst.msk [vmem:[#allocation2 + $0x90] sm:$0xf] %vm1408, %v1292
    %1422 = vst.msk [vmem:[#allocation2 + $0x9c] sm:$0xf] %vm1408, %v1293
    %1423 = vst.msk [vmem:[#allocation2 + $0xa8] sm:$0xf] %vm1408, %v1294
    %1424 = vst.msk [vmem:[#allocation2 + $0xb4] sm:$0xf] %vm1408, %v1295
    %1425 = vst.msk [vmem:[#allocation2 + $0xc0] sm:$0xf] %vm1408, %v1296
    %1426 = vst.msk [vmem:[#allocation2 + $0xcc] sm:$0xf] %vm1408, %v1297
    %1427 = vst.msk [vmem:[#allocation2 + $0xd8] sm:$0xf] %vm1408, %v1298
    %1428 = vst.msk [vmem:[#allocation2 + $0xe4] sm:$0xf] %vm1408, %v1299
    %1429 = vst.msk [vmem:[#allocation2 + $0xf0] sm:$0xf] %vm1408, %v1300
    %1430 = vst.msk [vmem:[#allocation2 + $0xfc] sm:$0xf] %vm1408, %v1301
    %1431 = vst.msk [vmem:[#allocation2 + $0x108] sm:$0xf] %vm1408, %v1302
    %1432 = vst.msk [vmem:[#allocation2 + $0x114] sm:$0xf] %vm1408, %v1303
    %1433 = vst.msk [vmem:[#allocation2 + $0x120] sm:$0xf] %vm1408, %v1304
    %1434 = vst.msk [vmem:[#allocation2 + $0x12c] sm:$0xf] %vm1408, %v1305
    %1435 = vst.msk [vmem:[#allocation2 + $0x138] sm:$0xf] %vm1408, %v1306
    %1436 = vst.msk [vmem:[#allocation2 + $0x144] sm:$0xf] %vm1408, %v1307
    %1437 = vst.msk [vmem:[#allocation2 + $0x150] sm:$0xf] %vm1408, %v1308
    %1438 = vst.msk [vmem:[#allocation2 + $0x15c] sm:$0xf] %vm1408, %v1309
    %1439 = vst.msk [vmem:[#allocation2 + $0x168] sm:$0xf] %vm1408, %v1310
    %1440 = vst.msk [vmem:[#allocation2 + $0x174] sm:$0xf] %vm1408, %v1311
    %1441 = vst.msk [vmem:[#allocation2 + $0x180] sm:$0xf] %vm1408, %v1312
    %1442 = vst.msk [vmem:[#allocation2 + $0x18c] sm:$0xf] %vm1408, %v1313
    %1443 = vst.msk [vmem:[#allocation2 + $0x198] sm:$0xf] %vm1408, %v1314
    %1444 = vst.msk [vmem:[#allocation2 + $0x1a4] sm:$0xf] %vm1408, %v1315
    %1445 = vst.msk [vmem:[#allocation2 + $0x1b0] sm:$0xf] %vm1408, %v1316
    %1446 = vst.msk [vmem:[#allocation2 + $0x1bc] sm:$0xf] %vm1408, %v1317
    %1447 = vst.msk [vmem:[#allocation2 + $0x1c8] sm:$0xf] %vm1408, %v1318
    %1448 = vst.msk [vmem:[#allocation2 + $0x1d4] sm:$0xf] %vm1408, %v1319
    %1449 = vst.msk [vmem:[#allocation2 + $0x1e0] sm:$0xf] %vm1408, %v1320
    %1450 = vst.msk [vmem:[#allocation2 + $0x1ec] sm:$0xf] %vm1408, %v1321
    %1451 = vst.msk [vmem:[#allocation2 + $0x1f8] sm:$0xf] %vm1408, %v1322
    %1452 = vst.msk [vmem:[#allocation2 + $0x204] sm:$0xf] %vm1408, %v1323
    %1453 = vst.msk [vmem:[#allocation2 + $0x210] sm:$0xf] %vm1408, %v1324
    %1454 = vst.msk [vmem:[#allocation2 + $0x21c] sm:$0xf] %vm1408, %v1325
    %1455 = vst.msk [vmem:[#allocation2 + $0x228] sm:$0xf] %vm1408, %v1326
    %1456 = vst.msk [vmem:[#allocation2 + $0x234] sm:$0xf] %vm1408, %v1327
    %1457 = vst.msk [vmem:[#allocation2 + $0x240] sm:$0xf] %vm1408, %v1328
    %1458 = vst.msk [vmem:[#allocation2 + $0x24c] sm:$0xf] %vm1408, %v1329
    %1459 = vst.msk [vmem:[#allocation2 + $0x258] sm:$0xf] %vm1408, %v1330
    %1460 = vst.msk [vmem:[#allocation2 + $0x264] sm:$0xf] %vm1408, %v1331
    %1461 = vst.msk [vmem:[#allocation2 + $0x270] sm:$0xf] %vm1408, %v1332
    %1462 = vst.msk [vmem:[#allocation2 + $0x27c] sm:$0xf] %vm1408, %v1333
    %1463 = vst.msk [vmem:[#allocation2 + $0x288] sm:$0xf] %vm1408, %v1334
    %1464 = vst.msk [vmem:[#allocation2 + $0x294] sm:$0xf] %vm1408, %v1335
    %1465 = vst.msk [vmem:[#allocation2 + $0x2a0] sm:$0xf] %vm1408, %v1336
    %1466 = vst.msk [vmem:[#allocation2 + $0x2ac] sm:$0xf] %vm1408, %v1337
    %1467 = vst.msk [vmem:[#allocation2 + $0x2b8] sm:$0xf] %vm1408, %v1338
    %1468 = vst.msk [vmem:[#allocation2 + $0x2c4] sm:$0xf] %vm1408, %v1339
    %1469 = vst.msk [vmem:[#allocation2 + $0x2d0] sm:$0xf] %vm1408, %v1340
    %1470 = vst.msk [vmem:[#allocation2 + $0x2dc] sm:$0xf] %vm1408, %v1341
    %1471 = vst.msk [vmem:[#allocation2 + $0x2e8] sm:$0xf] %vm1408, %v1342
    %1472 = vst.msk [vmem:[#allocation2 + $0x2f4] sm:$0xf] %vm1408, %v1343
    %s1473 = scalar_lea.vmem [#allocation3], 512
    %v1474 = vld [vmem:[%s1473] sm:$0xff]
    %v1475 = vld [vmem:[%s1473 + $0x8] sm:$0xff]
    %v1476 = vld [vmem:[%s1473 + $0x10] sm:$0xff]
    %v1477 = vld [vmem:[%s1473 + $0x18] sm:$0xff]
    %v1478 = vld [vmem:[%s1473 + $0x20] sm:$0xff]
    %v1479 = vld [vmem:[%s1473 + $0x28] sm:$0xff]
    %v1480 = vld [vmem:[%s1473 + $0x30] sm:$0xff]
    %v1481 = vld [vmem:[%s1473 + $0x38] sm:$0xff]
    %v1482 = vld [vmem:[%s1473 + $0x40] sm:$0xff]
    %v1483 = vld [vmem:[%s1473 + $0x48] sm:$0xff]
    %v1484 = vld [vmem:[%s1473 + $0x50] sm:$0xff]
    %v1485 = vld [vmem:[%s1473 + $0x58] sm:$0xff]
    %v1486 = vld [vmem:[%s1473 + $0x60] sm:$0xff]
    %v1487 = vld [vmem:[%s1473 + $0x68] sm:$0xff]
    %v1488 = vld [vmem:[%s1473 + $0x70] sm:$0xff]
    %v1489 = vld [vmem:[%s1473 + $0x78] sm:$0xff]
    %v1490 = vld [vmem:[%s1473 + $0x80] sm:$0xff]
    %v1491 = vld [vmem:[%s1473 + $0x88] sm:$0xff]
    %v1492 = vld [vmem:[%s1473 + $0x90] sm:$0xff]
    %v1493 = vld [vmem:[%s1473 + $0x98] sm:$0xff]
    %v1494 = vld [vmem:[%s1473 + $0xa0] sm:$0xff]
    %v1495 = vld [vmem:[%s1473 + $0xa8] sm:$0xff]
    %v1496 = vld [vmem:[%s1473 + $0xb0] sm:$0xff]
    %v1497 = vld [vmem:[%s1473 + $0xb8] sm:$0xff]
    %v1498 = vld [vmem:[%s1473 + $0xc0] sm:$0xff]
    %v1499 = vld [vmem:[%s1473 + $0xc8] sm:$0xff]
    %v1500 = vld [vmem:[%s1473 + $0xd0] sm:$0xff]
    %v1501 = vld [vmem:[%s1473 + $0xd8] sm:$0xff]
    %v1502 = vld [vmem:[%s1473 + $0xe0] sm:$0xff]
    %v1503 = vld [vmem:[%s1473 + $0xe8] sm:$0xff]
    %v1504 = vld [vmem:[%s1473 + $0xf0] sm:$0xff]
    %v1505 = vld [vmem:[%s1473 + $0xf8] sm:$0xff]
    %v1506 = vld [vmem:[%s1473 + $0x100] sm:$0xff]
    %v1507 = vld [vmem:[%s1473 + $0x108] sm:$0xff]
    %v1508 = vld [vmem:[%s1473 + $0x110] sm:$0xff]
    %v1509 = vld [vmem:[%s1473 + $0x118] sm:$0xff]
    %v1510 = vld [vmem:[%s1473 + $0x120] sm:$0xff]
    %v1511 = vld [vmem:[%s1473 + $0x128] sm:$0xff]
    %v1512 = vld [vmem:[%s1473 + $0x130] sm:$0xff]
    %v1513 = vld [vmem:[%s1473 + $0x138] sm:$0xff]
    %v1514 = vld [vmem:[%s1473 + $0x140] sm:$0xff]
    %v1515 = vld [vmem:[%s1473 + $0x148] sm:$0xff]
    %v1516 = vld [vmem:[%s1473 + $0x150] sm:$0xff]
    %v1517 = vld [vmem:[%s1473 + $0x158] sm:$0xff]
    %v1518 = vld [vmem:[%s1473 + $0x160] sm:$0xff]
    %v1519 = vld [vmem:[%s1473 + $0x168] sm:$0xff]
    %v1520 = vld [vmem:[%s1473 + $0x170] sm:$0xff]
    %v1521 = vld [vmem:[%s1473 + $0x178] sm:$0xff]
    %v1522 = vld [vmem:[%s1473 + $0x180] sm:$0xff]
    %v1523 = vld [vmem:[%s1473 + $0x188] sm:$0xff]
    %v1524 = vld [vmem:[%s1473 + $0x190] sm:$0xff]
    %v1525 = vld [vmem:[%s1473 + $0x198] sm:$0xff]
    %v1526 = vld [vmem:[%s1473 + $0x1a0] sm:$0xff]
    %v1527 = vld [vmem:[%s1473 + $0x1a8] sm:$0xff]
    %v1528 = vld [vmem:[%s1473 + $0x1b0] sm:$0xff]
    %v1529 = vld [vmem:[%s1473 + $0x1b8] sm:$0xff]
    %v1530 = vld [vmem:[%s1473 + $0x1c0] sm:$0xff]
    %v1531 = vld [vmem:[%s1473 + $0x1c8] sm:$0xff]
    %v1532 = vld [vmem:[%s1473 + $0x1d0] sm:$0xff]
    %v1533 = vld [vmem:[%s1473 + $0x1d8] sm:$0xff]
    %v1534 = vld [vmem:[%s1473 + $0x1e0] sm:$0xff]
    %v1535 = vld [vmem:[%s1473 + $0x1e8] sm:$0xff]
    %v1536 = vld [vmem:[%s1473 + $0x1f0] sm:$0xff]
    %v1537 = vld [vmem:[%s1473 + $0x1f8] sm:$0xff]
    %v1538 = vpack.c.bf16 %v1475, %v1474
    %v1539 = vpack.c.bf16 %v1477, %v1476
    %v1540 = vpack.c.bf16 %v1479, %v1478
    %v1541 = vpack.c.bf16 %v1481, %v1480
    %v1542 = vpack.c.bf16 %v1483, %v1482
    %v1543 = vpack.c.bf16 %v1485, %v1484
    %v1544 = vpack.c.bf16 %v1487, %v1486
    %v1545 = vpack.c.bf16 %v1489, %v1488
    %v1546 = vpack.c.bf16 %v1491, %v1490
    %v1547 = vpack.c.bf16 %v1493, %v1492
    %v1548 = vpack.c.bf16 %v1495, %v1494
    %v1549 = vpack.c.bf16 %v1497, %v1496
    %v1550 = vpack.c.bf16 %v1499, %v1498
    %v1551 = vpack.c.bf16 %v1501, %v1500
    %v1552 = vpack.c.bf16 %v1503, %v1502
    %v1553 = vpack.c.bf16 %v1505, %v1504
    %v1554 = vpack.c.bf16 %v1507, %v1506
    %v1555 = vpack.c.bf16 %v1509, %v1508
    %v1556 = vpack.c.bf16 %v1511, %v1510
    %v1557 = vpack.c.bf16 %v1513, %v1512
    %v1558 = vpack.c.bf16 %v1515, %v1514
    %v1559 = vpack.c.bf16 %v1517, %v1516
    %v1560 = vpack.c.bf16 %v1519, %v1518
    %v1561 = vpack.c.bf16 %v1521, %v1520
    %v1562 = vpack.c.bf16 %v1523, %v1522
    %v1563 = vpack.c.bf16 %v1525, %v1524
    %v1564 = vpack.c.bf16 %v1527, %v1526
    %v1565 = vpack.c.bf16 %v1529, %v1528
    %v1566 = vpack.c.bf16 %v1531, %v1530
    %v1567 = vpack.c.bf16 %v1533, %v1532
    %v1568 = vpack.c.bf16 %v1535, %v1534
    %v1569 = vpack.c.bf16 %v1537, %v1536
    %s1570 = scalar_lea.vmem %s1, 64
    %v1571 = vld [vmem:[%s1570] sm:$0xf]
    %v1572 = vld [vmem:[%s1570 + $0x4] sm:$0xf]
    %v1573 = vld [vmem:[%s1570 + $0x8] sm:$0xf]
    %v1574 = vld [vmem:[%s1570 + $0xc] sm:$0xf]
    %v1575 = vld [vmem:[%s1570 + $0x10] sm:$0xf]
    %v1576 = vld [vmem:[%s1570 + $0x14] sm:$0xf]
    %v1577 = vld [vmem:[%s1570 + $0x18] sm:$0xf]
    %v1578 = vld [vmem:[%s1570 + $0x1c] sm:$0xf]
    %v1579 = vld [vmem:[%s1570 + $0x20] sm:$0xf]
    %v1580 = vld [vmem:[%s1570 + $0x24] sm:$0xf]
    %v1581 = vld [vmem:[%s1570 + $0x28] sm:$0xf]
    %v1582 = vld [vmem:[%s1570 + $0x2c] sm:$0xf]
    %v1583 = vld [vmem:[%s1570 + $0x30] sm:$0xf]
    %v1584 = vld [vmem:[%s1570 + $0x34] sm:$0xf]
    %v1585 = vld [vmem:[%s1570 + $0x38] sm:$0xf]
    %v1586 = vld [vmem:[%s1570 + $0x3c] sm:$0xf]
    %s1587 = scalar_lea.vmem [#allocation5], 1
    %v1588 = vld [vmem:[%s1587] sm:$0x1]
    %v1590 = vlaneseq
    %v1591 = vshrl.u32 %v1590, 7
    %v1592 = vsub.s32 0, %v1591
    %v1593 = vrot.slane %v1588, %v1592
    %v1611 = vunpack.c.l.b16 %v1571
    %v1612 = vunpack.c.l.b16 %v1572
    %v1613 = vunpack.c.l.b16 %v1573
    %v1614 = vunpack.c.l.b16 %v1574
    %v1615 = vunpack.c.l.b16 %v1575
    %v1616 = vunpack.c.l.b16 %v1576
    %v1617 = vunpack.c.l.b16 %v1577
    %v1618 = vunpack.c.l.b16 %v1578
    %v1619 = vunpack.c.l.b16 %v1579
    %v1620 = vunpack.c.l.b16 %v1580
    %v1621 = vunpack.c.l.b16 %v1581
    %v1622 = vunpack.c.l.b16 %v1582
    %v1623 = vunpack.c.l.b16 %v1583
    %v1624 = vunpack.c.l.b16 %v1584
    %v1625 = vunpack.c.l.b16 %v1585
    %v1626 = vunpack.c.l.b16 %v1586
    %v1627 = vpack.c.b16 %v1612, %v1611
    %v1628 = vpack.c.b16 %v1614, %v1613
    %v1629 = vpack.c.b16 %v1616, %v1615
    %v1630 = vpack.c.b16 %v1618, %v1617
    %v1631 = vpack.c.b16 %v1620, %v1619
    %v1632 = vpack.c.b16 %v1622, %v1621
    %v1633 = vpack.c.b16 %v1624, %v1623
    %v1634 = vpack.c.b16 %v1626, %v1625
    %1643 = vmatprep.subr.bf16.mxu0 0
    %1644 = vmatpush1.bf16.msra.mxu0 %v1634
    %1645 = vmatprep.subr.bf16.mxu0 0
    %1646 = vmatpush1.bf16.msra.mxu0 %v1633
    %1647 = vmatprep.subr.bf16.mxu0 0
    %1648 = vmatpush1.bf16.msra.mxu0 %v1632
    %1649 = vmatprep.subr.bf16.mxu0 0
    %1650 = vmatpush1.bf16.msra.mxu0 %v1631
    %1651 = vmatprep.subr.bf16.mxu0 0
    %1652 = vmatpush1.bf16.msra.mxu0 %v1630
    %1653 = vmatprep.subr.bf16.mxu0 0
    %1654 = vmatpush1.bf16.msra.mxu0 %v1629
    %1655 = vmatprep.subr.bf16.mxu0 0
    %1656 = vmatpush1.bf16.msra.mxu0 %v1628
    %1657 = vmatprep.subr.bf16.mxu0 0
    %1658 = vmatpush1.bf16.msra.mxu0 %v1627
    %1659 = vmatprep.subr.bf16.mxu0 0
    %1660 = vmatpush2.bf16.msra.mxu0 0
    %1661 = vmatprep.subr.bf16.mxu0 0
    %1662 = vmatpush2.bf16.msra.mxu0 0
    %1663 = vmatprep.subr.bf16.mxu0 0
    %1664 = vmatpush2.bf16.msra.mxu0 0
    %1665 = vmatprep.subr.bf16.mxu0 0
    %1666 = vmatpush2.bf16.msra.mxu0 0
    %1667 = vmatprep.subr.bf16.mxu0 0
    %1668 = vmatpush2.bf16.msra.mxu0 0
    %1669 = vmatprep.subr.bf16.mxu0 0
    %1670 = vmatpush2.bf16.msra.mxu0 0
    %1671 = vmatprep.subr.bf16.mxu0 0
    %1672 = vmatpush2.bf16.msra.mxu0 0
    %1673 = vmatprep.subr.bf16.mxu0 0
    %1674 = vmatpush2.bf16.msra.mxu0 0
    %1675 = vmatprep.mubr.bf16.mxu0 0
    %1676 = vmatmul.mubr.bf16.gmra.mxu0 %v1538
    %v1677 = vpop.f32.mrf.mxu0
    %v1678 = vadd.f32 %v1593, %v1677
    %v1679 = vpop.f32.mrf.mxu0
    %v1680 = vpop.f32.mrf.mxu0
    %v1681 = vadd.f32 %v1593, %v1680
    %v1682 = vpop.f32.mrf.mxu0
    %1683 = vmatprep.mubr.bf16.mxu0 0
    %1684 = vmatmul.mubr.bf16.gmra.mxu0 %v1539
    %v1685 = vpop.f32.mrf.mxu0
    %v1686 = vadd.f32 %v1593, %v1685
    %v1687 = vpop.f32.mrf.mxu0
    %v1688 = vpop.f32.mrf.mxu0
    %v1689 = vadd.f32 %v1593, %v1688
    %v1690 = vpop.f32.mrf.mxu0
    %1691 = vmatprep.mubr.bf16.mxu0 0
    %1692 = vmatmul.mubr.bf16.gmra.mxu0 %v1540
    %v1693 = vpop.f32.mrf.mxu0
    %v1694 = vadd.f32 %v1593, %v1693
    %v1695 = vpop.f32.mrf.mxu0
    %v1696 = vpop.f32.mrf.mxu0
    %v1697 = vadd.f32 %v1593, %v1696
    %v1698 = vpop.f32.mrf.mxu0
    %1699 = vmatprep.mubr.bf16.mxu0 0
    %1700 = vmatmul.mubr.bf16.gmra.mxu0 %v1541
    %v1701 = vpop.f32.mrf.mxu0
    %v1702 = vadd.f32 %v1593, %v1701
    %v1703 = vpop.f32.mrf.mxu0
    %v1704 = vpop.f32.mrf.mxu0
    %v1705 = vadd.f32 %v1593, %v1704
    %v1706 = vpop.f32.mrf.mxu0
    %1707 = vmatprep.mubr.bf16.mxu0 0
    %1708 = vmatmul.mubr.bf16.gmra.mxu0 %v1542
    %v1709 = vpop.f32.mrf.mxu0
    %v1710 = vadd.f32 %v1593, %v1709
    %v1711 = vpop.f32.mrf.mxu0
    %v1712 = vpop.f32.mrf.mxu0
    %v1713 = vadd.f32 %v1593, %v1712
    %v1714 = vpop.f32.mrf.mxu0
    %1715 = vmatprep.mubr.bf16.mxu0 0
    %1716 = vmatmul.mubr.bf16.gmra.mxu0 %v1543
    %v1717 = vpop.f32.mrf.mxu0
    %v1718 = vadd.f32 %v1593, %v1717
    %v1719 = vpop.f32.mrf.mxu0
    %v1720 = vpop.f32.mrf.mxu0
    %v1721 = vadd.f32 %v1593, %v1720
    %v1722 = vpop.f32.mrf.mxu0
    %1723 = vmatprep.mubr.bf16.mxu0 0
    %1724 = vmatmul.mubr.bf16.gmra.mxu0 %v1544
    %v1725 = vpop.f32.mrf.mxu0
    %v1726 = vadd.f32 %v1593, %v1725
    %v1727 = vpop.f32.mrf.mxu0
    %v1728 = vpop.f32.mrf.mxu0
    %v1729 = vadd.f32 %v1593, %v1728
    %v1730 = vpop.f32.mrf.mxu0
    %1731 = vmatprep.mubr.bf16.mxu0 0
    %1732 = vmatmul.mubr.bf16.gmra.mxu0 %v1545
    %v1733 = vpop.f32.mrf.mxu0
    %v1734 = vadd.f32 %v1593, %v1733
    %v1735 = vpop.f32.mrf.mxu0
    %v1736 = vpop.f32.mrf.mxu0
    %v1737 = vadd.f32 %v1593, %v1736
    %v1738 = vpop.f32.mrf.mxu0
    %1739 = vmatprep.mubr.bf16.mxu0 0
    %1740 = vmatmul.mubr.bf16.gmra.mxu0 %v1546
    %v1741 = vpop.f32.mrf.mxu0
    %v1742 = vadd.f32 %v1593, %v1741
    %v1743 = vpop.f32.mrf.mxu0
    %v1744 = vpop.f32.mrf.mxu0
    %v1745 = vadd.f32 %v1593, %v1744
    %v1746 = vpop.f32.mrf.mxu0
    %1747 = vmatprep.mubr.bf16.mxu0 0
    %1748 = vmatmul.mubr.bf16.gmra.mxu0 %v1547
    %v1749 = vpop.f32.mrf.mxu0
    %v1750 = vadd.f32 %v1593, %v1749
    %v1751 = vpop.f32.mrf.mxu0
    %v1752 = vpop.f32.mrf.mxu0
    %v1753 = vadd.f32 %v1593, %v1752
    %v1754 = vpop.f32.mrf.mxu0
    %1755 = vmatprep.mubr.bf16.mxu0 0
    %1756 = vmatmul.mubr.bf16.gmra.mxu0 %v1548
    %v1757 = vpop.f32.mrf.mxu0
    %v1758 = vadd.f32 %v1593, %v1757
    %v1759 = vpop.f32.mrf.mxu0
    %v1760 = vpop.f32.mrf.mxu0
    %v1761 = vadd.f32 %v1593, %v1760
    %v1762 = vpop.f32.mrf.mxu0
    %1763 = vmatprep.mubr.bf16.mxu0 0
    %1764 = vmatmul.mubr.bf16.gmra.mxu0 %v1549
    %v1765 = vpop.f32.mrf.mxu0
    %v1766 = vadd.f32 %v1593, %v1765
    %v1767 = vpop.f32.mrf.mxu0
    %v1768 = vpop.f32.mrf.mxu0
    %v1769 = vadd.f32 %v1593, %v1768
    %v1770 = vpop.f32.mrf.mxu0
    %1771 = vmatprep.mubr.bf16.mxu0 0
    %1772 = vmatmul.mubr.bf16.gmra.mxu0 %v1550
    %v1773 = vpop.f32.mrf.mxu0
    %v1774 = vadd.f32 %v1593, %v1773
    %v1775 = vpop.f32.mrf.mxu0
    %v1776 = vpop.f32.mrf.mxu0
    %v1777 = vadd.f32 %v1593, %v1776
    %v1778 = vpop.f32.mrf.mxu0
    %1779 = vmatprep.mubr.bf16.mxu0 0
    %1780 = vmatmul.mubr.bf16.gmra.mxu0 %v1551
    %v1781 = vpop.f32.mrf.mxu0
    %v1782 = vadd.f32 %v1593, %v1781
    %v1783 = vpop.f32.mrf.mxu0
    %v1784 = vpop.f32.mrf.mxu0
    %v1785 = vadd.f32 %v1593, %v1784
    %v1786 = vpop.f32.mrf.mxu0
    %1787 = vmatprep.mubr.bf16.mxu0 0
    %1788 = vmatmul.mubr.bf16.gmra.mxu0 %v1552
    %v1789 = vpop.f32.mrf.mxu0
    %v1790 = vadd.f32 %v1593, %v1789
    %v1791 = vpop.f32.mrf.mxu0
    %v1792 = vpop.f32.mrf.mxu0
    %v1793 = vadd.f32 %v1593, %v1792
    %v1794 = vpop.f32.mrf.mxu0
    %1795 = vmatprep.mubr.bf16.mxu0 0
    %1796 = vmatmul.mubr.bf16.gmra.mxu0 %v1553
    %v1797 = vpop.f32.mrf.mxu0
    %v1798 = vadd.f32 %v1593, %v1797
    %v1799 = vpop.f32.mrf.mxu0
    %v1800 = vpop.f32.mrf.mxu0
    %v1801 = vadd.f32 %v1593, %v1800
    %v1802 = vpop.f32.mrf.mxu0
    %1803 = vmatprep.mubr.bf16.mxu0 0
    %1804 = vmatmul.mubr.bf16.gmra.mxu0 %v1554
    %v1805 = vpop.f32.mrf.mxu0
    %v1806 = vadd.f32 %v1593, %v1805
    %v1807 = vpop.f32.mrf.mxu0
    %v1808 = vpop.f32.mrf.mxu0
    %v1809 = vadd.f32 %v1593, %v1808
    %v1810 = vpop.f32.mrf.mxu0
    %1811 = vmatprep.mubr.bf16.mxu0 0
    %1812 = vmatmul.mubr.bf16.gmra.mxu0 %v1555
    %v1813 = vpop.f32.mrf.mxu0
    %v1814 = vadd.f32 %v1593, %v1813
    %v1815 = vpop.f32.mrf.mxu0
    %v1816 = vpop.f32.mrf.mxu0
    %v1817 = vadd.f32 %v1593, %v1816
    %v1818 = vpop.f32.mrf.mxu0
    %1819 = vmatprep.mubr.bf16.mxu0 0
    %1820 = vmatmul.mubr.bf16.gmra.mxu0 %v1556
    %v1821 = vpop.f32.mrf.mxu0
    %v1822 = vadd.f32 %v1593, %v1821
    %v1823 = vpop.f32.mrf.mxu0
    %v1824 = vpop.f32.mrf.mxu0
    %v1825 = vadd.f32 %v1593, %v1824
    %v1826 = vpop.f32.mrf.mxu0
    %1827 = vmatprep.mubr.bf16.mxu0 0
    %1828 = vmatmul.mubr.bf16.gmra.mxu0 %v1557
    %v1829 = vpop.f32.mrf.mxu0
    %v1830 = vadd.f32 %v1593, %v1829
    %v1831 = vpop.f32.mrf.mxu0
    %v1832 = vpop.f32.mrf.mxu0
    %v1833 = vadd.f32 %v1593, %v1832
    %v1834 = vpop.f32.mrf.mxu0
    %1835 = vmatprep.mubr.bf16.mxu0 0
    %1836 = vmatmul.mubr.bf16.gmra.mxu0 %v1558
    %v1837 = vpop.f32.mrf.mxu0
    %v1838 = vadd.f32 %v1593, %v1837
    %v1839 = vpop.f32.mrf.mxu0
    %v1840 = vpop.f32.mrf.mxu0
    %v1841 = vadd.f32 %v1593, %v1840
    %v1842 = vpop.f32.mrf.mxu0
    %1843 = vmatprep.mubr.bf16.mxu0 0
    %1844 = vmatmul.mubr.bf16.gmra.mxu0 %v1559
    %v1845 = vpop.f32.mrf.mxu0
    %v1846 = vadd.f32 %v1593, %v1845
    %v1847 = vpop.f32.mrf.mxu0
    %v1848 = vpop.f32.mrf.mxu0
    %v1849 = vadd.f32 %v1593, %v1848
    %v1850 = vpop.f32.mrf.mxu0
    %1851 = vmatprep.mubr.bf16.mxu0 0
    %1852 = vmatmul.mubr.bf16.gmra.mxu0 %v1560
    %v1853 = vpop.f32.mrf.mxu0
    %v1854 = vadd.f32 %v1593, %v1853
    %v1855 = vpop.f32.mrf.mxu0
    %v1856 = vpop.f32.mrf.mxu0
    %v1857 = vadd.f32 %v1593, %v1856
    %v1858 = vpop.f32.mrf.mxu0
    %1859 = vmatprep.mubr.bf16.mxu0 0
    %1860 = vmatmul.mubr.bf16.gmra.mxu0 %v1561
    %v1861 = vpop.f32.mrf.mxu0
    %v1862 = vadd.f32 %v1593, %v1861
    %v1863 = vpop.f32.mrf.mxu0
    %v1864 = vpop.f32.mrf.mxu0
    %v1865 = vadd.f32 %v1593, %v1864
    %v1866 = vpop.f32.mrf.mxu0
    %1867 = vmatprep.mubr.bf16.mxu0 0
    %1868 = vmatmul.mubr.bf16.gmra.mxu0 %v1562
    %v1869 = vpop.f32.mrf.mxu0
    %v1870 = vadd.f32 %v1593, %v1869
    %v1871 = vpop.f32.mrf.mxu0
    %v1872 = vpop.f32.mrf.mxu0
    %v1873 = vadd.f32 %v1593, %v1872
    %v1874 = vpop.f32.mrf.mxu0
    %1875 = vmatprep.mubr.bf16.mxu0 0
    %1876 = vmatmul.mubr.bf16.gmra.mxu0 %v1563
    %v1877 = vpop.f32.mrf.mxu0
    %v1878 = vadd.f32 %v1593, %v1877
    %v1879 = vpop.f32.mrf.mxu0
    %v1880 = vpop.f32.mrf.mxu0
    %v1881 = vadd.f32 %v1593, %v1880
    %v1882 = vpop.f32.mrf.mxu0
    %1883 = vmatprep.mubr.bf16.mxu0 0
    %1884 = vmatmul.mubr.bf16.gmra.mxu0 %v1564
    %v1885 = vpop.f32.mrf.mxu0
    %v1886 = vadd.f32 %v1593, %v1885
    %v1887 = vpop.f32.mrf.mxu0
    %v1888 = vpop.f32.mrf.mxu0
    %v1889 = vadd.f32 %v1593, %v1888
    %v1890 = vpop.f32.mrf.mxu0
    %1891 = vmatprep.mubr.bf16.mxu0 0
    %1892 = vmatmul.mubr.bf16.gmra.mxu0 %v1565
    %v1893 = vpop.f32.mrf.mxu0
    %v1894 = vadd.f32 %v1593, %v1893
    %v1895 = vpop.f32.mrf.mxu0
    %v1896 = vpop.f32.mrf.mxu0
    %v1897 = vadd.f32 %v1593, %v1896
    %v1898 = vpop.f32.mrf.mxu0
    %1899 = vmatprep.mubr.bf16.mxu0 0
    %1900 = vmatmul.mubr.bf16.gmra.mxu0 %v1566
    %v1901 = vpop.f32.mrf.mxu0
    %v1902 = vadd.f32 %v1593, %v1901
    %v1903 = vpop.f32.mrf.mxu0
    %v1904 = vpop.f32.mrf.mxu0
    %v1905 = vadd.f32 %v1593, %v1904
    %v1906 = vpop.f32.mrf.mxu0
    %1907 = vmatprep.mubr.bf16.mxu0 0
    %1908 = vmatmul.mubr.bf16.gmra.mxu0 %v1567
    %v1909 = vpop.f32.mrf.mxu0
    %v1910 = vadd.f32 %v1593, %v1909
    %v1911 = vpop.f32.mrf.mxu0
    %v1912 = vpop.f32.mrf.mxu0
    %v1913 = vadd.f32 %v1593, %v1912
    %v1914 = vpop.f32.mrf.mxu0
    %1915 = vmatprep.mubr.bf16.mxu0 0
    %1916 = vmatmul.mubr.bf16.gmra.mxu0 %v1568
    %v1917 = vpop.f32.mrf.mxu0
    %v1918 = vadd.f32 %v1593, %v1917
    %v1919 = vpop.f32.mrf.mxu0
    %v1920 = vpop.f32.mrf.mxu0
    %v1921 = vadd.f32 %v1593, %v1920
    %v1922 = vpop.f32.mrf.mxu0
    %1923 = vmatprep.mubr.bf16.mxu0 0
    %1924 = vmatmul.mubr.bf16.gmra.mxu0 %v1569
    %v1925 = vpop.f32.mrf.mxu0
    %v1926 = vadd.f32 %v1593, %v1925
    %v1927 = vpop.f32.mrf.mxu0
    %v1928 = vpop.f32.mrf.mxu0
    %v1929 = vadd.f32 %v1593, %v1928
    %v1930 = vpop.f32.mrf.mxu0
    %1931 = vdwg.mxu0
    %v1932 = vmax.f32 %v1678, 0.0
    %v1933 = vmax.f32 %v1681, 0.0
    %v1934 = vmax.f32 %v1686, 0.0
    %v1935 = vmax.f32 %v1689, 0.0
    %v1936 = vmax.f32 %v1694, 0.0
    %v1937 = vmax.f32 %v1697, 0.0
    %v1938 = vmax.f32 %v1702, 0.0
    %v1939 = vmax.f32 %v1705, 0.0
    %v1940 = vmax.f32 %v1710, 0.0
    %v1941 = vmax.f32 %v1713, 0.0
    %v1942 = vmax.f32 %v1718, 0.0
    %v1943 = vmax.f32 %v1721, 0.0
    %v1944 = vmax.f32 %v1726, 0.0
    %v1945 = vmax.f32 %v1729, 0.0
    %v1946 = vmax.f32 %v1734, 0.0
    %v1947 = vmax.f32 %v1737, 0.0
    %v1948 = vmax.f32 %v1742, 0.0
    %v1949 = vmax.f32 %v1745, 0.0
    %v1950 = vmax.f32 %v1750, 0.0
    %v1951 = vmax.f32 %v1753, 0.0
    %v1952 = vmax.f32 %v1758, 0.0
    %v1953 = vmax.f32 %v1761, 0.0
    %v1954 = vmax.f32 %v1766, 0.0
    %v1955 = vmax.f32 %v1769, 0.0
    %v1956 = vmax.f32 %v1774, 0.0
    %v1957 = vmax.f32 %v1777, 0.0
    %v1958 = vmax.f32 %v1782, 0.0
    %v1959 = vmax.f32 %v1785, 0.0
    %v1960 = vmax.f32 %v1790, 0.0
    %v1961 = vmax.f32 %v1793, 0.0
    %v1962 = vmax.f32 %v1798, 0.0
    %v1963 = vmax.f32 %v1801, 0.0
    %v1964 = vmax.f32 %v1806, 0.0
    %v1965 = vmax.f32 %v1809, 0.0
    %v1966 = vmax.f32 %v1814, 0.0
    %v1967 = vmax.f32 %v1817, 0.0
    %v1968 = vmax.f32 %v1822, 0.0
    %v1969 = vmax.f32 %v1825, 0.0
    %v1970 = vmax.f32 %v1830, 0.0
    %v1971 = vmax.f32 %v1833, 0.0
    %v1972 = vmax.f32 %v1838, 0.0
    %v1973 = vmax.f32 %v1841, 0.0
    %v1974 = vmax.f32 %v1846, 0.0
    %v1975 = vmax.f32 %v1849, 0.0
    %v1976 = vmax.f32 %v1854, 0.0
    %v1977 = vmax.f32 %v1857, 0.0
    %v1978 = vmax.f32 %v1862, 0.0
    %v1979 = vmax.f32 %v1865, 0.0
    %v1980 = vmax.f32 %v1870, 0.0
    %v1981 = vmax.f32 %v1873, 0.0
    %v1982 = vmax.f32 %v1878, 0.0
    %v1983 = vmax.f32 %v1881, 0.0
    %v1984 = vmax.f32 %v1886, 0.0
    %v1985 = vmax.f32 %v1889, 0.0
    %v1986 = vmax.f32 %v1894, 0.0
    %v1987 = vmax.f32 %v1897, 0.0
    %v1988 = vmax.f32 %v1902, 0.0
    %v1989 = vmax.f32 %v1905, 0.0
    %v1990 = vmax.f32 %v1910, 0.0
    %v1991 = vmax.f32 %v1913, 0.0
    %v1992 = vmax.f32 %v1918, 0.0
    %v1993 = vmax.f32 %v1921, 0.0
    %v1994 = vmax.f32 %v1926, 0.0
    %v1995 = vmax.f32 %v1929, 0.0
    %v1996 = vpack.c.bf16 %v1933, %v1932
    %v1997 = vpack.c.bf16 %v1935, %v1934
    %v1998 = vpack.c.bf16 %v1937, %v1936
    %v1999 = vpack.c.bf16 %v1939, %v1938
    %v2000 = vpack.c.bf16 %v1941, %v1940
    %v2001 = vpack.c.bf16 %v1943, %v1942
    %v2002 = vpack.c.bf16 %v1945, %v1944
    %v2003 = vpack.c.bf16 %v1947, %v1946
    %v2004 = vpack.c.bf16 %v1949, %v1948
    %v2005 = vpack.c.bf16 %v1951, %v1950
    %v2006 = vpack.c.bf16 %v1953, %v1952
    %v2007 = vpack.c.bf16 %v1955, %v1954
    %v2008 = vpack.c.bf16 %v1957, %v1956
    %v2009 = vpack.c.bf16 %v1959, %v1958
    %v2010 = vpack.c.bf16 %v1961, %v1960
    %v2011 = vpack.c.bf16 %v1963, %v1962
    %v2012 = vpack.c.bf16 %v1965, %v1964
    %v2013 = vpack.c.bf16 %v1967, %v1966
    %v2014 = vpack.c.bf16 %v1969, %v1968
    %v2015 = vpack.c.bf16 %v1971, %v1970
    %v2016 = vpack.c.bf16 %v1973, %v1972
    %v2017 = vpack.c.bf16 %v1975, %v1974
    %v2018 = vpack.c.bf16 %v1977, %v1976
    %v2019 = vpack.c.bf16 %v1979, %v1978
    %v2020 = vpack.c.bf16 %v1981, %v1980
    %v2021 = vpack.c.bf16 %v1983, %v1982
    %v2022 = vpack.c.bf16 %v1985, %v1984
    %v2023 = vpack.c.bf16 %v1987, %v1986
    %v2024 = vpack.c.bf16 %v1989, %v1988
    %v2025 = vpack.c.bf16 %v1991, %v1990
    %v2026 = vpack.c.bf16 %v1993, %v1992
    %v2027 = vpack.c.bf16 %v1995, %v1994
    %s2028 = scalar_lea.vmem [#allocation7], 32
    %v2029 = vld [vmem:[%s2028] sm:$0xf]
    %v2030 = vld [vmem:[%s2028 + $0x4] sm:$0xf]
    %v2031 = vld [vmem:[%s2028 + $0x8] sm:$0xf]
    %v2032 = vld [vmem:[%s2028 + $0xc] sm:$0xf]
    %v2033 = vld [vmem:[%s2028 + $0x10] sm:$0xf]
    %v2034 = vld [vmem:[%s2028 + $0x14] sm:$0xf]
    %v2035 = vld [vmem:[%s2028 + $0x18] sm:$0xf]
    %v2036 = vld [vmem:[%s2028 + $0x1c] sm:$0xf]
    %s2037 = scalar_lea.vmem [#allocation8], 1
    %v2038 = vld [vmem:[%s2037] sm:$0x1]
    %v2040 = vlaneseq
    %v2041 = vshrl.u32 %v2040, 7
    %v2042 = vsub.s32 0, %v2041
    %v2043 = vrot.slane %v2038, %v2042
    %v2053 = vunpack.c.l.b16 %v2029
    %v2054 = vunpack.c.l.b16 %v2030
    %v2055 = vunpack.c.l.b16 %v2031
    %v2056 = vunpack.c.l.b16 %v2032
    %v2057 = vunpack.c.l.b16 %v2033
    %v2058 = vunpack.c.l.b16 %v2034
    %v2059 = vunpack.c.l.b16 %v2035
    %v2060 = vunpack.c.l.b16 %v2036
    %v2061 = vpack.c.b16 %v2054, %v2053
    %v2062 = vpack.c.b16 %v2056, %v2055
    %v2063 = vpack.c.b16 %v2058, %v2057
    %v2064 = vpack.c.b16 %v2060, %v2059
    %v2070 = vsel %vm702, %v1996, 0
    %v2073 = vsel %vm702, %v1997, 0
    %v2076 = vsel %vm702, %v1998, 0
    %v2079 = vsel %vm702, %v1999, 0
    %v2082 = vsel %vm702, %v2000, 0
    %v2085 = vsel %vm702, %v2001, 0
    %v2088 = vsel %vm702, %v2002, 0
    %v2091 = vsel %vm702, %v2003, 0
    %v2094 = vsel %vm702, %v2004, 0
    %v2097 = vsel %vm702, %v2005, 0
    %v2100 = vsel %vm702, %v2006, 0
    %v2103 = vsel %vm702, %v2007, 0
    %v2106 = vsel %vm702, %v2008, 0
    %v2109 = vsel %vm702, %v2009, 0
    %v2112 = vsel %vm702, %v2010, 0
    %v2115 = vsel %vm702, %v2011, 0
    %v2118 = vsel %vm702, %v2012, 0
    %v2121 = vsel %vm702, %v2013, 0
    %v2124 = vsel %vm702, %v2014, 0
    %v2127 = vsel %vm702, %v2015, 0
    %v2130 = vsel %vm702, %v2016, 0
    %v2133 = vsel %vm702, %v2017, 0
    %v2136 = vsel %vm702, %v2018, 0
    %v2139 = vsel %vm702, %v2019, 0
    %v2142 = vsel %vm702, %v2020, 0
    %v2145 = vsel %vm702, %v2021, 0
    %v2148 = vsel %vm702, %v2022, 0
    %v2151 = vsel %vm702, %v2023, 0
    %v2154 = vsel %vm702, %v2024, 0
    %v2157 = vsel %vm702, %v2025, 0
    %v2160 = vsel %vm702, %v2026, 0
    %v2163 = vsel %vm702, %v2027, 0
    %2165 = vmatprep.subr.bf16.mxu0 0
    %2166 = vmatpush1.bf16.msra.mxu0 0
    %2167 = vmatprep.subr.bf16.mxu0 0
    %2168 = vmatpush1.bf16.msra.mxu0 0
    %2169 = vmatprep.subr.bf16.mxu0 0
    %2170 = vmatpush1.bf16.msra.mxu0 0
    %2171 = vmatprep.subr.bf16.mxu0 0
    %2172 = vmatpush1.bf16.msra.mxu0 0
    %2173 = vmatprep.subr.bf16.mxu0 0
    %2174 = vmatpush1.bf16.msra.mxu0 %v2064
    %2175 = vmatprep.subr.bf16.mxu0 0
    %2176 = vmatpush1.bf16.msra.mxu0 %v2063
    %2177 = vmatprep.subr.bf16.mxu0 0
    %2178 = vmatpush1.bf16.msra.mxu0 %v2062
    %2179 = vmatprep.subr.bf16.mxu0 0
    %2180 = vmatpush1.bf16.msra.mxu0 %v2061
    %2181 = vmatprep.subr.bf16.mxu0 0
    %2182 = vmatpush2.bf16.msra.mxu0 0
    %2183 = vmatprep.subr.bf16.mxu0 0
    %2184 = vmatpush2.bf16.msra.mxu0 0
    %2185 = vmatprep.subr.bf16.mxu0 0
    %2186 = vmatpush2.bf16.msra.mxu0 0
    %2187 = vmatprep.subr.bf16.mxu0 0
    %2188 = vmatpush2.bf16.msra.mxu0 0
    %2189 = vmatprep.subr.bf16.mxu0 0
    %2190 = vmatpush2.bf16.msra.mxu0 0
    %2191 = vmatprep.subr.bf16.mxu0 0
    %2192 = vmatpush2.bf16.msra.mxu0 0
    %2193 = vmatprep.subr.bf16.mxu0 0
    %2194 = vmatpush2.bf16.msra.mxu0 0
    %2195 = vmatprep.subr.bf16.mxu0 0
    %2196 = vmatpush2.bf16.msra.mxu0 0
    %2197 = vmatprep.mubr.bf16.mxu0 0
    %2198 = vmatmul.mubr.bf16.gmra.mxu0 %v2070
    %v2199 = vpop.f32.mrf.mxu0
    %v2200 = vadd.f32 %v2043, %v2199
    %v2201 = vpop.f32.mrf.mxu0
    %v2202 = vpop.f32.mrf.mxu0
    %v2203 = vadd.f32 %v2043, %v2202
    %v2204 = vpop.f32.mrf.mxu0
    %2205 = vmatprep.mubr.bf16.mxu0 0
    %2206 = vmatmul.mubr.bf16.gmra.mxu0 %v2073
    %v2207 = vpop.f32.mrf.mxu0
    %v2208 = vadd.f32 %v2043, %v2207
    %v2209 = vpop.f32.mrf.mxu0
    %v2210 = vpop.f32.mrf.mxu0
    %v2211 = vadd.f32 %v2043, %v2210
    %v2212 = vpop.f32.mrf.mxu0
    %2213 = vmatprep.mubr.bf16.mxu0 0
    %2214 = vmatmul.mubr.bf16.gmra.mxu0 %v2076
    %v2215 = vpop.f32.mrf.mxu0
    %v2216 = vadd.f32 %v2043, %v2215
    %v2217 = vpop.f32.mrf.mxu0
    %v2218 = vpop.f32.mrf.mxu0
    %v2219 = vadd.f32 %v2043, %v2218
    %v2220 = vpop.f32.mrf.mxu0
    %2221 = vmatprep.mubr.bf16.mxu0 0
    %2222 = vmatmul.mubr.bf16.gmra.mxu0 %v2079
    %v2223 = vpop.f32.mrf.mxu0
    %v2224 = vadd.f32 %v2043, %v2223
    %v2225 = vpop.f32.mrf.mxu0
    %v2226 = vpop.f32.mrf.mxu0
    %v2227 = vadd.f32 %v2043, %v2226
    %v2228 = vpop.f32.mrf.mxu0
    %2229 = vmatprep.mubr.bf16.mxu0 0
    %2230 = vmatmul.mubr.bf16.gmra.mxu0 %v2082
    %v2231 = vpop.f32.mrf.mxu0
    %v2232 = vadd.f32 %v2043, %v2231
    %v2233 = vpop.f32.mrf.mxu0
    %v2234 = vpop.f32.mrf.mxu0
    %v2235 = vadd.f32 %v2043, %v2234
    %v2236 = vpop.f32.mrf.mxu0
    %2237 = vmatprep.mubr.bf16.mxu0 0
    %2238 = vmatmul.mubr.bf16.gmra.mxu0 %v2085
    %v2239 = vpop.f32.mrf.mxu0
    %v2240 = vadd.f32 %v2043, %v2239
    %v2241 = vpop.f32.mrf.mxu0
    %v2242 = vpop.f32.mrf.mxu0
    %v2243 = vadd.f32 %v2043, %v2242
    %v2244 = vpop.f32.mrf.mxu0
    %2245 = vmatprep.mubr.bf16.mxu0 0
    %2246 = vmatmul.mubr.bf16.gmra.mxu0 %v2088
    %v2247 = vpop.f32.mrf.mxu0
    %v2248 = vadd.f32 %v2043, %v2247
    %v2249 = vpop.f32.mrf.mxu0
    %v2250 = vpop.f32.mrf.mxu0
    %v2251 = vadd.f32 %v2043, %v2250
    %v2252 = vpop.f32.mrf.mxu0
    %2253 = vmatprep.mubr.bf16.mxu0 0
    %2254 = vmatmul.mubr.bf16.gmra.mxu0 %v2091
    %v2255 = vpop.f32.mrf.mxu0
    %v2256 = vadd.f32 %v2043, %v2255
    %v2257 = vpop.f32.mrf.mxu0
    %v2258 = vpop.f32.mrf.mxu0
    %v2259 = vadd.f32 %v2043, %v2258
    %v2260 = vpop.f32.mrf.mxu0
    %2261 = vmatprep.mubr.bf16.mxu0 0
    %2262 = vmatmul.mubr.bf16.gmra.mxu0 %v2094
    %v2263 = vpop.f32.mrf.mxu0
    %v2264 = vadd.f32 %v2043, %v2263
    %v2265 = vpop.f32.mrf.mxu0
    %v2266 = vpop.f32.mrf.mxu0
    %v2267 = vadd.f32 %v2043, %v2266
    %v2268 = vpop.f32.mrf.mxu0
    %2269 = vmatprep.mubr.bf16.mxu0 0
    %2270 = vmatmul.mubr.bf16.gmra.mxu0 %v2097
    %v2271 = vpop.f32.mrf.mxu0
    %v2272 = vadd.f32 %v2043, %v2271
    %v2273 = vpop.f32.mrf.mxu0
    %v2274 = vpop.f32.mrf.mxu0
    %v2275 = vadd.f32 %v2043, %v2274
    %v2276 = vpop.f32.mrf.mxu0
    %2277 = vmatprep.mubr.bf16.mxu0 0
    %2278 = vmatmul.mubr.bf16.gmra.mxu0 %v2100
    %v2279 = vpop.f32.mrf.mxu0
    %v2280 = vadd.f32 %v2043, %v2279
    %v2281 = vpop.f32.mrf.mxu0
    %v2282 = vpop.f32.mrf.mxu0
    %v2283 = vadd.f32 %v2043, %v2282
    %v2284 = vpop.f32.mrf.mxu0
    %2285 = vmatprep.mubr.bf16.mxu0 0
    %2286 = vmatmul.mubr.bf16.gmra.mxu0 %v2103
    %v2287 = vpop.f32.mrf.mxu0
    %v2288 = vadd.f32 %v2043, %v2287
    %v2289 = vpop.f32.mrf.mxu0
    %v2290 = vpop.f32.mrf.mxu0
    %v2291 = vadd.f32 %v2043, %v2290
    %v2292 = vpop.f32.mrf.mxu0
    %2293 = vmatprep.mubr.bf16.mxu0 0
    %2294 = vmatmul.mubr.bf16.gmra.mxu0 %v2106
    %v2295 = vpop.f32.mrf.mxu0
    %v2296 = vadd.f32 %v2043, %v2295
    %v2297 = vpop.f32.mrf.mxu0
    %v2298 = vpop.f32.mrf.mxu0
    %v2299 = vadd.f32 %v2043, %v2298
    %v2300 = vpop.f32.mrf.mxu0
    %2301 = vmatprep.mubr.bf16.mxu0 0
    %2302 = vmatmul.mubr.bf16.gmra.mxu0 %v2109
    %v2303 = vpop.f32.mrf.mxu0
    %v2304 = vadd.f32 %v2043, %v2303
    %v2305 = vpop.f32.mrf.mxu0
    %v2306 = vpop.f32.mrf.mxu0
    %v2307 = vadd.f32 %v2043, %v2306
    %v2308 = vpop.f32.mrf.mxu0
    %2309 = vmatprep.mubr.bf16.mxu0 0
    %2310 = vmatmul.mubr.bf16.gmra.mxu0 %v2112
    %v2311 = vpop.f32.mrf.mxu0
    %v2312 = vadd.f32 %v2043, %v2311
    %v2313 = vpop.f32.mrf.mxu0
    %v2314 = vpop.f32.mrf.mxu0
    %v2315 = vadd.f32 %v2043, %v2314
    %v2316 = vpop.f32.mrf.mxu0
    %2317 = vmatprep.mubr.bf16.mxu0 0
    %2318 = vmatmul.mubr.bf16.gmra.mxu0 %v2115
    %v2319 = vpop.f32.mrf.mxu0
    %v2320 = vadd.f32 %v2043, %v2319
    %v2321 = vpop.f32.mrf.mxu0
    %v2322 = vpop.f32.mrf.mxu0
    %v2323 = vadd.f32 %v2043, %v2322
    %v2324 = vpop.f32.mrf.mxu0
    %2325 = vmatprep.mubr.bf16.mxu0 0
    %2326 = vmatmul.mubr.bf16.gmra.mxu0 %v2118
    %v2327 = vpop.f32.mrf.mxu0
    %v2328 = vadd.f32 %v2043, %v2327
    %v2329 = vpop.f32.mrf.mxu0
    %v2330 = vpop.f32.mrf.mxu0
    %v2331 = vadd.f32 %v2043, %v2330
    %v2332 = vpop.f32.mrf.mxu0
    %2333 = vmatprep.mubr.bf16.mxu0 0
    %2334 = vmatmul.mubr.bf16.gmra.mxu0 %v2121
    %v2335 = vpop.f32.mrf.mxu0
    %v2336 = vadd.f32 %v2043, %v2335
    %v2337 = vpop.f32.mrf.mxu0
    %v2338 = vpop.f32.mrf.mxu0
    %v2339 = vadd.f32 %v2043, %v2338
    %v2340 = vpop.f32.mrf.mxu0
    %2341 = vmatprep.mubr.bf16.mxu0 0
    %2342 = vmatmul.mubr.bf16.gmra.mxu0 %v2124
    %v2343 = vpop.f32.mrf.mxu0
    %v2344 = vadd.f32 %v2043, %v2343
    %v2345 = vpop.f32.mrf.mxu0
    %v2346 = vpop.f32.mrf.mxu0
    %v2347 = vadd.f32 %v2043, %v2346
    %v2348 = vpop.f32.mrf.mxu0
    %2349 = vmatprep.mubr.bf16.mxu0 0
    %2350 = vmatmul.mubr.bf16.gmra.mxu0 %v2127
    %v2351 = vpop.f32.mrf.mxu0
    %v2352 = vadd.f32 %v2043, %v2351
    %v2353 = vpop.f32.mrf.mxu0
    %v2354 = vpop.f32.mrf.mxu0
    %v2355 = vadd.f32 %v2043, %v2354
    %v2356 = vpop.f32.mrf.mxu0
    %2357 = vmatprep.mubr.bf16.mxu0 0
    %2358 = vmatmul.mubr.bf16.gmra.mxu0 %v2130
    %v2359 = vpop.f32.mrf.mxu0
    %v2360 = vadd.f32 %v2043, %v2359
    %v2361 = vpop.f32.mrf.mxu0
    %v2362 = vpop.f32.mrf.mxu0
    %v2363 = vadd.f32 %v2043, %v2362
    %v2364 = vpop.f32.mrf.mxu0
    %2365 = vmatprep.mubr.bf16.mxu0 0
    %2366 = vmatmul.mubr.bf16.gmra.mxu0 %v2133
    %v2367 = vpop.f32.mrf.mxu0
    %v2368 = vadd.f32 %v2043, %v2367
    %v2369 = vpop.f32.mrf.mxu0
    %v2370 = vpop.f32.mrf.mxu0
    %v2371 = vadd.f32 %v2043, %v2370
    %v2372 = vpop.f32.mrf.mxu0
    %2373 = vmatprep.mubr.bf16.mxu0 0
    %2374 = vmatmul.mubr.bf16.gmra.mxu0 %v2136
    %v2375 = vpop.f32.mrf.mxu0
    %v2376 = vadd.f32 %v2043, %v2375
    %v2377 = vpop.f32.mrf.mxu0
    %v2378 = vpop.f32.mrf.mxu0
    %v2379 = vadd.f32 %v2043, %v2378
    %v2380 = vpop.f32.mrf.mxu0
    %2381 = vmatprep.mubr.bf16.mxu0 0
    %2382 = vmatmul.mubr.bf16.gmra.mxu0 %v2139
    %v2383 = vpop.f32.mrf.mxu0
    %v2384 = vadd.f32 %v2043, %v2383
    %v2385 = vpop.f32.mrf.mxu0
    %v2386 = vpop.f32.mrf.mxu0
    %v2387 = vadd.f32 %v2043, %v2386
    %v2388 = vpop.f32.mrf.mxu0
    %2389 = vmatprep.mubr.bf16.mxu0 0
    %2390 = vmatmul.mubr.bf16.gmra.mxu0 %v2142
    %v2391 = vpop.f32.mrf.mxu0
    %v2392 = vadd.f32 %v2043, %v2391
    %v2393 = vpop.f32.mrf.mxu0
    %v2394 = vpop.f32.mrf.mxu0
    %v2395 = vadd.f32 %v2043, %v2394
    %v2396 = vpop.f32.mrf.mxu0
    %2397 = vmatprep.mubr.bf16.mxu0 0
    %2398 = vmatmul.mubr.bf16.gmra.mxu0 %v2145
    %v2399 = vpop.f32.mrf.mxu0
    %v2400 = vadd.f32 %v2043, %v2399
    %v2401 = vpop.f32.mrf.mxu0
    %v2402 = vpop.f32.mrf.mxu0
    %v2403 = vadd.f32 %v2043, %v2402
    %v2404 = vpop.f32.mrf.mxu0
    %2405 = vmatprep.mubr.bf16.mxu0 0
    %2406 = vmatmul.mubr.bf16.gmra.mxu0 %v2148
    %v2407 = vpop.f32.mrf.mxu0
    %v2408 = vadd.f32 %v2043, %v2407
    %v2409 = vpop.f32.mrf.mxu0
    %v2410 = vpop.f32.mrf.mxu0
    %v2411 = vadd.f32 %v2043, %v2410
    %v2412 = vpop.f32.mrf.mxu0
    %2413 = vmatprep.mubr.bf16.mxu0 0
    %2414 = vmatmul.mubr.bf16.gmra.mxu0 %v2151
    %v2415 = vpop.f32.mrf.mxu0
    %v2416 = vadd.f32 %v2043, %v2415
    %v2417 = vpop.f32.mrf.mxu0
    %v2418 = vpop.f32.mrf.mxu0
    %v2419 = vadd.f32 %v2043, %v2418
    %v2420 = vpop.f32.mrf.mxu0
    %2421 = vmatprep.mubr.bf16.mxu0 0
    %2422 = vmatmul.mubr.bf16.gmra.mxu0 %v2154
    %v2423 = vpop.f32.mrf.mxu0
    %v2424 = vadd.f32 %v2043, %v2423
    %v2425 = vpop.f32.mrf.mxu0
    %v2426 = vpop.f32.mrf.mxu0
    %v2427 = vadd.f32 %v2043, %v2426
    %v2428 = vpop.f32.mrf.mxu0
    %2429 = vmatprep.mubr.bf16.mxu0 0
    %2430 = vmatmul.mubr.bf16.gmra.mxu0 %v2157
    %v2431 = vpop.f32.mrf.mxu0
    %v2432 = vadd.f32 %v2043, %v2431
    %v2433 = vpop.f32.mrf.mxu0
    %v2434 = vpop.f32.mrf.mxu0
    %v2435 = vadd.f32 %v2043, %v2434
    %v2436 = vpop.f32.mrf.mxu0
    %2437 = vmatprep.mubr.bf16.mxu0 0
    %2438 = vmatmul.mubr.bf16.gmra.mxu0 %v2160
    %v2439 = vpop.f32.mrf.mxu0
    %v2440 = vadd.f32 %v2043, %v2439
    %v2441 = vpop.f32.mrf.mxu0
    %v2442 = vpop.f32.mrf.mxu0
    %v2443 = vadd.f32 %v2043, %v2442
    %v2444 = vpop.f32.mrf.mxu0
    %2445 = vmatprep.mubr.bf16.mxu0 0
    %2446 = vmatmul.mubr.bf16.gmra.mxu0 %v2163
    %v2447 = vpop.f32.mrf.mxu0
    %v2448 = vadd.f32 %v2043, %v2447
    %v2449 = vpop.f32.mrf.mxu0
    %v2450 = vpop.f32.mrf.mxu0
    %v2451 = vadd.f32 %v2043, %v2450
    %v2452 = vpop.f32.mrf.mxu0
    %2453 = vdwg.mxu0
    %v2454 = vmax.f32 %v2200, 0.0
    %v2455 = vmax.f32 %v2203, 0.0
    %v2456 = vmax.f32 %v2208, 0.0
    %v2457 = vmax.f32 %v2211, 0.0
    %v2458 = vmax.f32 %v2216, 0.0
    %v2459 = vmax.f32 %v2219, 0.0
    %v2460 = vmax.f32 %v2224, 0.0
    %v2461 = vmax.f32 %v2227, 0.0
    %v2462 = vmax.f32 %v2232, 0.0
    %v2463 = vmax.f32 %v2235, 0.0
    %v2464 = vmax.f32 %v2240, 0.0
    %v2465 = vmax.f32 %v2243, 0.0
    %v2466 = vmax.f32 %v2248, 0.0
    %v2467 = vmax.f32 %v2251, 0.0
    %v2468 = vmax.f32 %v2256, 0.0
    %v2469 = vmax.f32 %v2259, 0.0
    %v2470 = vmax.f32 %v2264, 0.0
    %v2471 = vmax.f32 %v2267, 0.0
    %v2472 = vmax.f32 %v2272, 0.0
    %v2473 = vmax.f32 %v2275, 0.0
    %v2474 = vmax.f32 %v2280, 0.0
    %v2475 = vmax.f32 %v2283, 0.0
    %v2476 = vmax.f32 %v2288, 0.0
    %v2477 = vmax.f32 %v2291, 0.0
    %v2478 = vmax.f32 %v2296, 0.0
    %v2479 = vmax.f32 %v2299, 0.0
    %v2480 = vmax.f32 %v2304, 0.0
    %v2481 = vmax.f32 %v2307, 0.0
    %v2482 = vmax.f32 %v2312, 0.0
    %v2483 = vmax.f32 %v2315, 0.0
    %v2484 = vmax.f32 %v2320, 0.0
    %v2485 = vmax.f32 %v2323, 0.0
    %v2486 = vmax.f32 %v2328, 0.0
    %v2487 = vmax.f32 %v2331, 0.0
    %v2488 = vmax.f32 %v2336, 0.0
    %v2489 = vmax.f32 %v2339, 0.0
    %v2490 = vmax.f32 %v2344, 0.0
    %v2491 = vmax.f32 %v2347, 0.0
    %v2492 = vmax.f32 %v2352, 0.0
    %v2493 = vmax.f32 %v2355, 0.0
    %v2494 = vmax.f32 %v2360, 0.0
    %v2495 = vmax.f32 %v2363, 0.0
    %v2496 = vmax.f32 %v2368, 0.0
    %v2497 = vmax.f32 %v2371, 0.0
    %v2498 = vmax.f32 %v2376, 0.0
    %v2499 = vmax.f32 %v2379, 0.0
    %v2500 = vmax.f32 %v2384, 0.0
    %v2501 = vmax.f32 %v2387, 0.0
    %v2502 = vmax.f32 %v2392, 0.0
    %v2503 = vmax.f32 %v2395, 0.0
    %v2504 = vmax.f32 %v2400, 0.0
    %v2505 = vmax.f32 %v2403, 0.0
    %v2506 = vmax.f32 %v2408, 0.0
    %v2507 = vmax.f32 %v2411, 0.0
    %v2508 = vmax.f32 %v2416, 0.0
    %v2509 = vmax.f32 %v2419, 0.0
    %v2510 = vmax.f32 %v2424, 0.0
    %v2511 = vmax.f32 %v2427, 0.0
    %v2512 = vmax.f32 %v2432, 0.0
    %v2513 = vmax.f32 %v2435, 0.0
    %v2514 = vmax.f32 %v2440, 0.0
    %v2515 = vmax.f32 %v2443, 0.0
    %v2516 = vmax.f32 %v2448, 0.0
    %v2517 = vmax.f32 %v2451, 0.0
    %v2518 = vpack.c.bf16 %v2455, %v2454
    %v2519 = vpack.c.bf16 %v2457, %v2456
    %v2520 = vpack.c.bf16 %v2459, %v2458
    %v2521 = vpack.c.bf16 %v2461, %v2460
    %v2522 = vpack.c.bf16 %v2463, %v2462
    %v2523 = vpack.c.bf16 %v2465, %v2464
    %v2524 = vpack.c.bf16 %v2467, %v2466
    %v2525 = vpack.c.bf16 %v2469, %v2468
    %v2526 = vpack.c.bf16 %v2471, %v2470
    %v2527 = vpack.c.bf16 %v2473, %v2472
    %v2528 = vpack.c.bf16 %v2475, %v2474
    %v2529 = vpack.c.bf16 %v2477, %v2476
    %v2530 = vpack.c.bf16 %v2479, %v2478
    %v2531 = vpack.c.bf16 %v2481, %v2480
    %v2532 = vpack.c.bf16 %v2483, %v2482
    %v2533 = vpack.c.bf16 %v2485, %v2484
    %v2534 = vpack.c.bf16 %v2487, %v2486
    %v2535 = vpack.c.bf16 %v2489, %v2488
    %v2536 = vpack.c.bf16 %v2491, %v2490
    %v2537 = vpack.c.bf16 %v2493, %v2492
    %v2538 = vpack.c.bf16 %v2495, %v2494
    %v2539 = vpack.c.bf16 %v2497, %v2496
    %v2540 = vpack.c.bf16 %v2499, %v2498
    %v2541 = vpack.c.bf16 %v2501, %v2500
    %v2542 = vpack.c.bf16 %v2503, %v2502
    %v2543 = vpack.c.bf16 %v2505, %v2504
    %v2544 = vpack.c.bf16 %v2507, %v2506
    %v2545 = vpack.c.bf16 %v2509, %v2508
    %v2546 = vpack.c.bf16 %v2511, %v2510
    %v2547 = vpack.c.bf16 %v2513, %v2512
    %v2548 = vpack.c.bf16 %v2515, %v2514
    %v2549 = vpack.c.bf16 %v2517, %v2516
    %v2582 = vunpack.c.l.b16 %v2518
    %v2583 = vunpack.c.h.b16 %v2518
    %v2584 = vunpack.c.l.b16 %v2519
    %v2585 = vunpack.c.h.b16 %v2519
    %v2586 = vunpack.c.l.b16 %v2520
    %v2587 = vunpack.c.h.b16 %v2520
    %v2588 = vunpack.c.l.b16 %v2521
    %v2589 = vunpack.c.h.b16 %v2521
    %v2590 = vunpack.c.l.b16 %v2522
    %v2591 = vunpack.c.h.b16 %v2522
    %v2592 = vunpack.c.l.b16 %v2523
    %v2593 = vunpack.c.h.b16 %v2523
    %v2594 = vunpack.c.l.b16 %v2524
    %v2595 = vunpack.c.h.b16 %v2524
    %v2596 = vunpack.c.l.b16 %v2525
    %v2597 = vunpack.c.h.b16 %v2525
    %v2598 = vunpack.c.l.b16 %v2526
    %v2599 = vunpack.c.h.b16 %v2526
    %v2600 = vunpack.c.l.b16 %v2527
    %v2601 = vunpack.c.h.b16 %v2527
    %v2602 = vunpack.c.l.b16 %v2528
    %v2603 = vunpack.c.h.b16 %v2528
    %v2604 = vunpack.c.l.b16 %v2529
    %v2605 = vunpack.c.h.b16 %v2529
    %v2606 = vunpack.c.l.b16 %v2530
    %v2607 = vunpack.c.h.b16 %v2530
    %v2608 = vunpack.c.l.b16 %v2531
    %v2609 = vunpack.c.h.b16 %v2531
    %v2610 = vunpack.c.l.b16 %v2532
    %v2611 = vunpack.c.h.b16 %v2532
    %v2612 = vunpack.c.l.b16 %v2533
    %v2613 = vunpack.c.h.b16 %v2533
    %v2614 = vunpack.c.l.b16 %v2534
    %v2615 = vunpack.c.h.b16 %v2534
    %v2616 = vunpack.c.l.b16 %v2535
    %v2617 = vunpack.c.h.b16 %v2535
    %v2618 = vunpack.c.l.b16 %v2536
    %v2619 = vunpack.c.h.b16 %v2536
    %v2620 = vunpack.c.l.b16 %v2537
    %v2621 = vunpack.c.h.b16 %v2537
    %v2622 = vunpack.c.l.b16 %v2538
    %v2623 = vunpack.c.h.b16 %v2538
    %v2624 = vunpack.c.l.b16 %v2539
    %v2625 = vunpack.c.h.b16 %v2539
    %v2626 = vunpack.c.l.b16 %v2540
    %v2627 = vunpack.c.h.b16 %v2540
    %v2628 = vunpack.c.l.b16 %v2541
    %v2629 = vunpack.c.h.b16 %v2541
    %v2630 = vunpack.c.l.b16 %v2542
    %v2631 = vunpack.c.h.b16 %v2542
    %v2632 = vunpack.c.l.b16 %v2543
    %v2633 = vunpack.c.h.b16 %v2543
    %v2634 = vunpack.c.l.b16 %v2544
    %v2635 = vunpack.c.h.b16 %v2544
    %v2636 = vunpack.c.l.b16 %v2545
    %v2637 = vunpack.c.h.b16 %v2545
    %v2638 = vunpack.c.l.b16 %v2546
    %v2639 = vunpack.c.h.b16 %v2546
    %v2640 = vunpack.c.l.b16 %v2547
    %v2641 = vunpack.c.h.b16 %v2547
    %v2642 = vunpack.c.l.b16 %v2548
    %v2643 = vunpack.c.h.b16 %v2548
    %v2644 = vunpack.c.l.b16 %v2549
    %v2645 = vunpack.c.h.b16 %v2549
    %v2646 = vpack.c.b16 %v2582, %v2582
    %v2647 = vpack.c.b16 %v2583, %v2583
    %v2648 = vpack.c.b16 %v2584, %v2584
    %v2649 = vpack.c.b16 %v2585, %v2585
    %v2650 = vpack.c.b16 %v2586, %v2586
    %v2651 = vpack.c.b16 %v2587, %v2587
    %v2652 = vpack.c.b16 %v2588, %v2588
    %v2653 = vpack.c.b16 %v2589, %v2589
    %v2654 = vpack.c.b16 %v2590, %v2590
    %v2655 = vpack.c.b16 %v2591, %v2591
    %v2656 = vpack.c.b16 %v2592, %v2592
    %v2657 = vpack.c.b16 %v2593, %v2593
    %v2658 = vpack.c.b16 %v2594, %v2594
    %v2659 = vpack.c.b16 %v2595, %v2595
    %v2660 = vpack.c.b16 %v2596, %v2596
    %v2661 = vpack.c.b16 %v2597, %v2597
    %v2662 = vpack.c.b16 %v2598, %v2598
    %v2663 = vpack.c.b16 %v2599, %v2599
    %v2664 = vpack.c.b16 %v2600, %v2600
    %v2665 = vpack.c.b16 %v2601, %v2601
    %v2666 = vpack.c.b16 %v2602, %v2602
    %v2667 = vpack.c.b16 %v2603, %v2603
    %v2668 = vpack.c.b16 %v2604, %v2604
    %v2669 = vpack.c.b16 %v2605, %v2605
    %v2670 = vpack.c.b16 %v2606, %v2606
    %v2671 = vpack.c.b16 %v2607, %v2607
    %v2672 = vpack.c.b16 %v2608, %v2608
    %v2673 = vpack.c.b16 %v2609, %v2609
    %v2674 = vpack.c.b16 %v2610, %v2610
    %v2675 = vpack.c.b16 %v2611, %v2611
    %v2676 = vpack.c.b16 %v2612, %v2612
    %v2677 = vpack.c.b16 %v2613, %v2613
    %v2678 = vpack.c.b16 %v2614, %v2614
    %v2679 = vpack.c.b16 %v2615, %v2615
    %v2680 = vpack.c.b16 %v2616, %v2616
    %v2681 = vpack.c.b16 %v2617, %v2617
    %v2682 = vpack.c.b16 %v2618, %v2618
    %v2683 = vpack.c.b16 %v2619, %v2619
    %v2684 = vpack.c.b16 %v2620, %v2620
    %v2685 = vpack.c.b16 %v2621, %v2621
    %v2686 = vpack.c.b16 %v2622, %v2622
    %v2687 = vpack.c.b16 %v2623, %v2623
    %v2688 = vpack.c.b16 %v2624, %v2624
    %v2689 = vpack.c.b16 %v2625, %v2625
    %v2690 = vpack.c.b16 %v2626, %v2626
    %v2691 = vpack.c.b16 %v2627, %v2627
    %v2692 = vpack.c.b16 %v2628, %v2628
    %v2693 = vpack.c.b16 %v2629, %v2629
    %v2694 = vpack.c.b16 %v2630, %v2630
    %v2695 = vpack.c.b16 %v2631, %v2631
    %v2696 = vpack.c.b16 %v2632, %v2632
    %v2697 = vpack.c.b16 %v2633, %v2633
    %v2698 = vpack.c.b16 %v2634, %v2634
    %v2699 = vpack.c.b16 %v2635, %v2635
    %v2700 = vpack.c.b16 %v2636, %v2636
    %v2701 = vpack.c.b16 %v2637, %v2637
    %v2702 = vpack.c.b16 %v2638, %v2638
    %v2703 = vpack.c.b16 %v2639, %v2639
    %v2704 = vpack.c.b16 %v2640, %v2640
    %v2705 = vpack.c.b16 %v2641, %v2641
    %v2706 = vpack.c.b16 %v2642, %v2642
    %v2707 = vpack.c.b16 %v2643, %v2643
    %v2708 = vpack.c.b16 %v2644, %v2644
    %v2709 = vpack.c.b16 %v2645, %v2645
    %2710 = vrot.lane.b32.xlu0 %v2646, 64
    %v2711 = vpop.permute.xlu0 %2710
    %2712 = vrot.lane.b32.xlu0 %v2647, 64
    %v2713 = vpop.permute.xlu0 %2712
    %2714 = vrot.lane.b32.xlu0 %v2648, 64
    %v2715 = vpop.permute.xlu0 %2714
    %2716 = vrot.lane.b32.xlu0 %v2649, 64
    %v2717 = vpop.permute.xlu0 %2716
    %2718 = vrot.lane.b32.xlu0 %v2650, 64
    %v2719 = vpop.permute.xlu0 %2718
    %2720 = vrot.lane.b32.xlu0 %v2651, 64
    %v2721 = vpop.permute.xlu0 %2720
    %2722 = vrot.lane.b32.xlu0 %v2652, 64
    %v2723 = vpop.permute.xlu0 %2722
    %2724 = vrot.lane.b32.xlu0 %v2653, 64
    %v2725 = vpop.permute.xlu0 %2724
    %2726 = vrot.lane.b32.xlu0 %v2654, 64
    %v2727 = vpop.permute.xlu0 %2726
    %2728 = vrot.lane.b32.xlu0 %v2655, 64
    %v2729 = vpop.permute.xlu0 %2728
    %2730 = vrot.lane.b32.xlu0 %v2656, 64
    %v2731 = vpop.permute.xlu0 %2730
    %2732 = vrot.lane.b32.xlu0 %v2657, 64
    %v2733 = vpop.permute.xlu0 %2732
    %2734 = vrot.lane.b32.xlu0 %v2658, 64
    %v2735 = vpop.permute.xlu0 %2734
    %2736 = vrot.lane.b32.xlu0 %v2659, 64
    %v2737 = vpop.permute.xlu0 %2736
    %2738 = vrot.lane.b32.xlu0 %v2660, 64
    %v2739 = vpop.permute.xlu0 %2738
    %2740 = vrot.lane.b32.xlu0 %v2661, 64
    %v2741 = vpop.permute.xlu0 %2740
    %2742 = vrot.lane.b32.xlu0 %v2662, 64
    %v2743 = vpop.permute.xlu0 %2742
    %2744 = vrot.lane.b32.xlu0 %v2663, 64
    %v2745 = vpop.permute.xlu0 %2744
    %2746 = vrot.lane.b32.xlu0 %v2664, 64
    %v2747 = vpop.permute.xlu0 %2746
    %2748 = vrot.lane.b32.xlu0 %v2665, 64
    %v2749 = vpop.permute.xlu0 %2748
    %2750 = vrot.lane.b32.xlu0 %v2666, 64
    %v2751 = vpop.permute.xlu0 %2750
    %2752 = vrot.lane.b32.xlu0 %v2667, 64
    %v2753 = vpop.permute.xlu0 %2752
    %2754 = vrot.lane.b32.xlu0 %v2668, 64
    %v2755 = vpop.permute.xlu0 %2754
    %2756 = vrot.lane.b32.xlu0 %v2669, 64
    %v2757 = vpop.permute.xlu0 %2756
    %2758 = vrot.lane.b32.xlu0 %v2670, 64
    %v2759 = vpop.permute.xlu0 %2758
    %2760 = vrot.lane.b32.xlu0 %v2671, 64
    %v2761 = vpop.permute.xlu0 %2760
    %2762 = vrot.lane.b32.xlu0 %v2672, 64
    %v2763 = vpop.permute.xlu0 %2762
    %2764 = vrot.lane.b32.xlu0 %v2673, 64
    %v2765 = vpop.permute.xlu0 %2764
    %2766 = vrot.lane.b32.xlu0 %v2674, 64
    %v2767 = vpop.permute.xlu0 %2766
    %2768 = vrot.lane.b32.xlu0 %v2675, 64
    %v2769 = vpop.permute.xlu0 %2768
    %2770 = vrot.lane.b32.xlu0 %v2676, 64
    %v2771 = vpop.permute.xlu0 %2770
    %2772 = vrot.lane.b32.xlu0 %v2677, 64
    %v2773 = vpop.permute.xlu0 %2772
    %2774 = vrot.lane.b32.xlu0 %v2678, 64
    %v2775 = vpop.permute.xlu0 %2774
    %2776 = vrot.lane.b32.xlu0 %v2679, 64
    %v2777 = vpop.permute.xlu0 %2776
    %2778 = vrot.lane.b32.xlu0 %v2680, 64
    %v2779 = vpop.permute.xlu0 %2778
    %2780 = vrot.lane.b32.xlu0 %v2681, 64
    %v2781 = vpop.permute.xlu0 %2780
    %2782 = vrot.lane.b32.xlu0 %v2682, 64
    %v2783 = vpop.permute.xlu0 %2782
    %2784 = vrot.lane.b32.xlu0 %v2683, 64
    %v2785 = vpop.permute.xlu0 %2784
    %2786 = vrot.lane.b32.xlu0 %v2684, 64
    %v2787 = vpop.permute.xlu0 %2786
    %2788 = vrot.lane.b32.xlu0 %v2685, 64
    %v2789 = vpop.permute.xlu0 %2788
    %2790 = vrot.lane.b32.xlu0 %v2686, 64
    %v2791 = vpop.permute.xlu0 %2790
    %2792 = vrot.lane.b32.xlu0 %v2687, 64
    %v2793 = vpop.permute.xlu0 %2792
    %2794 = vrot.lane.b32.xlu0 %v2688, 64
    %v2795 = vpop.permute.xlu0 %2794
    %2796 = vrot.lane.b32.xlu0 %v2689, 64
    %v2797 = vpop.permute.xlu0 %2796
    %2798 = vrot.lane.b32.xlu0 %v2690, 64
    %v2799 = vpop.permute.xlu0 %2798
    %2800 = vrot.lane.b32.xlu0 %v2691, 64
    %v2801 = vpop.permute.xlu0 %2800
    %2802 = vrot.lane.b32.xlu0 %v2692, 64
    %v2803 = vpop.permute.xlu0 %2802
    %2804 = vrot.lane.b32.xlu0 %v2693, 64
    %v2805 = vpop.permute.xlu0 %2804
    %2806 = vrot.lane.b32.xlu0 %v2694, 64
    %v2807 = vpop.permute.xlu0 %2806
    %2808 = vrot.lane.b32.xlu0 %v2695, 64
    %v2809 = vpop.permute.xlu0 %2808
    %2810 = vrot.lane.b32.xlu0 %v2696, 64
    %v2811 = vpop.permute.xlu0 %2810
    %2812 = vrot.lane.b32.xlu0 %v2697, 64
    %v2813 = vpop.permute.xlu0 %2812
    %2814 = vrot.lane.b32.xlu0 %v2698, 64
    %v2815 = vpop.permute.xlu0 %2814
    %2816 = vrot.lane.b32.xlu0 %v2699, 64
    %v2817 = vpop.permute.xlu0 %2816
    %2818 = vrot.lane.b32.xlu0 %v2700, 64
    %v2819 = vpop.permute.xlu0 %2818
    %2820 = vrot.lane.b32.xlu0 %v2701, 64
    %v2821 = vpop.permute.xlu0 %2820
    %2822 = vrot.lane.b32.xlu0 %v2702, 64
    %v2823 = vpop.permute.xlu0 %2822
    %2824 = vrot.lane.b32.xlu0 %v2703, 64
    %v2825 = vpop.permute.xlu0 %2824
    %2826 = vrot.lane.b32.xlu0 %v2704, 64
    %v2827 = vpop.permute.xlu0 %2826
    %2828 = vrot.lane.b32.xlu0 %v2705, 64
    %v2829 = vpop.permute.xlu0 %2828
    %2830 = vrot.lane.b32.xlu0 %v2706, 64
    %v2831 = vpop.permute.xlu0 %2830
    %2832 = vrot.lane.b32.xlu0 %v2707, 64
    %v2833 = vpop.permute.xlu0 %2832
    %2834 = vrot.lane.b32.xlu0 %v2708, 64
    %v2835 = vpop.permute.xlu0 %2834
    %2836 = vrot.lane.b32.xlu0 %v2709, 64
    %v2837 = vpop.permute.xlu0 %2836
    %vm2902 = vcmask 1043968
    %2903 = vst.msk [vmem:[#allocation2] sm:$0xf] %vm2902, %v2711
    %2904 = vst.msk [vmem:[#allocation2 + $0xc] sm:$0xf] %vm2902, %v2713
    %2905 = vst.msk [vmem:[#allocation2 + $0x18] sm:$0xf] %vm2902, %v2715
    %2906 = vst.msk [vmem:[#allocation2 + $0x24] sm:$0xf] %vm2902, %v2717
    %2907 = vst.msk [vmem:[#allocation2 + $0x30] sm:$0xf] %vm2902, %v2719
    %2908 = vst.msk [vmem:[#allocation2 + $0x3c] sm:$0xf] %vm2902, %v2721
    %2909 = vst.msk [vmem:[#allocation2 + $0x48] sm:$0xf] %vm2902, %v2723
    %2910 = vst.msk [vmem:[#allocation2 + $0x54] sm:$0xf] %vm2902, %v2725
    %2911 = vst.msk [vmem:[#allocation2 + $0x60] sm:$0xf] %vm2902, %v2727
    %2912 = vst.msk [vmem:[#allocation2 + $0x6c] sm:$0xf] %vm2902, %v2729
    %2913 = vst.msk [vmem:[#allocation2 + $0x78] sm:$0xf] %vm2902, %v2731
    %2914 = vst.msk [vmem:[#allocation2 + $0x84] sm:$0xf] %vm2902, %v2733
    %2915 = vst.msk [vmem:[#allocation2 + $0x90] sm:$0xf] %vm2902, %v2735
    %2916 = vst.msk [vmem:[#allocation2 + $0x9c] sm:$0xf] %vm2902, %v2737
    %2917 = vst.msk [vmem:[#allocation2 + $0xa8] sm:$0xf] %vm2902, %v2739
    %2918 = vst.msk [vmem:[#allocation2 + $0xb4] sm:$0xf] %vm2902, %v2741
    %2919 = vst.msk [vmem:[#allocation2 + $0xc0] sm:$0xf] %vm2902, %v2743
    %2920 = vst.msk [vmem:[#allocation2 + $0xcc] sm:$0xf] %vm2902, %v2745
    %2921 = vst.msk [vmem:[#allocation2 + $0xd8] sm:$0xf] %vm2902, %v2747
    %2922 = vst.msk [vmem:[#allocation2 + $0xe4] sm:$0xf] %vm2902, %v2749
    %2923 = vst.msk [vmem:[#allocation2 + $0xf0] sm:$0xf] %vm2902, %v2751
    %2924 = vst.msk [vmem:[#allocation2 + $0xfc] sm:$0xf] %vm2902, %v2753
    %2925 = vst.msk [vmem:[#allocation2 + $0x108] sm:$0xf] %vm2902, %v2755
    %2926 = vst.msk [vmem:[#allocation2 + $0x114] sm:$0xf] %vm2902, %v2757
    %2927 = vst.msk [vmem:[#allocation2 + $0x120] sm:$0xf] %vm2902, %v2759
    %2928 = vst.msk [vmem:[#allocation2 + $0x12c] sm:$0xf] %vm2902, %v2761
    %2929 = vst.msk [vmem:[#allocation2 + $0x138] sm:$0xf] %vm2902, %v2763
    %2930 = vst.msk [vmem:[#allocation2 + $0x144] sm:$0xf] %vm2902, %v2765
    %2931 = vst.msk [vmem:[#allocation2 + $0x150] sm:$0xf] %vm2902, %v2767
    %2932 = vst.msk [vmem:[#allocation2 + $0x15c] sm:$0xf] %vm2902, %v2769
    %2933 = vst.msk [vmem:[#allocation2 + $0x168] sm:$0xf] %vm2902, %v2771
    %2934 = vst.msk [vmem:[#allocation2 + $0x174] sm:$0xf] %vm2902, %v2773
    %2935 = vst.msk [vmem:[#allocation2 + $0x180] sm:$0xf] %vm2902, %v2775
    %2936 = vst.msk [vmem:[#allocation2 + $0x18c] sm:$0xf] %vm2902, %v2777
    %2937 = vst.msk [vmem:[#allocation2 + $0x198] sm:$0xf] %vm2902, %v2779
    %2938 = vst.msk [vmem:[#allocation2 + $0x1a4] sm:$0xf] %vm2902, %v2781
    %2939 = vst.msk [vmem:[#allocation2 + $0x1b0] sm:$0xf] %vm2902, %v2783
    %2940 = vst.msk [vmem:[#allocation2 + $0x1bc] sm:$0xf] %vm2902, %v2785
    %2941 = vst.msk [vmem:[#allocation2 + $0x1c8] sm:$0xf] %vm2902, %v2787
    %2942 = vst.msk [vmem:[#allocation2 + $0x1d4] sm:$0xf] %vm2902, %v2789
    %2943 = vst.msk [vmem:[#allocation2 + $0x1e0] sm:$0xf] %vm2902, %v2791
    %2944 = vst.msk [vmem:[#allocation2 + $0x1ec] sm:$0xf] %vm2902, %v2793
    %2945 = vst.msk [vmem:[#allocation2 + $0x1f8] sm:$0xf] %vm2902, %v2795
    %2946 = vst.msk [vmem:[#allocation2 + $0x204] sm:$0xf] %vm2902, %v2797
    %2947 = vst.msk [vmem:[#allocation2 + $0x210] sm:$0xf] %vm2902, %v2799
    %2948 = vst.msk [vmem:[#allocation2 + $0x21c] sm:$0xf] %vm2902, %v2801
    %2949 = vst.msk [vmem:[#allocation2 + $0x228] sm:$0xf] %vm2902, %v2803
    %2950 = vst.msk [vmem:[#allocation2 + $0x234] sm:$0xf] %vm2902, %v2805
    %2951 = vst.msk [vmem:[#allocation2 + $0x240] sm:$0xf] %vm2902, %v2807
    %2952 = vst.msk [vmem:[#allocation2 + $0x24c] sm:$0xf] %vm2902, %v2809
    %2953 = vst.msk [vmem:[#allocation2 + $0x258] sm:$0xf] %vm2902, %v2811
    %2954 = vst.msk [vmem:[#allocation2 + $0x264] sm:$0xf] %vm2902, %v2813
    %2955 = vst.msk [vmem:[#allocation2 + $0x270] sm:$0xf] %vm2902, %v2815
    %2956 = vst.msk [vmem:[#allocation2 + $0x27c] sm:$0xf] %vm2902, %v2817
    %2957 = vst.msk [vmem:[#allocation2 + $0x288] sm:$0xf] %vm2902, %v2819
    %2958 = vst.msk [vmem:[#allocation2 + $0x294] sm:$0xf] %vm2902, %v2821
    %2959 = vst.msk [vmem:[#allocation2 + $0x2a0] sm:$0xf] %vm2902, %v2823
    %2960 = vst.msk [vmem:[#allocation2 + $0x2ac] sm:$0xf] %vm2902, %v2825
    %2961 = vst.msk [vmem:[#allocation2 + $0x2b8] sm:$0xf] %vm2902, %v2827
    %2962 = vst.msk [vmem:[#allocation2 + $0x2c4] sm:$0xf] %vm2902, %v2829
    %2963 = vst.msk [vmem:[#allocation2 + $0x2d0] sm:$0xf] %vm2902, %v2831
    %2964 = vst.msk [vmem:[#allocation2 + $0x2dc] sm:$0xf] %vm2902, %v2833
    %2965 = vst.msk [vmem:[#allocation2 + $0x2e8] sm:$0xf] %vm2902, %v2835
    %2966 = vst.msk [vmem:[#allocation2 + $0x2f4] sm:$0xf] %vm2902, %v2837
    %s2967 = scalar_lea.vmem [#allocation3], 1024
    %v2968 = vld [vmem:[%s2967] sm:$0xff]
    %v2969 = vld [vmem:[%s2967 + $0x8] sm:$0xff]
    %v2970 = vld [vmem:[%s2967 + $0x10] sm:$0xff]
    %v2971 = vld [vmem:[%s2967 + $0x18] sm:$0xff]
    %v2972 = vld [vmem:[%s2967 + $0x20] sm:$0xff]
    %v2973 = vld [vmem:[%s2967 + $0x28] sm:$0xff]
    %v2974 = vld [vmem:[%s2967 + $0x30] sm:$0xff]
    %v2975 = vld [vmem:[%s2967 + $0x38] sm:$0xff]
    %v2976 = vld [vmem:[%s2967 + $0x40] sm:$0xff]
    %v2977 = vld [vmem:[%s2967 + $0x48] sm:$0xff]
    %v2978 = vld [vmem:[%s2967 + $0x50] sm:$0xff]
    %v2979 = vld [vmem:[%s2967 + $0x58] sm:$0xff]
    %v2980 = vld [vmem:[%s2967 + $0x60] sm:$0xff]
    %v2981 = vld [vmem:[%s2967 + $0x68] sm:$0xff]
    %v2982 = vld [vmem:[%s2967 + $0x70] sm:$0xff]
    %v2983 = vld [vmem:[%s2967 + $0x78] sm:$0xff]
    %v2984 = vld [vmem:[%s2967 + $0x80] sm:$0xff]
    %v2985 = vld [vmem:[%s2967 + $0x88] sm:$0xff]
    %v2986 = vld [vmem:[%s2967 + $0x90] sm:$0xff]
    %v2987 = vld [vmem:[%s2967 + $0x98] sm:$0xff]
    %v2988 = vld [vmem:[%s2967 + $0xa0] sm:$0xff]
    %v2989 = vld [vmem:[%s2967 + $0xa8] sm:$0xff]
    %v2990 = vld [vmem:[%s2967 + $0xb0] sm:$0xff]
    %v2991 = vld [vmem:[%s2967 + $0xb8] sm:$0xff]
    %v2992 = vld [vmem:[%s2967 + $0xc0] sm:$0xff]
    %v2993 = vld [vmem:[%s2967 + $0xc8] sm:$0xff]
    %v2994 = vld [vmem:[%s2967 + $0xd0] sm:$0xff]
    %v2995 = vld [vmem:[%s2967 + $0xd8] sm:$0xff]
    %v2996 = vld [vmem:[%s2967 + $0xe0] sm:$0xff]
    %v2997 = vld [vmem:[%s2967 + $0xe8] sm:$0xff]
    %v2998 = vld [vmem:[%s2967 + $0xf0] sm:$0xff]
    %v2999 = vld [vmem:[%s2967 + $0xf8] sm:$0xff]
    %v3000 = vld [vmem:[%s2967 + $0x100] sm:$0xff]
    %v3001 = vld [vmem:[%s2967 + $0x108] sm:$0xff]
    %v3002 = vld [vmem:[%s2967 + $0x110] sm:$0xff]
    %v3003 = vld [vmem:[%s2967 + $0x118] sm:$0xff]
    %v3004 = vld [vmem:[%s2967 + $0x120] sm:$0xff]
    %v3005 = vld [vmem:[%s2967 + $0x128] sm:$0xff]
    %v3006 = vld [vmem:[%s2967 + $0x130] sm:$0xff]
    %v3007 = vld [vmem:[%s2967 + $0x138] sm:$0xff]
    %v3008 = vld [vmem:[%s2967 + $0x140] sm:$0xff]
    %v3009 = vld [vmem:[%s2967 + $0x148] sm:$0xff]
    %v3010 = vld [vmem:[%s2967 + $0x150] sm:$0xff]
    %v3011 = vld [vmem:[%s2967 + $0x158] sm:$0xff]
    %v3012 = vld [vmem:[%s2967 + $0x160] sm:$0xff]
    %v3013 = vld [vmem:[%s2967 + $0x168] sm:$0xff]
    %v3014 = vld [vmem:[%s2967 + $0x170] sm:$0xff]
    %v3015 = vld [vmem:[%s2967 + $0x178] sm:$0xff]
    %v3016 = vld [vmem:[%s2967 + $0x180] sm:$0xff]
    %v3017 = vld [vmem:[%s2967 + $0x188] sm:$0xff]
    %v3018 = vld [vmem:[%s2967 + $0x190] sm:$0xff]
    %v3019 = vld [vmem:[%s2967 + $0x198] sm:$0xff]
    %v3020 = vld [vmem:[%s2967 + $0x1a0] sm:$0xff]
    %v3021 = vld [vmem:[%s2967 + $0x1a8] sm:$0xff]
    %v3022 = vld [vmem:[%s2967 + $0x1b0] sm:$0xff]
    %v3023 = vld [vmem:[%s2967 + $0x1b8] sm:$0xff]
    %v3024 = vld [vmem:[%s2967 + $0x1c0] sm:$0xff]
    %v3025 = vld [vmem:[%s2967 + $0x1c8] sm:$0xff]
    %v3026 = vld [vmem:[%s2967 + $0x1d0] sm:$0xff]
    %v3027 = vld [vmem:[%s2967 + $0x1d8] sm:$0xff]
    %v3028 = vld [vmem:[%s2967 + $0x1e0] sm:$0xff]
    %v3029 = vld [vmem:[%s2967 + $0x1e8] sm:$0xff]
    %v3030 = vld [vmem:[%s2967 + $0x1f0] sm:$0xff]
    %v3031 = vld [vmem:[%s2967 + $0x1f8] sm:$0xff]
    %v3032 = vpack.c.bf16 %v2969, %v2968
    %v3033 = vpack.c.bf16 %v2971, %v2970
    %v3034 = vpack.c.bf16 %v2973, %v2972
    %v3035 = vpack.c.bf16 %v2975, %v2974
    %v3036 = vpack.c.bf16 %v2977, %v2976
    %v3037 = vpack.c.bf16 %v2979, %v2978
    %v3038 = vpack.c.bf16 %v2981, %v2980
    %v3039 = vpack.c.bf16 %v2983, %v2982
    %v3040 = vpack.c.bf16 %v2985, %v2984
    %v3041 = vpack.c.bf16 %v2987, %v2986
    %v3042 = vpack.c.bf16 %v2989, %v2988
    %v3043 = vpack.c.bf16 %v2991, %v2990
    %v3044 = vpack.c.bf16 %v2993, %v2992
    %v3045 = vpack.c.bf16 %v2995, %v2994
    %v3046 = vpack.c.bf16 %v2997, %v2996
    %v3047 = vpack.c.bf16 %v2999, %v2998
    %v3048 = vpack.c.bf16 %v3001, %v3000
    %v3049 = vpack.c.bf16 %v3003, %v3002
    %v3050 = vpack.c.bf16 %v3005, %v3004
    %v3051 = vpack.c.bf16 %v3007, %v3006
    %v3052 = vpack.c.bf16 %v3009, %v3008
    %v3053 = vpack.c.bf16 %v3011, %v3010
    %v3054 = vpack.c.bf16 %v3013, %v3012
    %v3055 = vpack.c.bf16 %v3015, %v3014
    %v3056 = vpack.c.bf16 %v3017, %v3016
    %v3057 = vpack.c.bf16 %v3019, %v3018
    %v3058 = vpack.c.bf16 %v3021, %v3020
    %v3059 = vpack.c.bf16 %v3023, %v3022
    %v3060 = vpack.c.bf16 %v3025, %v3024
    %v3061 = vpack.c.bf16 %v3027, %v3026
    %v3062 = vpack.c.bf16 %v3029, %v3028
    %v3063 = vpack.c.bf16 %v3031, %v3030
    %s3064 = scalar_lea.vmem %s1, 128
    %v3065 = vld [vmem:[%s3064] sm:$0xf]
    %v3066 = vld [vmem:[%s3064 + $0x4] sm:$0xf]
    %v3067 = vld [vmem:[%s3064 + $0x8] sm:$0xf]
    %v3068 = vld [vmem:[%s3064 + $0xc] sm:$0xf]
    %v3069 = vld [vmem:[%s3064 + $0x10] sm:$0xf]
    %v3070 = vld [vmem:[%s3064 + $0x14] sm:$0xf]
    %v3071 = vld [vmem:[%s3064 + $0x18] sm:$0xf]
    %v3072 = vld [vmem:[%s3064 + $0x1c] sm:$0xf]
    %v3073 = vld [vmem:[%s3064 + $0x20] sm:$0xf]
    %v3074 = vld [vmem:[%s3064 + $0x24] sm:$0xf]
    %v3075 = vld [vmem:[%s3064 + $0x28] sm:$0xf]
    %v3076 = vld [vmem:[%s3064 + $0x2c] sm:$0xf]
    %v3077 = vld [vmem:[%s3064 + $0x30] sm:$0xf]
    %v3078 = vld [vmem:[%s3064 + $0x34] sm:$0xf]
    %v3079 = vld [vmem:[%s3064 + $0x38] sm:$0xf]
    %v3080 = vld [vmem:[%s3064 + $0x3c] sm:$0xf]
    %s3081 = scalar_lea.vmem [#allocation5], 2
    %v3082 = vld [vmem:[%s3081] sm:$0x1]
    %v3084 = vlaneseq
    %v3085 = vshrl.u32 %v3084, 7
    %v3086 = vsub.s32 0, %v3085
    %v3087 = vrot.slane %v3082, %v3086
    %v3105 = vunpack.c.l.b16 %v3065
    %v3106 = vunpack.c.l.b16 %v3066
    %v3107 = vunpack.c.l.b16 %v3067
    %v3108 = vunpack.c.l.b16 %v3068
    %v3109 = vunpack.c.l.b16 %v3069
    %v3110 = vunpack.c.l.b16 %v3070
    %v3111 = vunpack.c.l.b16 %v3071
    %v3112 = vunpack.c.l.b16 %v3072
    %v3113 = vunpack.c.l.b16 %v3073
    %v3114 = vunpack.c.l.b16 %v3074
    %v3115 = vunpack.c.l.b16 %v3075
    %v3116 = vunpack.c.l.b16 %v3076
    %v3117 = vunpack.c.l.b16 %v3077
    %v3118 = vunpack.c.l.b16 %v3078
    %v3119 = vunpack.c.l.b16 %v3079
    %v3120 = vunpack.c.l.b16 %v3080
    %v3121 = vpack.c.b16 %v3106, %v3105
    %v3122 = vpack.c.b16 %v3108, %v3107
    %v3123 = vpack.c.b16 %v3110, %v3109
    %v3124 = vpack.c.b16 %v3112, %v3111
    %v3125 = vpack.c.b16 %v3114, %v3113
    %v3126 = vpack.c.b16 %v3116, %v3115
    %v3127 = vpack.c.b16 %v3118, %v3117
    %v3128 = vpack.c.b16 %v3120, %v3119
    %3137 = vmatprep.subr.bf16.mxu0 0
    %3138 = vmatpush1.bf16.msra.mxu0 %v3128
    %3139 = vmatprep.subr.bf16.mxu0 0
    %3140 = vmatpush1.bf16.msra.mxu0 %v3127
    %3141 = vmatprep.subr.bf16.mxu0 0
    %3142 = vmatpush1.bf16.msra.mxu0 %v3126
    %3143 = vmatprep.subr.bf16.mxu0 0
    %3144 = vmatpush1.bf16.msra.mxu0 %v3125
    %3145 = vmatprep.subr.bf16.mxu0 0
    %3146 = vmatpush1.bf16.msra.mxu0 %v3124
    %3147 = vmatprep.subr.bf16.mxu0 0
    %3148 = vmatpush1.bf16.msra.mxu0 %v3123
    %3149 = vmatprep.subr.bf16.mxu0 0
    %3150 = vmatpush1.bf16.msra.mxu0 %v3122
    %3151 = vmatprep.subr.bf16.mxu0 0
    %3152 = vmatpush1.bf16.msra.mxu0 %v3121
    %3153 = vmatprep.subr.bf16.mxu0 0
    %3154 = vmatpush2.bf16.msra.mxu0 0
    %3155 = vmatprep.subr.bf16.mxu0 0
    %3156 = vmatpush2.bf16.msra.mxu0 0
    %3157 = vmatprep.subr.bf16.mxu0 0
    %3158 = vmatpush2.bf16.msra.mxu0 0
    %3159 = vmatprep.subr.bf16.mxu0 0
    %3160 = vmatpush2.bf16.msra.mxu0 0
    %3161 = vmatprep.subr.bf16.mxu0 0
    %3162 = vmatpush2.bf16.msra.mxu0 0
    %3163 = vmatprep.subr.bf16.mxu0 0
    %3164 = vmatpush2.bf16.msra.mxu0 0
    %3165 = vmatprep.subr.bf16.mxu0 0
    %3166 = vmatpush2.bf16.msra.mxu0 0
    %3167 = vmatprep.subr.bf16.mxu0 0
    %3168 = vmatpush2.bf16.msra.mxu0 0
    %3169 = vmatprep.mubr.bf16.mxu0 0
    %3170 = vmatmul.mubr.bf16.gmra.mxu0 %v3032
    %v3171 = vpop.f32.mrf.mxu0
    %v3172 = vadd.f32 %v3087, %v3171
    %v3173 = vpop.f32.mrf.mxu0
    %v3174 = vpop.f32.mrf.mxu0
    %v3175 = vadd.f32 %v3087, %v3174
    %v3176 = vpop.f32.mrf.mxu0
    %3177 = vmatprep.mubr.bf16.mxu0 0
    %3178 = vmatmul.mubr.bf16.gmra.mxu0 %v3033
    %v3179 = vpop.f32.mrf.mxu0
    %v3180 = vadd.f32 %v3087, %v3179
    %v3181 = vpop.f32.mrf.mxu0
    %v3182 = vpop.f32.mrf.mxu0
    %v3183 = vadd.f32 %v3087, %v3182
    %v3184 = vpop.f32.mrf.mxu0
    %3185 = vmatprep.mubr.bf16.mxu0 0
    %3186 = vmatmul.mubr.bf16.gmra.mxu0 %v3034
    %v3187 = vpop.f32.mrf.mxu0
    %v3188 = vadd.f32 %v3087, %v3187
    %v3189 = vpop.f32.mrf.mxu0
    %v3190 = vpop.f32.mrf.mxu0
    %v3191 = vadd.f32 %v3087, %v3190
    %v3192 = vpop.f32.mrf.mxu0
    %3193 = vmatprep.mubr.bf16.mxu0 0
    %3194 = vmatmul.mubr.bf16.gmra.mxu0 %v3035
    %v3195 = vpop.f32.mrf.mxu0
    %v3196 = vadd.f32 %v3087, %v3195
    %v3197 = vpop.f32.mrf.mxu0
    %v3198 = vpop.f32.mrf.mxu0
    %v3199 = vadd.f32 %v3087, %v3198
    %v3200 = vpop.f32.mrf.mxu0
    %3201 = vmatprep.mubr.bf16.mxu0 0
    %3202 = vmatmul.mubr.bf16.gmra.mxu0 %v3036
    %v3203 = vpop.f32.mrf.mxu0
    %v3204 = vadd.f32 %v3087, %v3203
    %v3205 = vpop.f32.mrf.mxu0
    %v3206 = vpop.f32.mrf.mxu0
    %v3207 = vadd.f32 %v3087, %v3206
    %v3208 = vpop.f32.mrf.mxu0
    %3209 = vmatprep.mubr.bf16.mxu0 0
    %3210 = vmatmul.mubr.bf16.gmra.mxu0 %v3037
    %v3211 = vpop.f32.mrf.mxu0
    %v3212 = vadd.f32 %v3087, %v3211
    %v3213 = vpop.f32.mrf.mxu0
    %v3214 = vpop.f32.mrf.mxu0
    %v3215 = vadd.f32 %v3087, %v3214
    %v3216 = vpop.f32.mrf.mxu0
    %3217 = vmatprep.mubr.bf16.mxu0 0
    %3218 = vmatmul.mubr.bf16.gmra.mxu0 %v3038
    %v3219 = vpop.f32.mrf.mxu0
    %v3220 = vadd.f32 %v3087, %v3219
    %v3221 = vpop.f32.mrf.mxu0
    %v3222 = vpop.f32.mrf.mxu0
    %v3223 = vadd.f32 %v3087, %v3222
    %v3224 = vpop.f32.mrf.mxu0
    %3225 = vmatprep.mubr.bf16.mxu0 0
    %3226 = vmatmul.mubr.bf16.gmra.mxu0 %v3039
    %v3227 = vpop.f32.mrf.mxu0
    %v3228 = vadd.f32 %v3087, %v3227
    %v3229 = vpop.f32.mrf.mxu0
    %v3230 = vpop.f32.mrf.mxu0
    %v3231 = vadd.f32 %v3087, %v3230
    %v3232 = vpop.f32.mrf.mxu0
    %3233 = vmatprep.mubr.bf16.mxu0 0
    %3234 = vmatmul.mubr.bf16.gmra.mxu0 %v3040
    %v3235 = vpop.f32.mrf.mxu0
    %v3236 = vadd.f32 %v3087, %v3235
    %v3237 = vpop.f32.mrf.mxu0
    %v3238 = vpop.f32.mrf.mxu0
    %v3239 = vadd.f32 %v3087, %v3238
    %v3240 = vpop.f32.mrf.mxu0
    %3241 = vmatprep.mubr.bf16.mxu0 0
    %3242 = vmatmul.mubr.bf16.gmra.mxu0 %v3041
    %v3243 = vpop.f32.mrf.mxu0
    %v3244 = vadd.f32 %v3087, %v3243
    %v3245 = vpop.f32.mrf.mxu0
    %v3246 = vpop.f32.mrf.mxu0
    %v3247 = vadd.f32 %v3087, %v3246
    %v3248 = vpop.f32.mrf.mxu0
    %3249 = vmatprep.mubr.bf16.mxu0 0
    %3250 = vmatmul.mubr.bf16.gmra.mxu0 %v3042
    %v3251 = vpop.f32.mrf.mxu0
    %v3252 = vadd.f32 %v3087, %v3251
    %v3253 = vpop.f32.mrf.mxu0
    %v3254 = vpop.f32.mrf.mxu0
    %v3255 = vadd.f32 %v3087, %v3254
    %v3256 = vpop.f32.mrf.mxu0
    %3257 = vmatprep.mubr.bf16.mxu0 0
    %3258 = vmatmul.mubr.bf16.gmra.mxu0 %v3043
    %v3259 = vpop.f32.mrf.mxu0
    %v3260 = vadd.f32 %v3087, %v3259
    %v3261 = vpop.f32.mrf.mxu0
    %v3262 = vpop.f32.mrf.mxu0
    %v3263 = vadd.f32 %v3087, %v3262
    %v3264 = vpop.f32.mrf.mxu0
    %3265 = vmatprep.mubr.bf16.mxu0 0
    %3266 = vmatmul.mubr.bf16.gmra.mxu0 %v3044
    %v3267 = vpop.f32.mrf.mxu0
    %v3268 = vadd.f32 %v3087, %v3267
    %v3269 = vpop.f32.mrf.mxu0
    %v3270 = vpop.f32.mrf.mxu0
    %v3271 = vadd.f32 %v3087, %v3270
    %v3272 = vpop.f32.mrf.mxu0
    %3273 = vmatprep.mubr.bf16.mxu0 0
    %3274 = vmatmul.mubr.bf16.gmra.mxu0 %v3045
    %v3275 = vpop.f32.mrf.mxu0
    %v3276 = vadd.f32 %v3087, %v3275
    %v3277 = vpop.f32.mrf.mxu0
    %v3278 = vpop.f32.mrf.mxu0
    %v3279 = vadd.f32 %v3087, %v3278
    %v3280 = vpop.f32.mrf.mxu0
    %3281 = vmatprep.mubr.bf16.mxu0 0
    %3282 = vmatmul.mubr.bf16.gmra.mxu0 %v3046
    %v3283 = vpop.f32.mrf.mxu0
    %v3284 = vadd.f32 %v3087, %v3283
    %v3285 = vpop.f32.mrf.mxu0
    %v3286 = vpop.f32.mrf.mxu0
    %v3287 = vadd.f32 %v3087, %v3286
    %v3288 = vpop.f32.mrf.mxu0
    %3289 = vmatprep.mubr.bf16.mxu0 0
    %3290 = vmatmul.mubr.bf16.gmra.mxu0 %v3047
    %v3291 = vpop.f32.mrf.mxu0
    %v3292 = vadd.f32 %v3087, %v3291
    %v3293 = vpop.f32.mrf.mxu0
    %v3294 = vpop.f32.mrf.mxu0
    %v3295 = vadd.f32 %v3087, %v3294
    %v3296 = vpop.f32.mrf.mxu0
    %3297 = vmatprep.mubr.bf16.mxu0 0
    %3298 = vmatmul.mubr.bf16.gmra.mxu0 %v3048
    %v3299 = vpop.f32.mrf.mxu0
    %v3300 = vadd.f32 %v3087, %v3299
    %v3301 = vpop.f32.mrf.mxu0
    %v3302 = vpop.f32.mrf.mxu0
    %v3303 = vadd.f32 %v3087, %v3302
    %v3304 = vpop.f32.mrf.mxu0
    %3305 = vmatprep.mubr.bf16.mxu0 0
    %3306 = vmatmul.mubr.bf16.gmra.mxu0 %v3049
    %v3307 = vpop.f32.mrf.mxu0
    %v3308 = vadd.f32 %v3087, %v3307
    %v3309 = vpop.f32.mrf.mxu0
    %v3310 = vpop.f32.mrf.mxu0
    %v3311 = vadd.f32 %v3087, %v3310
    %v3312 = vpop.f32.mrf.mxu0
    %3313 = vmatprep.mubr.bf16.mxu0 0
    %3314 = vmatmul.mubr.bf16.gmra.mxu0 %v3050
    %v3315 = vpop.f32.mrf.mxu0
    %v3316 = vadd.f32 %v3087, %v3315
    %v3317 = vpop.f32.mrf.mxu0
    %v3318 = vpop.f32.mrf.mxu0
    %v3319 = vadd.f32 %v3087, %v3318
    %v3320 = vpop.f32.mrf.mxu0
    %3321 = vmatprep.mubr.bf16.mxu0 0
    %3322 = vmatmul.mubr.bf16.gmra.mxu0 %v3051
    %v3323 = vpop.f32.mrf.mxu0
    %v3324 = vadd.f32 %v3087, %v3323
    %v3325 = vpop.f32.mrf.mxu0
    %v3326 = vpop.f32.mrf.mxu0
    %v3327 = vadd.f32 %v3087, %v3326
    %v3328 = vpop.f32.mrf.mxu0
    %3329 = vmatprep.mubr.bf16.mxu0 0
    %3330 = vmatmul.mubr.bf16.gmra.mxu0 %v3052
    %v3331 = vpop.f32.mrf.mxu0
    %v3332 = vadd.f32 %v3087, %v3331
    %v3333 = vpop.f32.mrf.mxu0
    %v3334 = vpop.f32.mrf.mxu0
    %v3335 = vadd.f32 %v3087, %v3334
    %v3336 = vpop.f32.mrf.mxu0
    %3337 = vmatprep.mubr.bf16.mxu0 0
    %3338 = vmatmul.mubr.bf16.gmra.mxu0 %v3053
    %v3339 = vpop.f32.mrf.mxu0
    %v3340 = vadd.f32 %v3087, %v3339
    %v3341 = vpop.f32.mrf.mxu0
    %v3342 = vpop.f32.mrf.mxu0
    %v3343 = vadd.f32 %v3087, %v3342
    %v3344 = vpop.f32.mrf.mxu0
    %3345 = vmatprep.mubr.bf16.mxu0 0
    %3346 = vmatmul.mubr.bf16.gmra.mxu0 %v3054
    %v3347 = vpop.f32.mrf.mxu0
    %v3348 = vadd.f32 %v3087, %v3347
    %v3349 = vpop.f32.mrf.mxu0
    %v3350 = vpop.f32.mrf.mxu0
    %v3351 = vadd.f32 %v3087, %v3350
    %v3352 = vpop.f32.mrf.mxu0
    %3353 = vmatprep.mubr.bf16.mxu0 0
    %3354 = vmatmul.mubr.bf16.gmra.mxu0 %v3055
    %v3355 = vpop.f32.mrf.mxu0
    %v3356 = vadd.f32 %v3087, %v3355
    %v3357 = vpop.f32.mrf.mxu0
    %v3358 = vpop.f32.mrf.mxu0
    %v3359 = vadd.f32 %v3087, %v3358
    %v3360 = vpop.f32.mrf.mxu0
    %3361 = vmatprep.mubr.bf16.mxu0 0
    %3362 = vmatmul.mubr.bf16.gmra.mxu0 %v3056
    %v3363 = vpop.f32.mrf.mxu0
    %v3364 = vadd.f32 %v3087, %v3363
    %v3365 = vpop.f32.mrf.mxu0
    %v3366 = vpop.f32.mrf.mxu0
    %v3367 = vadd.f32 %v3087, %v3366
    %v3368 = vpop.f32.mrf.mxu0
    %3369 = vmatprep.mubr.bf16.mxu0 0
    %3370 = vmatmul.mubr.bf16.gmra.mxu0 %v3057
    %v3371 = vpop.f32.mrf.mxu0
    %v3372 = vadd.f32 %v3087, %v3371
    %v3373 = vpop.f32.mrf.mxu0
    %v3374 = vpop.f32.mrf.mxu0
    %v3375 = vadd.f32 %v3087, %v3374
    %v3376 = vpop.f32.mrf.mxu0
    %3377 = vmatprep.mubr.bf16.mxu0 0
    %3378 = vmatmul.mubr.bf16.gmra.mxu0 %v3058
    %v3379 = vpop.f32.mrf.mxu0
    %v3380 = vadd.f32 %v3087, %v3379
    %v3381 = vpop.f32.mrf.mxu0
    %v3382 = vpop.f32.mrf.mxu0
    %v3383 = vadd.f32 %v3087, %v3382
    %v3384 = vpop.f32.mrf.mxu0
    %3385 = vmatprep.mubr.bf16.mxu0 0
    %3386 = vmatmul.mubr.bf16.gmra.mxu0 %v3059
    %v3387 = vpop.f32.mrf.mxu0
    %v3388 = vadd.f32 %v3087, %v3387
    %v3389 = vpop.f32.mrf.mxu0
    %v3390 = vpop.f32.mrf.mxu0
    %v3391 = vadd.f32 %v3087, %v3390
    %v3392 = vpop.f32.mrf.mxu0
    %3393 = vmatprep.mubr.bf16.mxu0 0
    %3394 = vmatmul.mubr.bf16.gmra.mxu0 %v3060
    %v3395 = vpop.f32.mrf.mxu0
    %v3396 = vadd.f32 %v3087, %v3395
    %v3397 = vpop.f32.mrf.mxu0
    %v3398 = vpop.f32.mrf.mxu0
    %v3399 = vadd.f32 %v3087, %v3398
    %v3400 = vpop.f32.mrf.mxu0
    %3401 = vmatprep.mubr.bf16.mxu0 0
    %3402 = vmatmul.mubr.bf16.gmra.mxu0 %v3061
    %v3403 = vpop.f32.mrf.mxu0
    %v3404 = vadd.f32 %v3087, %v3403
    %v3405 = vpop.f32.mrf.mxu0
    %v3406 = vpop.f32.mrf.mxu0
    %v3407 = vadd.f32 %v3087, %v3406
    %v3408 = vpop.f32.mrf.mxu0
    %3409 = vmatprep.mubr.bf16.mxu0 0
    %3410 = vmatmul.mubr.bf16.gmra.mxu0 %v3062
    %v3411 = vpop.f32.mrf.mxu0
    %v3412 = vadd.f32 %v3087, %v3411
    %v3413 = vpop.f32.mrf.mxu0
    %v3414 = vpop.f32.mrf.mxu0
    %v3415 = vadd.f32 %v3087, %v3414
    %v3416 = vpop.f32.mrf.mxu0
    %3417 = vmatprep.mubr.bf16.mxu0 0
    %3418 = vmatmul.mubr.bf16.gmra.mxu0 %v3063
    %v3419 = vpop.f32.mrf.mxu0
    %v3420 = vadd.f32 %v3087, %v3419
    %v3421 = vpop.f32.mrf.mxu0
    %v3422 = vpop.f32.mrf.mxu0
    %v3423 = vadd.f32 %v3087, %v3422
    %v3424 = vpop.f32.mrf.mxu0
    %3425 = vdwg.mxu0
    %v3426 = vmax.f32 %v3172, 0.0
    %v3427 = vmax.f32 %v3175, 0.0
    %v3428 = vmax.f32 %v3180, 0.0
    %v3429 = vmax.f32 %v3183, 0.0
    %v3430 = vmax.f32 %v3188, 0.0
    %v3431 = vmax.f32 %v3191, 0.0
    %v3432 = vmax.f32 %v3196, 0.0
    %v3433 = vmax.f32 %v3199, 0.0
    %v3434 = vmax.f32 %v3204, 0.0
    %v3435 = vmax.f32 %v3207, 0.0
    %v3436 = vmax.f32 %v3212, 0.0
    %v3437 = vmax.f32 %v3215, 0.0
    %v3438 = vmax.f32 %v3220, 0.0
    %v3439 = vmax.f32 %v3223, 0.0
    %v3440 = vmax.f32 %v3228, 0.0
    %v3441 = vmax.f32 %v3231, 0.0
    %v3442 = vmax.f32 %v3236, 0.0
    %v3443 = vmax.f32 %v3239, 0.0
    %v3444 = vmax.f32 %v3244, 0.0
    %v3445 = vmax.f32 %v3247, 0.0
    %v3446 = vmax.f32 %v3252, 0.0
    %v3447 = vmax.f32 %v3255, 0.0
    %v3448 = vmax.f32 %v3260, 0.0
    %v3449 = vmax.f32 %v3263, 0.0
    %v3450 = vmax.f32 %v3268, 0.0
    %v3451 = vmax.f32 %v3271, 0.0
    %v3452 = vmax.f32 %v3276, 0.0
    %v3453 = vmax.f32 %v3279, 0.0
    %v3454 = vmax.f32 %v3284, 0.0
    %v3455 = vmax.f32 %v3287, 0.0
    %v3456 = vmax.f32 %v3292, 0.0
    %v3457 = vmax.f32 %v3295, 0.0
    %v3458 = vmax.f32 %v3300, 0.0
    %v3459 = vmax.f32 %v3303, 0.0
    %v3460 = vmax.f32 %v3308, 0.0
    %v3461 = vmax.f32 %v3311, 0.0
    %v3462 = vmax.f32 %v3316, 0.0
    %v3463 = vmax.f32 %v3319, 0.0
    %v3464 = vmax.f32 %v3324, 0.0
    %v3465 = vmax.f32 %v3327, 0.0
    %v3466 = vmax.f32 %v3332, 0.0
    %v3467 = vmax.f32 %v3335, 0.0
    %v3468 = vmax.f32 %v3340, 0.0
    %v3469 = vmax.f32 %v3343, 0.0
    %v3470 = vmax.f32 %v3348, 0.0
    %v3471 = vmax.f32 %v3351, 0.0
    %v3472 = vmax.f32 %v3356, 0.0
    %v3473 = vmax.f32 %v3359, 0.0
    %v3474 = vmax.f32 %v3364, 0.0
    %v3475 = vmax.f32 %v3367, 0.0
    %v3476 = vmax.f32 %v3372, 0.0
    %v3477 = vmax.f32 %v3375, 0.0
    %v3478 = vmax.f32 %v3380, 0.0
    %v3479 = vmax.f32 %v3383, 0.0
    %v3480 = vmax.f32 %v3388, 0.0
    %v3481 = vmax.f32 %v3391, 0.0
    %v3482 = vmax.f32 %v3396, 0.0
    %v3483 = vmax.f32 %v3399, 0.0
    %v3484 = vmax.f32 %v3404, 0.0
    %v3485 = vmax.f32 %v3407, 0.0
    %v3486 = vmax.f32 %v3412, 0.0
    %v3487 = vmax.f32 %v3415, 0.0
    %v3488 = vmax.f32 %v3420, 0.0
    %v3489 = vmax.f32 %v3423, 0.0
    %v3490 = vpack.c.bf16 %v3427, %v3426
    %v3491 = vpack.c.bf16 %v3429, %v3428
    %v3492 = vpack.c.bf16 %v3431, %v3430
    %v3493 = vpack.c.bf16 %v3433, %v3432
    %v3494 = vpack.c.bf16 %v3435, %v3434
    %v3495 = vpack.c.bf16 %v3437, %v3436
    %v3496 = vpack.c.bf16 %v3439, %v3438
    %v3497 = vpack.c.bf16 %v3441, %v3440
    %v3498 = vpack.c.bf16 %v3443, %v3442
    %v3499 = vpack.c.bf16 %v3445, %v3444
    %v3500 = vpack.c.bf16 %v3447, %v3446
    %v3501 = vpack.c.bf16 %v3449, %v3448
    %v3502 = vpack.c.bf16 %v3451, %v3450
    %v3503 = vpack.c.bf16 %v3453, %v3452
    %v3504 = vpack.c.bf16 %v3455, %v3454
    %v3505 = vpack.c.bf16 %v3457, %v3456
    %v3506 = vpack.c.bf16 %v3459, %v3458
    %v3507 = vpack.c.bf16 %v3461, %v3460
    %v3508 = vpack.c.bf16 %v3463, %v3462
    %v3509 = vpack.c.bf16 %v3465, %v3464
    %v3510 = vpack.c.bf16 %v3467, %v3466
    %v3511 = vpack.c.bf16 %v3469, %v3468
    %v3512 = vpack.c.bf16 %v3471, %v3470
    %v3513 = vpack.c.bf16 %v3473, %v3472
    %v3514 = vpack.c.bf16 %v3475, %v3474
    %v3515 = vpack.c.bf16 %v3477, %v3476
    %v3516 = vpack.c.bf16 %v3479, %v3478
    %v3517 = vpack.c.bf16 %v3481, %v3480
    %v3518 = vpack.c.bf16 %v3483, %v3482
    %v3519 = vpack.c.bf16 %v3485, %v3484
    %v3520 = vpack.c.bf16 %v3487, %v3486
    %v3521 = vpack.c.bf16 %v3489, %v3488
    %s3522 = scalar_lea.vmem [#allocation7], 64
    %v3523 = vld [vmem:[%s3522] sm:$0xf]
    %v3524 = vld [vmem:[%s3522 + $0x4] sm:$0xf]
    %v3525 = vld [vmem:[%s3522 + $0x8] sm:$0xf]
    %v3526 = vld [vmem:[%s3522 + $0xc] sm:$0xf]
    %v3527 = vld [vmem:[%s3522 + $0x10] sm:$0xf]
    %v3528 = vld [vmem:[%s3522 + $0x14] sm:$0xf]
    %v3529 = vld [vmem:[%s3522 + $0x18] sm:$0xf]
    %v3530 = vld [vmem:[%s3522 + $0x1c] sm:$0xf]
    %s3531 = scalar_lea.vmem [#allocation8], 2
    %v3532 = vld [vmem:[%s3531] sm:$0x1]
    %v3534 = vlaneseq
    %v3535 = vshrl.u32 %v3534, 7
    %v3536 = vsub.s32 0, %v3535
    %v3537 = vrot.slane %v3532, %v3536
    %v3547 = vunpack.c.l.b16 %v3523
    %v3548 = vunpack.c.l.b16 %v3524
    %v3549 = vunpack.c.l.b16 %v3525
    %v3550 = vunpack.c.l.b16 %v3526
    %v3551 = vunpack.c.l.b16 %v3527
    %v3552 = vunpack.c.l.b16 %v3528
    %v3553 = vunpack.c.l.b16 %v3529
    %v3554 = vunpack.c.l.b16 %v3530
    %v3555 = vpack.c.b16 %v3548, %v3547
    %v3556 = vpack.c.b16 %v3550, %v3549
    %v3557 = vpack.c.b16 %v3552, %v3551
    %v3558 = vpack.c.b16 %v3554, %v3553
    %v3564 = vsel %vm702, %v3490, 0
    %v3567 = vsel %vm702, %v3491, 0
    %v3570 = vsel %vm702, %v3492, 0
    %v3573 = vsel %vm702, %v3493, 0
    %v3576 = vsel %vm702, %v3494, 0
    %v3579 = vsel %vm702, %v3495, 0
    %v3582 = vsel %vm702, %v3496, 0
    %v3585 = vsel %vm702, %v3497, 0
    %v3588 = vsel %vm702, %v3498, 0
    %v3591 = vsel %vm702, %v3499, 0
    %v3594 = vsel %vm702, %v3500, 0
    %v3597 = vsel %vm702, %v3501, 0
    %v3600 = vsel %vm702, %v3502, 0
    %v3603 = vsel %vm702, %v3503, 0
    %v3606 = vsel %vm702, %v3504, 0
    %v3609 = vsel %vm702, %v3505, 0
    %v3612 = vsel %vm702, %v3506, 0
    %v3615 = vsel %vm702, %v3507, 0
    %v3618 = vsel %vm702, %v3508, 0
    %v3621 = vsel %vm702, %v3509, 0
    %v3624 = vsel %vm702, %v3510, 0
    %v3627 = vsel %vm702, %v3511, 0
    %v3630 = vsel %vm702, %v3512, 0
    %v3633 = vsel %vm702, %v3513, 0
    %v3636 = vsel %vm702, %v3514, 0
    %v3639 = vsel %vm702, %v3515, 0
    %v3642 = vsel %vm702, %v3516, 0
    %v3645 = vsel %vm702, %v3517, 0
    %v3648 = vsel %vm702, %v3518, 0
    %v3651 = vsel %vm702, %v3519, 0
    %v3654 = vsel %vm702, %v3520, 0
    %v3657 = vsel %vm702, %v3521, 0
    %3659 = vmatprep.subr.bf16.mxu0 0
    %3660 = vmatpush1.bf16.msra.mxu0 0
    %3661 = vmatprep.subr.bf16.mxu0 0
    %3662 = vmatpush1.bf16.msra.mxu0 0
    %3663 = vmatprep.subr.bf16.mxu0 0
    %3664 = vmatpush1.bf16.msra.mxu0 0
    %3665 = vmatprep.subr.bf16.mxu0 0
    %3666 = vmatpush1.bf16.msra.mxu0 0
    %3667 = vmatprep.subr.bf16.mxu0 0
    %3668 = vmatpush1.bf16.msra.mxu0 %v3558
    %3669 = vmatprep.subr.bf16.mxu0 0
    %3670 = vmatpush1.bf16.msra.mxu0 %v3557
    %3671 = vmatprep.subr.bf16.mxu0 0
    %3672 = vmatpush1.bf16.msra.mxu0 %v3556
    %3673 = vmatprep.subr.bf16.mxu0 0
    %3674 = vmatpush1.bf16.msra.mxu0 %v3555
    %3675 = vmatprep.subr.bf16.mxu0 0
    %3676 = vmatpush2.bf16.msra.mxu0 0
    %3677 = vmatprep.subr.bf16.mxu0 0
    %3678 = vmatpush2.bf16.msra.mxu0 0
    %3679 = vmatprep.subr.bf16.mxu0 0
    %3680 = vmatpush2.bf16.msra.mxu0 0
    %3681 = vmatprep.subr.bf16.mxu0 0
    %3682 = vmatpush2.bf16.msra.mxu0 0
    %3683 = vmatprep.subr.bf16.mxu0 0
    %3684 = vmatpush2.bf16.msra.mxu0 0
    %3685 = vmatprep.subr.bf16.mxu0 0
    %3686 = vmatpush2.bf16.msra.mxu0 0
    %3687 = vmatprep.subr.bf16.mxu0 0
    %3688 = vmatpush2.bf16.msra.mxu0 0
    %3689 = vmatprep.subr.bf16.mxu0 0
    %3690 = vmatpush2.bf16.msra.mxu0 0
    %3691 = vmatprep.mubr.bf16.mxu0 0
    %3692 = vmatmul.mubr.bf16.gmra.mxu0 %v3564
    %v3693 = vpop.f32.mrf.mxu0
    %v3694 = vadd.f32 %v3537, %v3693
    %v3695 = vpop.f32.mrf.mxu0
    %v3696 = vpop.f32.mrf.mxu0
    %v3697 = vadd.f32 %v3537, %v3696
    %v3698 = vpop.f32.mrf.mxu0
    %3699 = vmatprep.mubr.bf16.mxu0 0
    %3700 = vmatmul.mubr.bf16.gmra.mxu0 %v3567
    %v3701 = vpop.f32.mrf.mxu0
    %v3702 = vadd.f32 %v3537, %v3701
    %v3703 = vpop.f32.mrf.mxu0
    %v3704 = vpop.f32.mrf.mxu0
    %v3705 = vadd.f32 %v3537, %v3704
    %v3706 = vpop.f32.mrf.mxu0
    %3707 = vmatprep.mubr.bf16.mxu0 0
    %3708 = vmatmul.mubr.bf16.gmra.mxu0 %v3570
    %v3709 = vpop.f32.mrf.mxu0
    %v3710 = vadd.f32 %v3537, %v3709
    %v3711 = vpop.f32.mrf.mxu0
    %v3712 = vpop.f32.mrf.mxu0
    %v3713 = vadd.f32 %v3537, %v3712
    %v3714 = vpop.f32.mrf.mxu0
    %3715 = vmatprep.mubr.bf16.mxu0 0
    %3716 = vmatmul.mubr.bf16.gmra.mxu0 %v3573
    %v3717 = vpop.f32.mrf.mxu0
    %v3718 = vadd.f32 %v3537, %v3717
    %v3719 = vpop.f32.mrf.mxu0
    %v3720 = vpop.f32.mrf.mxu0
    %v3721 = vadd.f32 %v3537, %v3720
    %v3722 = vpop.f32.mrf.mxu0
    %3723 = vmatprep.mubr.bf16.mxu0 0
    %3724 = vmatmul.mubr.bf16.gmra.mxu0 %v3576
    %v3725 = vpop.f32.mrf.mxu0
    %v3726 = vadd.f32 %v3537, %v3725
    %v3727 = vpop.f32.mrf.mxu0
    %v3728 = vpop.f32.mrf.mxu0
    %v3729 = vadd.f32 %v3537, %v3728
    %v3730 = vpop.f32.mrf.mxu0
    %3731 = vmatprep.mubr.bf16.mxu0 0
    %3732 = vmatmul.mubr.bf16.gmra.mxu0 %v3579
    %v3733 = vpop.f32.mrf.mxu0
    %v3734 = vadd.f32 %v3537, %v3733
    %v3735 = vpop.f32.mrf.mxu0
    %v3736 = vpop.f32.mrf.mxu0
    %v3737 = vadd.f32 %v3537, %v3736
    %v3738 = vpop.f32.mrf.mxu0
    %3739 = vmatprep.mubr.bf16.mxu0 0
    %3740 = vmatmul.mubr.bf16.gmra.mxu0 %v3582
    %v3741 = vpop.f32.mrf.mxu0
    %v3742 = vadd.f32 %v3537, %v3741
    %v3743 = vpop.f32.mrf.mxu0
    %v3744 = vpop.f32.mrf.mxu0
    %v3745 = vadd.f32 %v3537, %v3744
    %v3746 = vpop.f32.mrf.mxu0
    %3747 = vmatprep.mubr.bf16.mxu0 0
    %3748 = vmatmul.mubr.bf16.gmra.mxu0 %v3585
    %v3749 = vpop.f32.mrf.mxu0
    %v3750 = vadd.f32 %v3537, %v3749
    %v3751 = vpop.f32.mrf.mxu0
    %v3752 = vpop.f32.mrf.mxu0
    %v3753 = vadd.f32 %v3537, %v3752
    %v3754 = vpop.f32.mrf.mxu0
    %3755 = vmatprep.mubr.bf16.mxu0 0
    %3756 = vmatmul.mubr.bf16.gmra.mxu0 %v3588
    %v3757 = vpop.f32.mrf.mxu0
    %v3758 = vadd.f32 %v3537, %v3757
    %v3759 = vpop.f32.mrf.mxu0
    %v3760 = vpop.f32.mrf.mxu0
    %v3761 = vadd.f32 %v3537, %v3760
    %v3762 = vpop.f32.mrf.mxu0
    %3763 = vmatprep.mubr.bf16.mxu0 0
    %3764 = vmatmul.mubr.bf16.gmra.mxu0 %v3591
    %v3765 = vpop.f32.mrf.mxu0
    %v3766 = vadd.f32 %v3537, %v3765
    %v3767 = vpop.f32.mrf.mxu0
    %v3768 = vpop.f32.mrf.mxu0
    %v3769 = vadd.f32 %v3537, %v3768
    %v3770 = vpop.f32.mrf.mxu0
    %3771 = vmatprep.mubr.bf16.mxu0 0
    %3772 = vmatmul.mubr.bf16.gmra.mxu0 %v3594
    %v3773 = vpop.f32.mrf.mxu0
    %v3774 = vadd.f32 %v3537, %v3773
    %v3775 = vpop.f32.mrf.mxu0
    %v3776 = vpop.f32.mrf.mxu0
    %v3777 = vadd.f32 %v3537, %v3776
    %v3778 = vpop.f32.mrf.mxu0
    %3779 = vmatprep.mubr.bf16.mxu0 0
    %3780 = vmatmul.mubr.bf16.gmra.mxu0 %v3597
    %v3781 = vpop.f32.mrf.mxu0
    %v3782 = vadd.f32 %v3537, %v3781
    %v3783 = vpop.f32.mrf.mxu0
    %v3784 = vpop.f32.mrf.mxu0
    %v3785 = vadd.f32 %v3537, %v3784
    %v3786 = vpop.f32.mrf.mxu0
    %3787 = vmatprep.mubr.bf16.mxu0 0
    %3788 = vmatmul.mubr.bf16.gmra.mxu0 %v3600
    %v3789 = vpop.f32.mrf.mxu0
    %v3790 = vadd.f32 %v3537, %v3789
    %v3791 = vpop.f32.mrf.mxu0
    %v3792 = vpop.f32.mrf.mxu0
    %v3793 = vadd.f32 %v3537, %v3792
    %v3794 = vpop.f32.mrf.mxu0
    %3795 = vmatprep.mubr.bf16.mxu0 0
    %3796 = vmatmul.mubr.bf16.gmra.mxu0 %v3603
    %v3797 = vpop.f32.mrf.mxu0
    %v3798 = vadd.f32 %v3537, %v3797
    %v3799 = vpop.f32.mrf.mxu0
    %v3800 = vpop.f32.mrf.mxu0
    %v3801 = vadd.f32 %v3537, %v3800
    %v3802 = vpop.f32.mrf.mxu0
    %3803 = vmatprep.mubr.bf16.mxu0 0
    %3804 = vmatmul.mubr.bf16.gmra.mxu0 %v3606
    %v3805 = vpop.f32.mrf.mxu0
    %v3806 = vadd.f32 %v3537, %v3805
    %v3807 = vpop.f32.mrf.mxu0
    %v3808 = vpop.f32.mrf.mxu0
    %v3809 = vadd.f32 %v3537, %v3808
    %v3810 = vpop.f32.mrf.mxu0
    %3811 = vmatprep.mubr.bf16.mxu0 0
    %3812 = vmatmul.mubr.bf16.gmra.mxu0 %v3609
    %v3813 = vpop.f32.mrf.mxu0
    %v3814 = vadd.f32 %v3537, %v3813
    %v3815 = vpop.f32.mrf.mxu0
    %v3816 = vpop.f32.mrf.mxu0
    %v3817 = vadd.f32 %v3537, %v3816
    %v3818 = vpop.f32.mrf.mxu0
    %3819 = vmatprep.mubr.bf16.mxu0 0
    %3820 = vmatmul.mubr.bf16.gmra.mxu0 %v3612
    %v3821 = vpop.f32.mrf.mxu0
    %v3822 = vadd.f32 %v3537, %v3821
    %v3823 = vpop.f32.mrf.mxu0
    %v3824 = vpop.f32.mrf.mxu0
    %v3825 = vadd.f32 %v3537, %v3824
    %v3826 = vpop.f32.mrf.mxu0
    %3827 = vmatprep.mubr.bf16.mxu0 0
    %3828 = vmatmul.mubr.bf16.gmra.mxu0 %v3615
    %v3829 = vpop.f32.mrf.mxu0
    %v3830 = vadd.f32 %v3537, %v3829
    %v3831 = vpop.f32.mrf.mxu0
    %v3832 = vpop.f32.mrf.mxu0
    %v3833 = vadd.f32 %v3537, %v3832
    %v3834 = vpop.f32.mrf.mxu0
    %3835 = vmatprep.mubr.bf16.mxu0 0
    %3836 = vmatmul.mubr.bf16.gmra.mxu0 %v3618
    %v3837 = vpop.f32.mrf.mxu0
    %v3838 = vadd.f32 %v3537, %v3837
    %v3839 = vpop.f32.mrf.mxu0
    %v3840 = vpop.f32.mrf.mxu0
    %v3841 = vadd.f32 %v3537, %v3840
    %v3842 = vpop.f32.mrf.mxu0
    %3843 = vmatprep.mubr.bf16.mxu0 0
    %3844 = vmatmul.mubr.bf16.gmra.mxu0 %v3621
    %v3845 = vpop.f32.mrf.mxu0
    %v3846 = vadd.f32 %v3537, %v3845
    %v3847 = vpop.f32.mrf.mxu0
    %v3848 = vpop.f32.mrf.mxu0
    %v3849 = vadd.f32 %v3537, %v3848
    %v3850 = vpop.f32.mrf.mxu0
    %3851 = vmatprep.mubr.bf16.mxu0 0
    %3852 = vmatmul.mubr.bf16.gmra.mxu0 %v3624
    %v3853 = vpop.f32.mrf.mxu0
    %v3854 = vadd.f32 %v3537, %v3853
    %v3855 = vpop.f32.mrf.mxu0
    %v3856 = vpop.f32.mrf.mxu0
    %v3857 = vadd.f32 %v3537, %v3856
    %v3858 = vpop.f32.mrf.mxu0
    %3859 = vmatprep.mubr.bf16.mxu0 0
    %3860 = vmatmul.mubr.bf16.gmra.mxu0 %v3627
    %v3861 = vpop.f32.mrf.mxu0
    %v3862 = vadd.f32 %v3537, %v3861
    %v3863 = vpop.f32.mrf.mxu0
    %v3864 = vpop.f32.mrf.mxu0
    %v3865 = vadd.f32 %v3537, %v3864
    %v3866 = vpop.f32.mrf.mxu0
    %3867 = vmatprep.mubr.bf16.mxu0 0
    %3868 = vmatmul.mubr.bf16.gmra.mxu0 %v3630
    %v3869 = vpop.f32.mrf.mxu0
    %v3870 = vadd.f32 %v3537, %v3869
    %v3871 = vpop.f32.mrf.mxu0
    %v3872 = vpop.f32.mrf.mxu0
    %v3873 = vadd.f32 %v3537, %v3872
    %v3874 = vpop.f32.mrf.mxu0
    %3875 = vmatprep.mubr.bf16.mxu0 0
    %3876 = vmatmul.mubr.bf16.gmra.mxu0 %v3633
    %v3877 = vpop.f32.mrf.mxu0
    %v3878 = vadd.f32 %v3537, %v3877
    %v3879 = vpop.f32.mrf.mxu0
    %v3880 = vpop.f32.mrf.mxu0
    %v3881 = vadd.f32 %v3537, %v3880
    %v3882 = vpop.f32.mrf.mxu0
    %3883 = vmatprep.mubr.bf16.mxu0 0
    %3884 = vmatmul.mubr.bf16.gmra.mxu0 %v3636
    %v3885 = vpop.f32.mrf.mxu0
    %v3886 = vadd.f32 %v3537, %v3885
    %v3887 = vpop.f32.mrf.mxu0
    %v3888 = vpop.f32.mrf.mxu0
    %v3889 = vadd.f32 %v3537, %v3888
    %v3890 = vpop.f32.mrf.mxu0
    %3891 = vmatprep.mubr.bf16.mxu0 0
    %3892 = vmatmul.mubr.bf16.gmra.mxu0 %v3639
    %v3893 = vpop.f32.mrf.mxu0
    %v3894 = vadd.f32 %v3537, %v3893
    %v3895 = vpop.f32.mrf.mxu0
    %v3896 = vpop.f32.mrf.mxu0
    %v3897 = vadd.f32 %v3537, %v3896
    %v3898 = vpop.f32.mrf.mxu0
    %3899 = vmatprep.mubr.bf16.mxu0 0
    %3900 = vmatmul.mubr.bf16.gmra.mxu0 %v3642
    %v3901 = vpop.f32.mrf.mxu0
    %v3902 = vadd.f32 %v3537, %v3901
    %v3903 = vpop.f32.mrf.mxu0
    %v3904 = vpop.f32.mrf.mxu0
    %v3905 = vadd.f32 %v3537, %v3904
    %v3906 = vpop.f32.mrf.mxu0
    %3907 = vmatprep.mubr.bf16.mxu0 0
    %3908 = vmatmul.mubr.bf16.gmra.mxu0 %v3645
    %v3909 = vpop.f32.mrf.mxu0
    %v3910 = vadd.f32 %v3537, %v3909
    %v3911 = vpop.f32.mrf.mxu0
    %v3912 = vpop.f32.mrf.mxu0
    %v3913 = vadd.f32 %v3537, %v3912
    %v3914 = vpop.f32.mrf.mxu0
    %3915 = vmatprep.mubr.bf16.mxu0 0
    %3916 = vmatmul.mubr.bf16.gmra.mxu0 %v3648
    %v3917 = vpop.f32.mrf.mxu0
    %v3918 = vadd.f32 %v3537, %v3917
    %v3919 = vpop.f32.mrf.mxu0
    %v3920 = vpop.f32.mrf.mxu0
    %v3921 = vadd.f32 %v3537, %v3920
    %v3922 = vpop.f32.mrf.mxu0
    %3923 = vmatprep.mubr.bf16.mxu0 0
    %3924 = vmatmul.mubr.bf16.gmra.mxu0 %v3651
    %v3925 = vpop.f32.mrf.mxu0
    %v3926 = vadd.f32 %v3537, %v3925
    %v3927 = vpop.f32.mrf.mxu0
    %v3928 = vpop.f32.mrf.mxu0
    %v3929 = vadd.f32 %v3537, %v3928
    %v3930 = vpop.f32.mrf.mxu0
    %3931 = vmatprep.mubr.bf16.mxu0 0
    %3932 = vmatmul.mubr.bf16.gmra.mxu0 %v3654
    %v3933 = vpop.f32.mrf.mxu0
    %v3934 = vadd.f32 %v3537, %v3933
    %v3935 = vpop.f32.mrf.mxu0
    %v3936 = vpop.f32.mrf.mxu0
    %v3937 = vadd.f32 %v3537, %v3936
    %v3938 = vpop.f32.mrf.mxu0
    %3939 = vmatprep.mubr.bf16.mxu0 0
    %3940 = vmatmul.mubr.bf16.gmra.mxu0 %v3657
    %v3941 = vpop.f32.mrf.mxu0
    %v3942 = vadd.f32 %v3537, %v3941
    %v3943 = vpop.f32.mrf.mxu0
    %v3944 = vpop.f32.mrf.mxu0
    %v3945 = vadd.f32 %v3537, %v3944
    %v3946 = vpop.f32.mrf.mxu0
    %3947 = vdwg.mxu0
    %v3948 = vmax.f32 %v3694, 0.0
    %v3949 = vmax.f32 %v3697, 0.0
    %v3950 = vmax.f32 %v3702, 0.0
    %v3951 = vmax.f32 %v3705, 0.0
    %v3952 = vmax.f32 %v3710, 0.0
    %v3953 = vmax.f32 %v3713, 0.0
    %v3954 = vmax.f32 %v3718, 0.0
    %v3955 = vmax.f32 %v3721, 0.0
    %v3956 = vmax.f32 %v3726, 0.0
    %v3957 = vmax.f32 %v3729, 0.0
    %v3958 = vmax.f32 %v3734, 0.0
    %v3959 = vmax.f32 %v3737, 0.0
    %v3960 = vmax.f32 %v3742, 0.0
    %v3961 = vmax.f32 %v3745, 0.0
    %v3962 = vmax.f32 %v3750, 0.0
    %v3963 = vmax.f32 %v3753, 0.0
    %v3964 = vmax.f32 %v3758, 0.0
    %v3965 = vmax.f32 %v3761, 0.0
    %v3966 = vmax.f32 %v3766, 0.0
    %v3967 = vmax.f32 %v3769, 0.0
    %v3968 = vmax.f32 %v3774, 0.0
    %v3969 = vmax.f32 %v3777, 0.0
    %v3970 = vmax.f32 %v3782, 0.0
    %v3971 = vmax.f32 %v3785, 0.0
    %v3972 = vmax.f32 %v3790, 0.0
    %v3973 = vmax.f32 %v3793, 0.0
    %v3974 = vmax.f32 %v3798, 0.0
    %v3975 = vmax.f32 %v3801, 0.0
    %v3976 = vmax.f32 %v3806, 0.0
    %v3977 = vmax.f32 %v3809, 0.0
    %v3978 = vmax.f32 %v3814, 0.0
    %v3979 = vmax.f32 %v3817, 0.0
    %v3980 = vmax.f32 %v3822, 0.0
    %v3981 = vmax.f32 %v3825, 0.0
    %v3982 = vmax.f32 %v3830, 0.0
    %v3983 = vmax.f32 %v3833, 0.0
    %v3984 = vmax.f32 %v3838, 0.0
    %v3985 = vmax.f32 %v3841, 0.0
    %v3986 = vmax.f32 %v3846, 0.0
    %v3987 = vmax.f32 %v3849, 0.0
    %v3988 = vmax.f32 %v3854, 0.0
    %v3989 = vmax.f32 %v3857, 0.0
    %v3990 = vmax.f32 %v3862, 0.0
    %v3991 = vmax.f32 %v3865, 0.0
    %v3992 = vmax.f32 %v3870, 0.0
    %v3993 = vmax.f32 %v3873, 0.0
    %v3994 = vmax.f32 %v3878, 0.0
    %v3995 = vmax.f32 %v3881, 0.0
    %v3996 = vmax.f32 %v3886, 0.0
    %v3997 = vmax.f32 %v3889, 0.0
    %v3998 = vmax.f32 %v3894, 0.0
    %v3999 = vmax.f32 %v3897, 0.0
    %v4000 = vmax.f32 %v3902, 0.0
    %v4001 = vmax.f32 %v3905, 0.0
    %v4002 = vmax.f32 %v3910, 0.0
    %v4003 = vmax.f32 %v3913, 0.0
    %v4004 = vmax.f32 %v3918, 0.0
    %v4005 = vmax.f32 %v3921, 0.0
    %v4006 = vmax.f32 %v3926, 0.0
    %v4007 = vmax.f32 %v3929, 0.0
    %v4008 = vmax.f32 %v3934, 0.0
    %v4009 = vmax.f32 %v3937, 0.0
    %v4010 = vmax.f32 %v3942, 0.0
    %v4011 = vmax.f32 %v3945, 0.0
    %v4012 = vpack.c.bf16 %v3949, %v3948
    %v4013 = vpack.c.bf16 %v3951, %v3950
    %v4014 = vpack.c.bf16 %v3953, %v3952
    %v4015 = vpack.c.bf16 %v3955, %v3954
    %v4016 = vpack.c.bf16 %v3957, %v3956
    %v4017 = vpack.c.bf16 %v3959, %v3958
    %v4018 = vpack.c.bf16 %v3961, %v3960
    %v4019 = vpack.c.bf16 %v3963, %v3962
    %v4020 = vpack.c.bf16 %v3965, %v3964
    %v4021 = vpack.c.bf16 %v3967, %v3966
    %v4022 = vpack.c.bf16 %v3969, %v3968
    %v4023 = vpack.c.bf16 %v3971, %v3970
    %v4024 = vpack.c.bf16 %v3973, %v3972
    %v4025 = vpack.c.bf16 %v3975, %v3974
    %v4026 = vpack.c.bf16 %v3977, %v3976
    %v4027 = vpack.c.bf16 %v3979, %v3978
    %v4028 = vpack.c.bf16 %v3981, %v3980
    %v4029 = vpack.c.bf16 %v3983, %v3982
    %v4030 = vpack.c.bf16 %v3985, %v3984
    %v4031 = vpack.c.bf16 %v3987, %v3986
    %v4032 = vpack.c.bf16 %v3989, %v3988
    %v4033 = vpack.c.bf16 %v3991, %v3990
    %v4034 = vpack.c.bf16 %v3993, %v3992
    %v4035 = vpack.c.bf16 %v3995, %v3994
    %v4036 = vpack.c.bf16 %v3997, %v3996
    %v4037 = vpack.c.bf16 %v3999, %v3998
    %v4038 = vpack.c.bf16 %v4001, %v4000
    %v4039 = vpack.c.bf16 %v4003, %v4002
    %v4040 = vpack.c.bf16 %v4005, %v4004
    %v4041 = vpack.c.bf16 %v4007, %v4006
    %v4042 = vpack.c.bf16 %v4009, %v4008
    %v4043 = vpack.c.bf16 %v4011, %v4010
    %v4076 = vunpack.c.l.b16 %v4012
    %v4077 = vunpack.c.h.b16 %v4012
    %v4078 = vunpack.c.l.b16 %v4013
    %v4079 = vunpack.c.h.b16 %v4013
    %v4080 = vunpack.c.l.b16 %v4014
    %v4081 = vunpack.c.h.b16 %v4014
    %v4082 = vunpack.c.l.b16 %v4015
    %v4083 = vunpack.c.h.b16 %v4015
    %v4084 = vunpack.c.l.b16 %v4016
    %v4085 = vunpack.c.h.b16 %v4016
    %v4086 = vunpack.c.l.b16 %v4017
    %v4087 = vunpack.c.h.b16 %v4017
    %v4088 = vunpack.c.l.b16 %v4018
    %v4089 = vunpack.c.h.b16 %v4018
    %v4090 = vunpack.c.l.b16 %v4019
    %v4091 = vunpack.c.h.b16 %v4019
    %v4092 = vunpack.c.l.b16 %v4020
    %v4093 = vunpack.c.h.b16 %v4020
    %v4094 = vunpack.c.l.b16 %v4021
    %v4095 = vunpack.c.h.b16 %v4021
    %v4096 = vunpack.c.l.b16 %v4022
    %v4097 = vunpack.c.h.b16 %v4022
    %v4098 = vunpack.c.l.b16 %v4023
    %v4099 = vunpack.c.h.b16 %v4023
    %v4100 = vunpack.c.l.b16 %v4024
    %v4101 = vunpack.c.h.b16 %v4024
    %v4102 = vunpack.c.l.b16 %v4025
    %v4103 = vunpack.c.h.b16 %v4025
    %v4104 = vunpack.c.l.b16 %v4026
    %v4105 = vunpack.c.h.b16 %v4026
    %v4106 = vunpack.c.l.b16 %v4027
    %v4107 = vunpack.c.h.b16 %v4027
    %v4108 = vunpack.c.l.b16 %v4028
    %v4109 = vunpack.c.h.b16 %v4028
    %v4110 = vunpack.c.l.b16 %v4029
    %v4111 = vunpack.c.h.b16 %v4029
    %v4112 = vunpack.c.l.b16 %v4030
    %v4113 = vunpack.c.h.b16 %v4030
    %v4114 = vunpack.c.l.b16 %v4031
    %v4115 = vunpack.c.h.b16 %v4031
    %v4116 = vunpack.c.l.b16 %v4032
    %v4117 = vunpack.c.h.b16 %v4032
    %v4118 = vunpack.c.l.b16 %v4033
    %v4119 = vunpack.c.h.b16 %v4033
    %v4120 = vunpack.c.l.b16 %v4034
    %v4121 = vunpack.c.h.b16 %v4034
    %v4122 = vunpack.c.l.b16 %v4035
    %v4123 = vunpack.c.h.b16 %v4035
    %v4124 = vunpack.c.l.b16 %v4036
    %v4125 = vunpack.c.h.b16 %v4036
    %v4126 = vunpack.c.l.b16 %v4037
    %v4127 = vunpack.c.h.b16 %v4037
    %v4128 = vunpack.c.l.b16 %v4038
    %v4129 = vunpack.c.h.b16 %v4038
    %v4130 = vunpack.c.l.b16 %v4039
    %v4131 = vunpack.c.h.b16 %v4039
    %v4132 = vunpack.c.l.b16 %v4040
    %v4133 = vunpack.c.h.b16 %v4040
    %v4134 = vunpack.c.l.b16 %v4041
    %v4135 = vunpack.c.h.b16 %v4041
    %v4136 = vunpack.c.l.b16 %v4042
    %v4137 = vunpack.c.h.b16 %v4042
    %v4138 = vunpack.c.l.b16 %v4043
    %v4139 = vunpack.c.h.b16 %v4043
    %v4140 = vpack.c.b16 %v4076, %v4076
    %v4141 = vpack.c.b16 %v4077, %v4077
    %v4142 = vpack.c.b16 %v4078, %v4078
    %v4143 = vpack.c.b16 %v4079, %v4079
    %v4144 = vpack.c.b16 %v4080, %v4080
    %v4145 = vpack.c.b16 %v4081, %v4081
    %v4146 = vpack.c.b16 %v4082, %v4082
    %v4147 = vpack.c.b16 %v4083, %v4083
    %v4148 = vpack.c.b16 %v4084, %v4084
    %v4149 = vpack.c.b16 %v4085, %v4085
    %v4150 = vpack.c.b16 %v4086, %v4086
    %v4151 = vpack.c.b16 %v4087, %v4087
    %v4152 = vpack.c.b16 %v4088, %v4088
    %v4153 = vpack.c.b16 %v4089, %v4089
    %v4154 = vpack.c.b16 %v4090, %v4090
    %v4155 = vpack.c.b16 %v4091, %v4091
    %v4156 = vpack.c.b16 %v4092, %v4092
    %v4157 = vpack.c.b16 %v4093, %v4093
    %v4158 = vpack.c.b16 %v4094, %v4094
    %v4159 = vpack.c.b16 %v4095, %v4095
    %v4160 = vpack.c.b16 %v4096, %v4096
    %v4161 = vpack.c.b16 %v4097, %v4097
    %v4162 = vpack.c.b16 %v4098, %v4098
    %v4163 = vpack.c.b16 %v4099, %v4099
    %v4164 = vpack.c.b16 %v4100, %v4100
    %v4165 = vpack.c.b16 %v4101, %v4101
    %v4166 = vpack.c.b16 %v4102, %v4102
    %v4167 = vpack.c.b16 %v4103, %v4103
    %v4168 = vpack.c.b16 %v4104, %v4104
    %v4169 = vpack.c.b16 %v4105, %v4105
    %v4170 = vpack.c.b16 %v4106, %v4106
    %v4171 = vpack.c.b16 %v4107, %v4107
    %v4172 = vpack.c.b16 %v4108, %v4108
    %v4173 = vpack.c.b16 %v4109, %v4109
    %v4174 = vpack.c.b16 %v4110, %v4110
    %v4175 = vpack.c.b16 %v4111, %v4111
    %v4176 = vpack.c.b16 %v4112, %v4112
    %v4177 = vpack.c.b16 %v4113, %v4113
    %v4178 = vpack.c.b16 %v4114, %v4114
    %v4179 = vpack.c.b16 %v4115, %v4115
    %v4180 = vpack.c.b16 %v4116, %v4116
    %v4181 = vpack.c.b16 %v4117, %v4117
    %v4182 = vpack.c.b16 %v4118, %v4118
    %v4183 = vpack.c.b16 %v4119, %v4119
    %v4184 = vpack.c.b16 %v4120, %v4120
    %v4185 = vpack.c.b16 %v4121, %v4121
    %v4186 = vpack.c.b16 %v4122, %v4122
    %v4187 = vpack.c.b16 %v4123, %v4123
    %v4188 = vpack.c.b16 %v4124, %v4124
    %v4189 = vpack.c.b16 %v4125, %v4125
    %v4190 = vpack.c.b16 %v4126, %v4126
    %v4191 = vpack.c.b16 %v4127, %v4127
    %v4192 = vpack.c.b16 %v4128, %v4128
    %v4193 = vpack.c.b16 %v4129, %v4129
    %v4194 = vpack.c.b16 %v4130, %v4130
    %v4195 = vpack.c.b16 %v4131, %v4131
    %v4196 = vpack.c.b16 %v4132, %v4132
    %v4197 = vpack.c.b16 %v4133, %v4133
    %v4198 = vpack.c.b16 %v4134, %v4134
    %v4199 = vpack.c.b16 %v4135, %v4135
    %v4200 = vpack.c.b16 %v4136, %v4136
    %v4201 = vpack.c.b16 %v4137, %v4137
    %v4202 = vpack.c.b16 %v4138, %v4138
    %v4203 = vpack.c.b16 %v4139, %v4139
    %4268 = vst.msk [vmem:[#allocation2 + $0x4] sm:$0xf] %vm1408, %v4140
    %4269 = vst.msk [vmem:[#allocation2 + $0x10] sm:$0xf] %vm1408, %v4141
    %4270 = vst.msk [vmem:[#allocation2 + $0x1c] sm:$0xf] %vm1408, %v4142
    %4271 = vst.msk [vmem:[#allocation2 + $0x28] sm:$0xf] %vm1408, %v4143
    %4272 = vst.msk [vmem:[#allocation2 + $0x34] sm:$0xf] %vm1408, %v4144
    %4273 = vst.msk [vmem:[#allocation2 + $0x40] sm:$0xf] %vm1408, %v4145
    %4274 = vst.msk [vmem:[#allocation2 + $0x4c] sm:$0xf] %vm1408, %v4146
    %4275 = vst.msk [vmem:[#allocation2 + $0x58] sm:$0xf] %vm1408, %v4147
    %4276 = vst.msk [vmem:[#allocation2 + $0x64] sm:$0xf] %vm1408, %v4148
    %4277 = vst.msk [vmem:[#allocation2 + $0x70] sm:$0xf] %vm1408, %v4149
    %4278 = vst.msk [vmem:[#allocation2 + $0x7c] sm:$0xf] %vm1408, %v4150
    %4279 = vst.msk [vmem:[#allocation2 + $0x88] sm:$0xf] %vm1408, %v4151
    %4280 = vst.msk [vmem:[#allocation2 + $0x94] sm:$0xf] %vm1408, %v4152
    %4281 = vst.msk [vmem:[#allocation2 + $0xa0] sm:$0xf] %vm1408, %v4153
    %4282 = vst.msk [vmem:[#allocation2 + $0xac] sm:$0xf] %vm1408, %v4154
    %4283 = vst.msk [vmem:[#allocation2 + $0xb8] sm:$0xf] %vm1408, %v4155
    %4284 = vst.msk [vmem:[#allocation2 + $0xc4] sm:$0xf] %vm1408, %v4156
    %4285 = vst.msk [vmem:[#allocation2 + $0xd0] sm:$0xf] %vm1408, %v4157
    %4286 = vst.msk [vmem:[#allocation2 + $0xdc] sm:$0xf] %vm1408, %v4158
    %4287 = vst.msk [vmem:[#allocation2 + $0xe8] sm:$0xf] %vm1408, %v4159
    %4288 = vst.msk [vmem:[#allocation2 + $0xf4] sm:$0xf] %vm1408, %v4160
    %4289 = vst.msk [vmem:[#allocation2 + $0x100] sm:$0xf] %vm1408, %v4161
    %4290 = vst.msk [vmem:[#allocation2 + $0x10c] sm:$0xf] %vm1408, %v4162
    %4291 = vst.msk [vmem:[#allocation2 + $0x118] sm:$0xf] %vm1408, %v4163
    %4292 = vst.msk [vmem:[#allocation2 + $0x124] sm:$0xf] %vm1408, %v4164
    %4293 = vst.msk [vmem:[#allocation2 + $0x130] sm:$0xf] %vm1408, %v4165
    %4294 = vst.msk [vmem:[#allocation2 + $0x13c] sm:$0xf] %vm1408, %v4166
    %4295 = vst.msk [vmem:[#allocation2 + $0x148] sm:$0xf] %vm1408, %v4167
    %4296 = vst.msk [vmem:[#allocation2 + $0x154] sm:$0xf] %vm1408, %v4168
    %4297 = vst.msk [vmem:[#allocation2 + $0x160] sm:$0xf] %vm1408, %v4169
    %4298 = vst.msk [vmem:[#allocation2 + $0x16c] sm:$0xf] %vm1408, %v4170
    %4299 = vst.msk [vmem:[#allocation2 + $0x178] sm:$0xf] %vm1408, %v4171
    %4300 = vst.msk [vmem:[#allocation2 + $0x184] sm:$0xf] %vm1408, %v4172
    %4301 = vst.msk [vmem:[#allocation2 + $0x190] sm:$0xf] %vm1408, %v4173
    %4302 = vst.msk [vmem:[#allocation2 + $0x19c] sm:$0xf] %vm1408, %v4174
    %4303 = vst.msk [vmem:[#allocation2 + $0x1a8] sm:$0xf] %vm1408, %v4175
    %4304 = vst.msk [vmem:[#allocation2 + $0x1b4] sm:$0xf] %vm1408, %v4176
    %4305 = vst.msk [vmem:[#allocation2 + $0x1c0] sm:$0xf] %vm1408, %v4177
    %4306 = vst.msk [vmem:[#allocation2 + $0x1cc] sm:$0xf] %vm1408, %v4178
    %4307 = vst.msk [vmem:[#allocation2 + $0x1d8] sm:$0xf] %vm1408, %v4179
    %4308 = vst.msk [vmem:[#allocation2 + $0x1e4] sm:$0xf] %vm1408, %v4180
    %4309 = vst.msk [vmem:[#allocation2 + $0x1f0] sm:$0xf] %vm1408, %v4181
    %4310 = vst.msk [vmem:[#allocation2 + $0x1fc] sm:$0xf] %vm1408, %v4182
    %4311 = vst.msk [vmem:[#allocation2 + $0x208] sm:$0xf] %vm1408, %v4183
    %4312 = vst.msk [vmem:[#allocation2 + $0x214] sm:$0xf] %vm1408, %v4184
    %4313 = vst.msk [vmem:[#allocation2 + $0x220] sm:$0xf] %vm1408, %v4185
    %4314 = vst.msk [vmem:[#allocation2 + $0x22c] sm:$0xf] %vm1408, %v4186
    %4315 = vst.msk [vmem:[#allocation2 + $0x238] sm:$0xf] %vm1408, %v4187
    %4316 = vst.msk [vmem:[#allocation2 + $0x244] sm:$0xf] %vm1408, %v4188
    %4317 = vst.msk [vmem:[#allocation2 + $0x250] sm:$0xf] %vm1408, %v4189
    %4318 = vst.msk [vmem:[#allocation2 + $0x25c] sm:$0xf] %vm1408, %v4190
    %4319 = vst.msk [vmem:[#allocation2 + $0x268] sm:$0xf] %vm1408, %v4191
    %4320 = vst.msk [vmem:[#allocation2 + $0x274] sm:$0xf] %vm1408, %v4192
    %4321 = vst.msk [vmem:[#allocation2 + $0x280] sm:$0xf] %vm1408, %v4193
    %4322 = vst.msk [vmem:[#allocation2 + $0x28c] sm:$0xf] %vm1408, %v4194
    %4323 = vst.msk [vmem:[#allocation2 + $0x298] sm:$0xf] %vm1408, %v4195
    %4324 = vst.msk [vmem:[#allocation2 + $0x2a4] sm:$0xf] %vm1408, %v4196
    %4325 = vst.msk [vmem:[#allocation2 + $0x2b0] sm:$0xf] %vm1408, %v4197
    %4326 = vst.msk [vmem:[#allocation2 + $0x2bc] sm:$0xf] %vm1408, %v4198
    %4327 = vst.msk [vmem:[#allocation2 + $0x2c8] sm:$0xf] %vm1408, %v4199
    %4328 = vst.msk [vmem:[#allocation2 + $0x2d4] sm:$0xf] %vm1408, %v4200
    %4329 = vst.msk [vmem:[#allocation2 + $0x2e0] sm:$0xf] %vm1408, %v4201
    %4330 = vst.msk [vmem:[#allocation2 + $0x2ec] sm:$0xf] %vm1408, %v4202
    %4331 = vst.msk [vmem:[#allocation2 + $0x2f8] sm:$0xf] %vm1408, %v4203
    %s4332 = scalar_lea.vmem [#allocation3], 1536
    %v4333 = vld [vmem:[%s4332] sm:$0xff]
    %v4334 = vld [vmem:[%s4332 + $0x8] sm:$0xff]
    %v4335 = vld [vmem:[%s4332 + $0x10] sm:$0xff]
    %v4336 = vld [vmem:[%s4332 + $0x18] sm:$0xff]
    %v4337 = vld [vmem:[%s4332 + $0x20] sm:$0xff]
    %v4338 = vld [vmem:[%s4332 + $0x28] sm:$0xff]
    %v4339 = vld [vmem:[%s4332 + $0x30] sm:$0xff]
    %v4340 = vld [vmem:[%s4332 + $0x38] sm:$0xff]
    %v4341 = vld [vmem:[%s4332 + $0x40] sm:$0xff]
    %v4342 = vld [vmem:[%s4332 + $0x48] sm:$0xff]
    %v4343 = vld [vmem:[%s4332 + $0x50] sm:$0xff]
    %v4344 = vld [vmem:[%s4332 + $0x58] sm:$0xff]
    %v4345 = vld [vmem:[%s4332 + $0x60] sm:$0xff]
    %v4346 = vld [vmem:[%s4332 + $0x68] sm:$0xff]
    %v4347 = vld [vmem:[%s4332 + $0x70] sm:$0xff]
    %v4348 = vld [vmem:[%s4332 + $0x78] sm:$0xff]
    %v4349 = vld [vmem:[%s4332 + $0x80] sm:$0xff]
    %v4350 = vld [vmem:[%s4332 + $0x88] sm:$0xff]
    %v4351 = vld [vmem:[%s4332 + $0x90] sm:$0xff]
    %v4352 = vld [vmem:[%s4332 + $0x98] sm:$0xff]
    %v4353 = vld [vmem:[%s4332 + $0xa0] sm:$0xff]
    %v4354 = vld [vmem:[%s4332 + $0xa8] sm:$0xff]
    %v4355 = vld [vmem:[%s4332 + $0xb0] sm:$0xff]
    %v4356 = vld [vmem:[%s4332 + $0xb8] sm:$0xff]
    %v4357 = vld [vmem:[%s4332 + $0xc0] sm:$0xff]
    %v4358 = vld [vmem:[%s4332 + $0xc8] sm:$0xff]
    %v4359 = vld [vmem:[%s4332 + $0xd0] sm:$0xff]
    %v4360 = vld [vmem:[%s4332 + $0xd8] sm:$0xff]
    %v4361 = vld [vmem:[%s4332 + $0xe0] sm:$0xff]
    %v4362 = vld [vmem:[%s4332 + $0xe8] sm:$0xff]
    %v4363 = vld [vmem:[%s4332 + $0xf0] sm:$0xff]
    %v4364 = vld [vmem:[%s4332 + $0xf8] sm:$0xff]
    %v4365 = vld [vmem:[%s4332 + $0x100] sm:$0xff]
    %v4366 = vld [vmem:[%s4332 + $0x108] sm:$0xff]
    %v4367 = vld [vmem:[%s4332 + $0x110] sm:$0xff]
    %v4368 = vld [vmem:[%s4332 + $0x118] sm:$0xff]
    %v4369 = vld [vmem:[%s4332 + $0x120] sm:$0xff]
    %v4370 = vld [vmem:[%s4332 + $0x128] sm:$0xff]
    %v4371 = vld [vmem:[%s4332 + $0x130] sm:$0xff]
    %v4372 = vld [vmem:[%s4332 + $0x138] sm:$0xff]
    %v4373 = vld [vmem:[%s4332 + $0x140] sm:$0xff]
    %v4374 = vld [vmem:[%s4332 + $0x148] sm:$0xff]
    %v4375 = vld [vmem:[%s4332 + $0x150] sm:$0xff]
    %v4376 = vld [vmem:[%s4332 + $0x158] sm:$0xff]
    %v4377 = vld [vmem:[%s4332 + $0x160] sm:$0xff]
    %v4378 = vld [vmem:[%s4332 + $0x168] sm:$0xff]
    %v4379 = vld [vmem:[%s4332 + $0x170] sm:$0xff]
    %v4380 = vld [vmem:[%s4332 + $0x178] sm:$0xff]
    %v4381 = vld [vmem:[%s4332 + $0x180] sm:$0xff]
    %v4382 = vld [vmem:[%s4332 + $0x188] sm:$0xff]
    %v4383 = vld [vmem:[%s4332 + $0x190] sm:$0xff]
    %v4384 = vld [vmem:[%s4332 + $0x198] sm:$0xff]
    %v4385 = vld [vmem:[%s4332 + $0x1a0] sm:$0xff]
    %v4386 = vld [vmem:[%s4332 + $0x1a8] sm:$0xff]
    %v4387 = vld [vmem:[%s4332 + $0x1b0] sm:$0xff]
    %v4388 = vld [vmem:[%s4332 + $0x1b8] sm:$0xff]
    %v4389 = vld [vmem:[%s4332 + $0x1c0] sm:$0xff]
    %v4390 = vld [vmem:[%s4332 + $0x1c8] sm:$0xff]
    %v4391 = vld [vmem:[%s4332 + $0x1d0] sm:$0xff]
    %v4392 = vld [vmem:[%s4332 + $0x1d8] sm:$0xff]
    %v4393 = vld [vmem:[%s4332 + $0x1e0] sm:$0xff]
    %v4394 = vld [vmem:[%s4332 + $0x1e8] sm:$0xff]
    %v4395 = vld [vmem:[%s4332 + $0x1f0] sm:$0xff]
    %v4396 = vld [vmem:[%s4332 + $0x1f8] sm:$0xff]
    %v4397 = vpack.c.bf16 %v4334, %v4333
    %v4398 = vpack.c.bf16 %v4336, %v4335
    %v4399 = vpack.c.bf16 %v4338, %v4337
    %v4400 = vpack.c.bf16 %v4340, %v4339
    %v4401 = vpack.c.bf16 %v4342, %v4341
    %v4402 = vpack.c.bf16 %v4344, %v4343
    %v4403 = vpack.c.bf16 %v4346, %v4345
    %v4404 = vpack.c.bf16 %v4348, %v4347
    %v4405 = vpack.c.bf16 %v4350, %v4349
    %v4406 = vpack.c.bf16 %v4352, %v4351
    %v4407 = vpack.c.bf16 %v4354, %v4353
    %v4408 = vpack.c.bf16 %v4356, %v4355
    %v4409 = vpack.c.bf16 %v4358, %v4357
    %v4410 = vpack.c.bf16 %v4360, %v4359
    %v4411 = vpack.c.bf16 %v4362, %v4361
    %v4412 = vpack.c.bf16 %v4364, %v4363
    %v4413 = vpack.c.bf16 %v4366, %v4365
    %v4414 = vpack.c.bf16 %v4368, %v4367
    %v4415 = vpack.c.bf16 %v4370, %v4369
    %v4416 = vpack.c.bf16 %v4372, %v4371
    %v4417 = vpack.c.bf16 %v4374, %v4373
    %v4418 = vpack.c.bf16 %v4376, %v4375
    %v4419 = vpack.c.bf16 %v4378, %v4377
    %v4420 = vpack.c.bf16 %v4380, %v4379
    %v4421 = vpack.c.bf16 %v4382, %v4381
    %v4422 = vpack.c.bf16 %v4384, %v4383
    %v4423 = vpack.c.bf16 %v4386, %v4385
    %v4424 = vpack.c.bf16 %v4388, %v4387
    %v4425 = vpack.c.bf16 %v4390, %v4389
    %v4426 = vpack.c.bf16 %v4392, %v4391
    %v4427 = vpack.c.bf16 %v4394, %v4393
    %v4428 = vpack.c.bf16 %v4396, %v4395
    %s4429 = scalar_lea.vmem %s1, 192
    %v4430 = vld [vmem:[%s4429] sm:$0xf]
    %v4431 = vld [vmem:[%s4429 + $0x4] sm:$0xf]
    %v4432 = vld [vmem:[%s4429 + $0x8] sm:$0xf]
    %v4433 = vld [vmem:[%s4429 + $0xc] sm:$0xf]
    %v4434 = vld [vmem:[%s4429 + $0x10] sm:$0xf]
    %v4435 = vld [vmem:[%s4429 + $0x14] sm:$0xf]
    %v4436 = vld [vmem:[%s4429 + $0x18] sm:$0xf]
    %v4437 = vld [vmem:[%s4429 + $0x1c] sm:$0xf]
    %v4438 = vld [vmem:[%s4429 + $0x20] sm:$0xf]
    %v4439 = vld [vmem:[%s4429 + $0x24] sm:$0xf]
    %v4440 = vld [vmem:[%s4429 + $0x28] sm:$0xf]
    %v4441 = vld [vmem:[%s4429 + $0x2c] sm:$0xf]
    %v4442 = vld [vmem:[%s4429 + $0x30] sm:$0xf]
    %v4443 = vld [vmem:[%s4429 + $0x34] sm:$0xf]
    %v4444 = vld [vmem:[%s4429 + $0x38] sm:$0xf]
    %v4445 = vld [vmem:[%s4429 + $0x3c] sm:$0xf]
    %s4446 = scalar_lea.vmem [#allocation5], 3
    %v4447 = vld [vmem:[%s4446] sm:$0x1]
    %v4449 = vlaneseq
    %v4450 = vshrl.u32 %v4449, 7
    %v4451 = vsub.s32 0, %v4450
    %v4452 = vrot.slane %v4447, %v4451
    %v4470 = vunpack.c.l.b16 %v4430
    %v4471 = vunpack.c.l.b16 %v4431
    %v4472 = vunpack.c.l.b16 %v4432
    %v4473 = vunpack.c.l.b16 %v4433
    %v4474 = vunpack.c.l.b16 %v4434
    %v4475 = vunpack.c.l.b16 %v4435
    %v4476 = vunpack.c.l.b16 %v4436
    %v4477 = vunpack.c.l.b16 %v4437
    %v4478 = vunpack.c.l.b16 %v4438
    %v4479 = vunpack.c.l.b16 %v4439
    %v4480 = vunpack.c.l.b16 %v4440
    %v4481 = vunpack.c.l.b16 %v4441
    %v4482 = vunpack.c.l.b16 %v4442
    %v4483 = vunpack.c.l.b16 %v4443
    %v4484 = vunpack.c.l.b16 %v4444
    %v4485 = vunpack.c.l.b16 %v4445
    %v4486 = vpack.c.b16 %v4471, %v4470
    %v4487 = vpack.c.b16 %v4473, %v4472
    %v4488 = vpack.c.b16 %v4475, %v4474
    %v4489 = vpack.c.b16 %v4477, %v4476
    %v4490 = vpack.c.b16 %v4479, %v4478
    %v4491 = vpack.c.b16 %v4481, %v4480
    %v4492 = vpack.c.b16 %v4483, %v4482
    %v4493 = vpack.c.b16 %v4485, %v4484
    %4502 = vmatprep.subr.bf16.mxu0 0
    %4503 = vmatpush1.bf16.msra.mxu0 %v4493
    %4504 = vmatprep.subr.bf16.mxu0 0
    %4505 = vmatpush1.bf16.msra.mxu0 %v4492
    %4506 = vmatprep.subr.bf16.mxu0 0
    %4507 = vmatpush1.bf16.msra.mxu0 %v4491
    %4508 = vmatprep.subr.bf16.mxu0 0
    %4509 = vmatpush1.bf16.msra.mxu0 %v4490
    %4510 = vmatprep.subr.bf16.mxu0 0
    %4511 = vmatpush1.bf16.msra.mxu0 %v4489
    %4512 = vmatprep.subr.bf16.mxu0 0
    %4513 = vmatpush1.bf16.msra.mxu0 %v4488
    %4514 = vmatprep.subr.bf16.mxu0 0
    %4515 = vmatpush1.bf16.msra.mxu0 %v4487
    %4516 = vmatprep.subr.bf16.mxu0 0
    %4517 = vmatpush1.bf16.msra.mxu0 %v4486
    %4518 = vmatprep.subr.bf16.mxu0 0
    %4519 = vmatpush2.bf16.msra.mxu0 0
    %4520 = vmatprep.subr.bf16.mxu0 0
    %4521 = vmatpush2.bf16.msra.mxu0 0
    %4522 = vmatprep.subr.bf16.mxu0 0
    %4523 = vmatpush2.bf16.msra.mxu0 0
    %4524 = vmatprep.subr.bf16.mxu0 0
    %4525 = vmatpush2.bf16.msra.mxu0 0
    %4526 = vmatprep.subr.bf16.mxu0 0
    %4527 = vmatpush2.bf16.msra.mxu0 0
    %4528 = vmatprep.subr.bf16.mxu0 0
    %4529 = vmatpush2.bf16.msra.mxu0 0
    %4530 = vmatprep.subr.bf16.mxu0 0
    %4531 = vmatpush2.bf16.msra.mxu0 0
    %4532 = vmatprep.subr.bf16.mxu0 0
    %4533 = vmatpush2.bf16.msra.mxu0 0
    %4534 = vmatprep.mubr.bf16.mxu0 0
    %4535 = vmatmul.mubr.bf16.gmra.mxu0 %v4397
    %v4536 = vpop.f32.mrf.mxu0
    %v4537 = vadd.f32 %v4452, %v4536
    %v4538 = vpop.f32.mrf.mxu0
    %v4539 = vpop.f32.mrf.mxu0
    %v4540 = vadd.f32 %v4452, %v4539
    %v4541 = vpop.f32.mrf.mxu0
    %4542 = vmatprep.mubr.bf16.mxu0 0
    %4543 = vmatmul.mubr.bf16.gmra.mxu0 %v4398
    %v4544 = vpop.f32.mrf.mxu0
    %v4545 = vadd.f32 %v4452, %v4544
    %v4546 = vpop.f32.mrf.mxu0
    %v4547 = vpop.f32.mrf.mxu0
    %v4548 = vadd.f32 %v4452, %v4547
    %v4549 = vpop.f32.mrf.mxu0
    %4550 = vmatprep.mubr.bf16.mxu0 0
    %4551 = vmatmul.mubr.bf16.gmra.mxu0 %v4399
    %v4552 = vpop.f32.mrf.mxu0
    %v4553 = vadd.f32 %v4452, %v4552
    %v4554 = vpop.f32.mrf.mxu0
    %v4555 = vpop.f32.mrf.mxu0
    %v4556 = vadd.f32 %v4452, %v4555
    %v4557 = vpop.f32.mrf.mxu0
    %4558 = vmatprep.mubr.bf16.mxu0 0
    %4559 = vmatmul.mubr.bf16.gmra.mxu0 %v4400
    %v4560 = vpop.f32.mrf.mxu0
    %v4561 = vadd.f32 %v4452, %v4560
    %v4562 = vpop.f32.mrf.mxu0
    %v4563 = vpop.f32.mrf.mxu0
    %v4564 = vadd.f32 %v4452, %v4563
    %v4565 = vpop.f32.mrf.mxu0
    %4566 = vmatprep.mubr.bf16.mxu0 0
    %4567 = vmatmul.mubr.bf16.gmra.mxu0 %v4401
    %v4568 = vpop.f32.mrf.mxu0
    %v4569 = vadd.f32 %v4452, %v4568
    %v4570 = vpop.f32.mrf.mxu0
    %v4571 = vpop.f32.mrf.mxu0
    %v4572 = vadd.f32 %v4452, %v4571
    %v4573 = vpop.f32.mrf.mxu0
    %4574 = vmatprep.mubr.bf16.mxu0 0
    %4575 = vmatmul.mubr.bf16.gmra.mxu0 %v4402
    %v4576 = vpop.f32.mrf.mxu0
    %v4577 = vadd.f32 %v4452, %v4576
    %v4578 = vpop.f32.mrf.mxu0
    %v4579 = vpop.f32.mrf.mxu0
    %v4580 = vadd.f32 %v4452, %v4579
    %v4581 = vpop.f32.mrf.mxu0
    %4582 = vmatprep.mubr.bf16.mxu0 0
    %4583 = vmatmul.mubr.bf16.gmra.mxu0 %v4403
    %v4584 = vpop.f32.mrf.mxu0
    %v4585 = vadd.f32 %v4452, %v4584
    %v4586 = vpop.f32.mrf.mxu0
    %v4587 = vpop.f32.mrf.mxu0
    %v4588 = vadd.f32 %v4452, %v4587
    %v4589 = vpop.f32.mrf.mxu0
    %4590 = vmatprep.mubr.bf16.mxu0 0
    %4591 = vmatmul.mubr.bf16.gmra.mxu0 %v4404
    %v4592 = vpop.f32.mrf.mxu0
    %v4593 = vadd.f32 %v4452, %v4592
    %v4594 = vpop.f32.mrf.mxu0
    %v4595 = vpop.f32.mrf.mxu0
    %v4596 = vadd.f32 %v4452, %v4595
    %v4597 = vpop.f32.mrf.mxu0
    %4598 = vmatprep.mubr.bf16.mxu0 0
    %4599 = vmatmul.mubr.bf16.gmra.mxu0 %v4405
    %v4600 = vpop.f32.mrf.mxu0
    %v4601 = vadd.f32 %v4452, %v4600
    %v4602 = vpop.f32.mrf.mxu0
    %v4603 = vpop.f32.mrf.mxu0
    %v4604 = vadd.f32 %v4452, %v4603
    %v4605 = vpop.f32.mrf.mxu0
    %4606 = vmatprep.mubr.bf16.mxu0 0
    %4607 = vmatmul.mubr.bf16.gmra.mxu0 %v4406
    %v4608 = vpop.f32.mrf.mxu0
    %v4609 = vadd.f32 %v4452, %v4608
    %v4610 = vpop.f32.mrf.mxu0
    %v4611 = vpop.f32.mrf.mxu0
    %v4612 = vadd.f32 %v4452, %v4611
    %v4613 = vpop.f32.mrf.mxu0
    %4614 = vmatprep.mubr.bf16.mxu0 0
    %4615 = vmatmul.mubr.bf16.gmra.mxu0 %v4407
    %v4616 = vpop.f32.mrf.mxu0
    %v4617 = vadd.f32 %v4452, %v4616
    %v4618 = vpop.f32.mrf.mxu0
    %v4619 = vpop.f32.mrf.mxu0
    %v4620 = vadd.f32 %v4452, %v4619
    %v4621 = vpop.f32.mrf.mxu0
    %4622 = vmatprep.mubr.bf16.mxu0 0
    %4623 = vmatmul.mubr.bf16.gmra.mxu0 %v4408
    %v4624 = vpop.f32.mrf.mxu0
    %v4625 = vadd.f32 %v4452, %v4624
    %v4626 = vpop.f32.mrf.mxu0
    %v4627 = vpop.f32.mrf.mxu0
    %v4628 = vadd.f32 %v4452, %v4627
    %v4629 = vpop.f32.mrf.mxu0
    %4630 = vmatprep.mubr.bf16.mxu0 0
    %4631 = vmatmul.mubr.bf16.gmra.mxu0 %v4409
    %v4632 = vpop.f32.mrf.mxu0
    %v4633 = vadd.f32 %v4452, %v4632
    %v4634 = vpop.f32.mrf.mxu0
    %v4635 = vpop.f32.mrf.mxu0
    %v4636 = vadd.f32 %v4452, %v4635
    %v4637 = vpop.f32.mrf.mxu0
    %4638 = vmatprep.mubr.bf16.mxu0 0
    %4639 = vmatmul.mubr.bf16.gmra.mxu0 %v4410
    %v4640 = vpop.f32.mrf.mxu0
    %v4641 = vadd.f32 %v4452, %v4640
    %v4642 = vpop.f32.mrf.mxu0
    %v4643 = vpop.f32.mrf.mxu0
    %v4644 = vadd.f32 %v4452, %v4643
    %v4645 = vpop.f32.mrf.mxu0
    %4646 = vmatprep.mubr.bf16.mxu0 0
    %4647 = vmatmul.mubr.bf16.gmra.mxu0 %v4411
    %v4648 = vpop.f32.mrf.mxu0
    %v4649 = vadd.f32 %v4452, %v4648
    %v4650 = vpop.f32.mrf.mxu0
    %v4651 = vpop.f32.mrf.mxu0
    %v4652 = vadd.f32 %v4452, %v4651
    %v4653 = vpop.f32.mrf.mxu0
    %4654 = vmatprep.mubr.bf16.mxu0 0
    %4655 = vmatmul.mubr.bf16.gmra.mxu0 %v4412
    %v4656 = vpop.f32.mrf.mxu0
    %v4657 = vadd.f32 %v4452, %v4656
    %v4658 = vpop.f32.mrf.mxu0
    %v4659 = vpop.f32.mrf.mxu0
    %v4660 = vadd.f32 %v4452, %v4659
    %v4661 = vpop.f32.mrf.mxu0
    %4662 = vmatprep.mubr.bf16.mxu0 0
    %4663 = vmatmul.mubr.bf16.gmra.mxu0 %v4413
    %v4664 = vpop.f32.mrf.mxu0
    %v4665 = vadd.f32 %v4452, %v4664
    %v4666 = vpop.f32.mrf.mxu0
    %v4667 = vpop.f32.mrf.mxu0
    %v4668 = vadd.f32 %v4452, %v4667
    %v4669 = vpop.f32.mrf.mxu0
    %4670 = vmatprep.mubr.bf16.mxu0 0
    %4671 = vmatmul.mubr.bf16.gmra.mxu0 %v4414
    %v4672 = vpop.f32.mrf.mxu0
    %v4673 = vadd.f32 %v4452, %v4672
    %v4674 = vpop.f32.mrf.mxu0
    %v4675 = vpop.f32.mrf.mxu0
    %v4676 = vadd.f32 %v4452, %v4675
    %v4677 = vpop.f32.mrf.mxu0
    %4678 = vmatprep.mubr.bf16.mxu0 0
    %4679 = vmatmul.mubr.bf16.gmra.mxu0 %v4415
    %v4680 = vpop.f32.mrf.mxu0
    %v4681 = vadd.f32 %v4452, %v4680
    %v4682 = vpop.f32.mrf.mxu0
    %v4683 = vpop.f32.mrf.mxu0
    %v4684 = vadd.f32 %v4452, %v4683
    %v4685 = vpop.f32.mrf.mxu0
    %4686 = vmatprep.mubr.bf16.mxu0 0
    %4687 = vmatmul.mubr.bf16.gmra.mxu0 %v4416
    %v4688 = vpop.f32.mrf.mxu0
    %v4689 = vadd.f32 %v4452, %v4688
    %v4690 = vpop.f32.mrf.mxu0
    %v4691 = vpop.f32.mrf.mxu0
    %v4692 = vadd.f32 %v4452, %v4691
    %v4693 = vpop.f32.mrf.mxu0
    %4694 = vmatprep.mubr.bf16.mxu0 0
    %4695 = vmatmul.mubr.bf16.gmra.mxu0 %v4417
    %v4696 = vpop.f32.mrf.mxu0
    %v4697 = vadd.f32 %v4452, %v4696
    %v4698 = vpop.f32.mrf.mxu0
    %v4699 = vpop.f32.mrf.mxu0
    %v4700 = vadd.f32 %v4452, %v4699
    %v4701 = vpop.f32.mrf.mxu0
    %4702 = vmatprep.mubr.bf16.mxu0 0
    %4703 = vmatmul.mubr.bf16.gmra.mxu0 %v4418
    %v4704 = vpop.f32.mrf.mxu0
    %v4705 = vadd.f32 %v4452, %v4704
    %v4706 = vpop.f32.mrf.mxu0
    %v4707 = vpop.f32.mrf.mxu0
    %v4708 = vadd.f32 %v4452, %v4707
    %v4709 = vpop.f32.mrf.mxu0
    %4710 = vmatprep.mubr.bf16.mxu0 0
    %4711 = vmatmul.mubr.bf16.gmra.mxu0 %v4419
    %v4712 = vpop.f32.mrf.mxu0
    %v4713 = vadd.f32 %v4452, %v4712
    %v4714 = vpop.f32.mrf.mxu0
    %v4715 = vpop.f32.mrf.mxu0
    %v4716 = vadd.f32 %v4452, %v4715
    %v4717 = vpop.f32.mrf.mxu0
    %4718 = vmatprep.mubr.bf16.mxu0 0
    %4719 = vmatmul.mubr.bf16.gmra.mxu0 %v4420
    %v4720 = vpop.f32.mrf.mxu0
    %v4721 = vadd.f32 %v4452, %v4720
    %v4722 = vpop.f32.mrf.mxu0
    %v4723 = vpop.f32.mrf.mxu0
    %v4724 = vadd.f32 %v4452, %v4723
    %v4725 = vpop.f32.mrf.mxu0
    %4726 = vmatprep.mubr.bf16.mxu0 0
    %4727 = vmatmul.mubr.bf16.gmra.mxu0 %v4421
    %v4728 = vpop.f32.mrf.mxu0
    %v4729 = vadd.f32 %v4452, %v4728
    %v4730 = vpop.f32.mrf.mxu0
    %v4731 = vpop.f32.mrf.mxu0
    %v4732 = vadd.f32 %v4452, %v4731
    %v4733 = vpop.f32.mrf.mxu0
    %4734 = vmatprep.mubr.bf16.mxu0 0
    %4735 = vmatmul.mubr.bf16.gmra.mxu0 %v4422
    %v4736 = vpop.f32.mrf.mxu0
    %v4737 = vadd.f32 %v4452, %v4736
    %v4738 = vpop.f32.mrf.mxu0
    %v4739 = vpop.f32.mrf.mxu0
    %v4740 = vadd.f32 %v4452, %v4739
    %v4741 = vpop.f32.mrf.mxu0
    %4742 = vmatprep.mubr.bf16.mxu0 0
    %4743 = vmatmul.mubr.bf16.gmra.mxu0 %v4423
    %v4744 = vpop.f32.mrf.mxu0
    %v4745 = vadd.f32 %v4452, %v4744
    %v4746 = vpop.f32.mrf.mxu0
    %v4747 = vpop.f32.mrf.mxu0
    %v4748 = vadd.f32 %v4452, %v4747
    %v4749 = vpop.f32.mrf.mxu0
    %4750 = vmatprep.mubr.bf16.mxu0 0
    %4751 = vmatmul.mubr.bf16.gmra.mxu0 %v4424
    %v4752 = vpop.f32.mrf.mxu0
    %v4753 = vadd.f32 %v4452, %v4752
    %v4754 = vpop.f32.mrf.mxu0
    %v4755 = vpop.f32.mrf.mxu0
    %v4756 = vadd.f32 %v4452, %v4755
    %v4757 = vpop.f32.mrf.mxu0
    %4758 = vmatprep.mubr.bf16.mxu0 0
    %4759 = vmatmul.mubr.bf16.gmra.mxu0 %v4425
    %v4760 = vpop.f32.mrf.mxu0
    %v4761 = vadd.f32 %v4452, %v4760
    %v4762 = vpop.f32.mrf.mxu0
    %v4763 = vpop.f32.mrf.mxu0
    %v4764 = vadd.f32 %v4452, %v4763
    %v4765 = vpop.f32.mrf.mxu0
    %4766 = vmatprep.mubr.bf16.mxu0 0
    %4767 = vmatmul.mubr.bf16.gmra.mxu0 %v4426
    %v4768 = vpop.f32.mrf.mxu0
    %v4769 = vadd.f32 %v4452, %v4768
    %v4770 = vpop.f32.mrf.mxu0
    %v4771 = vpop.f32.mrf.mxu0
    %v4772 = vadd.f32 %v4452, %v4771
    %v4773 = vpop.f32.mrf.mxu0
    %4774 = vmatprep.mubr.bf16.mxu0 0
    %4775 = vmatmul.mubr.bf16.gmra.mxu0 %v4427
    %v4776 = vpop.f32.mrf.mxu0
    %v4777 = vadd.f32 %v4452, %v4776
    %v4778 = vpop.f32.mrf.mxu0
    %v4779 = vpop.f32.mrf.mxu0
    %v4780 = vadd.f32 %v4452, %v4779
    %v4781 = vpop.f32.mrf.mxu0
    %4782 = vmatprep.mubr.bf16.mxu0 0
    %4783 = vmatmul.mubr.bf16.gmra.mxu0 %v4428
    %v4784 = vpop.f32.mrf.mxu0
    %v4785 = vadd.f32 %v4452, %v4784
    %v4786 = vpop.f32.mrf.mxu0
    %v4787 = vpop.f32.mrf.mxu0
    %v4788 = vadd.f32 %v4452, %v4787
    %v4789 = vpop.f32.mrf.mxu0
    %4790 = vdwg.mxu0
    %v4791 = vmax.f32 %v4537, 0.0
    %v4792 = vmax.f32 %v4540, 0.0
    %v4793 = vmax.f32 %v4545, 0.0
    %v4794 = vmax.f32 %v4548, 0.0
    %v4795 = vmax.f32 %v4553, 0.0
    %v4796 = vmax.f32 %v4556, 0.0
    %v4797 = vmax.f32 %v4561, 0.0
    %v4798 = vmax.f32 %v4564, 0.0
    %v4799 = vmax.f32 %v4569, 0.0
    %v4800 = vmax.f32 %v4572, 0.0
    %v4801 = vmax.f32 %v4577, 0.0
    %v4802 = vmax.f32 %v4580, 0.0
    %v4803 = vmax.f32 %v4585, 0.0
    %v4804 = vmax.f32 %v4588, 0.0
    %v4805 = vmax.f32 %v4593, 0.0
    %v4806 = vmax.f32 %v4596, 0.0
    %v4807 = vmax.f32 %v4601, 0.0
    %v4808 = vmax.f32 %v4604, 0.0
    %v4809 = vmax.f32 %v4609, 0.0
    %v4810 = vmax.f32 %v4612, 0.0
    %v4811 = vmax.f32 %v4617, 0.0
    %v4812 = vmax.f32 %v4620, 0.0
    %v4813 = vmax.f32 %v4625, 0.0
    %v4814 = vmax.f32 %v4628, 0.0
    %v4815 = vmax.f32 %v4633, 0.0
    %v4816 = vmax.f32 %v4636, 0.0
    %v4817 = vmax.f32 %v4641, 0.0
    %v4818 = vmax.f32 %v4644, 0.0
    %v4819 = vmax.f32 %v4649, 0.0
    %v4820 = vmax.f32 %v4652, 0.0
    %v4821 = vmax.f32 %v4657, 0.0
    %v4822 = vmax.f32 %v4660, 0.0
    %v4823 = vmax.f32 %v4665, 0.0
    %v4824 = vmax.f32 %v4668, 0.0
    %v4825 = vmax.f32 %v4673, 0.0
    %v4826 = vmax.f32 %v4676, 0.0
    %v4827 = vmax.f32 %v4681, 0.0
    %v4828 = vmax.f32 %v4684, 0.0
    %v4829 = vmax.f32 %v4689, 0.0
    %v4830 = vmax.f32 %v4692, 0.0
    %v4831 = vmax.f32 %v4697, 0.0
    %v4832 = vmax.f32 %v4700, 0.0
    %v4833 = vmax.f32 %v4705, 0.0
    %v4834 = vmax.f32 %v4708, 0.0
    %v4835 = vmax.f32 %v4713, 0.0
    %v4836 = vmax.f32 %v4716, 0.0
    %v4837 = vmax.f32 %v4721, 0.0
    %v4838 = vmax.f32 %v4724, 0.0
    %v4839 = vmax.f32 %v4729, 0.0
    %v4840 = vmax.f32 %v4732, 0.0
    %v4841 = vmax.f32 %v4737, 0.0
    %v4842 = vmax.f32 %v4740, 0.0
    %v4843 = vmax.f32 %v4745, 0.0
    %v4844 = vmax.f32 %v4748, 0.0
    %v4845 = vmax.f32 %v4753, 0.0
    %v4846 = vmax.f32 %v4756, 0.0
    %v4847 = vmax.f32 %v4761, 0.0
    %v4848 = vmax.f32 %v4764, 0.0
    %v4849 = vmax.f32 %v4769, 0.0
    %v4850 = vmax.f32 %v4772, 0.0
    %v4851 = vmax.f32 %v4777, 0.0
    %v4852 = vmax.f32 %v4780, 0.0
    %v4853 = vmax.f32 %v4785, 0.0
    %v4854 = vmax.f32 %v4788, 0.0
    %v4855 = vpack.c.bf16 %v4792, %v4791
    %v4856 = vpack.c.bf16 %v4794, %v4793
    %v4857 = vpack.c.bf16 %v4796, %v4795
    %v4858 = vpack.c.bf16 %v4798, %v4797
    %v4859 = vpack.c.bf16 %v4800, %v4799
    %v4860 = vpack.c.bf16 %v4802, %v4801
    %v4861 = vpack.c.bf16 %v4804, %v4803
    %v4862 = vpack.c.bf16 %v4806, %v4805
    %v4863 = vpack.c.bf16 %v4808, %v4807
    %v4864 = vpack.c.bf16 %v4810, %v4809
    %v4865 = vpack.c.bf16 %v4812, %v4811
    %v4866 = vpack.c.bf16 %v4814, %v4813
    %v4867 = vpack.c.bf16 %v4816, %v4815
    %v4868 = vpack.c.bf16 %v4818, %v4817
    %v4869 = vpack.c.bf16 %v4820, %v4819
    %v4870 = vpack.c.bf16 %v4822, %v4821
    %v4871 = vpack.c.bf16 %v4824, %v4823
    %v4872 = vpack.c.bf16 %v4826, %v4825
    %v4873 = vpack.c.bf16 %v4828, %v4827
    %v4874 = vpack.c.bf16 %v4830, %v4829
    %v4875 = vpack.c.bf16 %v4832, %v4831
    %v4876 = vpack.c.bf16 %v4834, %v4833
    %v4877 = vpack.c.bf16 %v4836, %v4835
    %v4878 = vpack.c.bf16 %v4838, %v4837
    %v4879 = vpack.c.bf16 %v4840, %v4839
    %v4880 = vpack.c.bf16 %v4842, %v4841
    %v4881 = vpack.c.bf16 %v4844, %v4843
    %v4882 = vpack.c.bf16 %v4846, %v4845
    %v4883 = vpack.c.bf16 %v4848, %v4847
    %v4884 = vpack.c.bf16 %v4850, %v4849
    %v4885 = vpack.c.bf16 %v4852, %v4851
    %v4886 = vpack.c.bf16 %v4854, %v4853
    %s4887 = scalar_lea.vmem [#allocation7], 96
    %v4888 = vld [vmem:[%s4887] sm:$0xf]
    %v4889 = vld [vmem:[%s4887 + $0x4] sm:$0xf]
    %v4890 = vld [vmem:[%s4887 + $0x8] sm:$0xf]
    %v4891 = vld [vmem:[%s4887 + $0xc] sm:$0xf]
    %v4892 = vld [vmem:[%s4887 + $0x10] sm:$0xf]
    %v4893 = vld [vmem:[%s4887 + $0x14] sm:$0xf]
    %v4894 = vld [vmem:[%s4887 + $0x18] sm:$0xf]
    %v4895 = vld [vmem:[%s4887 + $0x1c] sm:$0xf]
    %s4896 = scalar_lea.vmem [#allocation8], 3
    %v4897 = vld [vmem:[%s4896] sm:$0x1]
    %v4899 = vlaneseq
    %v4900 = vshrl.u32 %v4899, 7
    %v4901 = vsub.s32 0, %v4900
    %v4902 = vrot.slane %v4897, %v4901
    %v4912 = vunpack.c.l.b16 %v4888
    %v4913 = vunpack.c.l.b16 %v4889
    %v4914 = vunpack.c.l.b16 %v4890
    %v4915 = vunpack.c.l.b16 %v4891
    %v4916 = vunpack.c.l.b16 %v4892
    %v4917 = vunpack.c.l.b16 %v4893
    %v4918 = vunpack.c.l.b16 %v4894
    %v4919 = vunpack.c.l.b16 %v4895
    %v4920 = vpack.c.b16 %v4913, %v4912
    %v4921 = vpack.c.b16 %v4915, %v4914
    %v4922 = vpack.c.b16 %v4917, %v4916
    %v4923 = vpack.c.b16 %v4919, %v4918
    %v4929 = vsel %vm702, %v4855, 0
    %v4932 = vsel %vm702, %v4856, 0
    %v4935 = vsel %vm702, %v4857, 0
    %v4938 = vsel %vm702, %v4858, 0
    %v4941 = vsel %vm702, %v4859, 0
    %v4944 = vsel %vm702, %v4860, 0
    %v4947 = vsel %vm702, %v4861, 0
    %v4950 = vsel %vm702, %v4862, 0
    %v4953 = vsel %vm702, %v4863, 0
    %v4956 = vsel %vm702, %v4864, 0
    %v4959 = vsel %vm702, %v4865, 0
    %v4962 = vsel %vm702, %v4866, 0
    %v4965 = vsel %vm702, %v4867, 0
    %v4968 = vsel %vm702, %v4868, 0
    %v4971 = vsel %vm702, %v4869, 0
    %v4974 = vsel %vm702, %v4870, 0
    %v4977 = vsel %vm702, %v4871, 0
    %v4980 = vsel %vm702, %v4872, 0
    %v4983 = vsel %vm702, %v4873, 0
    %v4986 = vsel %vm702, %v4874, 0
    %v4989 = vsel %vm702, %v4875, 0
    %v4992 = vsel %vm702, %v4876, 0
    %v4995 = vsel %vm702, %v4877, 0
    %v4998 = vsel %vm702, %v4878, 0
    %v5001 = vsel %vm702, %v4879, 0
    %v5004 = vsel %vm702, %v4880, 0
    %v5007 = vsel %vm702, %v4881, 0
    %v5010 = vsel %vm702, %v4882, 0
    %v5013 = vsel %vm702, %v4883, 0
    %v5016 = vsel %vm702, %v4884, 0
    %v5019 = vsel %vm702, %v4885, 0
    %v5022 = vsel %vm702, %v4886, 0
    %5024 = vmatprep.subr.bf16.mxu0 0
    %5025 = vmatpush1.bf16.msra.mxu0 0
    %5026 = vmatprep.subr.bf16.mxu0 0
    %5027 = vmatpush1.bf16.msra.mxu0 0
    %5028 = vmatprep.subr.bf16.mxu0 0
    %5029 = vmatpush1.bf16.msra.mxu0 0
    %5030 = vmatprep.subr.bf16.mxu0 0
    %5031 = vmatpush1.bf16.msra.mxu0 0
    %5032 = vmatprep.subr.bf16.mxu0 0
    %5033 = vmatpush1.bf16.msra.mxu0 %v4923
    %5034 = vmatprep.subr.bf16.mxu0 0
    %5035 = vmatpush1.bf16.msra.mxu0 %v4922
    %5036 = vmatprep.subr.bf16.mxu0 0
    %5037 = vmatpush1.bf16.msra.mxu0 %v4921
    %5038 = vmatprep.subr.bf16.mxu0 0
    %5039 = vmatpush1.bf16.msra.mxu0 %v4920
    %5040 = vmatprep.subr.bf16.mxu0 0
    %5041 = vmatpush2.bf16.msra.mxu0 0
    %5042 = vmatprep.subr.bf16.mxu0 0
    %5043 = vmatpush2.bf16.msra.mxu0 0
    %5044 = vmatprep.subr.bf16.mxu0 0
    %5045 = vmatpush2.bf16.msra.mxu0 0
    %5046 = vmatprep.subr.bf16.mxu0 0
    %5047 = vmatpush2.bf16.msra.mxu0 0
    %5048 = vmatprep.subr.bf16.mxu0 0
    %5049 = vmatpush2.bf16.msra.mxu0 0
    %5050 = vmatprep.subr.bf16.mxu0 0
    %5051 = vmatpush2.bf16.msra.mxu0 0
    %5052 = vmatprep.subr.bf16.mxu0 0
    %5053 = vmatpush2.bf16.msra.mxu0 0
    %5054 = vmatprep.subr.bf16.mxu0 0
    %5055 = vmatpush2.bf16.msra.mxu0 0
    %5056 = vmatprep.mubr.bf16.mxu0 0
    %5057 = vmatmul.mubr.bf16.gmra.mxu0 %v4929
    %v5058 = vpop.f32.mrf.mxu0
    %v5059 = vadd.f32 %v4902, %v5058
    %v5060 = vpop.f32.mrf.mxu0
    %v5061 = vpop.f32.mrf.mxu0
    %v5062 = vadd.f32 %v4902, %v5061
    %v5063 = vpop.f32.mrf.mxu0
    %5064 = vmatprep.mubr.bf16.mxu0 0
    %5065 = vmatmul.mubr.bf16.gmra.mxu0 %v4932
    %v5066 = vpop.f32.mrf.mxu0
    %v5067 = vadd.f32 %v4902, %v5066
    %v5068 = vpop.f32.mrf.mxu0
    %v5069 = vpop.f32.mrf.mxu0
    %v5070 = vadd.f32 %v4902, %v5069
    %v5071 = vpop.f32.mrf.mxu0
    %5072 = vmatprep.mubr.bf16.mxu0 0
    %5073 = vmatmul.mubr.bf16.gmra.mxu0 %v4935
    %v5074 = vpop.f32.mrf.mxu0
    %v5075 = vadd.f32 %v4902, %v5074
    %v5076 = vpop.f32.mrf.mxu0
    %v5077 = vpop.f32.mrf.mxu0
    %v5078 = vadd.f32 %v4902, %v5077
    %v5079 = vpop.f32.mrf.mxu0
    %5080 = vmatprep.mubr.bf16.mxu0 0
    %5081 = vmatmul.mubr.bf16.gmra.mxu0 %v4938
    %v5082 = vpop.f32.mrf.mxu0
    %v5083 = vadd.f32 %v4902, %v5082
    %v5084 = vpop.f32.mrf.mxu0
    %v5085 = vpop.f32.mrf.mxu0
    %v5086 = vadd.f32 %v4902, %v5085
    %v5087 = vpop.f32.mrf.mxu0
    %5088 = vmatprep.mubr.bf16.mxu0 0
    %5089 = vmatmul.mubr.bf16.gmra.mxu0 %v4941
    %v5090 = vpop.f32.mrf.mxu0
    %v5091 = vadd.f32 %v4902, %v5090
    %v5092 = vpop.f32.mrf.mxu0
    %v5093 = vpop.f32.mrf.mxu0
    %v5094 = vadd.f32 %v4902, %v5093
    %v5095 = vpop.f32.mrf.mxu0
    %5096 = vmatprep.mubr.bf16.mxu0 0
    %5097 = vmatmul.mubr.bf16.gmra.mxu0 %v4944
    %v5098 = vpop.f32.mrf.mxu0
    %v5099 = vadd.f32 %v4902, %v5098
    %v5100 = vpop.f32.mrf.mxu0
    %v5101 = vpop.f32.mrf.mxu0
    %v5102 = vadd.f32 %v4902, %v5101
    %v5103 = vpop.f32.mrf.mxu0
    %5104 = vmatprep.mubr.bf16.mxu0 0
    %5105 = vmatmul.mubr.bf16.gmra.mxu0 %v4947
    %v5106 = vpop.f32.mrf.mxu0
    %v5107 = vadd.f32 %v4902, %v5106
    %v5108 = vpop.f32.mrf.mxu0
    %v5109 = vpop.f32.mrf.mxu0
    %v5110 = vadd.f32 %v4902, %v5109
    %v5111 = vpop.f32.mrf.mxu0
    %5112 = vmatprep.mubr.bf16.mxu0 0
    %5113 = vmatmul.mubr.bf16.gmra.mxu0 %v4950
    %v5114 = vpop.f32.mrf.mxu0
    %v5115 = vadd.f32 %v4902, %v5114
    %v5116 = vpop.f32.mrf.mxu0
    %v5117 = vpop.f32.mrf.mxu0
    %v5118 = vadd.f32 %v4902, %v5117
    %v5119 = vpop.f32.mrf.mxu0
    %5120 = vmatprep.mubr.bf16.mxu0 0
    %5121 = vmatmul.mubr.bf16.gmra.mxu0 %v4953
    %v5122 = vpop.f32.mrf.mxu0
    %v5123 = vadd.f32 %v4902, %v5122
    %v5124 = vpop.f32.mrf.mxu0
    %v5125 = vpop.f32.mrf.mxu0
    %v5126 = vadd.f32 %v4902, %v5125
    %v5127 = vpop.f32.mrf.mxu0
    %5128 = vmatprep.mubr.bf16.mxu0 0
    %5129 = vmatmul.mubr.bf16.gmra.mxu0 %v4956
    %v5130 = vpop.f32.mrf.mxu0
    %v5131 = vadd.f32 %v4902, %v5130
    %v5132 = vpop.f32.mrf.mxu0
    %v5133 = vpop.f32.mrf.mxu0
    %v5134 = vadd.f32 %v4902, %v5133
    %v5135 = vpop.f32.mrf.mxu0
    %5136 = vmatprep.mubr.bf16.mxu0 0
    %5137 = vmatmul.mubr.bf16.gmra.mxu0 %v4959
    %v5138 = vpop.f32.mrf.mxu0
    %v5139 = vadd.f32 %v4902, %v5138
    %v5140 = vpop.f32.mrf.mxu0
    %v5141 = vpop.f32.mrf.mxu0
    %v5142 = vadd.f32 %v4902, %v5141
    %v5143 = vpop.f32.mrf.mxu0
    %5144 = vmatprep.mubr.bf16.mxu0 0
    %5145 = vmatmul.mubr.bf16.gmra.mxu0 %v4962
    %v5146 = vpop.f32.mrf.mxu0
    %v5147 = vadd.f32 %v4902, %v5146
    %v5148 = vpop.f32.mrf.mxu0
    %v5149 = vpop.f32.mrf.mxu0
    %v5150 = vadd.f32 %v4902, %v5149
    %v5151 = vpop.f32.mrf.mxu0
    %5152 = vmatprep.mubr.bf16.mxu0 0
    %5153 = vmatmul.mubr.bf16.gmra.mxu0 %v4965
    %v5154 = vpop.f32.mrf.mxu0
    %v5155 = vadd.f32 %v4902, %v5154
    %v5156 = vpop.f32.mrf.mxu0
    %v5157 = vpop.f32.mrf.mxu0
    %v5158 = vadd.f32 %v4902, %v5157
    %v5159 = vpop.f32.mrf.mxu0
    %5160 = vmatprep.mubr.bf16.mxu0 0
    %5161 = vmatmul.mubr.bf16.gmra.mxu0 %v4968
    %v5162 = vpop.f32.mrf.mxu0
    %v5163 = vadd.f32 %v4902, %v5162
    %v5164 = vpop.f32.mrf.mxu0
    %v5165 = vpop.f32.mrf.mxu0
    %v5166 = vadd.f32 %v4902, %v5165
    %v5167 = vpop.f32.mrf.mxu0
    %5168 = vmatprep.mubr.bf16.mxu0 0
    %5169 = vmatmul.mubr.bf16.gmra.mxu0 %v4971
    %v5170 = vpop.f32.mrf.mxu0
    %v5171 = vadd.f32 %v4902, %v5170
    %v5172 = vpop.f32.mrf.mxu0
    %v5173 = vpop.f32.mrf.mxu0
    %v5174 = vadd.f32 %v4902, %v5173
    %v5175 = vpop.f32.mrf.mxu0
    %5176 = vmatprep.mubr.bf16.mxu0 0
    %5177 = vmatmul.mubr.bf16.gmra.mxu0 %v4974
    %v5178 = vpop.f32.mrf.mxu0
    %v5179 = vadd.f32 %v4902, %v5178
    %v5180 = vpop.f32.mrf.mxu0
    %v5181 = vpop.f32.mrf.mxu0
    %v5182 = vadd.f32 %v4902, %v5181
    %v5183 = vpop.f32.mrf.mxu0
    %5184 = vmatprep.mubr.bf16.mxu0 0
    %5185 = vmatmul.mubr.bf16.gmra.mxu0 %v4977
    %v5186 = vpop.f32.mrf.mxu0
    %v5187 = vadd.f32 %v4902, %v5186
    %v5188 = vpop.f32.mrf.mxu0
    %v5189 = vpop.f32.mrf.mxu0
    %v5190 = vadd.f32 %v4902, %v5189
    %v5191 = vpop.f32.mrf.mxu0
    %5192 = vmatprep.mubr.bf16.mxu0 0
    %5193 = vmatmul.mubr.bf16.gmra.mxu0 %v4980
    %v5194 = vpop.f32.mrf.mxu0
    %v5195 = vadd.f32 %v4902, %v5194
    %v5196 = vpop.f32.mrf.mxu0
    %v5197 = vpop.f32.mrf.mxu0
    %v5198 = vadd.f32 %v4902, %v5197
    %v5199 = vpop.f32.mrf.mxu0
    %5200 = vmatprep.mubr.bf16.mxu0 0
    %5201 = vmatmul.mubr.bf16.gmra.mxu0 %v4983
    %v5202 = vpop.f32.mrf.mxu0
    %v5203 = vadd.f32 %v4902, %v5202
    %v5204 = vpop.f32.mrf.mxu0
    %v5205 = vpop.f32.mrf.mxu0
    %v5206 = vadd.f32 %v4902, %v5205
    %v5207 = vpop.f32.mrf.mxu0
    %5208 = vmatprep.mubr.bf16.mxu0 0
    %5209 = vmatmul.mubr.bf16.gmra.mxu0 %v4986
    %v5210 = vpop.f32.mrf.mxu0
    %v5211 = vadd.f32 %v4902, %v5210
    %v5212 = vpop.f32.mrf.mxu0
    %v5213 = vpop.f32.mrf.mxu0
    %v5214 = vadd.f32 %v4902, %v5213
    %v5215 = vpop.f32.mrf.mxu0
    %5216 = vmatprep.mubr.bf16.mxu0 0
    %5217 = vmatmul.mubr.bf16.gmra.mxu0 %v4989
    %v5218 = vpop.f32.mrf.mxu0
    %v5219 = vadd.f32 %v4902, %v5218
    %v5220 = vpop.f32.mrf.mxu0
    %v5221 = vpop.f32.mrf.mxu0
    %v5222 = vadd.f32 %v4902, %v5221
    %v5223 = vpop.f32.mrf.mxu0
    %5224 = vmatprep.mubr.bf16.mxu0 0
    %5225 = vmatmul.mubr.bf16.gmra.mxu0 %v4992
    %v5226 = vpop.f32.mrf.mxu0
    %v5227 = vadd.f32 %v4902, %v5226
    %v5228 = vpop.f32.mrf.mxu0
    %v5229 = vpop.f32.mrf.mxu0
    %v5230 = vadd.f32 %v4902, %v5229
    %v5231 = vpop.f32.mrf.mxu0
    %5232 = vmatprep.mubr.bf16.mxu0 0
    %5233 = vmatmul.mubr.bf16.gmra.mxu0 %v4995
    %v5234 = vpop.f32.mrf.mxu0
    %v5235 = vadd.f32 %v4902, %v5234
    %v5236 = vpop.f32.mrf.mxu0
    %v5237 = vpop.f32.mrf.mxu0
    %v5238 = vadd.f32 %v4902, %v5237
    %v5239 = vpop.f32.mrf.mxu0
    %5240 = vmatprep.mubr.bf16.mxu0 0
    %5241 = vmatmul.mubr.bf16.gmra.mxu0 %v4998
    %v5242 = vpop.f32.mrf.mxu0
    %v5243 = vadd.f32 %v4902, %v5242
    %v5244 = vpop.f32.mrf.mxu0
    %v5245 = vpop.f32.mrf.mxu0
    %v5246 = vadd.f32 %v4902, %v5245
    %v5247 = vpop.f32.mrf.mxu0
    %5248 = vmatprep.mubr.bf16.mxu0 0
    %5249 = vmatmul.mubr.bf16.gmra.mxu0 %v5001
    %v5250 = vpop.f32.mrf.mxu0
    %v5251 = vadd.f32 %v4902, %v5250
    %v5252 = vpop.f32.mrf.mxu0
    %v5253 = vpop.f32.mrf.mxu0
    %v5254 = vadd.f32 %v4902, %v5253
    %v5255 = vpop.f32.mrf.mxu0
    %5256 = vmatprep.mubr.bf16.mxu0 0
    %5257 = vmatmul.mubr.bf16.gmra.mxu0 %v5004
    %v5258 = vpop.f32.mrf.mxu0
    %v5259 = vadd.f32 %v4902, %v5258
    %v5260 = vpop.f32.mrf.mxu0
    %v5261 = vpop.f32.mrf.mxu0
    %v5262 = vadd.f32 %v4902, %v5261
    %v5263 = vpop.f32.mrf.mxu0
    %5264 = vmatprep.mubr.bf16.mxu0 0
    %5265 = vmatmul.mubr.bf16.gmra.mxu0 %v5007
    %v5266 = vpop.f32.mrf.mxu0
    %v5267 = vadd.f32 %v4902, %v5266
    %v5268 = vpop.f32.mrf.mxu0
    %v5269 = vpop.f32.mrf.mxu0
    %v5270 = vadd.f32 %v4902, %v5269
    %v5271 = vpop.f32.mrf.mxu0
    %5272 = vmatprep.mubr.bf16.mxu0 0
    %5273 = vmatmul.mubr.bf16.gmra.mxu0 %v5010
    %v5274 = vpop.f32.mrf.mxu0
    %v5275 = vadd.f32 %v4902, %v5274
    %v5276 = vpop.f32.mrf.mxu0
    %v5277 = vpop.f32.mrf.mxu0
    %v5278 = vadd.f32 %v4902, %v5277
    %v5279 = vpop.f32.mrf.mxu0
    %5280 = vmatprep.mubr.bf16.mxu0 0
    %5281 = vmatmul.mubr.bf16.gmra.mxu0 %v5013
    %v5282 = vpop.f32.mrf.mxu0
    %v5283 = vadd.f32 %v4902, %v5282
    %v5284 = vpop.f32.mrf.mxu0
    %v5285 = vpop.f32.mrf.mxu0
    %v5286 = vadd.f32 %v4902, %v5285
    %v5287 = vpop.f32.mrf.mxu0
    %5288 = vmatprep.mubr.bf16.mxu0 0
    %5289 = vmatmul.mubr.bf16.gmra.mxu0 %v5016
    %v5290 = vpop.f32.mrf.mxu0
    %v5291 = vadd.f32 %v4902, %v5290
    %v5292 = vpop.f32.mrf.mxu0
    %v5293 = vpop.f32.mrf.mxu0
    %v5294 = vadd.f32 %v4902, %v5293
    %v5295 = vpop.f32.mrf.mxu0
    %5296 = vmatprep.mubr.bf16.mxu0 0
    %5297 = vmatmul.mubr.bf16.gmra.mxu0 %v5019
    %v5298 = vpop.f32.mrf.mxu0
    %v5299 = vadd.f32 %v4902, %v5298
    %v5300 = vpop.f32.mrf.mxu0
    %v5301 = vpop.f32.mrf.mxu0
    %v5302 = vadd.f32 %v4902, %v5301
    %v5303 = vpop.f32.mrf.mxu0
    %5304 = vmatprep.mubr.bf16.mxu0 0
    %5305 = vmatmul.mubr.bf16.gmra.mxu0 %v5022
    %v5306 = vpop.f32.mrf.mxu0
    %v5307 = vadd.f32 %v4902, %v5306
    %v5308 = vpop.f32.mrf.mxu0
    %v5309 = vpop.f32.mrf.mxu0
    %v5310 = vadd.f32 %v4902, %v5309
    %v5311 = vpop.f32.mrf.mxu0
    %5312 = vdwg.mxu0
    %v5313 = vmax.f32 %v5059, 0.0
    %v5314 = vmax.f32 %v5062, 0.0
    %v5315 = vmax.f32 %v5067, 0.0
    %v5316 = vmax.f32 %v5070, 0.0
    %v5317 = vmax.f32 %v5075, 0.0
    %v5318 = vmax.f32 %v5078, 0.0
    %v5319 = vmax.f32 %v5083, 0.0
    %v5320 = vmax.f32 %v5086, 0.0
    %v5321 = vmax.f32 %v5091, 0.0
    %v5322 = vmax.f32 %v5094, 0.0
    %v5323 = vmax.f32 %v5099, 0.0
    %v5324 = vmax.f32 %v5102, 0.0
    %v5325 = vmax.f32 %v5107, 0.0
    %v5326 = vmax.f32 %v5110, 0.0
    %v5327 = vmax.f32 %v5115, 0.0
    %v5328 = vmax.f32 %v5118, 0.0
    %v5329 = vmax.f32 %v5123, 0.0
    %v5330 = vmax.f32 %v5126, 0.0
    %v5331 = vmax.f32 %v5131, 0.0
    %v5332 = vmax.f32 %v5134, 0.0
    %v5333 = vmax.f32 %v5139, 0.0
    %v5334 = vmax.f32 %v5142, 0.0
    %v5335 = vmax.f32 %v5147, 0.0
    %v5336 = vmax.f32 %v5150, 0.0
    %v5337 = vmax.f32 %v5155, 0.0
    %v5338 = vmax.f32 %v5158, 0.0
    %v5339 = vmax.f32 %v5163, 0.0
    %v5340 = vmax.f32 %v5166, 0.0
    %v5341 = vmax.f32 %v5171, 0.0
    %v5342 = vmax.f32 %v5174, 0.0
    %v5343 = vmax.f32 %v5179, 0.0
    %v5344 = vmax.f32 %v5182, 0.0
    %v5345 = vmax.f32 %v5187, 0.0
    %v5346 = vmax.f32 %v5190, 0.0
    %v5347 = vmax.f32 %v5195, 0.0
    %v5348 = vmax.f32 %v5198, 0.0
    %v5349 = vmax.f32 %v5203, 0.0
    %v5350 = vmax.f32 %v5206, 0.0
    %v5351 = vmax.f32 %v5211, 0.0
    %v5352 = vmax.f32 %v5214, 0.0
    %v5353 = vmax.f32 %v5219, 0.0
    %v5354 = vmax.f32 %v5222, 0.0
    %v5355 = vmax.f32 %v5227, 0.0
    %v5356 = vmax.f32 %v5230, 0.0
    %v5357 = vmax.f32 %v5235, 0.0
    %v5358 = vmax.f32 %v5238, 0.0
    %v5359 = vmax.f32 %v5243, 0.0
    %v5360 = vmax.f32 %v5246, 0.0
    %v5361 = vmax.f32 %v5251, 0.0
    %v5362 = vmax.f32 %v5254, 0.0
    %v5363 = vmax.f32 %v5259, 0.0
    %v5364 = vmax.f32 %v5262, 0.0
    %v5365 = vmax.f32 %v5267, 0.0
    %v5366 = vmax.f32 %v5270, 0.0
    %v5367 = vmax.f32 %v5275, 0.0
    %v5368 = vmax.f32 %v5278, 0.0
    %v5369 = vmax.f32 %v5283, 0.0
    %v5370 = vmax.f32 %v5286, 0.0
    %v5371 = vmax.f32 %v5291, 0.0
    %v5372 = vmax.f32 %v5294, 0.0
    %v5373 = vmax.f32 %v5299, 0.0
    %v5374 = vmax.f32 %v5302, 0.0
    %v5375 = vmax.f32 %v5307, 0.0
    %v5376 = vmax.f32 %v5310, 0.0
    %v5377 = vpack.c.bf16 %v5314, %v5313
    %v5378 = vpack.c.bf16 %v5316, %v5315
    %v5379 = vpack.c.bf16 %v5318, %v5317
    %v5380 = vpack.c.bf16 %v5320, %v5319
    %v5381 = vpack.c.bf16 %v5322, %v5321
    %v5382 = vpack.c.bf16 %v5324, %v5323
    %v5383 = vpack.c.bf16 %v5326, %v5325
    %v5384 = vpack.c.bf16 %v5328, %v5327
    %v5385 = vpack.c.bf16 %v5330, %v5329
    %v5386 = vpack.c.bf16 %v5332, %v5331
    %v5387 = vpack.c.bf16 %v5334, %v5333
    %v5388 = vpack.c.bf16 %v5336, %v5335
    %v5389 = vpack.c.bf16 %v5338, %v5337
    %v5390 = vpack.c.bf16 %v5340, %v5339
    %v5391 = vpack.c.bf16 %v5342, %v5341
    %v5392 = vpack.c.bf16 %v5344, %v5343
    %v5393 = vpack.c.bf16 %v5346, %v5345
    %v5394 = vpack.c.bf16 %v5348, %v5347
    %v5395 = vpack.c.bf16 %v5350, %v5349
    %v5396 = vpack.c.bf16 %v5352, %v5351
    %v5397 = vpack.c.bf16 %v5354, %v5353
    %v5398 = vpack.c.bf16 %v5356, %v5355
    %v5399 = vpack.c.bf16 %v5358, %v5357
    %v5400 = vpack.c.bf16 %v5360, %v5359
    %v5401 = vpack.c.bf16 %v5362, %v5361
    %v5402 = vpack.c.bf16 %v5364, %v5363
    %v5403 = vpack.c.bf16 %v5366, %v5365
    %v5404 = vpack.c.bf16 %v5368, %v5367
    %v5405 = vpack.c.bf16 %v5370, %v5369
    %v5406 = vpack.c.bf16 %v5372, %v5371
    %v5407 = vpack.c.bf16 %v5374, %v5373
    %v5408 = vpack.c.bf16 %v5376, %v5375
    %v5441 = vunpack.c.l.b16 %v5377
    %v5442 = vunpack.c.h.b16 %v5377
    %v5443 = vunpack.c.l.b16 %v5378
    %v5444 = vunpack.c.h.b16 %v5378
    %v5445 = vunpack.c.l.b16 %v5379
    %v5446 = vunpack.c.h.b16 %v5379
    %v5447 = vunpack.c.l.b16 %v5380
    %v5448 = vunpack.c.h.b16 %v5380
    %v5449 = vunpack.c.l.b16 %v5381
    %v5450 = vunpack.c.h.b16 %v5381
    %v5451 = vunpack.c.l.b16 %v5382
    %v5452 = vunpack.c.h.b16 %v5382
    %v5453 = vunpack.c.l.b16 %v5383
    %v5454 = vunpack.c.h.b16 %v5383
    %v5455 = vunpack.c.l.b16 %v5384
    %v5456 = vunpack.c.h.b16 %v5384
    %v5457 = vunpack.c.l.b16 %v5385
    %v5458 = vunpack.c.h.b16 %v5385
    %v5459 = vunpack.c.l.b16 %v5386
    %v5460 = vunpack.c.h.b16 %v5386
    %v5461 = vunpack.c.l.b16 %v5387
    %v5462 = vunpack.c.h.b16 %v5387
    %v5463 = vunpack.c.l.b16 %v5388
    %v5464 = vunpack.c.h.b16 %v5388
    %v5465 = vunpack.c.l.b16 %v5389
    %v5466 = vunpack.c.h.b16 %v5389
    %v5467 = vunpack.c.l.b16 %v5390
    %v5468 = vunpack.c.h.b16 %v5390
    %v5469 = vunpack.c.l.b16 %v5391
    %v5470 = vunpack.c.h.b16 %v5391
    %v5471 = vunpack.c.l.b16 %v5392
    %v5472 = vunpack.c.h.b16 %v5392
    %v5473 = vunpack.c.l.b16 %v5393
    %v5474 = vunpack.c.h.b16 %v5393
    %v5475 = vunpack.c.l.b16 %v5394
    %v5476 = vunpack.c.h.b16 %v5394
    %v5477 = vunpack.c.l.b16 %v5395
    %v5478 = vunpack.c.h.b16 %v5395
    %v5479 = vunpack.c.l.b16 %v5396
    %v5480 = vunpack.c.h.b16 %v5396
    %v5481 = vunpack.c.l.b16 %v5397
    %v5482 = vunpack.c.h.b16 %v5397
    %v5483 = vunpack.c.l.b16 %v5398
    %v5484 = vunpack.c.h.b16 %v5398
    %v5485 = vunpack.c.l.b16 %v5399
    %v5486 = vunpack.c.h.b16 %v5399
    %v5487 = vunpack.c.l.b16 %v5400
    %v5488 = vunpack.c.h.b16 %v5400
    %v5489 = vunpack.c.l.b16 %v5401
    %v5490 = vunpack.c.h.b16 %v5401
    %v5491 = vunpack.c.l.b16 %v5402
    %v5492 = vunpack.c.h.b16 %v5402
    %v5493 = vunpack.c.l.b16 %v5403
    %v5494 = vunpack.c.h.b16 %v5403
    %v5495 = vunpack.c.l.b16 %v5404
    %v5496 = vunpack.c.h.b16 %v5404
    %v5497 = vunpack.c.l.b16 %v5405
    %v5498 = vunpack.c.h.b16 %v5405
    %v5499 = vunpack.c.l.b16 %v5406
    %v5500 = vunpack.c.h.b16 %v5406
    %v5501 = vunpack.c.l.b16 %v5407
    %v5502 = vunpack.c.h.b16 %v5407
    %v5503 = vunpack.c.l.b16 %v5408
    %v5504 = vunpack.c.h.b16 %v5408
    %v5505 = vpack.c.b16 %v5441, %v5441
    %v5506 = vpack.c.b16 %v5442, %v5442
    %v5507 = vpack.c.b16 %v5443, %v5443
    %v5508 = vpack.c.b16 %v5444, %v5444
    %v5509 = vpack.c.b16 %v5445, %v5445
    %v5510 = vpack.c.b16 %v5446, %v5446
    %v5511 = vpack.c.b16 %v5447, %v5447
    %v5512 = vpack.c.b16 %v5448, %v5448
    %v5513 = vpack.c.b16 %v5449, %v5449
    %v5514 = vpack.c.b16 %v5450, %v5450
    %v5515 = vpack.c.b16 %v5451, %v5451
    %v5516 = vpack.c.b16 %v5452, %v5452
    %v5517 = vpack.c.b16 %v5453, %v5453
    %v5518 = vpack.c.b16 %v5454, %v5454
    %v5519 = vpack.c.b16 %v5455, %v5455
    %v5520 = vpack.c.b16 %v5456, %v5456
    %v5521 = vpack.c.b16 %v5457, %v5457
    %v5522 = vpack.c.b16 %v5458, %v5458
    %v5523 = vpack.c.b16 %v5459, %v5459
    %v5524 = vpack.c.b16 %v5460, %v5460
    %v5525 = vpack.c.b16 %v5461, %v5461
    %v5526 = vpack.c.b16 %v5462, %v5462
    %v5527 = vpack.c.b16 %v5463, %v5463
    %v5528 = vpack.c.b16 %v5464, %v5464
    %v5529 = vpack.c.b16 %v5465, %v5465
    %v5530 = vpack.c.b16 %v5466, %v5466
    %v5531 = vpack.c.b16 %v5467, %v5467
    %v5532 = vpack.c.b16 %v5468, %v5468
    %v5533 = vpack.c.b16 %v5469, %v5469
    %v5534 = vpack.c.b16 %v5470, %v5470
    %v5535 = vpack.c.b16 %v5471, %v5471
    %v5536 = vpack.c.b16 %v5472, %v5472
    %v5537 = vpack.c.b16 %v5473, %v5473
    %v5538 = vpack.c.b16 %v5474, %v5474
    %v5539 = vpack.c.b16 %v5475, %v5475
    %v5540 = vpack.c.b16 %v5476, %v5476
    %v5541 = vpack.c.b16 %v5477, %v5477
    %v5542 = vpack.c.b16 %v5478, %v5478
    %v5543 = vpack.c.b16 %v5479, %v5479
    %v5544 = vpack.c.b16 %v5480, %v5480
    %v5545 = vpack.c.b16 %v5481, %v5481
    %v5546 = vpack.c.b16 %v5482, %v5482
    %v5547 = vpack.c.b16 %v5483, %v5483
    %v5548 = vpack.c.b16 %v5484, %v5484
    %v5549 = vpack.c.b16 %v5485, %v5485
    %v5550 = vpack.c.b16 %v5486, %v5486
    %v5551 = vpack.c.b16 %v5487, %v5487
    %v5552 = vpack.c.b16 %v5488, %v5488
    %v5553 = vpack.c.b16 %v5489, %v5489
    %v5554 = vpack.c.b16 %v5490, %v5490
    %v5555 = vpack.c.b16 %v5491, %v5491
    %v5556 = vpack.c.b16 %v5492, %v5492
    %v5557 = vpack.c.b16 %v5493, %v5493
    %v5558 = vpack.c.b16 %v5494, %v5494
    %v5559 = vpack.c.b16 %v5495, %v5495
    %v5560 = vpack.c.b16 %v5496, %v5496
    %v5561 = vpack.c.b16 %v5497, %v5497
    %v5562 = vpack.c.b16 %v5498, %v5498
    %v5563 = vpack.c.b16 %v5499, %v5499
    %v5564 = vpack.c.b16 %v5500, %v5500
    %v5565 = vpack.c.b16 %v5501, %v5501
    %v5566 = vpack.c.b16 %v5502, %v5502
    %v5567 = vpack.c.b16 %v5503, %v5503
    %v5568 = vpack.c.b16 %v5504, %v5504
    %5569 = vrot.lane.b32.xlu0 %v5505, 64
    %v5570 = vpop.permute.xlu0 %5569
    %5571 = vrot.lane.b32.xlu0 %v5506, 64
    %v5572 = vpop.permute.xlu0 %5571
    %5573 = vrot.lane.b32.xlu0 %v5507, 64
    %v5574 = vpop.permute.xlu0 %5573
    %5575 = vrot.lane.b32.xlu0 %v5508, 64
    %v5576 = vpop.permute.xlu0 %5575
    %5577 = vrot.lane.b32.xlu0 %v5509, 64
    %v5578 = vpop.permute.xlu0 %5577
    %5579 = vrot.lane.b32.xlu0 %v5510, 64
    %v5580 = vpop.permute.xlu0 %5579
    %5581 = vrot.lane.b32.xlu0 %v5511, 64
    %v5582 = vpop.permute.xlu0 %5581
    %5583 = vrot.lane.b32.xlu0 %v5512, 64
    %v5584 = vpop.permute.xlu0 %5583
    %5585 = vrot.lane.b32.xlu0 %v5513, 64
    %v5586 = vpop.permute.xlu0 %5585
    %5587 = vrot.lane.b32.xlu0 %v5514, 64
    %v5588 = vpop.permute.xlu0 %5587
    %5589 = vrot.lane.b32.xlu0 %v5515, 64
    %v5590 = vpop.permute.xlu0 %5589
    %5591 = vrot.lane.b32.xlu0 %v5516, 64
    %v5592 = vpop.permute.xlu0 %5591
    %5593 = vrot.lane.b32.xlu0 %v5517, 64
    %v5594 = vpop.permute.xlu0 %5593
    %5595 = vrot.lane.b32.xlu0 %v5518, 64
    %v5596 = vpop.permute.xlu0 %5595
    %5597 = vrot.lane.b32.xlu0 %v5519, 64
    %v5598 = vpop.permute.xlu0 %5597
    %5599 = vrot.lane.b32.xlu0 %v5520, 64
    %v5600 = vpop.permute.xlu0 %5599
    %5601 = vrot.lane.b32.xlu0 %v5521, 64
    %v5602 = vpop.permute.xlu0 %5601
    %5603 = vrot.lane.b32.xlu0 %v5522, 64
    %v5604 = vpop.permute.xlu0 %5603
    %5605 = vrot.lane.b32.xlu0 %v5523, 64
    %v5606 = vpop.permute.xlu0 %5605
    %5607 = vrot.lane.b32.xlu0 %v5524, 64
    %v5608 = vpop.permute.xlu0 %5607
    %5609 = vrot.lane.b32.xlu0 %v5525, 64
    %v5610 = vpop.permute.xlu0 %5609
    %5611 = vrot.lane.b32.xlu0 %v5526, 64
    %v5612 = vpop.permute.xlu0 %5611
    %5613 = vrot.lane.b32.xlu0 %v5527, 64
    %v5614 = vpop.permute.xlu0 %5613
    %5615 = vrot.lane.b32.xlu0 %v5528, 64
    %v5616 = vpop.permute.xlu0 %5615
    %5617 = vrot.lane.b32.xlu0 %v5529, 64
    %v5618 = vpop.permute.xlu0 %5617
    %5619 = vrot.lane.b32.xlu0 %v5530, 64
    %v5620 = vpop.permute.xlu0 %5619
    %5621 = vrot.lane.b32.xlu0 %v5531, 64
    %v5622 = vpop.permute.xlu0 %5621
    %5623 = vrot.lane.b32.xlu0 %v5532, 64
    %v5624 = vpop.permute.xlu0 %5623
    %5625 = vrot.lane.b32.xlu0 %v5533, 64
    %v5626 = vpop.permute.xlu0 %5625
    %5627 = vrot.lane.b32.xlu0 %v5534, 64
    %v5628 = vpop.permute.xlu0 %5627
    %5629 = vrot.lane.b32.xlu0 %v5535, 64
    %v5630 = vpop.permute.xlu0 %5629
    %5631 = vrot.lane.b32.xlu0 %v5536, 64
    %v5632 = vpop.permute.xlu0 %5631
    %5633 = vrot.lane.b32.xlu0 %v5537, 64
    %v5634 = vpop.permute.xlu0 %5633
    %5635 = vrot.lane.b32.xlu0 %v5538, 64
    %v5636 = vpop.permute.xlu0 %5635
    %5637 = vrot.lane.b32.xlu0 %v5539, 64
    %v5638 = vpop.permute.xlu0 %5637
    %5639 = vrot.lane.b32.xlu0 %v5540, 64
    %v5640 = vpop.permute.xlu0 %5639
    %5641 = vrot.lane.b32.xlu0 %v5541, 64
    %v5642 = vpop.permute.xlu0 %5641
    %5643 = vrot.lane.b32.xlu0 %v5542, 64
    %v5644 = vpop.permute.xlu0 %5643
    %5645 = vrot.lane.b32.xlu0 %v5543, 64
    %v5646 = vpop.permute.xlu0 %5645
    %5647 = vrot.lane.b32.xlu0 %v5544, 64
    %v5648 = vpop.permute.xlu0 %5647
    %5649 = vrot.lane.b32.xlu0 %v5545, 64
    %v5650 = vpop.permute.xlu0 %5649
    %5651 = vrot.lane.b32.xlu0 %v5546, 64
    %v5652 = vpop.permute.xlu0 %5651
    %5653 = vrot.lane.b32.xlu0 %v5547, 64
    %v5654 = vpop.permute.xlu0 %5653
    %5655 = vrot.lane.b32.xlu0 %v5548, 64
    %v5656 = vpop.permute.xlu0 %5655
    %5657 = vrot.lane.b32.xlu0 %v5549, 64
    %v5658 = vpop.permute.xlu0 %5657
    %5659 = vrot.lane.b32.xlu0 %v5550, 64
    %v5660 = vpop.permute.xlu0 %5659
    %5661 = vrot.lane.b32.xlu0 %v5551, 64
    %v5662 = vpop.permute.xlu0 %5661
    %5663 = vrot.lane.b32.xlu0 %v5552, 64
    %v5664 = vpop.permute.xlu0 %5663
    %5665 = vrot.lane.b32.xlu0 %v5553, 64
    %v5666 = vpop.permute.xlu0 %5665
    %5667 = vrot.lane.b32.xlu0 %v5554, 64
    %v5668 = vpop.permute.xlu0 %5667
    %5669 = vrot.lane.b32.xlu0 %v5555, 64
    %v5670 = vpop.permute.xlu0 %5669
    %5671 = vrot.lane.b32.xlu0 %v5556, 64
    %v5672 = vpop.permute.xlu0 %5671
    %5673 = vrot.lane.b32.xlu0 %v5557, 64
    %v5674 = vpop.permute.xlu0 %5673
    %5675 = vrot.lane.b32.xlu0 %v5558, 64
    %v5676 = vpop.permute.xlu0 %5675
    %5677 = vrot.lane.b32.xlu0 %v5559, 64
    %v5678 = vpop.permute.xlu0 %5677
    %5679 = vrot.lane.b32.xlu0 %v5560, 64
    %v5680 = vpop.permute.xlu0 %5679
    %5681 = vrot.lane.b32.xlu0 %v5561, 64
    %v5682 = vpop.permute.xlu0 %5681
    %5683 = vrot.lane.b32.xlu0 %v5562, 64
    %v5684 = vpop.permute.xlu0 %5683
    %5685 = vrot.lane.b32.xlu0 %v5563, 64
    %v5686 = vpop.permute.xlu0 %5685
    %5687 = vrot.lane.b32.xlu0 %v5564, 64
    %v5688 = vpop.permute.xlu0 %5687
    %5689 = vrot.lane.b32.xlu0 %v5565, 64
    %v5690 = vpop.permute.xlu0 %5689
    %5691 = vrot.lane.b32.xlu0 %v5566, 64
    %v5692 = vpop.permute.xlu0 %5691
    %5693 = vrot.lane.b32.xlu0 %v5567, 64
    %v5694 = vpop.permute.xlu0 %5693
    %5695 = vrot.lane.b32.xlu0 %v5568, 64
    %v5696 = vpop.permute.xlu0 %5695
    %5761 = vst.msk [vmem:[#allocation2 + $0x4] sm:$0xf] %vm2902, %v5570
    %5762 = vst.msk [vmem:[#allocation2 + $0x10] sm:$0xf] %vm2902, %v5572
    %5763 = vst.msk [vmem:[#allocation2 + $0x1c] sm:$0xf] %vm2902, %v5574
    %5764 = vst.msk [vmem:[#allocation2 + $0x28] sm:$0xf] %vm2902, %v5576
    %5765 = vst.msk [vmem:[#allocation2 + $0x34] sm:$0xf] %vm2902, %v5578
    %5766 = vst.msk [vmem:[#allocation2 + $0x40] sm:$0xf] %vm2902, %v5580
    %5767 = vst.msk [vmem:[#allocation2 + $0x4c] sm:$0xf] %vm2902, %v5582
    %5768 = vst.msk [vmem:[#allocation2 + $0x58] sm:$0xf] %vm2902, %v5584
    %5769 = vst.msk [vmem:[#allocation2 + $0x64] sm:$0xf] %vm2902, %v5586
    %5770 = vst.msk [vmem:[#allocation2 + $0x70] sm:$0xf] %vm2902, %v5588
    %5771 = vst.msk [vmem:[#allocation2 + $0x7c] sm:$0xf] %vm2902, %v5590
    %5772 = vst.msk [vmem:[#allocation2 + $0x88] sm:$0xf] %vm2902, %v5592
    %5773 = vst.msk [vmem:[#allocation2 + $0x94] sm:$0xf] %vm2902, %v5594
    %5774 = vst.msk [vmem:[#allocation2 + $0xa0] sm:$0xf] %vm2902, %v5596
    %5775 = vst.msk [vmem:[#allocation2 + $0xac] sm:$0xf] %vm2902, %v5598
    %5776 = vst.msk [vmem:[#allocation2 + $0xb8] sm:$0xf] %vm2902, %v5600
    %5777 = vst.msk [vmem:[#allocation2 + $0xc4] sm:$0xf] %vm2902, %v5602
    %5778 = vst.msk [vmem:[#allocation2 + $0xd0] sm:$0xf] %vm2902, %v5604
    %5779 = vst.msk [vmem:[#allocation2 + $0xdc] sm:$0xf] %vm2902, %v5606
    %5780 = vst.msk [vmem:[#allocation2 + $0xe8] sm:$0xf] %vm2902, %v5608
    %5781 = vst.msk [vmem:[#allocation2 + $0xf4] sm:$0xf] %vm2902, %v5610
    %5782 = vst.msk [vmem:[#allocation2 + $0x100] sm:$0xf] %vm2902, %v5612
    %5783 = vst.msk [vmem:[#allocation2 + $0x10c] sm:$0xf] %vm2902, %v5614
    %5784 = vst.msk [vmem:[#allocation2 + $0x118] sm:$0xf] %vm2902, %v5616
    %5785 = vst.msk [vmem:[#allocation2 + $0x124] sm:$0xf] %vm2902, %v5618
    %5786 = vst.msk [vmem:[#allocation2 + $0x130] sm:$0xf] %vm2902, %v5620
    %5787 = vst.msk [vmem:[#allocation2 + $0x13c] sm:$0xf] %vm2902, %v5622
    %5788 = vst.msk [vmem:[#allocation2 + $0x148] sm:$0xf] %vm2902, %v5624
    %5789 = vst.msk [vmem:[#allocation2 + $0x154] sm:$0xf] %vm2902, %v5626
    %5790 = vst.msk [vmem:[#allocation2 + $0x160] sm:$0xf] %vm2902, %v5628
    %5791 = vst.msk [vmem:[#allocation2 + $0x16c] sm:$0xf] %vm2902, %v5630
    %5792 = vst.msk [vmem:[#allocation2 + $0x178] sm:$0xf] %vm2902, %v5632
    %5793 = vst.msk [vmem:[#allocation2 + $0x184] sm:$0xf] %vm2902, %v5634
    %5794 = vst.msk [vmem:[#allocation2 + $0x190] sm:$0xf] %vm2902, %v5636
    %5795 = vst.msk [vmem:[#allocation2 + $0x19c] sm:$0xf] %vm2902, %v5638
    %5796 = vst.msk [vmem:[#allocation2 + $0x1a8] sm:$0xf] %vm2902, %v5640
    %5797 = vst.msk [vmem:[#allocation2 + $0x1b4] sm:$0xf] %vm2902, %v5642
    %5798 = vst.msk [vmem:[#allocation2 + $0x1c0] sm:$0xf] %vm2902, %v5644
    %5799 = vst.msk [vmem:[#allocation2 + $0x1cc] sm:$0xf] %vm2902, %v5646
    %5800 = vst.msk [vmem:[#allocation2 + $0x1d8] sm:$0xf] %vm2902, %v5648
    %5801 = vst.msk [vmem:[#allocation2 + $0x1e4] sm:$0xf] %vm2902, %v5650
    %5802 = vst.msk [vmem:[#allocation2 + $0x1f0] sm:$0xf] %vm2902, %v5652
    %5803 = vst.msk [vmem:[#allocation2 + $0x1fc] sm:$0xf] %vm2902, %v5654
    %5804 = vst.msk [vmem:[#allocation2 + $0x208] sm:$0xf] %vm2902, %v5656
    %5805 = vst.msk [vmem:[#allocation2 + $0x214] sm:$0xf] %vm2902, %v5658
    %5806 = vst.msk [vmem:[#allocation2 + $0x220] sm:$0xf] %vm2902, %v5660
    %5807 = vst.msk [vmem:[#allocation2 + $0x22c] sm:$0xf] %vm2902, %v5662
    %5808 = vst.msk [vmem:[#allocation2 + $0x238] sm:$0xf] %vm2902, %v5664
    %5809 = vst.msk [vmem:[#allocation2 + $0x244] sm:$0xf] %vm2902, %v5666
    %5810 = vst.msk [vmem:[#allocation2 + $0x250] sm:$0xf] %vm2902, %v5668
    %5811 = vst.msk [vmem:[#allocation2 + $0x25c] sm:$0xf] %vm2902, %v5670
    %5812 = vst.msk [vmem:[#allocation2 + $0x268] sm:$0xf] %vm2902, %v5672
    %5813 = vst.msk [vmem:[#allocation2 + $0x274] sm:$0xf] %vm2902, %v5674
    %5814 = vst.msk [vmem:[#allocation2 + $0x280] sm:$0xf] %vm2902, %v5676
    %5815 = vst.msk [vmem:[#allocation2 + $0x28c] sm:$0xf] %vm2902, %v5678
    %5816 = vst.msk [vmem:[#allocation2 + $0x298] sm:$0xf] %vm2902, %v5680
    %5817 = vst.msk [vmem:[#allocation2 + $0x2a4] sm:$0xf] %vm2902, %v5682
    %5818 = vst.msk [vmem:[#allocation2 + $0x2b0] sm:$0xf] %vm2902, %v5684
    %5819 = vst.msk [vmem:[#allocation2 + $0x2bc] sm:$0xf] %vm2902, %v5686
    %5820 = vst.msk [vmem:[#allocation2 + $0x2c8] sm:$0xf] %vm2902, %v5688
    %5821 = vst.msk [vmem:[#allocation2 + $0x2d4] sm:$0xf] %vm2902, %v5690
    %5822 = vst.msk [vmem:[#allocation2 + $0x2e0] sm:$0xf] %vm2902, %v5692
    %5823 = vst.msk [vmem:[#allocation2 + $0x2ec] sm:$0xf] %vm2902, %v5694
    %5824 = vst.msk [vmem:[#allocation2 + $0x2f8] sm:$0xf] %vm2902, %v5696
    %s5825 = scalar_lea.vmem [#allocation3], 2048
    %v5826 = vld [vmem:[%s5825] sm:$0xff]
    %v5827 = vld [vmem:[%s5825 + $0x8] sm:$0xff]
    %v5828 = vld [vmem:[%s5825 + $0x10] sm:$0xff]
    %v5829 = vld [vmem:[%s5825 + $0x18] sm:$0xff]
    %v5830 = vld [vmem:[%s5825 + $0x20] sm:$0xff]
    %v5831 = vld [vmem:[%s5825 + $0x28] sm:$0xff]
    %v5832 = vld [vmem:[%s5825 + $0x30] sm:$0xff]
    %v5833 = vld [vmem:[%s5825 + $0x38] sm:$0xff]
    %v5834 = vld [vmem:[%s5825 + $0x40] sm:$0xff]
    %v5835 = vld [vmem:[%s5825 + $0x48] sm:$0xff]
    %v5836 = vld [vmem:[%s5825 + $0x50] sm:$0xff]
    %v5837 = vld [vmem:[%s5825 + $0x58] sm:$0xff]
    %v5838 = vld [vmem:[%s5825 + $0x60] sm:$0xff]
    %v5839 = vld [vmem:[%s5825 + $0x68] sm:$0xff]
    %v5840 = vld [vmem:[%s5825 + $0x70] sm:$0xff]
    %v5841 = vld [vmem:[%s5825 + $0x78] sm:$0xff]
    %v5842 = vld [vmem:[%s5825 + $0x80] sm:$0xff]
    %v5843 = vld [vmem:[%s5825 + $0x88] sm:$0xff]
    %v5844 = vld [vmem:[%s5825 + $0x90] sm:$0xff]
    %v5845 = vld [vmem:[%s5825 + $0x98] sm:$0xff]
    %v5846 = vld [vmem:[%s5825 + $0xa0] sm:$0xff]
    %v5847 = vld [vmem:[%s5825 + $0xa8] sm:$0xff]
    %v5848 = vld [vmem:[%s5825 + $0xb0] sm:$0xff]
    %v5849 = vld [vmem:[%s5825 + $0xb8] sm:$0xff]
    %v5850 = vld [vmem:[%s5825 + $0xc0] sm:$0xff]
    %v5851 = vld [vmem:[%s5825 + $0xc8] sm:$0xff]
    %v5852 = vld [vmem:[%s5825 + $0xd0] sm:$0xff]
    %v5853 = vld [vmem:[%s5825 + $0xd8] sm:$0xff]
    %v5854 = vld [vmem:[%s5825 + $0xe0] sm:$0xff]
    %v5855 = vld [vmem:[%s5825 + $0xe8] sm:$0xff]
    %v5856 = vld [vmem:[%s5825 + $0xf0] sm:$0xff]
    %v5857 = vld [vmem:[%s5825 + $0xf8] sm:$0xff]
    %v5858 = vld [vmem:[%s5825 + $0x100] sm:$0xff]
    %v5859 = vld [vmem:[%s5825 + $0x108] sm:$0xff]
    %v5860 = vld [vmem:[%s5825 + $0x110] sm:$0xff]
    %v5861 = vld [vmem:[%s5825 + $0x118] sm:$0xff]
    %v5862 = vld [vmem:[%s5825 + $0x120] sm:$0xff]
    %v5863 = vld [vmem:[%s5825 + $0x128] sm:$0xff]
    %v5864 = vld [vmem:[%s5825 + $0x130] sm:$0xff]
    %v5865 = vld [vmem:[%s5825 + $0x138] sm:$0xff]
    %v5866 = vld [vmem:[%s5825 + $0x140] sm:$0xff]
    %v5867 = vld [vmem:[%s5825 + $0x148] sm:$0xff]
    %v5868 = vld [vmem:[%s5825 + $0x150] sm:$0xff]
    %v5869 = vld [vmem:[%s5825 + $0x158] sm:$0xff]
    %v5870 = vld [vmem:[%s5825 + $0x160] sm:$0xff]
    %v5871 = vld [vmem:[%s5825 + $0x168] sm:$0xff]
    %v5872 = vld [vmem:[%s5825 + $0x170] sm:$0xff]
    %v5873 = vld [vmem:[%s5825 + $0x178] sm:$0xff]
    %v5874 = vld [vmem:[%s5825 + $0x180] sm:$0xff]
    %v5875 = vld [vmem:[%s5825 + $0x188] sm:$0xff]
    %v5876 = vld [vmem:[%s5825 + $0x190] sm:$0xff]
    %v5877 = vld [vmem:[%s5825 + $0x198] sm:$0xff]
    %v5878 = vld [vmem:[%s5825 + $0x1a0] sm:$0xff]
    %v5879 = vld [vmem:[%s5825 + $0x1a8] sm:$0xff]
    %v5880 = vld [vmem:[%s5825 + $0x1b0] sm:$0xff]
    %v5881 = vld [vmem:[%s5825 + $0x1b8] sm:$0xff]
    %v5882 = vld [vmem:[%s5825 + $0x1c0] sm:$0xff]
    %v5883 = vld [vmem:[%s5825 + $0x1c8] sm:$0xff]
    %v5884 = vld [vmem:[%s5825 + $0x1d0] sm:$0xff]
    %v5885 = vld [vmem:[%s5825 + $0x1d8] sm:$0xff]
    %v5886 = vld [vmem:[%s5825 + $0x1e0] sm:$0xff]
    %v5887 = vld [vmem:[%s5825 + $0x1e8] sm:$0xff]
    %v5888 = vld [vmem:[%s5825 + $0x1f0] sm:$0xff]
    %v5889 = vld [vmem:[%s5825 + $0x1f8] sm:$0xff]
    %v5890 = vpack.c.bf16 %v5827, %v5826
    %v5891 = vpack.c.bf16 %v5829, %v5828
    %v5892 = vpack.c.bf16 %v5831, %v5830
    %v5893 = vpack.c.bf16 %v5833, %v5832
    %v5894 = vpack.c.bf16 %v5835, %v5834
    %v5895 = vpack.c.bf16 %v5837, %v5836
    %v5896 = vpack.c.bf16 %v5839, %v5838
    %v5897 = vpack.c.bf16 %v5841, %v5840
    %v5898 = vpack.c.bf16 %v5843, %v5842
    %v5899 = vpack.c.bf16 %v5845, %v5844
    %v5900 = vpack.c.bf16 %v5847, %v5846
    %v5901 = vpack.c.bf16 %v5849, %v5848
    %v5902 = vpack.c.bf16 %v5851, %v5850
    %v5903 = vpack.c.bf16 %v5853, %v5852
    %v5904 = vpack.c.bf16 %v5855, %v5854
    %v5905 = vpack.c.bf16 %v5857, %v5856
    %v5906 = vpack.c.bf16 %v5859, %v5858
    %v5907 = vpack.c.bf16 %v5861, %v5860
    %v5908 = vpack.c.bf16 %v5863, %v5862
    %v5909 = vpack.c.bf16 %v5865, %v5864
    %v5910 = vpack.c.bf16 %v5867, %v5866
    %v5911 = vpack.c.bf16 %v5869, %v5868
    %v5912 = vpack.c.bf16 %v5871, %v5870
    %v5913 = vpack.c.bf16 %v5873, %v5872
    %v5914 = vpack.c.bf16 %v5875, %v5874
    %v5915 = vpack.c.bf16 %v5877, %v5876
    %v5916 = vpack.c.bf16 %v5879, %v5878
    %v5917 = vpack.c.bf16 %v5881, %v5880
    %v5918 = vpack.c.bf16 %v5883, %v5882
    %v5919 = vpack.c.bf16 %v5885, %v5884
    %v5920 = vpack.c.bf16 %v5887, %v5886
    %v5921 = vpack.c.bf16 %v5889, %v5888
    %s5922 = scalar_lea.vmem %s1, 256
    %v5923 = vld [vmem:[%s5922] sm:$0xf]
    %v5924 = vld [vmem:[%s5922 + $0x4] sm:$0xf]
    %v5925 = vld [vmem:[%s5922 + $0x8] sm:$0xf]
    %v5926 = vld [vmem:[%s5922 + $0xc] sm:$0xf]
    %v5927 = vld [vmem:[%s5922 + $0x10] sm:$0xf]
    %v5928 = vld [vmem:[%s5922 + $0x14] sm:$0xf]
    %v5929 = vld [vmem:[%s5922 + $0x18] sm:$0xf]
    %v5930 = vld [vmem:[%s5922 + $0x1c] sm:$0xf]
    %v5931 = vld [vmem:[%s5922 + $0x20] sm:$0xf]
    %v5932 = vld [vmem:[%s5922 + $0x24] sm:$0xf]
    %v5933 = vld [vmem:[%s5922 + $0x28] sm:$0xf]
    %v5934 = vld [vmem:[%s5922 + $0x2c] sm:$0xf]
    %v5935 = vld [vmem:[%s5922 + $0x30] sm:$0xf]
    %v5936 = vld [vmem:[%s5922 + $0x34] sm:$0xf]
    %v5937 = vld [vmem:[%s5922 + $0x38] sm:$0xf]
    %v5938 = vld [vmem:[%s5922 + $0x3c] sm:$0xf]
    %s5939 = scalar_lea.vmem [#allocation5], 4
    %v5940 = vld [vmem:[%s5939] sm:$0x1]
    %v5942 = vlaneseq
    %v5943 = vshrl.u32 %v5942, 7
    %v5944 = vsub.s32 0, %v5943
    %v5945 = vrot.slane %v5940, %v5944
    %v5963 = vunpack.c.l.b16 %v5923
    %v5964 = vunpack.c.l.b16 %v5924
    %v5965 = vunpack.c.l.b16 %v5925
    %v5966 = vunpack.c.l.b16 %v5926
    %v5967 = vunpack.c.l.b16 %v5927
    %v5968 = vunpack.c.l.b16 %v5928
    %v5969 = vunpack.c.l.b16 %v5929
    %v5970 = vunpack.c.l.b16 %v5930
    %v5971 = vunpack.c.l.b16 %v5931
    %v5972 = vunpack.c.l.b16 %v5932
    %v5973 = vunpack.c.l.b16 %v5933
    %v5974 = vunpack.c.l.b16 %v5934
    %v5975 = vunpack.c.l.b16 %v5935
    %v5976 = vunpack.c.l.b16 %v5936
    %v5977 = vunpack.c.l.b16 %v5937
    %v5978 = vunpack.c.l.b16 %v5938
    %v5979 = vpack.c.b16 %v5964, %v5963
    %v5980 = vpack.c.b16 %v5966, %v5965
    %v5981 = vpack.c.b16 %v5968, %v5967
    %v5982 = vpack.c.b16 %v5970, %v5969
    %v5983 = vpack.c.b16 %v5972, %v5971
    %v5984 = vpack.c.b16 %v5974, %v5973
    %v5985 = vpack.c.b16 %v5976, %v5975
    %v5986 = vpack.c.b16 %v5978, %v5977
    %5995 = vmatprep.subr.bf16.mxu0 0
    %5996 = vmatpush1.bf16.msra.mxu0 %v5986
    %5997 = vmatprep.subr.bf16.mxu0 0
    %5998 = vmatpush1.bf16.msra.mxu0 %v5985
    %5999 = vmatprep.subr.bf16.mxu0 0
    %6000 = vmatpush1.bf16.msra.mxu0 %v5984
    %6001 = vmatprep.subr.bf16.mxu0 0
    %6002 = vmatpush1.bf16.msra.mxu0 %v5983
    %6003 = vmatprep.subr.bf16.mxu0 0
    %6004 = vmatpush1.bf16.msra.mxu0 %v5982
    %6005 = vmatprep.subr.bf16.mxu0 0
    %6006 = vmatpush1.bf16.msra.mxu0 %v5981
    %6007 = vmatprep.subr.bf16.mxu0 0
    %6008 = vmatpush1.bf16.msra.mxu0 %v5980
    %6009 = vmatprep.subr.bf16.mxu0 0
    %6010 = vmatpush1.bf16.msra.mxu0 %v5979
    %6011 = vmatprep.subr.bf16.mxu0 0
    %6012 = vmatpush2.bf16.msra.mxu0 0
    %6013 = vmatprep.subr.bf16.mxu0 0
    %6014 = vmatpush2.bf16.msra.mxu0 0
    %6015 = vmatprep.subr.bf16.mxu0 0
    %6016 = vmatpush2.bf16.msra.mxu0 0
    %6017 = vmatprep.subr.bf16.mxu0 0
    %6018 = vmatpush2.bf16.msra.mxu0 0
    %6019 = vmatprep.subr.bf16.mxu0 0
    %6020 = vmatpush2.bf16.msra.mxu0 0
    %6021 = vmatprep.subr.bf16.mxu0 0
    %6022 = vmatpush2.bf16.msra.mxu0 0
    %6023 = vmatprep.subr.bf16.mxu0 0
    %6024 = vmatpush2.bf16.msra.mxu0 0
    %6025 = vmatprep.subr.bf16.mxu0 0
    %6026 = vmatpush2.bf16.msra.mxu0 0
    %6027 = vmatprep.mubr.bf16.mxu0 0
    %6028 = vmatmul.mubr.bf16.gmra.mxu0 %v5890
    %v6029 = vpop.f32.mrf.mxu0
    %v6030 = vadd.f32 %v5945, %v6029
    %v6031 = vpop.f32.mrf.mxu0
    %v6032 = vpop.f32.mrf.mxu0
    %v6033 = vadd.f32 %v5945, %v6032
    %v6034 = vpop.f32.mrf.mxu0
    %6035 = vmatprep.mubr.bf16.mxu0 0
    %6036 = vmatmul.mubr.bf16.gmra.mxu0 %v5891
    %v6037 = vpop.f32.mrf.mxu0
    %v6038 = vadd.f32 %v5945, %v6037
    %v6039 = vpop.f32.mrf.mxu0
    %v6040 = vpop.f32.mrf.mxu0
    %v6041 = vadd.f32 %v5945, %v6040
    %v6042 = vpop.f32.mrf.mxu0
    %6043 = vmatprep.mubr.bf16.mxu0 0
    %6044 = vmatmul.mubr.bf16.gmra.mxu0 %v5892
    %v6045 = vpop.f32.mrf.mxu0
    %v6046 = vadd.f32 %v5945, %v6045
    %v6047 = vpop.f32.mrf.mxu0
    %v6048 = vpop.f32.mrf.mxu0
    %v6049 = vadd.f32 %v5945, %v6048
    %v6050 = vpop.f32.mrf.mxu0
    %6051 = vmatprep.mubr.bf16.mxu0 0
    %6052 = vmatmul.mubr.bf16.gmra.mxu0 %v5893
    %v6053 = vpop.f32.mrf.mxu0
    %v6054 = vadd.f32 %v5945, %v6053
    %v6055 = vpop.f32.mrf.mxu0
    %v6056 = vpop.f32.mrf.mxu0
    %v6057 = vadd.f32 %v5945, %v6056
    %v6058 = vpop.f32.mrf.mxu0
    %6059 = vmatprep.mubr.bf16.mxu0 0
    %6060 = vmatmul.mubr.bf16.gmra.mxu0 %v5894
    %v6061 = vpop.f32.mrf.mxu0
    %v6062 = vadd.f32 %v5945, %v6061
    %v6063 = vpop.f32.mrf.mxu0
    %v6064 = vpop.f32.mrf.mxu0
    %v6065 = vadd.f32 %v5945, %v6064
    %v6066 = vpop.f32.mrf.mxu0
    %6067 = vmatprep.mubr.bf16.mxu0 0
    %6068 = vmatmul.mubr.bf16.gmra.mxu0 %v5895
    %v6069 = vpop.f32.mrf.mxu0
    %v6070 = vadd.f32 %v5945, %v6069
    %v6071 = vpop.f32.mrf.mxu0
    %v6072 = vpop.f32.mrf.mxu0
    %v6073 = vadd.f32 %v5945, %v6072
    %v6074 = vpop.f32.mrf.mxu0
    %6075 = vmatprep.mubr.bf16.mxu0 0
    %6076 = vmatmul.mubr.bf16.gmra.mxu0 %v5896
    %v6077 = vpop.f32.mrf.mxu0
    %v6078 = vadd.f32 %v5945, %v6077
    %v6079 = vpop.f32.mrf.mxu0
    %v6080 = vpop.f32.mrf.mxu0
    %v6081 = vadd.f32 %v5945, %v6080
    %v6082 = vpop.f32.mrf.mxu0
    %6083 = vmatprep.mubr.bf16.mxu0 0
    %6084 = vmatmul.mubr.bf16.gmra.mxu0 %v5897
    %v6085 = vpop.f32.mrf.mxu0
    %v6086 = vadd.f32 %v5945, %v6085
    %v6087 = vpop.f32.mrf.mxu0
    %v6088 = vpop.f32.mrf.mxu0
    %v6089 = vadd.f32 %v5945, %v6088
    %v6090 = vpop.f32.mrf.mxu0
    %6091 = vmatprep.mubr.bf16.mxu0 0
    %6092 = vmatmul.mubr.bf16.gmra.mxu0 %v5898
    %v6093 = vpop.f32.mrf.mxu0
    %v6094 = vadd.f32 %v5945, %v6093
    %v6095 = vpop.f32.mrf.mxu0
    %v6096 = vpop.f32.mrf.mxu0
    %v6097 = vadd.f32 %v5945, %v6096
    %v6098 = vpop.f32.mrf.mxu0
    %6099 = vmatprep.mubr.bf16.mxu0 0
    %6100 = vmatmul.mubr.bf16.gmra.mxu0 %v5899
    %v6101 = vpop.f32.mrf.mxu0
    %v6102 = vadd.f32 %v5945, %v6101
    %v6103 = vpop.f32.mrf.mxu0
    %v6104 = vpop.f32.mrf.mxu0
    %v6105 = vadd.f32 %v5945, %v6104
    %v6106 = vpop.f32.mrf.mxu0
    %6107 = vmatprep.mubr.bf16.mxu0 0
    %6108 = vmatmul.mubr.bf16.gmra.mxu0 %v5900
    %v6109 = vpop.f32.mrf.mxu0
    %v6110 = vadd.f32 %v5945, %v6109
    %v6111 = vpop.f32.mrf.mxu0
    %v6112 = vpop.f32.mrf.mxu0
    %v6113 = vadd.f32 %v5945, %v6112
    %v6114 = vpop.f32.mrf.mxu0
    %6115 = vmatprep.mubr.bf16.mxu0 0
    %6116 = vmatmul.mubr.bf16.gmra.mxu0 %v5901
    %v6117 = vpop.f32.mrf.mxu0
    %v6118 = vadd.f32 %v5945, %v6117
    %v6119 = vpop.f32.mrf.mxu0
    %v6120 = vpop.f32.mrf.mxu0
    %v6121 = vadd.f32 %v5945, %v6120
    %v6122 = vpop.f32.mrf.mxu0
    %6123 = vmatprep.mubr.bf16.mxu0 0
    %6124 = vmatmul.mubr.bf16.gmra.mxu0 %v5902
    %v6125 = vpop.f32.mrf.mxu0
    %v6126 = vadd.f32 %v5945, %v6125
    %v6127 = vpop.f32.mrf.mxu0
    %v6128 = vpop.f32.mrf.mxu0
    %v6129 = vadd.f32 %v5945, %v6128
    %v6130 = vpop.f32.mrf.mxu0
    %6131 = vmatprep.mubr.bf16.mxu0 0
    %6132 = vmatmul.mubr.bf16.gmra.mxu0 %v5903
    %v6133 = vpop.f32.mrf.mxu0
    %v6134 = vadd.f32 %v5945, %v6133
    %v6135 = vpop.f32.mrf.mxu0
    %v6136 = vpop.f32.mrf.mxu0
    %v6137 = vadd.f32 %v5945, %v6136
    %v6138 = vpop.f32.mrf.mxu0
    %6139 = vmatprep.mubr.bf16.mxu0 0
    %6140 = vmatmul.mubr.bf16.gmra.mxu0 %v5904
    %v6141 = vpop.f32.mrf.mxu0
    %v6142 = vadd.f32 %v5945, %v6141
    %v6143 = vpop.f32.mrf.mxu0
    %v6144 = vpop.f32.mrf.mxu0
    %v6145 = vadd.f32 %v5945, %v6144
    %v6146 = vpop.f32.mrf.mxu0
    %6147 = vmatprep.mubr.bf16.mxu0 0
    %6148 = vmatmul.mubr.bf16.gmra.mxu0 %v5905
    %v6149 = vpop.f32.mrf.mxu0
    %v6150 = vadd.f32 %v5945, %v6149
    %v6151 = vpop.f32.mrf.mxu0
    %v6152 = vpop.f32.mrf.mxu0
    %v6153 = vadd.f32 %v5945, %v6152
    %v6154 = vpop.f32.mrf.mxu0
    %6155 = vmatprep.mubr.bf16.mxu0 0
    %6156 = vmatmul.mubr.bf16.gmra.mxu0 %v5906
    %v6157 = vpop.f32.mrf.mxu0
    %v6158 = vadd.f32 %v5945, %v6157
    %v6159 = vpop.f32.mrf.mxu0
    %v6160 = vpop.f32.mrf.mxu0
    %v6161 = vadd.f32 %v5945, %v6160
    %v6162 = vpop.f32.mrf.mxu0
    %6163 = vmatprep.mubr.bf16.mxu0 0
    %6164 = vmatmul.mubr.bf16.gmra.mxu0 %v5907
    %v6165 = vpop.f32.mrf.mxu0
    %v6166 = vadd.f32 %v5945, %v6165
    %v6167 = vpop.f32.mrf.mxu0
    %v6168 = vpop.f32.mrf.mxu0
    %v6169 = vadd.f32 %v5945, %v6168
    %v6170 = vpop.f32.mrf.mxu0
    %6171 = vmatprep.mubr.bf16.mxu0 0
    %6172 = vmatmul.mubr.bf16.gmra.mxu0 %v5908
    %v6173 = vpop.f32.mrf.mxu0
    %v6174 = vadd.f32 %v5945, %v6173
    %v6175 = vpop.f32.mrf.mxu0
    %v6176 = vpop.f32.mrf.mxu0
    %v6177 = vadd.f32 %v5945, %v6176
    %v6178 = vpop.f32.mrf.mxu0
    %6179 = vmatprep.mubr.bf16.mxu0 0
    %6180 = vmatmul.mubr.bf16.gmra.mxu0 %v5909
    %v6181 = vpop.f32.mrf.mxu0
    %v6182 = vadd.f32 %v5945, %v6181
    %v6183 = vpop.f32.mrf.mxu0
    %v6184 = vpop.f32.mrf.mxu0
    %v6185 = vadd.f32 %v5945, %v6184
    %v6186 = vpop.f32.mrf.mxu0
    %6187 = vmatprep.mubr.bf16.mxu0 0
    %6188 = vmatmul.mubr.bf16.gmra.mxu0 %v5910
    %v6189 = vpop.f32.mrf.mxu0
    %v6190 = vadd.f32 %v5945, %v6189
    %v6191 = vpop.f32.mrf.mxu0
    %v6192 = vpop.f32.mrf.mxu0
    %v6193 = vadd.f32 %v5945, %v6192
    %v6194 = vpop.f32.mrf.mxu0
    %6195 = vmatprep.mubr.bf16.mxu0 0
    %6196 = vmatmul.mubr.bf16.gmra.mxu0 %v5911
    %v6197 = vpop.f32.mrf.mxu0
    %v6198 = vadd.f32 %v5945, %v6197
    %v6199 = vpop.f32.mrf.mxu0
    %v6200 = vpop.f32.mrf.mxu0
    %v6201 = vadd.f32 %v5945, %v6200
    %v6202 = vpop.f32.mrf.mxu0
    %6203 = vmatprep.mubr.bf16.mxu0 0
    %6204 = vmatmul.mubr.bf16.gmra.mxu0 %v5912
    %v6205 = vpop.f32.mrf.mxu0
    %v6206 = vadd.f32 %v5945, %v6205
    %v6207 = vpop.f32.mrf.mxu0
    %v6208 = vpop.f32.mrf.mxu0
    %v6209 = vadd.f32 %v5945, %v6208
    %v6210 = vpop.f32.mrf.mxu0
    %6211 = vmatprep.mubr.bf16.mxu0 0
    %6212 = vmatmul.mubr.bf16.gmra.mxu0 %v5913
    %v6213 = vpop.f32.mrf.mxu0
    %v6214 = vadd.f32 %v5945, %v6213
    %v6215 = vpop.f32.mrf.mxu0
    %v6216 = vpop.f32.mrf.mxu0
    %v6217 = vadd.f32 %v5945, %v6216
    %v6218 = vpop.f32.mrf.mxu0
    %6219 = vmatprep.mubr.bf16.mxu0 0
    %6220 = vmatmul.mubr.bf16.gmra.mxu0 %v5914
    %v6221 = vpop.f32.mrf.mxu0
    %v6222 = vadd.f32 %v5945, %v6221
    %v6223 = vpop.f32.mrf.mxu0
    %v6224 = vpop.f32.mrf.mxu0
    %v6225 = vadd.f32 %v5945, %v6224
    %v6226 = vpop.f32.mrf.mxu0
    %6227 = vmatprep.mubr.bf16.mxu0 0
    %6228 = vmatmul.mubr.bf16.gmra.mxu0 %v5915
    %v6229 = vpop.f32.mrf.mxu0
    %v6230 = vadd.f32 %v5945, %v6229
    %v6231 = vpop.f32.mrf.mxu0
    %v6232 = vpop.f32.mrf.mxu0
    %v6233 = vadd.f32 %v5945, %v6232
    %v6234 = vpop.f32.mrf.mxu0
    %6235 = vmatprep.mubr.bf16.mxu0 0
    %6236 = vmatmul.mubr.bf16.gmra.mxu0 %v5916
    %v6237 = vpop.f32.mrf.mxu0
    %v6238 = vadd.f32 %v5945, %v6237
    %v6239 = vpop.f32.mrf.mxu0
    %v6240 = vpop.f32.mrf.mxu0
    %v6241 = vadd.f32 %v5945, %v6240
    %v6242 = vpop.f32.mrf.mxu0
    %6243 = vmatprep.mubr.bf16.mxu0 0
    %6244 = vmatmul.mubr.bf16.gmra.mxu0 %v5917
    %v6245 = vpop.f32.mrf.mxu0
    %v6246 = vadd.f32 %v5945, %v6245
    %v6247 = vpop.f32.mrf.mxu0
    %v6248 = vpop.f32.mrf.mxu0
    %v6249 = vadd.f32 %v5945, %v6248
    %v6250 = vpop.f32.mrf.mxu0
    %6251 = vmatprep.mubr.bf16.mxu0 0
    %6252 = vmatmul.mubr.bf16.gmra.mxu0 %v5918
    %v6253 = vpop.f32.mrf.mxu0
    %v6254 = vadd.f32 %v5945, %v6253
    %v6255 = vpop.f32.mrf.mxu0
    %v6256 = vpop.f32.mrf.mxu0
    %v6257 = vadd.f32 %v5945, %v6256
    %v6258 = vpop.f32.mrf.mxu0
    %6259 = vmatprep.mubr.bf16.mxu0 0
    %6260 = vmatmul.mubr.bf16.gmra.mxu0 %v5919
    %v6261 = vpop.f32.mrf.mxu0
    %v6262 = vadd.f32 %v5945, %v6261
    %v6263 = vpop.f32.mrf.mxu0
    %v6264 = vpop.f32.mrf.mxu0
    %v6265 = vadd.f32 %v5945, %v6264
    %v6266 = vpop.f32.mrf.mxu0
    %6267 = vmatprep.mubr.bf16.mxu0 0
    %6268 = vmatmul.mubr.bf16.gmra.mxu0 %v5920
    %v6269 = vpop.f32.mrf.mxu0
    %v6270 = vadd.f32 %v5945, %v6269
    %v6271 = vpop.f32.mrf.mxu0
    %v6272 = vpop.f32.mrf.mxu0
    %v6273 = vadd.f32 %v5945, %v6272
    %v6274 = vpop.f32.mrf.mxu0
    %6275 = vmatprep.mubr.bf16.mxu0 0
    %6276 = vmatmul.mubr.bf16.gmra.mxu0 %v5921
    %v6277 = vpop.f32.mrf.mxu0
    %v6278 = vadd.f32 %v5945, %v6277
    %v6279 = vpop.f32.mrf.mxu0
    %v6280 = vpop.f32.mrf.mxu0
    %v6281 = vadd.f32 %v5945, %v6280
    %v6282 = vpop.f32.mrf.mxu0
    %6283 = vdwg.mxu0
    %v6284 = vmax.f32 %v6030, 0.0
    %v6285 = vmax.f32 %v6033, 0.0
    %v6286 = vmax.f32 %v6038, 0.0
    %v6287 = vmax.f32 %v6041, 0.0
    %v6288 = vmax.f32 %v6046, 0.0
    %v6289 = vmax.f32 %v6049, 0.0
    %v6290 = vmax.f32 %v6054, 0.0
    %v6291 = vmax.f32 %v6057, 0.0
    %v6292 = vmax.f32 %v6062, 0.0
    %v6293 = vmax.f32 %v6065, 0.0
    %v6294 = vmax.f32 %v6070, 0.0
    %v6295 = vmax.f32 %v6073, 0.0
    %v6296 = vmax.f32 %v6078, 0.0
    %v6297 = vmax.f32 %v6081, 0.0
    %v6298 = vmax.f32 %v6086, 0.0
    %v6299 = vmax.f32 %v6089, 0.0
    %v6300 = vmax.f32 %v6094, 0.0
    %v6301 = vmax.f32 %v6097, 0.0
    %v6302 = vmax.f32 %v6102, 0.0
    %v6303 = vmax.f32 %v6105, 0.0
    %v6304 = vmax.f32 %v6110, 0.0
    %v6305 = vmax.f32 %v6113, 0.0
    %v6306 = vmax.f32 %v6118, 0.0
    %v6307 = vmax.f32 %v6121, 0.0
    %v6308 = vmax.f32 %v6126, 0.0
    %v6309 = vmax.f32 %v6129, 0.0
    %v6310 = vmax.f32 %v6134, 0.0
    %v6311 = vmax.f32 %v6137, 0.0
    %v6312 = vmax.f32 %v6142, 0.0
    %v6313 = vmax.f32 %v6145, 0.0
    %v6314 = vmax.f32 %v6150, 0.0
    %v6315 = vmax.f32 %v6153, 0.0
    %v6316 = vmax.f32 %v6158, 0.0
    %v6317 = vmax.f32 %v6161, 0.0
    %v6318 = vmax.f32 %v6166, 0.0
    %v6319 = vmax.f32 %v6169, 0.0
    %v6320 = vmax.f32 %v6174, 0.0
    %v6321 = vmax.f32 %v6177, 0.0
    %v6322 = vmax.f32 %v6182, 0.0
    %v6323 = vmax.f32 %v6185, 0.0
    %v6324 = vmax.f32 %v6190, 0.0
    %v6325 = vmax.f32 %v6193, 0.0
    %v6326 = vmax.f32 %v6198, 0.0
    %v6327 = vmax.f32 %v6201, 0.0
    %v6328 = vmax.f32 %v6206, 0.0
    %v6329 = vmax.f32 %v6209, 0.0
    %v6330 = vmax.f32 %v6214, 0.0
    %v6331 = vmax.f32 %v6217, 0.0
    %v6332 = vmax.f32 %v6222, 0.0
    %v6333 = vmax.f32 %v6225, 0.0
    %v6334 = vmax.f32 %v6230, 0.0
    %v6335 = vmax.f32 %v6233, 0.0
    %v6336 = vmax.f32 %v6238, 0.0
    %v6337 = vmax.f32 %v6241, 0.0
    %v6338 = vmax.f32 %v6246, 0.0
    %v6339 = vmax.f32 %v6249, 0.0
    %v6340 = vmax.f32 %v6254, 0.0
    %v6341 = vmax.f32 %v6257, 0.0
    %v6342 = vmax.f32 %v6262, 0.0
    %v6343 = vmax.f32 %v6265, 0.0
    %v6344 = vmax.f32 %v6270, 0.0
    %v6345 = vmax.f32 %v6273, 0.0
    %v6346 = vmax.f32 %v6278, 0.0
    %v6347 = vmax.f32 %v6281, 0.0
    %v6348 = vpack.c.bf16 %v6285, %v6284
    %v6349 = vpack.c.bf16 %v6287, %v6286
    %v6350 = vpack.c.bf16 %v6289, %v6288
    %v6351 = vpack.c.bf16 %v6291, %v6290
    %v6352 = vpack.c.bf16 %v6293, %v6292
    %v6353 = vpack.c.bf16 %v6295, %v6294
    %v6354 = vpack.c.bf16 %v6297, %v6296
    %v6355 = vpack.c.bf16 %v6299, %v6298
    %v6356 = vpack.c.bf16 %v6301, %v6300
    %v6357 = vpack.c.bf16 %v6303, %v6302
    %v6358 = vpack.c.bf16 %v6305, %v6304
    %v6359 = vpack.c.bf16 %v6307, %v6306
    %v6360 = vpack.c.bf16 %v6309, %v6308
    %v6361 = vpack.c.bf16 %v6311, %v6310
    %v6362 = vpack.c.bf16 %v6313, %v6312
    %v6363 = vpack.c.bf16 %v6315, %v6314
    %v6364 = vpack.c.bf16 %v6317, %v6316
    %v6365 = vpack.c.bf16 %v6319, %v6318
    %v6366 = vpack.c.bf16 %v6321, %v6320
    %v6367 = vpack.c.bf16 %v6323, %v6322
    %v6368 = vpack.c.bf16 %v6325, %v6324
    %v6369 = vpack.c.bf16 %v6327, %v6326
    %v6370 = vpack.c.bf16 %v6329, %v6328
    %v6371 = vpack.c.bf16 %v6331, %v6330
    %v6372 = vpack.c.bf16 %v6333, %v6332
    %v6373 = vpack.c.bf16 %v6335, %v6334
    %v6374 = vpack.c.bf16 %v6337, %v6336
    %v6375 = vpack.c.bf16 %v6339, %v6338
    %v6376 = vpack.c.bf16 %v6341, %v6340
    %v6377 = vpack.c.bf16 %v6343, %v6342
    %v6378 = vpack.c.bf16 %v6345, %v6344
    %v6379 = vpack.c.bf16 %v6347, %v6346
    %s6380 = scalar_lea.vmem [#allocation7], 128
    %v6381 = vld [vmem:[%s6380] sm:$0xf]
    %v6382 = vld [vmem:[%s6380 + $0x4] sm:$0xf]
    %v6383 = vld [vmem:[%s6380 + $0x8] sm:$0xf]
    %v6384 = vld [vmem:[%s6380 + $0xc] sm:$0xf]
    %v6385 = vld [vmem:[%s6380 + $0x10] sm:$0xf]
    %v6386 = vld [vmem:[%s6380 + $0x14] sm:$0xf]
    %v6387 = vld [vmem:[%s6380 + $0x18] sm:$0xf]
    %v6388 = vld [vmem:[%s6380 + $0x1c] sm:$0xf]
    %s6389 = scalar_lea.vmem [#allocation8], 4
    %v6390 = vld [vmem:[%s6389] sm:$0x1]
    %v6392 = vlaneseq
    %v6393 = vshrl.u32 %v6392, 7
    %v6394 = vsub.s32 0, %v6393
    %v6395 = vrot.slane %v6390, %v6394
    %v6405 = vunpack.c.l.b16 %v6381
    %v6406 = vunpack.c.l.b16 %v6382
    %v6407 = vunpack.c.l.b16 %v6383
    %v6408 = vunpack.c.l.b16 %v6384
    %v6409 = vunpack.c.l.b16 %v6385
    %v6410 = vunpack.c.l.b16 %v6386
    %v6411 = vunpack.c.l.b16 %v6387
    %v6412 = vunpack.c.l.b16 %v6388
    %v6413 = vpack.c.b16 %v6406, %v6405
    %v6414 = vpack.c.b16 %v6408, %v6407
    %v6415 = vpack.c.b16 %v6410, %v6409
    %v6416 = vpack.c.b16 %v6412, %v6411
    %v6422 = vsel %vm702, %v6348, 0
    %v6425 = vsel %vm702, %v6349, 0
    %v6428 = vsel %vm702, %v6350, 0
    %v6431 = vsel %vm702, %v6351, 0
    %v6434 = vsel %vm702, %v6352, 0
    %v6437 = vsel %vm702, %v6353, 0
    %v6440 = vsel %vm702, %v6354, 0
    %v6443 = vsel %vm702, %v6355, 0
    %v6446 = vsel %vm702, %v6356, 0
    %v6449 = vsel %vm702, %v6357, 0
    %v6452 = vsel %vm702, %v6358, 0
    %v6455 = vsel %vm702, %v6359, 0
    %v6458 = vsel %vm702, %v6360, 0
    %v6461 = vsel %vm702, %v6361, 0
    %v6464 = vsel %vm702, %v6362, 0
    %v6467 = vsel %vm702, %v6363, 0
    %v6470 = vsel %vm702, %v6364, 0
    %v6473 = vsel %vm702, %v6365, 0
    %v6476 = vsel %vm702, %v6366, 0
    %v6479 = vsel %vm702, %v6367, 0
    %v6482 = vsel %vm702, %v6368, 0
    %v6485 = vsel %vm702, %v6369, 0
    %v6488 = vsel %vm702, %v6370, 0
    %v6491 = vsel %vm702, %v6371, 0
    %v6494 = vsel %vm702, %v6372, 0
    %v6497 = vsel %vm702, %v6373, 0
    %v6500 = vsel %vm702, %v6374, 0
    %v6503 = vsel %vm702, %v6375, 0
    %v6506 = vsel %vm702, %v6376, 0
    %v6509 = vsel %vm702, %v6377, 0
    %v6512 = vsel %vm702, %v6378, 0
    %v6515 = vsel %vm702, %v6379, 0
    %6517 = vmatprep.subr.bf16.mxu0 0
    %6518 = vmatpush1.bf16.msra.mxu0 0
    %6519 = vmatprep.subr.bf16.mxu0 0
    %6520 = vmatpush1.bf16.msra.mxu0 0
    %6521 = vmatprep.subr.bf16.mxu0 0
    %6522 = vmatpush1.bf16.msra.mxu0 0
    %6523 = vmatprep.subr.bf16.mxu0 0
    %6524 = vmatpush1.bf16.msra.mxu0 0
    %6525 = vmatprep.subr.bf16.mxu0 0
    %6526 = vmatpush1.bf16.msra.mxu0 %v6416
    %6527 = vmatprep.subr.bf16.mxu0 0
    %6528 = vmatpush1.bf16.msra.mxu0 %v6415
    %6529 = vmatprep.subr.bf16.mxu0 0
    %6530 = vmatpush1.bf16.msra.mxu0 %v6414
    %6531 = vmatprep.subr.bf16.mxu0 0
    %6532 = vmatpush1.bf16.msra.mxu0 %v6413
    %6533 = vmatprep.subr.bf16.mxu0 0
    %6534 = vmatpush2.bf16.msra.mxu0 0
    %6535 = vmatprep.subr.bf16.mxu0 0
    %6536 = vmatpush2.bf16.msra.mxu0 0
    %6537 = vmatprep.subr.bf16.mxu0 0
    %6538 = vmatpush2.bf16.msra.mxu0 0
    %6539 = vmatprep.subr.bf16.mxu0 0
    %6540 = vmatpush2.bf16.msra.mxu0 0
    %6541 = vmatprep.subr.bf16.mxu0 0
    %6542 = vmatpush2.bf16.msra.mxu0 0
    %6543 = vmatprep.subr.bf16.mxu0 0
    %6544 = vmatpush2.bf16.msra.mxu0 0
    %6545 = vmatprep.subr.bf16.mxu0 0
    %6546 = vmatpush2.bf16.msra.mxu0 0
    %6547 = vmatprep.subr.bf16.mxu0 0
    %6548 = vmatpush2.bf16.msra.mxu0 0
    %6549 = vmatprep.mubr.bf16.mxu0 0
    %6550 = vmatmul.mubr.bf16.gmra.mxu0 %v6422
    %v6551 = vpop.f32.mrf.mxu0
    %v6552 = vadd.f32 %v6395, %v6551
    %v6553 = vpop.f32.mrf.mxu0
    %v6554 = vpop.f32.mrf.mxu0
    %v6555 = vadd.f32 %v6395, %v6554
    %v6556 = vpop.f32.mrf.mxu0
    %6557 = vmatprep.mubr.bf16.mxu0 0
    %6558 = vmatmul.mubr.bf16.gmra.mxu0 %v6425
    %v6559 = vpop.f32.mrf.mxu0
    %v6560 = vadd.f32 %v6395, %v6559
    %v6561 = vpop.f32.mrf.mxu0
    %v6562 = vpop.f32.mrf.mxu0
    %v6563 = vadd.f32 %v6395, %v6562
    %v6564 = vpop.f32.mrf.mxu0
    %6565 = vmatprep.mubr.bf16.mxu0 0
    %6566 = vmatmul.mubr.bf16.gmra.mxu0 %v6428
    %v6567 = vpop.f32.mrf.mxu0
    %v6568 = vadd.f32 %v6395, %v6567
    %v6569 = vpop.f32.mrf.mxu0
    %v6570 = vpop.f32.mrf.mxu0
    %v6571 = vadd.f32 %v6395, %v6570
    %v6572 = vpop.f32.mrf.mxu0
    %6573 = vmatprep.mubr.bf16.mxu0 0
    %6574 = vmatmul.mubr.bf16.gmra.mxu0 %v6431
    %v6575 = vpop.f32.mrf.mxu0
    %v6576 = vadd.f32 %v6395, %v6575
    %v6577 = vpop.f32.mrf.mxu0
    %v6578 = vpop.f32.mrf.mxu0
    %v6579 = vadd.f32 %v6395, %v6578
    %v6580 = vpop.f32.mrf.mxu0
    %6581 = vmatprep.mubr.bf16.mxu0 0
    %6582 = vmatmul.mubr.bf16.gmra.mxu0 %v6434
    %v6583 = vpop.f32.mrf.mxu0
    %v6584 = vadd.f32 %v6395, %v6583
    %v6585 = vpop.f32.mrf.mxu0
    %v6586 = vpop.f32.mrf.mxu0
    %v6587 = vadd.f32 %v6395, %v6586
    %v6588 = vpop.f32.mrf.mxu0
    %6589 = vmatprep.mubr.bf16.mxu0 0
    %6590 = vmatmul.mubr.bf16.gmra.mxu0 %v6437
    %v6591 = vpop.f32.mrf.mxu0
    %v6592 = vadd.f32 %v6395, %v6591
    %v6593 = vpop.f32.mrf.mxu0
    %v6594 = vpop.f32.mrf.mxu0
    %v6595 = vadd.f32 %v6395, %v6594
    %v6596 = vpop.f32.mrf.mxu0
    %6597 = vmatprep.mubr.bf16.mxu0 0
    %6598 = vmatmul.mubr.bf16.gmra.mxu0 %v6440
    %v6599 = vpop.f32.mrf.mxu0
    %v6600 = vadd.f32 %v6395, %v6599
    %v6601 = vpop.f32.mrf.mxu0
    %v6602 = vpop.f32.mrf.mxu0
    %v6603 = vadd.f32 %v6395, %v6602
    %v6604 = vpop.f32.mrf.mxu0
    %6605 = vmatprep.mubr.bf16.mxu0 0
    %6606 = vmatmul.mubr.bf16.gmra.mxu0 %v6443
    %v6607 = vpop.f32.mrf.mxu0
    %v6608 = vadd.f32 %v6395, %v6607
    %v6609 = vpop.f32.mrf.mxu0
    %v6610 = vpop.f32.mrf.mxu0
    %v6611 = vadd.f32 %v6395, %v6610
    %v6612 = vpop.f32.mrf.mxu0
    %6613 = vmatprep.mubr.bf16.mxu0 0
    %6614 = vmatmul.mubr.bf16.gmra.mxu0 %v6446
    %v6615 = vpop.f32.mrf.mxu0
    %v6616 = vadd.f32 %v6395, %v6615
    %v6617 = vpop.f32.mrf.mxu0
    %v6618 = vpop.f32.mrf.mxu0
    %v6619 = vadd.f32 %v6395, %v6618
    %v6620 = vpop.f32.mrf.mxu0
    %6621 = vmatprep.mubr.bf16.mxu0 0
    %6622 = vmatmul.mubr.bf16.gmra.mxu0 %v6449
    %v6623 = vpop.f32.mrf.mxu0
    %v6624 = vadd.f32 %v6395, %v6623
    %v6625 = vpop.f32.mrf.mxu0
    %v6626 = vpop.f32.mrf.mxu0
    %v6627 = vadd.f32 %v6395, %v6626
    %v6628 = vpop.f32.mrf.mxu0
    %6629 = vmatprep.mubr.bf16.mxu0 0
    %6630 = vmatmul.mubr.bf16.gmra.mxu0 %v6452
    %v6631 = vpop.f32.mrf.mxu0
    %v6632 = vadd.f32 %v6395, %v6631
    %v6633 = vpop.f32.mrf.mxu0
    %v6634 = vpop.f32.mrf.mxu0
    %v6635 = vadd.f32 %v6395, %v6634
    %v6636 = vpop.f32.mrf.mxu0
    %6637 = vmatprep.mubr.bf16.mxu0 0
    %6638 = vmatmul.mubr.bf16.gmra.mxu0 %v6455
    %v6639 = vpop.f32.mrf.mxu0
    %v6640 = vadd.f32 %v6395, %v6639
    %v6641 = vpop.f32.mrf.mxu0
    %v6642 = vpop.f32.mrf.mxu0
    %v6643 = vadd.f32 %v6395, %v6642
    %v6644 = vpop.f32.mrf.mxu0
    %6645 = vmatprep.mubr.bf16.mxu0 0
    %6646 = vmatmul.mubr.bf16.gmra.mxu0 %v6458
    %v6647 = vpop.f32.mrf.mxu0
    %v6648 = vadd.f32 %v6395, %v6647
    %v6649 = vpop.f32.mrf.mxu0
    %v6650 = vpop.f32.mrf.mxu0
    %v6651 = vadd.f32 %v6395, %v6650
    %v6652 = vpop.f32.mrf.mxu0
    %6653 = vmatprep.mubr.bf16.mxu0 0
    %6654 = vmatmul.mubr.bf16.gmra.mxu0 %v6461
    %v6655 = vpop.f32.mrf.mxu0
    %v6656 = vadd.f32 %v6395, %v6655
    %v6657 = vpop.f32.mrf.mxu0
    %v6658 = vpop.f32.mrf.mxu0
    %v6659 = vadd.f32 %v6395, %v6658
    %v6660 = vpop.f32.mrf.mxu0
    %6661 = vmatprep.mubr.bf16.mxu0 0
    %6662 = vmatmul.mubr.bf16.gmra.mxu0 %v6464
    %v6663 = vpop.f32.mrf.mxu0
    %v6664 = vadd.f32 %v6395, %v6663
    %v6665 = vpop.f32.mrf.mxu0
    %v6666 = vpop.f32.mrf.mxu0
    %v6667 = vadd.f32 %v6395, %v6666
    %v6668 = vpop.f32.mrf.mxu0
    %6669 = vmatprep.mubr.bf16.mxu0 0
    %6670 = vmatmul.mubr.bf16.gmra.mxu0 %v6467
    %v6671 = vpop.f32.mrf.mxu0
    %v6672 = vadd.f32 %v6395, %v6671
    %v6673 = vpop.f32.mrf.mxu0
    %v6674 = vpop.f32.mrf.mxu0
    %v6675 = vadd.f32 %v6395, %v6674
    %v6676 = vpop.f32.mrf.mxu0
    %6677 = vmatprep.mubr.bf16.mxu0 0
    %6678 = vmatmul.mubr.bf16.gmra.mxu0 %v6470
    %v6679 = vpop.f32.mrf.mxu0
    %v6680 = vadd.f32 %v6395, %v6679
    %v6681 = vpop.f32.mrf.mxu0
    %v6682 = vpop.f32.mrf.mxu0
    %v6683 = vadd.f32 %v6395, %v6682
    %v6684 = vpop.f32.mrf.mxu0
    %6685 = vmatprep.mubr.bf16.mxu0 0
    %6686 = vmatmul.mubr.bf16.gmra.mxu0 %v6473
    %v6687 = vpop.f32.mrf.mxu0
    %v6688 = vadd.f32 %v6395, %v6687
    %v6689 = vpop.f32.mrf.mxu0
    %v6690 = vpop.f32.mrf.mxu0
    %v6691 = vadd.f32 %v6395, %v6690
    %v6692 = vpop.f32.mrf.mxu0
    %6693 = vmatprep.mubr.bf16.mxu0 0
    %6694 = vmatmul.mubr.bf16.gmra.mxu0 %v6476
    %v6695 = vpop.f32.mrf.mxu0
    %v6696 = vadd.f32 %v6395, %v6695
    %v6697 = vpop.f32.mrf.mxu0
    %v6698 = vpop.f32.mrf.mxu0
    %v6699 = vadd.f32 %v6395, %v6698
    %v6700 = vpop.f32.mrf.mxu0
    %6701 = vmatprep.mubr.bf16.mxu0 0
    %6702 = vmatmul.mubr.bf16.gmra.mxu0 %v6479
    %v6703 = vpop.f32.mrf.mxu0
    %v6704 = vadd.f32 %v6395, %v6703
    %v6705 = vpop.f32.mrf.mxu0
    %v6706 = vpop.f32.mrf.mxu0
    %v6707 = vadd.f32 %v6395, %v6706
    %v6708 = vpop.f32.mrf.mxu0
    %6709 = vmatprep.mubr.bf16.mxu0 0
    %6710 = vmatmul.mubr.bf16.gmra.mxu0 %v6482
    %v6711 = vpop.f32.mrf.mxu0
    %v6712 = vadd.f32 %v6395, %v6711
    %v6713 = vpop.f32.mrf.mxu0
    %v6714 = vpop.f32.mrf.mxu0
    %v6715 = vadd.f32 %v6395, %v6714
    %v6716 = vpop.f32.mrf.mxu0
    %6717 = vmatprep.mubr.bf16.mxu0 0
    %6718 = vmatmul.mubr.bf16.gmra.mxu0 %v6485
    %v6719 = vpop.f32.mrf.mxu0
    %v6720 = vadd.f32 %v6395, %v6719
    %v6721 = vpop.f32.mrf.mxu0
    %v6722 = vpop.f32.mrf.mxu0
    %v6723 = vadd.f32 %v6395, %v6722
    %v6724 = vpop.f32.mrf.mxu0
    %6725 = vmatprep.mubr.bf16.mxu0 0
    %6726 = vmatmul.mubr.bf16.gmra.mxu0 %v6488
    %v6727 = vpop.f32.mrf.mxu0
    %v6728 = vadd.f32 %v6395, %v6727
    %v6729 = vpop.f32.mrf.mxu0
    %v6730 = vpop.f32.mrf.mxu0
    %v6731 = vadd.f32 %v6395, %v6730
    %v6732 = vpop.f32.mrf.mxu0
    %6733 = vmatprep.mubr.bf16.mxu0 0
    %6734 = vmatmul.mubr.bf16.gmra.mxu0 %v6491
    %v6735 = vpop.f32.mrf.mxu0
    %v6736 = vadd.f32 %v6395, %v6735
    %v6737 = vpop.f32.mrf.mxu0
    %v6738 = vpop.f32.mrf.mxu0
    %v6739 = vadd.f32 %v6395, %v6738
    %v6740 = vpop.f32.mrf.mxu0
    %6741 = vmatprep.mubr.bf16.mxu0 0
    %6742 = vmatmul.mubr.bf16.gmra.mxu0 %v6494
    %v6743 = vpop.f32.mrf.mxu0
    %v6744 = vadd.f32 %v6395, %v6743
    %v6745 = vpop.f32.mrf.mxu0
    %v6746 = vpop.f32.mrf.mxu0
    %v6747 = vadd.f32 %v6395, %v6746
    %v6748 = vpop.f32.mrf.mxu0
    %6749 = vmatprep.mubr.bf16.mxu0 0
    %6750 = vmatmul.mubr.bf16.gmra.mxu0 %v6497
    %v6751 = vpop.f32.mrf.mxu0
    %v6752 = vadd.f32 %v6395, %v6751
    %v6753 = vpop.f32.mrf.mxu0
    %v6754 = vpop.f32.mrf.mxu0
    %v6755 = vadd.f32 %v6395, %v6754
    %v6756 = vpop.f32.mrf.mxu0
    %6757 = vmatprep.mubr.bf16.mxu0 0
    %6758 = vmatmul.mubr.bf16.gmra.mxu0 %v6500
    %v6759 = vpop.f32.mrf.mxu0
    %v6760 = vadd.f32 %v6395, %v6759
    %v6761 = vpop.f32.mrf.mxu0
    %v6762 = vpop.f32.mrf.mxu0
    %v6763 = vadd.f32 %v6395, %v6762
    %v6764 = vpop.f32.mrf.mxu0
    %6765 = vmatprep.mubr.bf16.mxu0 0
    %6766 = vmatmul.mubr.bf16.gmra.mxu0 %v6503
    %v6767 = vpop.f32.mrf.mxu0
    %v6768 = vadd.f32 %v6395, %v6767
    %v6769 = vpop.f32.mrf.mxu0
    %v6770 = vpop.f32.mrf.mxu0
    %v6771 = vadd.f32 %v6395, %v6770
    %v6772 = vpop.f32.mrf.mxu0
    %6773 = vmatprep.mubr.bf16.mxu0 0
    %6774 = vmatmul.mubr.bf16.gmra.mxu0 %v6506
    %v6775 = vpop.f32.mrf.mxu0
    %v6776 = vadd.f32 %v6395, %v6775
    %v6777 = vpop.f32.mrf.mxu0
    %v6778 = vpop.f32.mrf.mxu0
    %v6779 = vadd.f32 %v6395, %v6778
    %v6780 = vpop.f32.mrf.mxu0
    %6781 = vmatprep.mubr.bf16.mxu0 0
    %6782 = vmatmul.mubr.bf16.gmra.mxu0 %v6509
    %v6783 = vpop.f32.mrf.mxu0
    %v6784 = vadd.f32 %v6395, %v6783
    %v6785 = vpop.f32.mrf.mxu0
    %v6786 = vpop.f32.mrf.mxu0
    %v6787 = vadd.f32 %v6395, %v6786
    %v6788 = vpop.f32.mrf.mxu0
    %6789 = vmatprep.mubr.bf16.mxu0 0
    %6790 = vmatmul.mubr.bf16.gmra.mxu0 %v6512
    %v6791 = vpop.f32.mrf.mxu0
    %v6792 = vadd.f32 %v6395, %v6791
    %v6793 = vpop.f32.mrf.mxu0
    %v6794 = vpop.f32.mrf.mxu0
    %v6795 = vadd.f32 %v6395, %v6794
    %v6796 = vpop.f32.mrf.mxu0
    %6797 = vmatprep.mubr.bf16.mxu0 0
    %6798 = vmatmul.mubr.bf16.gmra.mxu0 %v6515
    %v6799 = vpop.f32.mrf.mxu0
    %v6800 = vadd.f32 %v6395, %v6799
    %v6801 = vpop.f32.mrf.mxu0
    %v6802 = vpop.f32.mrf.mxu0
    %v6803 = vadd.f32 %v6395, %v6802
    %v6804 = vpop.f32.mrf.mxu0
    %6805 = vdwg.mxu0
    %v6806 = vmax.f32 %v6552, 0.0
    %v6807 = vmax.f32 %v6555, 0.0
    %v6808 = vmax.f32 %v6560, 0.0
    %v6809 = vmax.f32 %v6563, 0.0
    %v6810 = vmax.f32 %v6568, 0.0
    %v6811 = vmax.f32 %v6571, 0.0
    %v6812 = vmax.f32 %v6576, 0.0
    %v6813 = vmax.f32 %v6579, 0.0
    %v6814 = vmax.f32 %v6584, 0.0
    %v6815 = vmax.f32 %v6587, 0.0
    %v6816 = vmax.f32 %v6592, 0.0
    %v6817 = vmax.f32 %v6595, 0.0
    %v6818 = vmax.f32 %v6600, 0.0
    %v6819 = vmax.f32 %v6603, 0.0
    %v6820 = vmax.f32 %v6608, 0.0
    %v6821 = vmax.f32 %v6611, 0.0
    %v6822 = vmax.f32 %v6616, 0.0
    %v6823 = vmax.f32 %v6619, 0.0
    %v6824 = vmax.f32 %v6624, 0.0
    %v6825 = vmax.f32 %v6627, 0.0
    %v6826 = vmax.f32 %v6632, 0.0
    %v6827 = vmax.f32 %v6635, 0.0
    %v6828 = vmax.f32 %v6640, 0.0
    %v6829 = vmax.f32 %v6643, 0.0
    %v6830 = vmax.f32 %v6648, 0.0
    %v6831 = vmax.f32 %v6651, 0.0
    %v6832 = vmax.f32 %v6656, 0.0
    %v6833 = vmax.f32 %v6659, 0.0
    %v6834 = vmax.f32 %v6664, 0.0
    %v6835 = vmax.f32 %v6667, 0.0
    %v6836 = vmax.f32 %v6672, 0.0
    %v6837 = vmax.f32 %v6675, 0.0
    %v6838 = vmax.f32 %v6680, 0.0
    %v6839 = vmax.f32 %v6683, 0.0
    %v6840 = vmax.f32 %v6688, 0.0
    %v6841 = vmax.f32 %v6691, 0.0
    %v6842 = vmax.f32 %v6696, 0.0
    %v6843 = vmax.f32 %v6699, 0.0
    %v6844 = vmax.f32 %v6704, 0.0
    %v6845 = vmax.f32 %v6707, 0.0
    %v6846 = vmax.f32 %v6712, 0.0
    %v6847 = vmax.f32 %v6715, 0.0
    %v6848 = vmax.f32 %v6720, 0.0
    %v6849 = vmax.f32 %v6723, 0.0
    %v6850 = vmax.f32 %v6728, 0.0
    %v6851 = vmax.f32 %v6731, 0.0
    %v6852 = vmax.f32 %v6736, 0.0
    %v6853 = vmax.f32 %v6739, 0.0
    %v6854 = vmax.f32 %v6744, 0.0
    %v6855 = vmax.f32 %v6747, 0.0
    %v6856 = vmax.f32 %v6752, 0.0
    %v6857 = vmax.f32 %v6755, 0.0
    %v6858 = vmax.f32 %v6760, 0.0
    %v6859 = vmax.f32 %v6763, 0.0
    %v6860 = vmax.f32 %v6768, 0.0
    %v6861 = vmax.f32 %v6771, 0.0
    %v6862 = vmax.f32 %v6776, 0.0
    %v6863 = vmax.f32 %v6779, 0.0
    %v6864 = vmax.f32 %v6784, 0.0
    %v6865 = vmax.f32 %v6787, 0.0
    %v6866 = vmax.f32 %v6792, 0.0
    %v6867 = vmax.f32 %v6795, 0.0
    %v6868 = vmax.f32 %v6800, 0.0
    %v6869 = vmax.f32 %v6803, 0.0
    %v6870 = vpack.c.bf16 %v6807, %v6806
    %v6871 = vpack.c.bf16 %v6809, %v6808
    %v6872 = vpack.c.bf16 %v6811, %v6810
    %v6873 = vpack.c.bf16 %v6813, %v6812
    %v6874 = vpack.c.bf16 %v6815, %v6814
    %v6875 = vpack.c.bf16 %v6817, %v6816
    %v6876 = vpack.c.bf16 %v6819, %v6818
    %v6877 = vpack.c.bf16 %v6821, %v6820
    %v6878 = vpack.c.bf16 %v6823, %v6822
    %v6879 = vpack.c.bf16 %v6825, %v6824
    %v6880 = vpack.c.bf16 %v6827, %v6826
    %v6881 = vpack.c.bf16 %v6829, %v6828
    %v6882 = vpack.c.bf16 %v6831, %v6830
    %v6883 = vpack.c.bf16 %v6833, %v6832
    %v6884 = vpack.c.bf16 %v6835, %v6834
    %v6885 = vpack.c.bf16 %v6837, %v6836
    %v6886 = vpack.c.bf16 %v6839, %v6838
    %v6887 = vpack.c.bf16 %v6841, %v6840
    %v6888 = vpack.c.bf16 %v6843, %v6842
    %v6889 = vpack.c.bf16 %v6845, %v6844
    %v6890 = vpack.c.bf16 %v6847, %v6846
    %v6891 = vpack.c.bf16 %v6849, %v6848
    %v6892 = vpack.c.bf16 %v6851, %v6850
    %v6893 = vpack.c.bf16 %v6853, %v6852
    %v6894 = vpack.c.bf16 %v6855, %v6854
    %v6895 = vpack.c.bf16 %v6857, %v6856
    %v6896 = vpack.c.bf16 %v6859, %v6858
    %v6897 = vpack.c.bf16 %v6861, %v6860
    %v6898 = vpack.c.bf16 %v6863, %v6862
    %v6899 = vpack.c.bf16 %v6865, %v6864
    %v6900 = vpack.c.bf16 %v6867, %v6866
    %v6901 = vpack.c.bf16 %v6869, %v6868
    %v6934 = vunpack.c.l.b16 %v6870
    %v6935 = vunpack.c.h.b16 %v6870
    %v6936 = vunpack.c.l.b16 %v6871
    %v6937 = vunpack.c.h.b16 %v6871
    %v6938 = vunpack.c.l.b16 %v6872
    %v6939 = vunpack.c.h.b16 %v6872
    %v6940 = vunpack.c.l.b16 %v6873
    %v6941 = vunpack.c.h.b16 %v6873
    %v6942 = vunpack.c.l.b16 %v6874
    %v6943 = vunpack.c.h.b16 %v6874
    %v6944 = vunpack.c.l.b16 %v6875
    %v6945 = vunpack.c.h.b16 %v6875
    %v6946 = vunpack.c.l.b16 %v6876
    %v6947 = vunpack.c.h.b16 %v6876
    %v6948 = vunpack.c.l.b16 %v6877
    %v6949 = vunpack.c.h.b16 %v6877
    %v6950 = vunpack.c.l.b16 %v6878
    %v6951 = vunpack.c.h.b16 %v6878
    %v6952 = vunpack.c.l.b16 %v6879
    %v6953 = vunpack.c.h.b16 %v6879
    %v6954 = vunpack.c.l.b16 %v6880
    %v6955 = vunpack.c.h.b16 %v6880
    %v6956 = vunpack.c.l.b16 %v6881
    %v6957 = vunpack.c.h.b16 %v6881
    %v6958 = vunpack.c.l.b16 %v6882
    %v6959 = vunpack.c.h.b16 %v6882
    %v6960 = vunpack.c.l.b16 %v6883
    %v6961 = vunpack.c.h.b16 %v6883
    %v6962 = vunpack.c.l.b16 %v6884
    %v6963 = vunpack.c.h.b16 %v6884
    %v6964 = vunpack.c.l.b16 %v6885
    %v6965 = vunpack.c.h.b16 %v6885
    %v6966 = vunpack.c.l.b16 %v6886
    %v6967 = vunpack.c.h.b16 %v6886
    %v6968 = vunpack.c.l.b16 %v6887
    %v6969 = vunpack.c.h.b16 %v6887
    %v6970 = vunpack.c.l.b16 %v6888
    %v6971 = vunpack.c.h.b16 %v6888
    %v6972 = vunpack.c.l.b16 %v6889
    %v6973 = vunpack.c.h.b16 %v6889
    %v6974 = vunpack.c.l.b16 %v6890
    %v6975 = vunpack.c.h.b16 %v6890
    %v6976 = vunpack.c.l.b16 %v6891
    %v6977 = vunpack.c.h.b16 %v6891
    %v6978 = vunpack.c.l.b16 %v6892
    %v6979 = vunpack.c.h.b16 %v6892
    %v6980 = vunpack.c.l.b16 %v6893
    %v6981 = vunpack.c.h.b16 %v6893
    %v6982 = vunpack.c.l.b16 %v6894
    %v6983 = vunpack.c.h.b16 %v6894
    %v6984 = vunpack.c.l.b16 %v6895
    %v6985 = vunpack.c.h.b16 %v6895
    %v6986 = vunpack.c.l.b16 %v6896
    %v6987 = vunpack.c.h.b16 %v6896
    %v6988 = vunpack.c.l.b16 %v6897
    %v6989 = vunpack.c.h.b16 %v6897
    %v6990 = vunpack.c.l.b16 %v6898
    %v6991 = vunpack.c.h.b16 %v6898
    %v6992 = vunpack.c.l.b16 %v6899
    %v6993 = vunpack.c.h.b16 %v6899
    %v6994 = vunpack.c.l.b16 %v6900
    %v6995 = vunpack.c.h.b16 %v6900
    %v6996 = vunpack.c.l.b16 %v6901
    %v6997 = vunpack.c.h.b16 %v6901
    %v6998 = vpack.c.b16 %v6934, %v6934
    %v6999 = vpack.c.b16 %v6935, %v6935
    %v7000 = vpack.c.b16 %v6936, %v6936
    %v7001 = vpack.c.b16 %v6937, %v6937
    %v7002 = vpack.c.b16 %v6938, %v6938
    %v7003 = vpack.c.b16 %v6939, %v6939
    %v7004 = vpack.c.b16 %v6940, %v6940
    %v7005 = vpack.c.b16 %v6941, %v6941
    %v7006 = vpack.c.b16 %v6942, %v6942
    %v7007 = vpack.c.b16 %v6943, %v6943
    %v7008 = vpack.c.b16 %v6944, %v6944
    %v7009 = vpack.c.b16 %v6945, %v6945
    %v7010 = vpack.c.b16 %v6946, %v6946
    %v7011 = vpack.c.b16 %v6947, %v6947
    %v7012 = vpack.c.b16 %v6948, %v6948
    %v7013 = vpack.c.b16 %v6949, %v6949
    %v7014 = vpack.c.b16 %v6950, %v6950
    %v7015 = vpack.c.b16 %v6951, %v6951
    %v7016 = vpack.c.b16 %v6952, %v6952
    %v7017 = vpack.c.b16 %v6953, %v6953
    %v7018 = vpack.c.b16 %v6954, %v6954
    %v7019 = vpack.c.b16 %v6955, %v6955
    %v7020 = vpack.c.b16 %v6956, %v6956
    %v7021 = vpack.c.b16 %v6957, %v6957
    %v7022 = vpack.c.b16 %v6958, %v6958
    %v7023 = vpack.c.b16 %v6959, %v6959
    %v7024 = vpack.c.b16 %v6960, %v6960
    %v7025 = vpack.c.b16 %v6961, %v6961
    %v7026 = vpack.c.b16 %v6962, %v6962
    %v7027 = vpack.c.b16 %v6963, %v6963
    %v7028 = vpack.c.b16 %v6964, %v6964
    %v7029 = vpack.c.b16 %v6965, %v6965
    %v7030 = vpack.c.b16 %v6966, %v6966
    %v7031 = vpack.c.b16 %v6967, %v6967
    %v7032 = vpack.c.b16 %v6968, %v6968
    %v7033 = vpack.c.b16 %v6969, %v6969
    %v7034 = vpack.c.b16 %v6970, %v6970
    %v7035 = vpack.c.b16 %v6971, %v6971
    %v7036 = vpack.c.b16 %v6972, %v6972
    %v7037 = vpack.c.b16 %v6973, %v6973
    %v7038 = vpack.c.b16 %v6974, %v6974
    %v7039 = vpack.c.b16 %v6975, %v6975
    %v7040 = vpack.c.b16 %v6976, %v6976
    %v7041 = vpack.c.b16 %v6977, %v6977
    %v7042 = vpack.c.b16 %v6978, %v6978
    %v7043 = vpack.c.b16 %v6979, %v6979
    %v7044 = vpack.c.b16 %v6980, %v6980
    %v7045 = vpack.c.b16 %v6981, %v6981
    %v7046 = vpack.c.b16 %v6982, %v6982
    %v7047 = vpack.c.b16 %v6983, %v6983
    %v7048 = vpack.c.b16 %v6984, %v6984
    %v7049 = vpack.c.b16 %v6985, %v6985
    %v7050 = vpack.c.b16 %v6986, %v6986
    %v7051 = vpack.c.b16 %v6987, %v6987
    %v7052 = vpack.c.b16 %v6988, %v6988
    %v7053 = vpack.c.b16 %v6989, %v6989
    %v7054 = vpack.c.b16 %v6990, %v6990
    %v7055 = vpack.c.b16 %v6991, %v6991
    %v7056 = vpack.c.b16 %v6992, %v6992
    %v7057 = vpack.c.b16 %v6993, %v6993
    %v7058 = vpack.c.b16 %v6994, %v6994
    %v7059 = vpack.c.b16 %v6995, %v6995
    %v7060 = vpack.c.b16 %v6996, %v6996
    %v7061 = vpack.c.b16 %v6997, %v6997
    %7126 = vst.msk [vmem:[#allocation2 + $0x8] sm:$0xf] %vm1408, %v6998
    %7127 = vst.msk [vmem:[#allocation2 + $0x14] sm:$0xf] %vm1408, %v6999
    %7128 = vst.msk [vmem:[#allocation2 + $0x20] sm:$0xf] %vm1408, %v7000
    %7129 = vst.msk [vmem:[#allocation2 + $0x2c] sm:$0xf] %vm1408, %v7001
    %7130 = vst.msk [vmem:[#allocation2 + $0x38] sm:$0xf] %vm1408, %v7002
    %7131 = vst.msk [vmem:[#allocation2 + $0x44] sm:$0xf] %vm1408, %v7003
    %7132 = vst.msk [vmem:[#allocation2 + $0x50] sm:$0xf] %vm1408, %v7004
    %7133 = vst.msk [vmem:[#allocation2 + $0x5c] sm:$0xf] %vm1408, %v7005
    %7134 = vst.msk [vmem:[#allocation2 + $0x68] sm:$0xf] %vm1408, %v7006
    %7135 = vst.msk [vmem:[#allocation2 + $0x74] sm:$0xf] %vm1408, %v7007
    %7136 = vst.msk [vmem:[#allocation2 + $0x80] sm:$0xf] %vm1408, %v7008
    %7137 = vst.msk [vmem:[#allocation2 + $0x8c] sm:$0xf] %vm1408, %v7009
    %7138 = vst.msk [vmem:[#allocation2 + $0x98] sm:$0xf] %vm1408, %v7010
    %7139 = vst.msk [vmem:[#allocation2 + $0xa4] sm:$0xf] %vm1408, %v7011
    %7140 = vst.msk [vmem:[#allocation2 + $0xb0] sm:$0xf] %vm1408, %v7012
    %7141 = vst.msk [vmem:[#allocation2 + $0xbc] sm:$0xf] %vm1408, %v7013
    %7142 = vst.msk [vmem:[#allocation2 + $0xc8] sm:$0xf] %vm1408, %v7014
    %7143 = vst.msk [vmem:[#allocation2 + $0xd4] sm:$0xf] %vm1408, %v7015
    %7144 = vst.msk [vmem:[#allocation2 + $0xe0] sm:$0xf] %vm1408, %v7016
    %7145 = vst.msk [vmem:[#allocation2 + $0xec] sm:$0xf] %vm1408, %v7017
    %7146 = vst.msk [vmem:[#allocation2 + $0xf8] sm:$0xf] %vm1408, %v7018
    %7147 = vst.msk [vmem:[#allocation2 + $0x104] sm:$0xf] %vm1408, %v7019
    %7148 = vst.msk [vmem:[#allocation2 + $0x110] sm:$0xf] %vm1408, %v7020
    %7149 = vst.msk [vmem:[#allocation2 + $0x11c] sm:$0xf] %vm1408, %v7021
    %7150 = vst.msk [vmem:[#allocation2 + $0x128] sm:$0xf] %vm1408, %v7022
    %7151 = vst.msk [vmem:[#allocation2 + $0x134] sm:$0xf] %vm1408, %v7023
    %7152 = vst.msk [vmem:[#allocation2 + $0x140] sm:$0xf] %vm1408, %v7024
    %7153 = vst.msk [vmem:[#allocation2 + $0x14c] sm:$0xf] %vm1408, %v7025
    %7154 = vst.msk [vmem:[#allocation2 + $0x158] sm:$0xf] %vm1408, %v7026
    %7155 = vst.msk [vmem:[#allocation2 + $0x164] sm:$0xf] %vm1408, %v7027
    %7156 = vst.msk [vmem:[#allocation2 + $0x170] sm:$0xf] %vm1408, %v7028
    %7157 = vst.msk [vmem:[#allocation2 + $0x17c] sm:$0xf] %vm1408, %v7029
    %7158 = vst.msk [vmem:[#allocation2 + $0x188] sm:$0xf] %vm1408, %v7030
    %7159 = vst.msk [vmem:[#allocation2 + $0x194] sm:$0xf] %vm1408, %v7031
    %7160 = vst.msk [vmem:[#allocation2 + $0x1a0] sm:$0xf] %vm1408, %v7032
    %7161 = vst.msk [vmem:[#allocation2 + $0x1ac] sm:$0xf] %vm1408, %v7033
    %7162 = vst.msk [vmem:[#allocation2 + $0x1b8] sm:$0xf] %vm1408, %v7034
    %7163 = vst.msk [vmem:[#allocation2 + $0x1c4] sm:$0xf] %vm1408, %v7035
    %7164 = vst.msk [vmem:[#allocation2 + $0x1d0] sm:$0xf] %vm1408, %v7036
    %7165 = vst.msk [vmem:[#allocation2 + $0x1dc] sm:$0xf] %vm1408, %v7037
    %7166 = vst.msk [vmem:[#allocation2 + $0x1e8] sm:$0xf] %vm1408, %v7038
    %7167 = vst.msk [vmem:[#allocation2 + $0x1f4] sm:$0xf] %vm1408, %v7039
    %7168 = vst.msk [vmem:[#allocation2 + $0x200] sm:$0xf] %vm1408, %v7040
    %7169 = vst.msk [vmem:[#allocation2 + $0x20c] sm:$0xf] %vm1408, %v7041
    %7170 = vst.msk [vmem:[#allocation2 + $0x218] sm:$0xf] %vm1408, %v7042
    %7171 = vst.msk [vmem:[#allocation2 + $0x224] sm:$0xf] %vm1408, %v7043
    %7172 = vst.msk [vmem:[#allocation2 + $0x230] sm:$0xf] %vm1408, %v7044
    %7173 = vst.msk [vmem:[#allocation2 + $0x23c] sm:$0xf] %vm1408, %v7045
    %7174 = vst.msk [vmem:[#allocation2 + $0x248] sm:$0xf] %vm1408, %v7046
    %7175 = vst.msk [vmem:[#allocation2 + $0x254] sm:$0xf] %vm1408, %v7047
    %7176 = vst.msk [vmem:[#allocation2 + $0x260] sm:$0xf] %vm1408, %v7048
    %7177 = vst.msk [vmem:[#allocation2 + $0x26c] sm:$0xf] %vm1408, %v7049
    %7178 = vst.msk [vmem:[#allocation2 + $0x278] sm:$0xf] %vm1408, %v7050
    %7179 = vst.msk [vmem:[#allocation2 + $0x284] sm:$0xf] %vm1408, %v7051
    %7180 = vst.msk [vmem:[#allocation2 + $0x290] sm:$0xf] %vm1408, %v7052
    %7181 = vst.msk [vmem:[#allocation2 + $0x29c] sm:$0xf] %vm1408, %v7053
    %7182 = vst.msk [vmem:[#allocation2 + $0x2a8] sm:$0xf] %vm1408, %v7054
    %7183 = vst.msk [vmem:[#allocation2 + $0x2b4] sm:$0xf] %vm1408, %v7055
    %7184 = vst.msk [vmem:[#allocation2 + $0x2c0] sm:$0xf] %vm1408, %v7056
    %7185 = vst.msk [vmem:[#allocation2 + $0x2cc] sm:$0xf] %vm1408, %v7057
    %7186 = vst.msk [vmem:[#allocation2 + $0x2d8] sm:$0xf] %vm1408, %v7058
    %7187 = vst.msk [vmem:[#allocation2 + $0x2e4] sm:$0xf] %vm1408, %v7059
    %7188 = vst.msk [vmem:[#allocation2 + $0x2f0] sm:$0xf] %vm1408, %v7060
    %7189 = vst.msk [vmem:[#allocation2 + $0x2fc] sm:$0xf] %vm1408, %v7061
    %v7190 = vld [vmem:[#allocation2] sm:$0xff]
    %v7191 = vld [vmem:[#allocation2 + $0x8] sm:$0xf]
    %v7192 = vld [vmem:[#allocation2 + $0xc] sm:$0xff]
    %v7193 = vld [vmem:[#allocation2 + $0x14] sm:$0xf]
    %v7194 = vld [vmem:[#allocation2 + $0x18] sm:$0xff]
    %v7195 = vld [vmem:[#allocation2 + $0x20] sm:$0xf]
    %v7196 = vld [vmem:[#allocation2 + $0x24] sm:$0xff]
    %v7197 = vld [vmem:[#allocation2 + $0x2c] sm:$0xf]
    %v7198 = vld [vmem:[#allocation2 + $0x30] sm:$0xff]
    %v7199 = vld [vmem:[#allocation2 + $0x38] sm:$0xf]
    %v7200 = vld [vmem:[#allocation2 + $0x3c] sm:$0xff]
    %v7201 = vld [vmem:[#allocation2 + $0x44] sm:$0xf]
    %v7202 = vld [vmem:[#allocation2 + $0x48] sm:$0xff]
    %v7203 = vld [vmem:[#allocation2 + $0x50] sm:$0xf]
    %v7204 = vld [vmem:[#allocation2 + $0x54] sm:$0xff]
    %v7205 = vld [vmem:[#allocation2 + $0x5c] sm:$0xf]
    %v7206 = vld [vmem:[#allocation2 + $0x60] sm:$0xff]
    %v7207 = vld [vmem:[#allocation2 + $0x68] sm:$0xf]
    %v7208 = vld [vmem:[#allocation2 + $0x6c] sm:$0xff]
    %v7209 = vld [vmem:[#allocation2 + $0x74] sm:$0xf]
    %v7210 = vld [vmem:[#allocation2 + $0x78] sm:$0xff]
    %v7211 = vld [vmem:[#allocation2 + $0x80] sm:$0xf]
    %v7212 = vld [vmem:[#allocation2 + $0x84] sm:$0xff]
    %v7213 = vld [vmem:[#allocation2 + $0x8c] sm:$0xf]
    %v7214 = vld [vmem:[#allocation2 + $0x90] sm:$0xff]
    %v7215 = vld [vmem:[#allocation2 + $0x98] sm:$0xf]
    %v7216 = vld [vmem:[#allocation2 + $0x9c] sm:$0xff]
    %v7217 = vld [vmem:[#allocation2 + $0xa4] sm:$0xf]
    %v7218 = vld [vmem:[#allocation2 + $0xa8] sm:$0xff]
    %v7219 = vld [vmem:[#allocation2 + $0xb0] sm:$0xf]
    %v7220 = vld [vmem:[#allocation2 + $0xb4] sm:$0xff]
    %v7221 = vld [vmem:[#allocation2 + $0xbc] sm:$0xf]
    %v7222 = vld [vmem:[#allocation2 + $0xc0] sm:$0xff]
    %v7223 = vld [vmem:[#allocation2 + $0xc8] sm:$0xf]
    %v7224 = vld [vmem:[#allocation2 + $0xcc] sm:$0xff]
    %v7225 = vld [vmem:[#allocation2 + $0xd4] sm:$0xf]
    %v7226 = vld [vmem:[#allocation2 + $0xd8] sm:$0xff]
    %v7227 = vld [vmem:[#allocation2 + $0xe0] sm:$0xf]
    %v7228 = vld [vmem:[#allocation2 + $0xe4] sm:$0xff]
    %v7229 = vld [vmem:[#allocation2 + $0xec] sm:$0xf]
    %v7230 = vld [vmem:[#allocation2 + $0xf0] sm:$0xff]
    %v7231 = vld [vmem:[#allocation2 + $0xf8] sm:$0xf]
    %v7232 = vld [vmem:[#allocation2 + $0xfc] sm:$0xff]
    %v7233 = vld [vmem:[#allocation2 + $0x104] sm:$0xf]
    %v7234 = vld [vmem:[#allocation2 + $0x108] sm:$0xff]
    %v7235 = vld [vmem:[#allocation2 + $0x110] sm:$0xf]
    %v7236 = vld [vmem:[#allocation2 + $0x114] sm:$0xff]
    %v7237 = vld [vmem:[#allocation2 + $0x11c] sm:$0xf]
    %v7238 = vld [vmem:[#allocation2 + $0x120] sm:$0xff]
    %v7239 = vld [vmem:[#allocation2 + $0x128] sm:$0xf]
    %v7240 = vld [vmem:[#allocation2 + $0x12c] sm:$0xff]
    %v7241 = vld [vmem:[#allocation2 + $0x134] sm:$0xf]
    %v7242 = vld [vmem:[#allocation2 + $0x138] sm:$0xff]
    %v7243 = vld [vmem:[#allocation2 + $0x140] sm:$0xf]
    %v7244 = vld [vmem:[#allocation2 + $0x144] sm:$0xff]
    %v7245 = vld [vmem:[#allocation2 + $0x14c] sm:$0xf]
    %v7246 = vld [vmem:[#allocation2 + $0x150] sm:$0xff]
    %v7247 = vld [vmem:[#allocation2 + $0x158] sm:$0xf]
    %v7248 = vld [vmem:[#allocation2 + $0x15c] sm:$0xff]
    %v7249 = vld [vmem:[#allocation2 + $0x164] sm:$0xf]
    %v7250 = vld [vmem:[#allocation2 + $0x168] sm:$0xff]
    %v7251 = vld [vmem:[#allocation2 + $0x170] sm:$0xf]
    %v7252 = vld [vmem:[#allocation2 + $0x174] sm:$0xff]
    %v7253 = vld [vmem:[#allocation2 + $0x17c] sm:$0xf]
    %v7254 = vld [vmem:[#allocation2 + $0x180] sm:$0xff]
    %v7255 = vld [vmem:[#allocation2 + $0x188] sm:$0xf]
    %v7256 = vld [vmem:[#allocation2 + $0x18c] sm:$0xff]
    %v7257 = vld [vmem:[#allocation2 + $0x194] sm:$0xf]
    %v7258 = vld [vmem:[#allocation2 + $0x198] sm:$0xff]
    %v7259 = vld [vmem:[#allocation2 + $0x1a0] sm:$0xf]
    %v7260 = vld [vmem:[#allocation2 + $0x1a4] sm:$0xff]
    %v7261 = vld [vmem:[#allocation2 + $0x1ac] sm:$0xf]
    %v7262 = vld [vmem:[#allocation2 + $0x1b0] sm:$0xff]
    %v7263 = vld [vmem:[#allocation2 + $0x1b8] sm:$0xf]
    %v7264 = vld [vmem:[#allocation2 + $0x1bc] sm:$0xff]
    %v7265 = vld [vmem:[#allocation2 + $0x1c4] sm:$0xf]
    %v7266 = vld [vmem:[#allocation2 + $0x1c8] sm:$0xff]
    %v7267 = vld [vmem:[#allocation2 + $0x1d0] sm:$0xf]
    %v7268 = vld [vmem:[#allocation2 + $0x1d4] sm:$0xff]
    %v7269 = vld [vmem:[#allocation2 + $0x1dc] sm:$0xf]
    %v7270 = vld [vmem:[#allocation2 + $0x1e0] sm:$0xff]
    %v7271 = vld [vmem:[#allocation2 + $0x1e8] sm:$0xf]
    %v7272 = vld [vmem:[#allocation2 + $0x1ec] sm:$0xff]
    %v7273 = vld [vmem:[#allocation2 + $0x1f4] sm:$0xf]
    %v7274 = vld [vmem:[#allocation2 + $0x1f8] sm:$0xff]
    %v7275 = vld [vmem:[#allocation2 + $0x200] sm:$0xf]
    %v7276 = vld [vmem:[#allocation2 + $0x204] sm:$0xff]
    %v7277 = vld [vmem:[#allocation2 + $0x20c] sm:$0xf]
    %v7278 = vld [vmem:[#allocation2 + $0x210] sm:$0xff]
    %v7279 = vld [vmem:[#allocation2 + $0x218] sm:$0xf]
    %v7280 = vld [vmem:[#allocation2 + $0x21c] sm:$0xff]
    %v7281 = vld [vmem:[#allocation2 + $0x224] sm:$0xf]
    %v7282 = vld [vmem:[#allocation2 + $0x228] sm:$0xff]
    %v7283 = vld [vmem:[#allocation2 + $0x230] sm:$0xf]
    %v7284 = vld [vmem:[#allocation2 + $0x234] sm:$0xff]
    %v7285 = vld [vmem:[#allocation2 + $0x23c] sm:$0xf]
    %v7286 = vld [vmem:[#allocation2 + $0x240] sm:$0xff]
    %v7287 = vld [vmem:[#allocation2 + $0x248] sm:$0xf]
    %v7288 = vld [vmem:[#allocation2 + $0x24c] sm:$0xff]
    %v7289 = vld [vmem:[#allocation2 + $0x254] sm:$0xf]
    %v7290 = vld [vmem:[#allocation2 + $0x258] sm:$0xff]
    %v7291 = vld [vmem:[#allocation2 + $0x260] sm:$0xf]
    %v7292 = vld [vmem:[#allocation2 + $0x264] sm:$0xff]
    %v7293 = vld [vmem:[#allocation2 + $0x26c] sm:$0xf]
    %v7294 = vld [vmem:[#allocation2 + $0x270] sm:$0xff]
    %v7295 = vld [vmem:[#allocation2 + $0x278] sm:$0xf]
    %v7296 = vld [vmem:[#allocation2 + $0x27c] sm:$0xff]
    %v7297 = vld [vmem:[#allocation2 + $0x284] sm:$0xf]
    %v7298 = vld [vmem:[#allocation2 + $0x288] sm:$0xff]
    %v7299 = vld [vmem:[#allocation2 + $0x290] sm:$0xf]
    %v7300 = vld [vmem:[#allocation2 + $0x294] sm:$0xff]
    %v7301 = vld [vmem:[#allocation2 + $0x29c] sm:$0xf]
    %v7302 = vld [vmem:[#allocation2 + $0x2a0] sm:$0xff]
    %v7303 = vld [vmem:[#allocation2 + $0x2a8] sm:$0xf]
    %v7304 = vld [vmem:[#allocation2 + $0x2ac] sm:$0xff]
    %v7305 = vld [vmem:[#allocation2 + $0x2b4] sm:$0xf]
    %v7306 = vld [vmem:[#allocation2 + $0x2b8] sm:$0xff]
    %v7307 = vld [vmem:[#allocation2 + $0x2c0] sm:$0xf]
    %v7308 = vld [vmem:[#allocation2 + $0x2c4] sm:$0xff]
    %v7309 = vld [vmem:[#allocation2 + $0x2cc] sm:$0xf]
    %v7310 = vld [vmem:[#allocation2 + $0x2d0] sm:$0xff]
    %v7311 = vld [vmem:[#allocation2 + $0x2d8] sm:$0xf]
    %v7312 = vld [vmem:[#allocation2 + $0x2dc] sm:$0xff]
    %v7313 = vld [vmem:[#allocation2 + $0x2e4] sm:$0xf]
    %v7314 = vld [vmem:[#allocation2 + $0x2e8] sm:$0xff]
    %v7315 = vld [vmem:[#allocation2 + $0x2f0] sm:$0xf]
    %v7316 = vld [vmem:[#allocation2 + $0x2f4] sm:$0xff]
    %v7317 = vld [vmem:[#allocation2 + $0x2fc] sm:$0xf]
    %v7318 = vld [vmem:[%s5] sm:$0xf]
    %v7319 = vld [vmem:[%s5 + $0x4] sm:$0xf]
    %v7320 = vld [vmem:[%s5 + $0x8] sm:$0xf]
    %v7321 = vld [vmem:[%s5 + $0xc] sm:$0xf]
    %v7322 = vld [vmem:[%s5 + $0x10] sm:$0xf]
    %v7323 = vld [vmem:[%s5 + $0x14] sm:$0xf]
    %v7324 = vld [vmem:[%s5 + $0x18] sm:$0xf]
    %v7325 = vld [vmem:[%s5 + $0x1c] sm:$0xf]
    %v7326 = vld [vmem:[%s5 + $0x20] sm:$0xf]
    %v7327 = vld [vmem:[%s5 + $0x24] sm:$0xf]
    %v7328 = vld [vmem:[%s5 + $0x28] sm:$0xf]
    %v7329 = vld [vmem:[%s5 + $0x2c] sm:$0xf]
    %v7330 = vld [vmem:[%s5 + $0x30] sm:$0xf]
    %v7331 = vld [vmem:[%s5 + $0x34] sm:$0xf]
    %v7332 = vld [vmem:[%s5 + $0x38] sm:$0xf]
    %v7333 = vld [vmem:[%s5 + $0x3c] sm:$0xf]
    %v7334 = vld [vmem:[%s5 + $0x40] sm:$0xf]
    %v7335 = vld [vmem:[%s5 + $0x44] sm:$0xf]
    %v7336 = vld [vmem:[%s5 + $0x48] sm:$0xf]
    %v7337 = vld [vmem:[%s5 + $0x4c] sm:$0xf]
    %v7338 = vld [vmem:[%s5 + $0x50] sm:$0xf]
    %v7339 = vld [vmem:[%s5 + $0x54] sm:$0xf]
    %v7340 = vld [vmem:[%s5 + $0x58] sm:$0xf]
    %v7341 = vld [vmem:[%s5 + $0x5c] sm:$0xf]
    %v7342 = vld [vmem:[%s5 + $0x60] sm:$0xf]
    %v7343 = vld [vmem:[%s5 + $0x64] sm:$0xf]
    %v7344 = vld [vmem:[%s5 + $0x68] sm:$0xf]
    %v7345 = vld [vmem:[%s5 + $0x6c] sm:$0xf]
    %v7346 = vld [vmem:[%s5 + $0x70] sm:$0xf]
    %v7347 = vld [vmem:[%s5 + $0x74] sm:$0xf]
    %v7348 = vld [vmem:[%s5 + $0x78] sm:$0xf]
    %v7349 = vld [vmem:[%s5 + $0x7c] sm:$0xf]
    %v7350 = vld [vmem:[%s5 + $0x80] sm:$0xf]
    %v7351 = vld [vmem:[%s5 + $0x84] sm:$0xf]
    %v7352 = vld [vmem:[%s5 + $0x88] sm:$0xf]
    %v7353 = vld [vmem:[%s5 + $0x8c] sm:$0xf]
    %v7354 = vld [vmem:[%s5 + $0x90] sm:$0xf]
    %v7355 = vld [vmem:[%s5 + $0x94] sm:$0xf]
    %v7356 = vld [vmem:[%s5 + $0x98] sm:$0xf]
    %v7357 = vld [vmem:[%s5 + $0x9c] sm:$0xf]
    %v7358 = vld [vmem:[#allocation10] sm:$0x1]
    %v7360 = vlaneseq
    %v7361 = vshrl.u32 %v7360, 7
    %v7362 = vsub.s32 0, %v7361
    %v7363 = vrot.slane %v7358, %v7362
    %v7493 = vunpack.c.l.b16 %v7190
    %v7494 = vunpack.c.h.b16 %v7190
    %v7495 = vunpack.c.l.b16 %v7191
    %v7496 = vunpack.c.l.b16 %v7192
    %v7497 = vunpack.c.h.b16 %v7192
    %v7498 = vunpack.c.l.b16 %v7193
    %v7499 = vunpack.c.l.b16 %v7194
    %v7500 = vunpack.c.h.b16 %v7194
    %v7501 = vunpack.c.l.b16 %v7195
    %v7502 = vunpack.c.l.b16 %v7196
    %v7503 = vunpack.c.h.b16 %v7196
    %v7504 = vunpack.c.l.b16 %v7197
    %v7505 = vunpack.c.l.b16 %v7198
    %v7506 = vunpack.c.h.b16 %v7198
    %v7507 = vunpack.c.l.b16 %v7199
    %v7508 = vunpack.c.l.b16 %v7200
    %v7509 = vunpack.c.h.b16 %v7200
    %v7510 = vunpack.c.l.b16 %v7201
    %v7511 = vunpack.c.l.b16 %v7202
    %v7512 = vunpack.c.h.b16 %v7202
    %v7513 = vunpack.c.l.b16 %v7203
    %v7514 = vunpack.c.l.b16 %v7204
    %v7515 = vunpack.c.h.b16 %v7204
    %v7516 = vunpack.c.l.b16 %v7205
    %v7517 = vunpack.c.l.b16 %v7206
    %v7518 = vunpack.c.h.b16 %v7206
    %v7519 = vunpack.c.l.b16 %v7207
    %v7520 = vunpack.c.l.b16 %v7208
    %v7521 = vunpack.c.h.b16 %v7208
    %v7522 = vunpack.c.l.b16 %v7209
    %v7523 = vunpack.c.l.b16 %v7210
    %v7524 = vunpack.c.h.b16 %v7210
    %v7525 = vunpack.c.l.b16 %v7211
    %v7526 = vunpack.c.l.b16 %v7212
    %v7527 = vunpack.c.h.b16 %v7212
    %v7528 = vunpack.c.l.b16 %v7213
    %v7529 = vunpack.c.l.b16 %v7214
    %v7530 = vunpack.c.h.b16 %v7214
    %v7531 = vunpack.c.l.b16 %v7215
    %v7532 = vunpack.c.l.b16 %v7216
    %v7533 = vunpack.c.h.b16 %v7216
    %v7534 = vunpack.c.l.b16 %v7217
    %v7535 = vunpack.c.l.b16 %v7218
    %v7536 = vunpack.c.h.b16 %v7218
    %v7537 = vunpack.c.l.b16 %v7219
    %v7538 = vunpack.c.l.b16 %v7220
    %v7539 = vunpack.c.h.b16 %v7220
    %v7540 = vunpack.c.l.b16 %v7221
    %v7541 = vunpack.c.l.b16 %v7222
    %v7542 = vunpack.c.h.b16 %v7222
    %v7543 = vunpack.c.l.b16 %v7223
    %v7544 = vunpack.c.l.b16 %v7224
    %v7545 = vunpack.c.h.b16 %v7224
    %v7546 = vunpack.c.l.b16 %v7225
    %v7547 = vunpack.c.l.b16 %v7226
    %v7548 = vunpack.c.h.b16 %v7226
    %v7549 = vunpack.c.l.b16 %v7227
    %v7550 = vunpack.c.l.b16 %v7228
    %v7551 = vunpack.c.h.b16 %v7228
    %v7552 = vunpack.c.l.b16 %v7229
    %v7553 = vunpack.c.l.b16 %v7230
    %v7554 = vunpack.c.h.b16 %v7230
    %v7555 = vunpack.c.l.b16 %v7231
    %v7556 = vunpack.c.l.b16 %v7232
    %v7557 = vunpack.c.h.b16 %v7232
    %v7558 = vunpack.c.l.b16 %v7233
    %v7559 = vunpack.c.l.b16 %v7234
    %v7560 = vunpack.c.h.b16 %v7234
    %v7561 = vunpack.c.l.b16 %v7235
    %v7562 = vunpack.c.l.b16 %v7236
    %v7563 = vunpack.c.h.b16 %v7236
    %v7564 = vunpack.c.l.b16 %v7237
    %v7565 = vunpack.c.l.b16 %v7238
    %v7566 = vunpack.c.h.b16 %v7238
    %v7567 = vunpack.c.l.b16 %v7239
    %v7568 = vunpack.c.l.b16 %v7240
    %v7569 = vunpack.c.h.b16 %v7240
    %v7570 = vunpack.c.l.b16 %v7241
    %v7571 = vunpack.c.l.b16 %v7242
    %v7572 = vunpack.c.h.b16 %v7242
    %v7573 = vunpack.c.l.b16 %v7243
    %v7574 = vunpack.c.l.b16 %v7244
    %v7575 = vunpack.c.h.b16 %v7244
    %v7576 = vunpack.c.l.b16 %v7245
    %v7577 = vunpack.c.l.b16 %v7246
    %v7578 = vunpack.c.h.b16 %v7246
    %v7579 = vunpack.c.l.b16 %v7247
    %v7580 = vunpack.c.l.b16 %v7248
    %v7581 = vunpack.c.h.b16 %v7248
    %v7582 = vunpack.c.l.b16 %v7249
    %v7583 = vunpack.c.l.b16 %v7250
    %v7584 = vunpack.c.h.b16 %v7250
    %v7585 = vunpack.c.l.b16 %v7251
    %v7586 = vunpack.c.l.b16 %v7252
    %v7587 = vunpack.c.h.b16 %v7252
    %v7588 = vunpack.c.l.b16 %v7253
    %v7589 = vunpack.c.l.b16 %v7254
    %v7590 = vunpack.c.h.b16 %v7254
    %v7591 = vunpack.c.l.b16 %v7255
    %v7592 = vunpack.c.l.b16 %v7256
    %v7593 = vunpack.c.h.b16 %v7256
    %v7594 = vunpack.c.l.b16 %v7257
    %v7595 = vunpack.c.l.b16 %v7258
    %v7596 = vunpack.c.h.b16 %v7258
    %v7597 = vunpack.c.l.b16 %v7259
    %v7598 = vunpack.c.l.b16 %v7260
    %v7599 = vunpack.c.h.b16 %v7260
    %v7600 = vunpack.c.l.b16 %v7261
    %v7601 = vunpack.c.l.b16 %v7262
    %v7602 = vunpack.c.h.b16 %v7262
    %v7603 = vunpack.c.l.b16 %v7263
    %v7604 = vunpack.c.l.b16 %v7264
    %v7605 = vunpack.c.h.b16 %v7264
    %v7606 = vunpack.c.l.b16 %v7265
    %v7607 = vunpack.c.l.b16 %v7266
    %v7608 = vunpack.c.h.b16 %v7266
    %v7609 = vunpack.c.l.b16 %v7267
    %v7610 = vunpack.c.l.b16 %v7268
    %v7611 = vunpack.c.h.b16 %v7268
    %v7612 = vunpack.c.l.b16 %v7269
    %v7613 = vunpack.c.l.b16 %v7270
    %v7614 = vunpack.c.h.b16 %v7270
    %v7615 = vunpack.c.l.b16 %v7271
    %v7616 = vunpack.c.l.b16 %v7272
    %v7617 = vunpack.c.h.b16 %v7272
    %v7618 = vunpack.c.l.b16 %v7273
    %v7619 = vunpack.c.l.b16 %v7274
    %v7620 = vunpack.c.h.b16 %v7274
    %v7621 = vunpack.c.l.b16 %v7275
    %v7622 = vunpack.c.l.b16 %v7276
    %v7623 = vunpack.c.h.b16 %v7276
    %v7624 = vunpack.c.l.b16 %v7277
    %v7625 = vunpack.c.l.b16 %v7278
    %v7626 = vunpack.c.h.b16 %v7278
    %v7627 = vunpack.c.l.b16 %v7279
    %v7628 = vunpack.c.l.b16 %v7280
    %v7629 = vunpack.c.h.b16 %v7280
    %v7630 = vunpack.c.l.b16 %v7281
    %v7631 = vunpack.c.l.b16 %v7282
    %v7632 = vunpack.c.h.b16 %v7282
    %v7633 = vunpack.c.l.b16 %v7283
    %v7634 = vunpack.c.l.b16 %v7284
    %v7635 = vunpack.c.h.b16 %v7284
    %v7636 = vunpack.c.l.b16 %v7285
    %v7637 = vunpack.c.l.b16 %v7286
    %v7638 = vunpack.c.h.b16 %v7286
    %v7639 = vunpack.c.l.b16 %v7287
    %v7640 = vunpack.c.l.b16 %v7288
    %v7641 = vunpack.c.h.b16 %v7288
    %v7642 = vunpack.c.l.b16 %v7289
    %v7643 = vunpack.c.l.b16 %v7290
    %v7644 = vunpack.c.h.b16 %v7290
    %v7645 = vunpack.c.l.b16 %v7291
    %v7646 = vunpack.c.l.b16 %v7292
    %v7647 = vunpack.c.h.b16 %v7292
    %v7648 = vunpack.c.l.b16 %v7293
    %v7649 = vunpack.c.l.b16 %v7294
    %v7650 = vunpack.c.h.b16 %v7294
    %v7651 = vunpack.c.l.b16 %v7295
    %v7652 = vunpack.c.l.b16 %v7296
    %v7653 = vunpack.c.h.b16 %v7296
    %v7654 = vunpack.c.l.b16 %v7297
    %v7655 = vunpack.c.l.b16 %v7298
    %v7656 = vunpack.c.h.b16 %v7298
    %v7657 = vunpack.c.l.b16 %v7299
    %v7658 = vunpack.c.l.b16 %v7300
    %v7659 = vunpack.c.h.b16 %v7300
    %v7660 = vunpack.c.l.b16 %v7301
    %v7661 = vunpack.c.l.b16 %v7302
    %v7662 = vunpack.c.h.b16 %v7302
    %v7663 = vunpack.c.l.b16 %v7303
    %v7664 = vunpack.c.l.b16 %v7304
    %v7665 = vunpack.c.h.b16 %v7304
    %v7666 = vunpack.c.l.b16 %v7305
    %v7667 = vunpack.c.l.b16 %v7306
    %v7668 = vunpack.c.h.b16 %v7306
    %v7669 = vunpack.c.l.b16 %v7307
    %v7670 = vunpack.c.l.b16 %v7308
    %v7671 = vunpack.c.h.b16 %v7308
    %v7672 = vunpack.c.l.b16 %v7309
    %v7673 = vunpack.c.l.b16 %v7310
    %v7674 = vunpack.c.h.b16 %v7310
    %v7675 = vunpack.c.l.b16 %v7311
    %v7676 = vunpack.c.l.b16 %v7312
    %v7677 = vunpack.c.h.b16 %v7312
    %v7678 = vunpack.c.l.b16 %v7313
    %v7679 = vunpack.c.l.b16 %v7314
    %v7680 = vunpack.c.h.b16 %v7314
    %v7681 = vunpack.c.l.b16 %v7315
    %v7682 = vunpack.c.l.b16 %v7316
    %v7683 = vunpack.c.h.b16 %v7316
    %v7684 = vunpack.c.l.b16 %v7317
    %v7685 = vpack.c.b16 %v7496, %v7493
    %v7686 = vpack.c.b16 %v7497, %v7494
    %v7687 = vpack.c.b16 %v7498, %v7495
    %v7688 = vpack.c.b16 %v7502, %v7499
    %v7689 = vpack.c.b16 %v7503, %v7500
    %v7690 = vpack.c.b16 %v7504, %v7501
    %v7691 = vpack.c.b16 %v7508, %v7505
    %v7692 = vpack.c.b16 %v7509, %v7506
    %v7693 = vpack.c.b16 %v7510, %v7507
    %v7694 = vpack.c.b16 %v7514, %v7511
    %v7695 = vpack.c.b16 %v7515, %v7512
    %v7696 = vpack.c.b16 %v7516, %v7513
    %v7697 = vpack.c.b16 %v7520, %v7517
    %v7698 = vpack.c.b16 %v7521, %v7518
    %v7699 = vpack.c.b16 %v7522, %v7519
    %v7700 = vpack.c.b16 %v7526, %v7523
    %v7701 = vpack.c.b16 %v7527, %v7524
    %v7702 = vpack.c.b16 %v7528, %v7525
    %v7703 = vpack.c.b16 %v7532, %v7529
    %v7704 = vpack.c.b16 %v7533, %v7530
    %v7705 = vpack.c.b16 %v7534, %v7531
    %v7706 = vpack.c.b16 %v7538, %v7535
    %v7707 = vpack.c.b16 %v7539, %v7536
    %v7708 = vpack.c.b16 %v7540, %v7537
    %v7709 = vpack.c.b16 %v7544, %v7541
    %v7710 = vpack.c.b16 %v7545, %v7542
    %v7711 = vpack.c.b16 %v7546, %v7543
    %v7712 = vpack.c.b16 %v7550, %v7547
    %v7713 = vpack.c.b16 %v7551, %v7548
    %v7714 = vpack.c.b16 %v7552, %v7549
    %v7715 = vpack.c.b16 %v7556, %v7553
    %v7716 = vpack.c.b16 %v7557, %v7554
    %v7717 = vpack.c.b16 %v7558, %v7555
    %v7718 = vpack.c.b16 %v7562, %v7559
    %v7719 = vpack.c.b16 %v7563, %v7560
    %v7720 = vpack.c.b16 %v7564, %v7561
    %v7721 = vpack.c.b16 %v7568, %v7565
    %v7722 = vpack.c.b16 %v7569, %v7566
    %v7723 = vpack.c.b16 %v7570, %v7567
    %v7724 = vpack.c.b16 %v7574, %v7571
    %v7725 = vpack.c.b16 %v7575, %v7572
    %v7726 = vpack.c.b16 %v7576, %v7573
    %v7727 = vpack.c.b16 %v7580, %v7577
    %v7728 = vpack.c.b16 %v7581, %v7578
    %v7729 = vpack.c.b16 %v7582, %v7579
    %v7730 = vpack.c.b16 %v7586, %v7583
    %v7731 = vpack.c.b16 %v7587, %v7584
    %v7732 = vpack.c.b16 %v7588, %v7585
    %v7733 = vpack.c.b16 %v7592, %v7589
    %v7734 = vpack.c.b16 %v7593, %v7590
    %v7735 = vpack.c.b16 %v7594, %v7591
    %v7736 = vpack.c.b16 %v7598, %v7595
    %v7737 = vpack.c.b16 %v7599, %v7596
    %v7738 = vpack.c.b16 %v7600, %v7597
    %v7739 = vpack.c.b16 %v7604, %v7601
    %v7740 = vpack.c.b16 %v7605, %v7602
    %v7741 = vpack.c.b16 %v7606, %v7603
    %v7742 = vpack.c.b16 %v7610, %v7607
    %v7743 = vpack.c.b16 %v7611, %v7608
    %v7744 = vpack.c.b16 %v7612, %v7609
    %v7745 = vpack.c.b16 %v7616, %v7613
    %v7746 = vpack.c.b16 %v7617, %v7614
    %v7747 = vpack.c.b16 %v7618, %v7615
    %v7748 = vpack.c.b16 %v7622, %v7619
    %v7749 = vpack.c.b16 %v7623, %v7620
    %v7750 = vpack.c.b16 %v7624, %v7621
    %v7751 = vpack.c.b16 %v7628, %v7625
    %v7752 = vpack.c.b16 %v7629, %v7626
    %v7753 = vpack.c.b16 %v7630, %v7627
    %v7754 = vpack.c.b16 %v7634, %v7631
    %v7755 = vpack.c.b16 %v7635, %v7632
    %v7756 = vpack.c.b16 %v7636, %v7633
    %v7757 = vpack.c.b16 %v7640, %v7637
    %v7758 = vpack.c.b16 %v7641, %v7638
    %v7759 = vpack.c.b16 %v7642, %v7639
    %v7760 = vpack.c.b16 %v7646, %v7643
    %v7761 = vpack.c.b16 %v7647, %v7644
    %v7762 = vpack.c.b16 %v7648, %v7645
    %v7763 = vpack.c.b16 %v7652, %v7649
    %v7764 = vpack.c.b16 %v7653, %v7650
    %v7765 = vpack.c.b16 %v7654, %v7651
    %v7766 = vpack.c.b16 %v7658, %v7655
    %v7767 = vpack.c.b16 %v7659, %v7656
    %v7768 = vpack.c.b16 %v7660, %v7657
    %v7769 = vpack.c.b16 %v7664, %v7661
    %v7770 = vpack.c.b16 %v7665, %v7662
    %v7771 = vpack.c.b16 %v7666, %v7663
    %v7772 = vpack.c.b16 %v7670, %v7667
    %v7773 = vpack.c.b16 %v7671, %v7668
    %v7774 = vpack.c.b16 %v7672, %v7669
    %v7775 = vpack.c.b16 %v7676, %v7673
    %v7776 = vpack.c.b16 %v7677, %v7674
    %v7777 = vpack.c.b16 %v7678, %v7675
    %v7778 = vpack.c.b16 %v7682, %v7679
    %v7779 = vpack.c.b16 %v7683, %v7680
    %v7780 = vpack.c.b16 %v7684, %v7681
    %v7885 = vunpack.c.l.b16 %v7318
    %v7886 = vunpack.c.l.b16 %v7319
    %v7887 = vunpack.c.l.b16 %v7320
    %v7888 = vunpack.c.l.b16 %v7321
    %v7889 = vunpack.c.l.b16 %v7322
    %v7890 = vunpack.c.l.b16 %v7323
    %v7891 = vunpack.c.l.b16 %v7324
    %v7892 = vunpack.c.l.b16 %v7325
    %v7893 = vunpack.c.l.b16 %v7326
    %v7894 = vunpack.c.l.b16 %v7327
    %v7895 = vunpack.c.l.b16 %v7328
    %v7896 = vunpack.c.l.b16 %v7329
    %v7897 = vunpack.c.l.b16 %v7330
    %v7898 = vunpack.c.l.b16 %v7331
    %v7899 = vunpack.c.l.b16 %v7332
    %v7900 = vunpack.c.l.b16 %v7333
    %v7901 = vunpack.c.l.b16 %v7334
    %v7902 = vunpack.c.l.b16 %v7335
    %v7903 = vunpack.c.l.b16 %v7336
    %v7904 = vunpack.c.l.b16 %v7337
    %v7905 = vunpack.c.l.b16 %v7338
    %v7906 = vunpack.c.l.b16 %v7339
    %v7907 = vunpack.c.l.b16 %v7340
    %v7908 = vunpack.c.l.b16 %v7341
    %v7909 = vunpack.c.l.b16 %v7342
    %v7910 = vunpack.c.l.b16 %v7343
    %v7911 = vunpack.c.l.b16 %v7344
    %v7912 = vunpack.c.l.b16 %v7345
    %v7913 = vunpack.c.l.b16 %v7346
    %v7914 = vunpack.c.l.b16 %v7347
    %v7915 = vunpack.c.l.b16 %v7348
    %v7916 = vunpack.c.l.b16 %v7349
    %v7917 = vunpack.c.l.b16 %v7350
    %v7918 = vunpack.c.l.b16 %v7351
    %v7919 = vunpack.c.l.b16 %v7352
    %v7920 = vunpack.c.l.b16 %v7353
    %v7921 = vunpack.c.l.b16 %v7354
    %v7922 = vunpack.c.l.b16 %v7355
    %v7923 = vunpack.c.l.b16 %v7356
    %v7924 = vunpack.c.l.b16 %v7357
    %v7925 = vpack.c.b16 %v7886, %v7885
    %v7926 = vpack.c.b16 %v7888, %v7887
    %v7927 = vpack.c.b16 %v7890, %v7889
    %v7928 = vpack.c.b16 %v7892, %v7891
    %v7929 = vpack.c.b16 %v7894, %v7893
    %v7930 = vpack.c.b16 %v7896, %v7895
    %v7931 = vpack.c.b16 %v7898, %v7897
    %v7932 = vpack.c.b16 %v7900, %v7899
    %v7933 = vpack.c.b16 %v7902, %v7901
    %v7934 = vpack.c.b16 %v7904, %v7903
    %v7935 = vpack.c.b16 %v7906, %v7905
    %v7936 = vpack.c.b16 %v7908, %v7907
    %v7937 = vpack.c.b16 %v7910, %v7909
    %v7938 = vpack.c.b16 %v7912, %v7911
    %v7939 = vpack.c.b16 %v7914, %v7913
    %v7940 = vpack.c.b16 %v7916, %v7915
    %v7941 = vpack.c.b16 %v7918, %v7917
    %v7942 = vpack.c.b16 %v7920, %v7919
    %v7943 = vpack.c.b16 %v7922, %v7921
    %v7944 = vpack.c.b16 %v7924, %v7923
    %v7966 = vsel %vm702, %v7687, 0
    %v7969 = vsel %vm702, %v7690, 0
    %v7972 = vsel %vm702, %v7693, 0
    %v7975 = vsel %vm702, %v7696, 0
    %v7978 = vsel %vm702, %v7699, 0
    %v7981 = vsel %vm702, %v7702, 0
    %v7984 = vsel %vm702, %v7705, 0
    %v7987 = vsel %vm702, %v7708, 0
    %v7990 = vsel %vm702, %v7711, 0
    %v7993 = vsel %vm702, %v7714, 0
    %v7996 = vsel %vm702, %v7717, 0
    %v7999 = vsel %vm702, %v7720, 0
    %v8002 = vsel %vm702, %v7723, 0
    %v8005 = vsel %vm702, %v7726, 0
    %v8008 = vsel %vm702, %v7729, 0
    %v8011 = vsel %vm702, %v7732, 0
    %v8014 = vsel %vm702, %v7735, 0
    %v8017 = vsel %vm702, %v7738, 0
    %v8020 = vsel %vm702, %v7741, 0
    %v8023 = vsel %vm702, %v7744, 0
    %v8026 = vsel %vm702, %v7747, 0
    %v8029 = vsel %vm702, %v7750, 0
    %v8032 = vsel %vm702, %v7753, 0
    %v8035 = vsel %vm702, %v7756, 0
    %v8038 = vsel %vm702, %v7759, 0
    %v8041 = vsel %vm702, %v7762, 0
    %v8044 = vsel %vm702, %v7765, 0
    %v8047 = vsel %vm702, %v7768, 0
    %v8050 = vsel %vm702, %v7771, 0
    %v8053 = vsel %vm702, %v7774, 0
    %v8056 = vsel %vm702, %v7777, 0
    %v8059 = vsel %vm702, %v7780, 0
    %8061 = vmatprep.subr.bf16.mxu0 0
    %8062 = vmatpush1.bf16.msra.mxu0 %v7932
    %8063 = vmatprep.subr.bf16.mxu0 0
    %8064 = vmatpush1.bf16.msra.mxu0 %v7931
    %8065 = vmatprep.subr.bf16.mxu0 0
    %8066 = vmatpush1.bf16.msra.mxu0 %v7930
    %8067 = vmatprep.subr.bf16.mxu0 0
    %8068 = vmatpush1.bf16.msra.mxu0 %v7929
    %8069 = vmatprep.subr.bf16.mxu0 0
    %8070 = vmatpush1.bf16.msra.mxu0 %v7928
    %8071 = vmatprep.subr.bf16.mxu0 0
    %8072 = vmatpush1.bf16.msra.mxu0 %v7927
    %8073 = vmatprep.subr.bf16.mxu0 0
    %8074 = vmatpush1.bf16.msra.mxu0 %v7926
    %8075 = vmatprep.subr.bf16.mxu0 0
    %8076 = vmatpush1.bf16.msra.mxu0 %v7925
    %8077 = vmatprep.subr.bf16.mxu0 0
    %8078 = vmatpush2.bf16.msra.mxu0 %v7940
    %8079 = vmatprep.subr.bf16.mxu0 0
    %8080 = vmatpush2.bf16.msra.mxu0 %v7939
    %8081 = vmatprep.subr.bf16.mxu0 0
    %8082 = vmatpush2.bf16.msra.mxu0 %v7938
    %8083 = vmatprep.subr.bf16.mxu0 0
    %8084 = vmatpush2.bf16.msra.mxu0 %v7937
    %8085 = vmatprep.subr.bf16.mxu0 0
    %8086 = vmatpush2.bf16.msra.mxu0 %v7936
    %8087 = vmatprep.subr.bf16.mxu0 0
    %8088 = vmatpush2.bf16.msra.mxu0 %v7935
    %8089 = vmatprep.subr.bf16.mxu0 0
    %8090 = vmatpush2.bf16.msra.mxu0 %v7934
    %8091 = vmatprep.subr.bf16.mxu0 0
    %8092 = vmatpush2.bf16.msra.mxu0 %v7933
    %8093 = vmatprep.mubr.bf16.mxu0 %v7686
    %8094 = vmatmul.mubr.bf16.gmra.mxu0 %v7685
    %v8095 = vpop.f32.mrf.mxu0
    %v8096 = vadd.f32 %v7363, %v8095
    %v8097 = vpop.f32.mrf.mxu0
    %v8098 = vpop.f32.mrf.mxu0
    %v8099 = vadd.f32 %v7363, %v8098
    %v8100 = vpop.f32.mrf.mxu0
    %8101 = vmatprep.mubr.bf16.mxu0 %v7689
    %8102 = vmatmul.mubr.bf16.gmra.mxu0 %v7688
    %v8103 = vpop.f32.mrf.mxu0
    %v8104 = vadd.f32 %v7363, %v8103
    %v8105 = vpop.f32.mrf.mxu0
    %v8106 = vpop.f32.mrf.mxu0
    %v8107 = vadd.f32 %v7363, %v8106
    %v8108 = vpop.f32.mrf.mxu0
    %8109 = vmatprep.mubr.bf16.mxu0 %v7692
    %8110 = vmatmul.mubr.bf16.gmra.mxu0 %v7691
    %v8111 = vpop.f32.mrf.mxu0
    %v8112 = vadd.f32 %v7363, %v8111
    %v8113 = vpop.f32.mrf.mxu0
    %v8114 = vpop.f32.mrf.mxu0
    %v8115 = vadd.f32 %v7363, %v8114
    %v8116 = vpop.f32.mrf.mxu0
    %8117 = vmatprep.mubr.bf16.mxu0 %v7695
    %8118 = vmatmul.mubr.bf16.gmra.mxu0 %v7694
    %v8119 = vpop.f32.mrf.mxu0
    %v8120 = vadd.f32 %v7363, %v8119
    %v8121 = vpop.f32.mrf.mxu0
    %v8122 = vpop.f32.mrf.mxu0
    %v8123 = vadd.f32 %v7363, %v8122
    %v8124 = vpop.f32.mrf.mxu0
    %8125 = vmatprep.mubr.bf16.mxu0 %v7698
    %8126 = vmatmul.mubr.bf16.gmra.mxu0 %v7697
    %v8127 = vpop.f32.mrf.mxu0
    %v8128 = vadd.f32 %v7363, %v8127
    %v8129 = vpop.f32.mrf.mxu0
    %v8130 = vpop.f32.mrf.mxu0
    %v8131 = vadd.f32 %v7363, %v8130
    %v8132 = vpop.f32.mrf.mxu0
    %8133 = vmatprep.mubr.bf16.mxu0 %v7701
    %8134 = vmatmul.mubr.bf16.gmra.mxu0 %v7700
    %v8135 = vpop.f32.mrf.mxu0
    %v8136 = vadd.f32 %v7363, %v8135
    %v8137 = vpop.f32.mrf.mxu0
    %v8138 = vpop.f32.mrf.mxu0
    %v8139 = vadd.f32 %v7363, %v8138
    %v8140 = vpop.f32.mrf.mxu0
    %8141 = vmatprep.mubr.bf16.mxu0 %v7704
    %8142 = vmatmul.mubr.bf16.gmra.mxu0 %v7703
    %v8143 = vpop.f32.mrf.mxu0
    %v8144 = vadd.f32 %v7363, %v8143
    %v8145 = vpop.f32.mrf.mxu0
    %v8146 = vpop.f32.mrf.mxu0
    %v8147 = vadd.f32 %v7363, %v8146
    %v8148 = vpop.f32.mrf.mxu0
    %8149 = vmatprep.mubr.bf16.mxu0 %v7707
    %8150 = vmatmul.mubr.bf16.gmra.mxu0 %v7706
    %v8151 = vpop.f32.mrf.mxu0
    %v8152 = vadd.f32 %v7363, %v8151
    %v8153 = vpop.f32.mrf.mxu0
    %v8154 = vpop.f32.mrf.mxu0
    %v8155 = vadd.f32 %v7363, %v8154
    %v8156 = vpop.f32.mrf.mxu0
    %8157 = vmatprep.mubr.bf16.mxu0 %v7710
    %8158 = vmatmul.mubr.bf16.gmra.mxu0 %v7709
    %v8159 = vpop.f32.mrf.mxu0
    %v8160 = vadd.f32 %v7363, %v8159
    %v8161 = vpop.f32.mrf.mxu0
    %v8162 = vpop.f32.mrf.mxu0
    %v8163 = vadd.f32 %v7363, %v8162
    %v8164 = vpop.f32.mrf.mxu0
    %8165 = vmatprep.mubr.bf16.mxu0 %v7713
    %8166 = vmatmul.mubr.bf16.gmra.mxu0 %v7712
    %v8167 = vpop.f32.mrf.mxu0
    %v8168 = vadd.f32 %v7363, %v8167
    %v8169 = vpop.f32.mrf.mxu0
    %v8170 = vpop.f32.mrf.mxu0
    %v8171 = vadd.f32 %v7363, %v8170
    %v8172 = vpop.f32.mrf.mxu0
    %8173 = vmatprep.mubr.bf16.mxu0 %v7716
    %8174 = vmatmul.mubr.bf16.gmra.mxu0 %v7715
    %v8175 = vpop.f32.mrf.mxu0
    %v8176 = vadd.f32 %v7363, %v8175
    %v8177 = vpop.f32.mrf.mxu0
    %v8178 = vpop.f32.mrf.mxu0
    %v8179 = vadd.f32 %v7363, %v8178
    %v8180 = vpop.f32.mrf.mxu0
    %8181 = vmatprep.mubr.bf16.mxu0 %v7719
    %8182 = vmatmul.mubr.bf16.gmra.mxu0 %v7718
    %v8183 = vpop.f32.mrf.mxu0
    %v8184 = vadd.f32 %v7363, %v8183
    %v8185 = vpop.f32.mrf.mxu0
    %v8186 = vpop.f32.mrf.mxu0
    %v8187 = vadd.f32 %v7363, %v8186
    %v8188 = vpop.f32.mrf.mxu0
    %8189 = vmatprep.mubr.bf16.mxu0 %v7722
    %8190 = vmatmul.mubr.bf16.gmra.mxu0 %v7721
    %v8191 = vpop.f32.mrf.mxu0
    %v8192 = vadd.f32 %v7363, %v8191
    %v8193 = vpop.f32.mrf.mxu0
    %v8194 = vpop.f32.mrf.mxu0
    %v8195 = vadd.f32 %v7363, %v8194
    %v8196 = vpop.f32.mrf.mxu0
    %8197 = vmatprep.mubr.bf16.mxu0 %v7725
    %8198 = vmatmul.mubr.bf16.gmra.mxu0 %v7724
    %v8199 = vpop.f32.mrf.mxu0
    %v8200 = vadd.f32 %v7363, %v8199
    %v8201 = vpop.f32.mrf.mxu0
    %v8202 = vpop.f32.mrf.mxu0
    %v8203 = vadd.f32 %v7363, %v8202
    %v8204 = vpop.f32.mrf.mxu0
    %8205 = vmatprep.mubr.bf16.mxu0 %v7728
    %8206 = vmatmul.mubr.bf16.gmra.mxu0 %v7727
    %v8207 = vpop.f32.mrf.mxu0
    %v8208 = vadd.f32 %v7363, %v8207
    %v8209 = vpop.f32.mrf.mxu0
    %v8210 = vpop.f32.mrf.mxu0
    %v8211 = vadd.f32 %v7363, %v8210
    %v8212 = vpop.f32.mrf.mxu0
    %8213 = vmatprep.mubr.bf16.mxu0 %v7731
    %8214 = vmatmul.mubr.bf16.gmra.mxu0 %v7730
    %v8215 = vpop.f32.mrf.mxu0
    %v8216 = vadd.f32 %v7363, %v8215
    %v8217 = vpop.f32.mrf.mxu0
    %v8218 = vpop.f32.mrf.mxu0
    %v8219 = vadd.f32 %v7363, %v8218
    %v8220 = vpop.f32.mrf.mxu0
    %8221 = vmatprep.mubr.bf16.mxu0 %v7734
    %8222 = vmatmul.mubr.bf16.gmra.mxu0 %v7733
    %v8223 = vpop.f32.mrf.mxu0
    %v8224 = vadd.f32 %v7363, %v8223
    %v8225 = vpop.f32.mrf.mxu0
    %v8226 = vpop.f32.mrf.mxu0
    %v8227 = vadd.f32 %v7363, %v8226
    %v8228 = vpop.f32.mrf.mxu0
    %8229 = vmatprep.mubr.bf16.mxu0 %v7737
    %8230 = vmatmul.mubr.bf16.gmra.mxu0 %v7736
    %v8231 = vpop.f32.mrf.mxu0
    %v8232 = vadd.f32 %v7363, %v8231
    %v8233 = vpop.f32.mrf.mxu0
    %v8234 = vpop.f32.mrf.mxu0
    %v8235 = vadd.f32 %v7363, %v8234
    %v8236 = vpop.f32.mrf.mxu0
    %8237 = vmatprep.mubr.bf16.mxu0 %v7740
    %8238 = vmatmul.mubr.bf16.gmra.mxu0 %v7739
    %v8239 = vpop.f32.mrf.mxu0
    %v8240 = vadd.f32 %v7363, %v8239
    %v8241 = vpop.f32.mrf.mxu0
    %v8242 = vpop.f32.mrf.mxu0
    %v8243 = vadd.f32 %v7363, %v8242
    %v8244 = vpop.f32.mrf.mxu0
    %8245 = vmatprep.mubr.bf16.mxu0 %v7743
    %8246 = vmatmul.mubr.bf16.gmra.mxu0 %v7742
    %v8247 = vpop.f32.mrf.mxu0
    %v8248 = vadd.f32 %v7363, %v8247
    %v8249 = vpop.f32.mrf.mxu0
    %v8250 = vpop.f32.mrf.mxu0
    %v8251 = vadd.f32 %v7363, %v8250
    %v8252 = vpop.f32.mrf.mxu0
    %8253 = vmatprep.mubr.bf16.mxu0 %v7746
    %8254 = vmatmul.mubr.bf16.gmra.mxu0 %v7745
    %v8255 = vpop.f32.mrf.mxu0
    %v8256 = vadd.f32 %v7363, %v8255
    %v8257 = vpop.f32.mrf.mxu0
    %v8258 = vpop.f32.mrf.mxu0
    %v8259 = vadd.f32 %v7363, %v8258
    %v8260 = vpop.f32.mrf.mxu0
    %8261 = vmatprep.mubr.bf16.mxu0 %v7749
    %8262 = vmatmul.mubr.bf16.gmra.mxu0 %v7748
    %v8263 = vpop.f32.mrf.mxu0
    %v8264 = vadd.f32 %v7363, %v8263
    %v8265 = vpop.f32.mrf.mxu0
    %v8266 = vpop.f32.mrf.mxu0
    %v8267 = vadd.f32 %v7363, %v8266
    %v8268 = vpop.f32.mrf.mxu0
    %8269 = vmatprep.mubr.bf16.mxu0 %v7752
    %8270 = vmatmul.mubr.bf16.gmra.mxu0 %v7751
    %v8271 = vpop.f32.mrf.mxu0
    %v8272 = vadd.f32 %v7363, %v8271
    %v8273 = vpop.f32.mrf.mxu0
    %v8274 = vpop.f32.mrf.mxu0
    %v8275 = vadd.f32 %v7363, %v8274
    %v8276 = vpop.f32.mrf.mxu0
    %8277 = vmatprep.mubr.bf16.mxu0 %v7755
    %8278 = vmatmul.mubr.bf16.gmra.mxu0 %v7754
    %v8279 = vpop.f32.mrf.mxu0
    %v8280 = vadd.f32 %v7363, %v8279
    %v8281 = vpop.f32.mrf.mxu0
    %v8282 = vpop.f32.mrf.mxu0
    %v8283 = vadd.f32 %v7363, %v8282
    %v8284 = vpop.f32.mrf.mxu0
    %8285 = vmatprep.mubr.bf16.mxu0 %v7758
    %8286 = vmatmul.mubr.bf16.gmra.mxu0 %v7757
    %v8287 = vpop.f32.mrf.mxu0
    %v8288 = vadd.f32 %v7363, %v8287
    %v8289 = vpop.f32.mrf.mxu0
    %v8290 = vpop.f32.mrf.mxu0
    %v8291 = vadd.f32 %v7363, %v8290
    %v8292 = vpop.f32.mrf.mxu0
    %8293 = vmatprep.mubr.bf16.mxu0 %v7761
    %8294 = vmatmul.mubr.bf16.gmra.mxu0 %v7760
    %v8295 = vpop.f32.mrf.mxu0
    %v8296 = vadd.f32 %v7363, %v8295
    %v8297 = vpop.f32.mrf.mxu0
    %v8298 = vpop.f32.mrf.mxu0
    %v8299 = vadd.f32 %v7363, %v8298
    %v8300 = vpop.f32.mrf.mxu0
    %8301 = vmatprep.mubr.bf16.mxu0 %v7764
    %8302 = vmatmul.mubr.bf16.gmra.mxu0 %v7763
    %v8303 = vpop.f32.mrf.mxu0
    %v8304 = vadd.f32 %v7363, %v8303
    %v8305 = vpop.f32.mrf.mxu0
    %v8306 = vpop.f32.mrf.mxu0
    %v8307 = vadd.f32 %v7363, %v8306
    %v8308 = vpop.f32.mrf.mxu0
    %8309 = vmatprep.mubr.bf16.mxu0 %v7767
    %8310 = vmatmul.mubr.bf16.gmra.mxu0 %v7766
    %v8311 = vpop.f32.mrf.mxu0
    %v8312 = vadd.f32 %v7363, %v8311
    %v8313 = vpop.f32.mrf.mxu0
    %v8314 = vpop.f32.mrf.mxu0
    %v8315 = vadd.f32 %v7363, %v8314
    %v8316 = vpop.f32.mrf.mxu0
    %8317 = vmatprep.mubr.bf16.mxu0 %v7770
    %8318 = vmatmul.mubr.bf16.gmra.mxu0 %v7769
    %v8319 = vpop.f32.mrf.mxu0
    %v8320 = vadd.f32 %v7363, %v8319
    %v8321 = vpop.f32.mrf.mxu0
    %v8322 = vpop.f32.mrf.mxu0
    %v8323 = vadd.f32 %v7363, %v8322
    %v8324 = vpop.f32.mrf.mxu0
    %8325 = vmatprep.mubr.bf16.mxu0 %v7773
    %8326 = vmatmul.mubr.bf16.gmra.mxu0 %v7772
    %v8327 = vpop.f32.mrf.mxu0
    %v8328 = vadd.f32 %v7363, %v8327
    %v8329 = vpop.f32.mrf.mxu0
    %v8330 = vpop.f32.mrf.mxu0
    %v8331 = vadd.f32 %v7363, %v8330
    %v8332 = vpop.f32.mrf.mxu0
    %8333 = vmatprep.mubr.bf16.mxu0 %v7776
    %8334 = vmatmul.mubr.bf16.gmra.mxu0 %v7775
    %v8335 = vpop.f32.mrf.mxu0
    %v8336 = vadd.f32 %v7363, %v8335
    %v8337 = vpop.f32.mrf.mxu0
    %v8338 = vpop.f32.mrf.mxu0
    %v8339 = vadd.f32 %v7363, %v8338
    %v8340 = vpop.f32.mrf.mxu0
    %8341 = vmatprep.mubr.bf16.mxu0 %v7779
    %8342 = vmatmul.mubr.bf16.gmra.mxu0 %v7778
    %v8343 = vpop.f32.mrf.mxu0
    %v8344 = vadd.f32 %v7363, %v8343
    %v8345 = vpop.f32.mrf.mxu0
    %v8346 = vpop.f32.mrf.mxu0
    %v8347 = vadd.f32 %v7363, %v8346
    %v8348 = vpop.f32.mrf.mxu0
    %8349 = vdwg.mxu0
    %8350 = vmatprep.subr.bf16.mxu0 0
    %8351 = vmatpush1.bf16.msra.mxu0 0
    %8352 = vmatprep.subr.bf16.mxu0 0
    %8353 = vmatpush1.bf16.msra.mxu0 0
    %8354 = vmatprep.subr.bf16.mxu0 0
    %8355 = vmatpush1.bf16.msra.mxu0 0
    %8356 = vmatprep.subr.bf16.mxu0 0
    %8357 = vmatpush1.bf16.msra.mxu0 0
    %8358 = vmatprep.subr.bf16.mxu0 0
    %8359 = vmatpush1.bf16.msra.mxu0 %v7944
    %8360 = vmatprep.subr.bf16.mxu0 0
    %8361 = vmatpush1.bf16.msra.mxu0 %v7943
    %8362 = vmatprep.subr.bf16.mxu0 0
    %8363 = vmatpush1.bf16.msra.mxu0 %v7942
    %8364 = vmatprep.subr.bf16.mxu0 0
    %8365 = vmatpush1.bf16.msra.mxu0 %v7941
    %8366 = vmatprep.subr.bf16.mxu0 0
    %8367 = vmatpush2.bf16.msra.mxu0 0
    %8368 = vmatprep.subr.bf16.mxu0 0
    %8369 = vmatpush2.bf16.msra.mxu0 0
    %8370 = vmatprep.subr.bf16.mxu0 0
    %8371 = vmatpush2.bf16.msra.mxu0 0
    %8372 = vmatprep.subr.bf16.mxu0 0
    %8373 = vmatpush2.bf16.msra.mxu0 0
    %8374 = vmatprep.subr.bf16.mxu0 0
    %8375 = vmatpush2.bf16.msra.mxu0 0
    %8376 = vmatprep.subr.bf16.mxu0 0
    %8377 = vmatpush2.bf16.msra.mxu0 0
    %8378 = vmatprep.subr.bf16.mxu0 0
    %8379 = vmatpush2.bf16.msra.mxu0 0
    %8380 = vmatprep.subr.bf16.mxu0 0
    %8381 = vmatpush2.bf16.msra.mxu0 0
    %8382 = vmatprep.mubr.bf16.mxu0 0
    %8383 = vmatmul.mubr.bf16.gmra.mxu0 %v7966
    %v8384 = vpop.f32.mrf.mxu0
    %v8385 = vadd.f32 %v8096, %v8384
    %v8386 = vpop.f32.mrf.mxu0
    %v8387 = vpop.f32.mrf.mxu0
    %v8388 = vadd.f32 %v8099, %v8387
    %v8389 = vpop.f32.mrf.mxu0
    %8390 = vmatprep.mubr.bf16.mxu0 0
    %8391 = vmatmul.mubr.bf16.gmra.mxu0 %v7969
    %v8392 = vpop.f32.mrf.mxu0
    %v8393 = vadd.f32 %v8104, %v8392
    %v8394 = vpop.f32.mrf.mxu0
    %v8395 = vpop.f32.mrf.mxu0
    %v8396 = vadd.f32 %v8107, %v8395
    %v8397 = vpop.f32.mrf.mxu0
    %8398 = vmatprep.mubr.bf16.mxu0 0
    %8399 = vmatmul.mubr.bf16.gmra.mxu0 %v7972
    %v8400 = vpop.f32.mrf.mxu0
    %v8401 = vadd.f32 %v8112, %v8400
    %v8402 = vpop.f32.mrf.mxu0
    %v8403 = vpop.f32.mrf.mxu0
    %v8404 = vadd.f32 %v8115, %v8403
    %v8405 = vpop.f32.mrf.mxu0
    %8406 = vmatprep.mubr.bf16.mxu0 0
    %8407 = vmatmul.mubr.bf16.gmra.mxu0 %v7975
    %v8408 = vpop.f32.mrf.mxu0
    %v8409 = vadd.f32 %v8120, %v8408
    %v8410 = vpop.f32.mrf.mxu0
    %v8411 = vpop.f32.mrf.mxu0
    %v8412 = vadd.f32 %v8123, %v8411
    %v8413 = vpop.f32.mrf.mxu0
    %8414 = vmatprep.mubr.bf16.mxu0 0
    %8415 = vmatmul.mubr.bf16.gmra.mxu0 %v7978
    %v8416 = vpop.f32.mrf.mxu0
    %v8417 = vadd.f32 %v8128, %v8416
    %v8418 = vpop.f32.mrf.mxu0
    %v8419 = vpop.f32.mrf.mxu0
    %v8420 = vadd.f32 %v8131, %v8419
    %v8421 = vpop.f32.mrf.mxu0
    %8422 = vmatprep.mubr.bf16.mxu0 0
    %8423 = vmatmul.mubr.bf16.gmra.mxu0 %v7981
    %v8424 = vpop.f32.mrf.mxu0
    %v8425 = vadd.f32 %v8136, %v8424
    %v8426 = vpop.f32.mrf.mxu0
    %v8427 = vpop.f32.mrf.mxu0
    %v8428 = vadd.f32 %v8139, %v8427
    %v8429 = vpop.f32.mrf.mxu0
    %8430 = vmatprep.mubr.bf16.mxu0 0
    %8431 = vmatmul.mubr.bf16.gmra.mxu0 %v7984
    %v8432 = vpop.f32.mrf.mxu0
    %v8433 = vadd.f32 %v8144, %v8432
    %v8434 = vpop.f32.mrf.mxu0
    %v8435 = vpop.f32.mrf.mxu0
    %v8436 = vadd.f32 %v8147, %v8435
    %v8437 = vpop.f32.mrf.mxu0
    %8438 = vmatprep.mubr.bf16.mxu0 0
    %8439 = vmatmul.mubr.bf16.gmra.mxu0 %v7987
    %v8440 = vpop.f32.mrf.mxu0
    %v8441 = vadd.f32 %v8152, %v8440
    %v8442 = vpop.f32.mrf.mxu0
    %v8443 = vpop.f32.mrf.mxu0
    %v8444 = vadd.f32 %v8155, %v8443
    %v8445 = vpop.f32.mrf.mxu0
    %8446 = vmatprep.mubr.bf16.mxu0 0
    %8447 = vmatmul.mubr.bf16.gmra.mxu0 %v7990
    %v8448 = vpop.f32.mrf.mxu0
    %v8449 = vadd.f32 %v8160, %v8448
    %v8450 = vpop.f32.mrf.mxu0
    %v8451 = vpop.f32.mrf.mxu0
    %v8452 = vadd.f32 %v8163, %v8451
    %v8453 = vpop.f32.mrf.mxu0
    %8454 = vmatprep.mubr.bf16.mxu0 0
    %8455 = vmatmul.mubr.bf16.gmra.mxu0 %v7993
    %v8456 = vpop.f32.mrf.mxu0
    %v8457 = vadd.f32 %v8168, %v8456
    %v8458 = vpop.f32.mrf.mxu0
    %v8459 = vpop.f32.mrf.mxu0
    %v8460 = vadd.f32 %v8171, %v8459
    %v8461 = vpop.f32.mrf.mxu0
    %8462 = vmatprep.mubr.bf16.mxu0 0
    %8463 = vmatmul.mubr.bf16.gmra.mxu0 %v7996
    %v8464 = vpop.f32.mrf.mxu0
    %v8465 = vadd.f32 %v8176, %v8464
    %v8466 = vpop.f32.mrf.mxu0
    %v8467 = vpop.f32.mrf.mxu0
    %v8468 = vadd.f32 %v8179, %v8467
    %v8469 = vpop.f32.mrf.mxu0
    %8470 = vmatprep.mubr.bf16.mxu0 0
    %8471 = vmatmul.mubr.bf16.gmra.mxu0 %v7999
    %v8472 = vpop.f32.mrf.mxu0
    %v8473 = vadd.f32 %v8184, %v8472
    %v8474 = vpop.f32.mrf.mxu0
    %v8475 = vpop.f32.mrf.mxu0
    %v8476 = vadd.f32 %v8187, %v8475
    %v8477 = vpop.f32.mrf.mxu0
    %8478 = vmatprep.mubr.bf16.mxu0 0
    %8479 = vmatmul.mubr.bf16.gmra.mxu0 %v8002
    %v8480 = vpop.f32.mrf.mxu0
    %v8481 = vadd.f32 %v8192, %v8480
    %v8482 = vpop.f32.mrf.mxu0
    %v8483 = vpop.f32.mrf.mxu0
    %v8484 = vadd.f32 %v8195, %v8483
    %v8485 = vpop.f32.mrf.mxu0
    %8486 = vmatprep.mubr.bf16.mxu0 0
    %8487 = vmatmul.mubr.bf16.gmra.mxu0 %v8005
    %v8488 = vpop.f32.mrf.mxu0
    %v8489 = vadd.f32 %v8200, %v8488
    %v8490 = vpop.f32.mrf.mxu0
    %v8491 = vpop.f32.mrf.mxu0
    %v8492 = vadd.f32 %v8203, %v8491
    %v8493 = vpop.f32.mrf.mxu0
    %8494 = vmatprep.mubr.bf16.mxu0 0
    %8495 = vmatmul.mubr.bf16.gmra.mxu0 %v8008
    %v8496 = vpop.f32.mrf.mxu0
    %v8497 = vadd.f32 %v8208, %v8496
    %v8498 = vpop.f32.mrf.mxu0
    %v8499 = vpop.f32.mrf.mxu0
    %v8500 = vadd.f32 %v8211, %v8499
    %v8501 = vpop.f32.mrf.mxu0
    %8502 = vmatprep.mubr.bf16.mxu0 0
    %8503 = vmatmul.mubr.bf16.gmra.mxu0 %v8011
    %v8504 = vpop.f32.mrf.mxu0
    %v8505 = vadd.f32 %v8216, %v8504
    %v8506 = vpop.f32.mrf.mxu0
    %v8507 = vpop.f32.mrf.mxu0
    %v8508 = vadd.f32 %v8219, %v8507
    %v8509 = vpop.f32.mrf.mxu0
    %8510 = vmatprep.mubr.bf16.mxu0 0
    %8511 = vmatmul.mubr.bf16.gmra.mxu0 %v8014
    %v8512 = vpop.f32.mrf.mxu0
    %v8513 = vadd.f32 %v8224, %v8512
    %v8514 = vpop.f32.mrf.mxu0
    %v8515 = vpop.f32.mrf.mxu0
    %v8516 = vadd.f32 %v8227, %v8515
    %v8517 = vpop.f32.mrf.mxu0
    %8518 = vmatprep.mubr.bf16.mxu0 0
    %8519 = vmatmul.mubr.bf16.gmra.mxu0 %v8017
    %v8520 = vpop.f32.mrf.mxu0
    %v8521 = vadd.f32 %v8232, %v8520
    %v8522 = vpop.f32.mrf.mxu0
    %v8523 = vpop.f32.mrf.mxu0
    %v8524 = vadd.f32 %v8235, %v8523
    %v8525 = vpop.f32.mrf.mxu0
    %8526 = vmatprep.mubr.bf16.mxu0 0
    %8527 = vmatmul.mubr.bf16.gmra.mxu0 %v8020
    %v8528 = vpop.f32.mrf.mxu0
    %v8529 = vadd.f32 %v8240, %v8528
    %v8530 = vpop.f32.mrf.mxu0
    %v8531 = vpop.f32.mrf.mxu0
    %v8532 = vadd.f32 %v8243, %v8531
    %v8533 = vpop.f32.mrf.mxu0
    %8534 = vmatprep.mubr.bf16.mxu0 0
    %8535 = vmatmul.mubr.bf16.gmra.mxu0 %v8023
    %v8536 = vpop.f32.mrf.mxu0
    %v8537 = vadd.f32 %v8248, %v8536
    %v8538 = vpop.f32.mrf.mxu0
    %v8539 = vpop.f32.mrf.mxu0
    %v8540 = vadd.f32 %v8251, %v8539
    %v8541 = vpop.f32.mrf.mxu0
    %8542 = vmatprep.mubr.bf16.mxu0 0
    %8543 = vmatmul.mubr.bf16.gmra.mxu0 %v8026
    %v8544 = vpop.f32.mrf.mxu0
    %v8545 = vadd.f32 %v8256, %v8544
    %v8546 = vpop.f32.mrf.mxu0
    %v8547 = vpop.f32.mrf.mxu0
    %v8548 = vadd.f32 %v8259, %v8547
    %v8549 = vpop.f32.mrf.mxu0
    %8550 = vmatprep.mubr.bf16.mxu0 0
    %8551 = vmatmul.mubr.bf16.gmra.mxu0 %v8029
    %v8552 = vpop.f32.mrf.mxu0
    %v8553 = vadd.f32 %v8264, %v8552
    %v8554 = vpop.f32.mrf.mxu0
    %v8555 = vpop.f32.mrf.mxu0
    %v8556 = vadd.f32 %v8267, %v8555
    %v8557 = vpop.f32.mrf.mxu0
    %8558 = vmatprep.mubr.bf16.mxu0 0
    %8559 = vmatmul.mubr.bf16.gmra.mxu0 %v8032
    %v8560 = vpop.f32.mrf.mxu0
    %v8561 = vadd.f32 %v8272, %v8560
    %v8562 = vpop.f32.mrf.mxu0
    %v8563 = vpop.f32.mrf.mxu0
    %v8564 = vadd.f32 %v8275, %v8563
    %v8565 = vpop.f32.mrf.mxu0
    %8566 = vmatprep.mubr.bf16.mxu0 0
    %8567 = vmatmul.mubr.bf16.gmra.mxu0 %v8035
    %v8568 = vpop.f32.mrf.mxu0
    %v8569 = vadd.f32 %v8280, %v8568
    %v8570 = vpop.f32.mrf.mxu0
    %v8571 = vpop.f32.mrf.mxu0
    %v8572 = vadd.f32 %v8283, %v8571
    %v8573 = vpop.f32.mrf.mxu0
    %8574 = vmatprep.mubr.bf16.mxu0 0
    %8575 = vmatmul.mubr.bf16.gmra.mxu0 %v8038
    %v8576 = vpop.f32.mrf.mxu0
    %v8577 = vadd.f32 %v8288, %v8576
    %v8578 = vpop.f32.mrf.mxu0
    %v8579 = vpop.f32.mrf.mxu0
    %v8580 = vadd.f32 %v8291, %v8579
    %v8581 = vpop.f32.mrf.mxu0
    %8582 = vmatprep.mubr.bf16.mxu0 0
    %8583 = vmatmul.mubr.bf16.gmra.mxu0 %v8041
    %v8584 = vpop.f32.mrf.mxu0
    %v8585 = vadd.f32 %v8296, %v8584
    %v8586 = vpop.f32.mrf.mxu0
    %v8587 = vpop.f32.mrf.mxu0
    %v8588 = vadd.f32 %v8299, %v8587
    %v8589 = vpop.f32.mrf.mxu0
    %8590 = vmatprep.mubr.bf16.mxu0 0
    %8591 = vmatmul.mubr.bf16.gmra.mxu0 %v8044
    %v8592 = vpop.f32.mrf.mxu0
    %v8593 = vadd.f32 %v8304, %v8592
    %v8594 = vpop.f32.mrf.mxu0
    %v8595 = vpop.f32.mrf.mxu0
    %v8596 = vadd.f32 %v8307, %v8595
    %v8597 = vpop.f32.mrf.mxu0
    %8598 = vmatprep.mubr.bf16.mxu0 0
    %8599 = vmatmul.mubr.bf16.gmra.mxu0 %v8047
    %v8600 = vpop.f32.mrf.mxu0
    %v8601 = vadd.f32 %v8312, %v8600
    %v8602 = vpop.f32.mrf.mxu0
    %v8603 = vpop.f32.mrf.mxu0
    %v8604 = vadd.f32 %v8315, %v8603
    %v8605 = vpop.f32.mrf.mxu0
    %8606 = vmatprep.mubr.bf16.mxu0 0
    %8607 = vmatmul.mubr.bf16.gmra.mxu0 %v8050
    %v8608 = vpop.f32.mrf.mxu0
    %v8609 = vadd.f32 %v8320, %v8608
    %v8610 = vpop.f32.mrf.mxu0
    %v8611 = vpop.f32.mrf.mxu0
    %v8612 = vadd.f32 %v8323, %v8611
    %v8613 = vpop.f32.mrf.mxu0
    %8614 = vmatprep.mubr.bf16.mxu0 0
    %8615 = vmatmul.mubr.bf16.gmra.mxu0 %v8053
    %v8616 = vpop.f32.mrf.mxu0
    %v8617 = vadd.f32 %v8328, %v8616
    %v8618 = vpop.f32.mrf.mxu0
    %v8619 = vpop.f32.mrf.mxu0
    %v8620 = vadd.f32 %v8331, %v8619
    %v8621 = vpop.f32.mrf.mxu0
    %8622 = vmatprep.mubr.bf16.mxu0 0
    %8623 = vmatmul.mubr.bf16.gmra.mxu0 %v8056
    %v8624 = vpop.f32.mrf.mxu0
    %v8625 = vadd.f32 %v8336, %v8624
    %v8626 = vpop.f32.mrf.mxu0
    %v8627 = vpop.f32.mrf.mxu0
    %v8628 = vadd.f32 %v8339, %v8627
    %v8629 = vpop.f32.mrf.mxu0
    %8630 = vmatprep.mubr.bf16.mxu0 0
    %8631 = vmatmul.mubr.bf16.gmra.mxu0 %v8059
    %v8632 = vpop.f32.mrf.mxu0
    %v8633 = vadd.f32 %v8344, %v8632
    %v8634 = vpop.f32.mrf.mxu0
    %v8635 = vpop.f32.mrf.mxu0
    %v8636 = vadd.f32 %v8347, %v8635
    %v8637 = vpop.f32.mrf.mxu0
    %8638 = vdwg.mxu0
    %v8639 = vmax.f32 %v8385, 0.0
    %v8640 = vmax.f32 %v8388, 0.0
    %v8641 = vmax.f32 %v8393, 0.0
    %v8642 = vmax.f32 %v8396, 0.0
    %v8643 = vmax.f32 %v8401, 0.0
    %v8644 = vmax.f32 %v8404, 0.0
    %v8645 = vmax.f32 %v8409, 0.0
    %v8646 = vmax.f32 %v8412, 0.0
    %v8647 = vmax.f32 %v8417, 0.0
    %v8648 = vmax.f32 %v8420, 0.0
    %v8649 = vmax.f32 %v8425, 0.0
    %v8650 = vmax.f32 %v8428, 0.0
    %v8651 = vmax.f32 %v8433, 0.0
    %v8652 = vmax.f32 %v8436, 0.0
    %v8653 = vmax.f32 %v8441, 0.0
    %v8654 = vmax.f32 %v8444, 0.0
    %v8655 = vmax.f32 %v8449, 0.0
    %v8656 = vmax.f32 %v8452, 0.0
    %v8657 = vmax.f32 %v8457, 0.0
    %v8658 = vmax.f32 %v8460, 0.0
    %v8659 = vmax.f32 %v8465, 0.0
    %v8660 = vmax.f32 %v8468, 0.0
    %v8661 = vmax.f32 %v8473, 0.0
    %v8662 = vmax.f32 %v8476, 0.0
    %v8663 = vmax.f32 %v8481, 0.0
    %v8664 = vmax.f32 %v8484, 0.0
    %v8665 = vmax.f32 %v8489, 0.0
    %v8666 = vmax.f32 %v8492, 0.0
    %v8667 = vmax.f32 %v8497, 0.0
    %v8668 = vmax.f32 %v8500, 0.0
    %v8669 = vmax.f32 %v8505, 0.0
    %v8670 = vmax.f32 %v8508, 0.0
    %v8671 = vmax.f32 %v8513, 0.0
    %v8672 = vmax.f32 %v8516, 0.0
    %v8673 = vmax.f32 %v8521, 0.0
    %v8674 = vmax.f32 %v8524, 0.0
    %v8675 = vmax.f32 %v8529, 0.0
    %v8676 = vmax.f32 %v8532, 0.0
    %v8677 = vmax.f32 %v8537, 0.0
    %v8678 = vmax.f32 %v8540, 0.0
    %v8679 = vmax.f32 %v8545, 0.0
    %v8680 = vmax.f32 %v8548, 0.0
    %v8681 = vmax.f32 %v8553, 0.0
    %v8682 = vmax.f32 %v8556, 0.0
    %v8683 = vmax.f32 %v8561, 0.0
    %v8684 = vmax.f32 %v8564, 0.0
    %v8685 = vmax.f32 %v8569, 0.0
    %v8686 = vmax.f32 %v8572, 0.0
    %v8687 = vmax.f32 %v8577, 0.0
    %v8688 = vmax.f32 %v8580, 0.0
    %v8689 = vmax.f32 %v8585, 0.0
    %v8690 = vmax.f32 %v8588, 0.0
    %v8691 = vmax.f32 %v8593, 0.0
    %v8692 = vmax.f32 %v8596, 0.0
    %v8693 = vmax.f32 %v8601, 0.0
    %v8694 = vmax.f32 %v8604, 0.0
    %v8695 = vmax.f32 %v8609, 0.0
    %v8696 = vmax.f32 %v8612, 0.0
    %v8697 = vmax.f32 %v8617, 0.0
    %v8698 = vmax.f32 %v8620, 0.0
    %v8699 = vmax.f32 %v8625, 0.0
    %v8700 = vmax.f32 %v8628, 0.0
    %v8701 = vmax.f32 %v8633, 0.0
    %v8702 = vmax.f32 %v8636, 0.0
    %v8703 = vpack.c.bf16 %v8640, %v8639
    %v8704 = vpack.c.bf16 %v8642, %v8641
    %v8705 = vpack.c.bf16 %v8644, %v8643
    %v8706 = vpack.c.bf16 %v8646, %v8645
    %v8707 = vpack.c.bf16 %v8648, %v8647
    %v8708 = vpack.c.bf16 %v8650, %v8649
    %v8709 = vpack.c.bf16 %v8652, %v8651
    %v8710 = vpack.c.bf16 %v8654, %v8653
    %v8711 = vpack.c.bf16 %v8656, %v8655
    %v8712 = vpack.c.bf16 %v8658, %v8657
    %v8713 = vpack.c.bf16 %v8660, %v8659
    %v8714 = vpack.c.bf16 %v8662, %v8661
    %v8715 = vpack.c.bf16 %v8664, %v8663
    %v8716 = vpack.c.bf16 %v8666, %v8665
    %v8717 = vpack.c.bf16 %v8668, %v8667
    %v8718 = vpack.c.bf16 %v8670, %v8669
    %v8719 = vpack.c.bf16 %v8672, %v8671
    %v8720 = vpack.c.bf16 %v8674, %v8673
    %v8721 = vpack.c.bf16 %v8676, %v8675
    %v8722 = vpack.c.bf16 %v8678, %v8677
    %v8723 = vpack.c.bf16 %v8680, %v8679
    %v8724 = vpack.c.bf16 %v8682, %v8681
    %v8725 = vpack.c.bf16 %v8684, %v8683
    %v8726 = vpack.c.bf16 %v8686, %v8685
    %v8727 = vpack.c.bf16 %v8688, %v8687
    %v8728 = vpack.c.bf16 %v8690, %v8689
    %v8729 = vpack.c.bf16 %v8692, %v8691
    %v8730 = vpack.c.bf16 %v8694, %v8693
    %v8731 = vpack.c.bf16 %v8696, %v8695
    %v8732 = vpack.c.bf16 %v8698, %v8697
    %v8733 = vpack.c.bf16 %v8700, %v8699
    %v8734 = vpack.c.bf16 %v8702, %v8701
    %v8735 = vld [vmem:[%s7] sm:$0xf]
    %v8736 = vld [vmem:[%s7 + $0x4] sm:$0xf]
    %v8737 = vld [vmem:[%s7 + $0x8] sm:$0xf]
    %v8738 = vld [vmem:[%s7 + $0xc] sm:$0xf]
    %v8739 = vld [vmem:[%s7 + $0x10] sm:$0xf]
    %v8740 = vld [vmem:[%s7 + $0x14] sm:$0xf]
    %v8741 = vld [vmem:[%s7 + $0x18] sm:$0xf]
    %v8742 = vld [vmem:[%s7 + $0x1c] sm:$0xf]
    %v8743 = vld [vmem:[#allocation11] sm:$0x1]
    %v8745 = vlaneseq
    %v8746 = vshrl.u32 %v8745, 7
    %v8747 = vsub.s32 0, %v8746
    %v8748 = vrot.slane %v8743, %v8747
    %v8758 = vunpack.c.l.b16 %v8735
    %v8759 = vunpack.c.l.b16 %v8736
    %v8760 = vunpack.c.l.b16 %v8737
    %v8761 = vunpack.c.l.b16 %v8738
    %v8762 = vunpack.c.l.b16 %v8739
    %v8763 = vunpack.c.l.b16 %v8740
    %v8764 = vunpack.c.l.b16 %v8741
    %v8765 = vunpack.c.l.b16 %v8742
    %v8766 = vpack.c.b16 %v8759, %v8758
    %v8767 = vpack.c.b16 %v8761, %v8760
    %v8768 = vpack.c.b16 %v8763, %v8762
    %v8769 = vpack.c.b16 %v8765, %v8764
    %v8775 = vsel %vm702, %v8703, 0
    %v8778 = vsel %vm702, %v8704, 0
    %v8781 = vsel %vm702, %v8705, 0
    %v8784 = vsel %vm702, %v8706, 0
    %v8787 = vsel %vm702, %v8707, 0
    %v8790 = vsel %vm702, %v8708, 0
    %v8793 = vsel %vm702, %v8709, 0
    %v8796 = vsel %vm702, %v8710, 0
    %v8799 = vsel %vm702, %v8711, 0
    %v8802 = vsel %vm702, %v8712, 0
    %v8805 = vsel %vm702, %v8713, 0
    %v8808 = vsel %vm702, %v8714, 0
    %v8811 = vsel %vm702, %v8715, 0
    %v8814 = vsel %vm702, %v8716, 0
    %v8817 = vsel %vm702, %v8717, 0
    %v8820 = vsel %vm702, %v8718, 0
    %v8823 = vsel %vm702, %v8719, 0
    %v8826 = vsel %vm702, %v8720, 0
    %v8829 = vsel %vm702, %v8721, 0
    %v8832 = vsel %vm702, %v8722, 0
    %v8835 = vsel %vm702, %v8723, 0
    %v8838 = vsel %vm702, %v8724, 0
    %v8841 = vsel %vm702, %v8725, 0
    %v8844 = vsel %vm702, %v8726, 0
    %v8847 = vsel %vm702, %v8727, 0
    %v8850 = vsel %vm702, %v8728, 0
    %v8853 = vsel %vm702, %v8729, 0
    %v8856 = vsel %vm702, %v8730, 0
    %v8859 = vsel %vm702, %v8731, 0
    %v8862 = vsel %vm702, %v8732, 0
    %v8865 = vsel %vm702, %v8733, 0
    %v8868 = vsel %vm702, %v8734, 0
    %8870 = vmatprep.subr.bf16.mxu0 0
    %8871 = vmatpush1.bf16.msra.mxu0 0
    %8872 = vmatprep.subr.bf16.mxu0 0
    %8873 = vmatpush1.bf16.msra.mxu0 0
    %8874 = vmatprep.subr.bf16.mxu0 0
    %8875 = vmatpush1.bf16.msra.mxu0 0
    %8876 = vmatprep.subr.bf16.mxu0 0
    %8877 = vmatpush1.bf16.msra.mxu0 0
    %8878 = vmatprep.subr.bf16.mxu0 0
    %8879 = vmatpush1.bf16.msra.mxu0 %v8769
    %8880 = vmatprep.subr.bf16.mxu0 0
    %8881 = vmatpush1.bf16.msra.mxu0 %v8768
    %8882 = vmatprep.subr.bf16.mxu0 0
    %8883 = vmatpush1.bf16.msra.mxu0 %v8767
    %8884 = vmatprep.subr.bf16.mxu0 0
    %8885 = vmatpush1.bf16.msra.mxu0 %v8766
    %8886 = vmatprep.subr.bf16.mxu0 0
    %8887 = vmatpush2.bf16.msra.mxu0 0
    %8888 = vmatprep.subr.bf16.mxu0 0
    %8889 = vmatpush2.bf16.msra.mxu0 0
    %8890 = vmatprep.subr.bf16.mxu0 0
    %8891 = vmatpush2.bf16.msra.mxu0 0
    %8892 = vmatprep.subr.bf16.mxu0 0
    %8893 = vmatpush2.bf16.msra.mxu0 0
    %8894 = vmatprep.subr.bf16.mxu0 0
    %8895 = vmatpush2.bf16.msra.mxu0 0
    %8896 = vmatprep.subr.bf16.mxu0 0
    %8897 = vmatpush2.bf16.msra.mxu0 0
    %8898 = vmatprep.subr.bf16.mxu0 0
    %8899 = vmatpush2.bf16.msra.mxu0 0
    %8900 = vmatprep.subr.bf16.mxu0 0
    %8901 = vmatpush2.bf16.msra.mxu0 0
    %8902 = vmatprep.mubr.bf16.mxu0 0
    %8903 = vmatmul.mubr.bf16.gmra.mxu0 %v8775
    %v8904 = vpop.f32.mrf.mxu0
    %v8905 = vadd.f32 %v8748, %v8904
    %v8906 = vpop.f32.mrf.mxu0
    %v8907 = vpop.f32.mrf.mxu0
    %v8908 = vadd.f32 %v8748, %v8907
    %v8909 = vpop.f32.mrf.mxu0
    %8910 = vmatprep.mubr.bf16.mxu0 0
    %8911 = vmatmul.mubr.bf16.gmra.mxu0 %v8778
    %v8912 = vpop.f32.mrf.mxu0
    %v8913 = vadd.f32 %v8748, %v8912
    %v8914 = vpop.f32.mrf.mxu0
    %v8915 = vpop.f32.mrf.mxu0
    %v8916 = vadd.f32 %v8748, %v8915
    %v8917 = vpop.f32.mrf.mxu0
    %8918 = vmatprep.mubr.bf16.mxu0 0
    %8919 = vmatmul.mubr.bf16.gmra.mxu0 %v8781
    %v8920 = vpop.f32.mrf.mxu0
    %v8921 = vadd.f32 %v8748, %v8920
    %v8922 = vpop.f32.mrf.mxu0
    %v8923 = vpop.f32.mrf.mxu0
    %v8924 = vadd.f32 %v8748, %v8923
    %v8925 = vpop.f32.mrf.mxu0
    %8926 = vmatprep.mubr.bf16.mxu0 0
    %8927 = vmatmul.mubr.bf16.gmra.mxu0 %v8784
    %v8928 = vpop.f32.mrf.mxu0
    %v8929 = vadd.f32 %v8748, %v8928
    %v8930 = vpop.f32.mrf.mxu0
    %v8931 = vpop.f32.mrf.mxu0
    %v8932 = vadd.f32 %v8748, %v8931
    %v8933 = vpop.f32.mrf.mxu0
    %8934 = vmatprep.mubr.bf16.mxu0 0
    %8935 = vmatmul.mubr.bf16.gmra.mxu0 %v8787
    %v8936 = vpop.f32.mrf.mxu0
    %v8937 = vadd.f32 %v8748, %v8936
    %v8938 = vpop.f32.mrf.mxu0
    %v8939 = vpop.f32.mrf.mxu0
    %v8940 = vadd.f32 %v8748, %v8939
    %v8941 = vpop.f32.mrf.mxu0
    %8942 = vmatprep.mubr.bf16.mxu0 0
    %8943 = vmatmul.mubr.bf16.gmra.mxu0 %v8790
    %v8944 = vpop.f32.mrf.mxu0
    %v8945 = vadd.f32 %v8748, %v8944
    %v8946 = vpop.f32.mrf.mxu0
    %v8947 = vpop.f32.mrf.mxu0
    %v8948 = vadd.f32 %v8748, %v8947
    %v8949 = vpop.f32.mrf.mxu0
    %8950 = vmatprep.mubr.bf16.mxu0 0
    %8951 = vmatmul.mubr.bf16.gmra.mxu0 %v8793
    %v8952 = vpop.f32.mrf.mxu0
    %v8953 = vadd.f32 %v8748, %v8952
    %v8954 = vpop.f32.mrf.mxu0
    %v8955 = vpop.f32.mrf.mxu0
    %v8956 = vadd.f32 %v8748, %v8955
    %v8957 = vpop.f32.mrf.mxu0
    %8958 = vmatprep.mubr.bf16.mxu0 0
    %8959 = vmatmul.mubr.bf16.gmra.mxu0 %v8796
    %v8960 = vpop.f32.mrf.mxu0
    %v8961 = vadd.f32 %v8748, %v8960
    %v8962 = vpop.f32.mrf.mxu0
    %v8963 = vpop.f32.mrf.mxu0
    %v8964 = vadd.f32 %v8748, %v8963
    %v8965 = vpop.f32.mrf.mxu0
    %8966 = vmatprep.mubr.bf16.mxu0 0
    %8967 = vmatmul.mubr.bf16.gmra.mxu0 %v8799
    %v8968 = vpop.f32.mrf.mxu0
    %v8969 = vadd.f32 %v8748, %v8968
    %v8970 = vpop.f32.mrf.mxu0
    %v8971 = vpop.f32.mrf.mxu0
    %v8972 = vadd.f32 %v8748, %v8971
    %v8973 = vpop.f32.mrf.mxu0
    %8974 = vmatprep.mubr.bf16.mxu0 0
    %8975 = vmatmul.mubr.bf16.gmra.mxu0 %v8802
    %v8976 = vpop.f32.mrf.mxu0
    %v8977 = vadd.f32 %v8748, %v8976
    %v8978 = vpop.f32.mrf.mxu0
    %v8979 = vpop.f32.mrf.mxu0
    %v8980 = vadd.f32 %v8748, %v8979
    %v8981 = vpop.f32.mrf.mxu0
    %8982 = vmatprep.mubr.bf16.mxu0 0
    %8983 = vmatmul.mubr.bf16.gmra.mxu0 %v8805
    %v8984 = vpop.f32.mrf.mxu0
    %v8985 = vadd.f32 %v8748, %v8984
    %v8986 = vpop.f32.mrf.mxu0
    %v8987 = vpop.f32.mrf.mxu0
    %v8988 = vadd.f32 %v8748, %v8987
    %v8989 = vpop.f32.mrf.mxu0
    %8990 = vmatprep.mubr.bf16.mxu0 0
    %8991 = vmatmul.mubr.bf16.gmra.mxu0 %v8808
    %v8992 = vpop.f32.mrf.mxu0
    %v8993 = vadd.f32 %v8748, %v8992
    %v8994 = vpop.f32.mrf.mxu0
    %v8995 = vpop.f32.mrf.mxu0
    %v8996 = vadd.f32 %v8748, %v8995
    %v8997 = vpop.f32.mrf.mxu0
    %8998 = vmatprep.mubr.bf16.mxu0 0
    %8999 = vmatmul.mubr.bf16.gmra.mxu0 %v8811
    %v9000 = vpop.f32.mrf.mxu0
    %v9001 = vadd.f32 %v8748, %v9000
    %v9002 = vpop.f32.mrf.mxu0
    %v9003 = vpop.f32.mrf.mxu0
    %v9004 = vadd.f32 %v8748, %v9003
    %v9005 = vpop.f32.mrf.mxu0
    %9006 = vmatprep.mubr.bf16.mxu0 0
    %9007 = vmatmul.mubr.bf16.gmra.mxu0 %v8814
    %v9008 = vpop.f32.mrf.mxu0
    %v9009 = vadd.f32 %v8748, %v9008
    %v9010 = vpop.f32.mrf.mxu0
    %v9011 = vpop.f32.mrf.mxu0
    %v9012 = vadd.f32 %v8748, %v9011
    %v9013 = vpop.f32.mrf.mxu0
    %9014 = vmatprep.mubr.bf16.mxu0 0
    %9015 = vmatmul.mubr.bf16.gmra.mxu0 %v8817
    %v9016 = vpop.f32.mrf.mxu0
    %v9017 = vadd.f32 %v8748, %v9016
    %v9018 = vpop.f32.mrf.mxu0
    %v9019 = vpop.f32.mrf.mxu0
    %v9020 = vadd.f32 %v8748, %v9019
    %v9021 = vpop.f32.mrf.mxu0
    %9022 = vmatprep.mubr.bf16.mxu0 0
    %9023 = vmatmul.mubr.bf16.gmra.mxu0 %v8820
    %v9024 = vpop.f32.mrf.mxu0
    %v9025 = vadd.f32 %v8748, %v9024
    %v9026 = vpop.f32.mrf.mxu0
    %v9027 = vpop.f32.mrf.mxu0
    %v9028 = vadd.f32 %v8748, %v9027
    %v9029 = vpop.f32.mrf.mxu0
    %9030 = vmatprep.mubr.bf16.mxu0 0
    %9031 = vmatmul.mubr.bf16.gmra.mxu0 %v8823
    %v9032 = vpop.f32.mrf.mxu0
    %v9033 = vadd.f32 %v8748, %v9032
    %v9034 = vpop.f32.mrf.mxu0
    %v9035 = vpop.f32.mrf.mxu0
    %v9036 = vadd.f32 %v8748, %v9035
    %v9037 = vpop.f32.mrf.mxu0
    %9038 = vmatprep.mubr.bf16.mxu0 0
    %9039 = vmatmul.mubr.bf16.gmra.mxu0 %v8826
    %v9040 = vpop.f32.mrf.mxu0
    %v9041 = vadd.f32 %v8748, %v9040
    %v9042 = vpop.f32.mrf.mxu0
    %v9043 = vpop.f32.mrf.mxu0
    %v9044 = vadd.f32 %v8748, %v9043
    %v9045 = vpop.f32.mrf.mxu0
    %9046 = vmatprep.mubr.bf16.mxu0 0
    %9047 = vmatmul.mubr.bf16.gmra.mxu0 %v8829
    %v9048 = vpop.f32.mrf.mxu0
    %v9049 = vadd.f32 %v8748, %v9048
    %v9050 = vpop.f32.mrf.mxu0
    %v9051 = vpop.f32.mrf.mxu0
    %v9052 = vadd.f32 %v8748, %v9051
    %v9053 = vpop.f32.mrf.mxu0
    %9054 = vmatprep.mubr.bf16.mxu0 0
    %9055 = vmatmul.mubr.bf16.gmra.mxu0 %v8832
    %v9056 = vpop.f32.mrf.mxu0
    %v9057 = vadd.f32 %v8748, %v9056
    %v9058 = vpop.f32.mrf.mxu0
    %v9059 = vpop.f32.mrf.mxu0
    %v9060 = vadd.f32 %v8748, %v9059
    %v9061 = vpop.f32.mrf.mxu0
    %9062 = vmatprep.mubr.bf16.mxu0 0
    %9063 = vmatmul.mubr.bf16.gmra.mxu0 %v8835
    %v9064 = vpop.f32.mrf.mxu0
    %v9065 = vadd.f32 %v8748, %v9064
    %v9066 = vpop.f32.mrf.mxu0
    %v9067 = vpop.f32.mrf.mxu0
    %v9068 = vadd.f32 %v8748, %v9067
    %v9069 = vpop.f32.mrf.mxu0
    %9070 = vmatprep.mubr.bf16.mxu0 0
    %9071 = vmatmul.mubr.bf16.gmra.mxu0 %v8838
    %v9072 = vpop.f32.mrf.mxu0
    %v9073 = vadd.f32 %v8748, %v9072
    %v9074 = vpop.f32.mrf.mxu0
    %v9075 = vpop.f32.mrf.mxu0
    %v9076 = vadd.f32 %v8748, %v9075
    %v9077 = vpop.f32.mrf.mxu0
    %9078 = vmatprep.mubr.bf16.mxu0 0
    %9079 = vmatmul.mubr.bf16.gmra.mxu0 %v8841
    %v9080 = vpop.f32.mrf.mxu0
    %v9081 = vadd.f32 %v8748, %v9080
    %v9082 = vpop.f32.mrf.mxu0
    %v9083 = vpop.f32.mrf.mxu0
    %v9084 = vadd.f32 %v8748, %v9083
    %v9085 = vpop.f32.mrf.mxu0
    %9086 = vmatprep.mubr.bf16.mxu0 0
    %9087 = vmatmul.mubr.bf16.gmra.mxu0 %v8844
    %v9088 = vpop.f32.mrf.mxu0
    %v9089 = vadd.f32 %v8748, %v9088
    %v9090 = vpop.f32.mrf.mxu0
    %v9091 = vpop.f32.mrf.mxu0
    %v9092 = vadd.f32 %v8748, %v9091
    %v9093 = vpop.f32.mrf.mxu0
    %9094 = vmatprep.mubr.bf16.mxu0 0
    %9095 = vmatmul.mubr.bf16.gmra.mxu0 %v8847
    %v9096 = vpop.f32.mrf.mxu0
    %v9097 = vadd.f32 %v8748, %v9096
    %v9098 = vpop.f32.mrf.mxu0
    %v9099 = vpop.f32.mrf.mxu0
    %v9100 = vadd.f32 %v8748, %v9099
    %v9101 = vpop.f32.mrf.mxu0
    %9102 = vmatprep.mubr.bf16.mxu0 0
    %9103 = vmatmul.mubr.bf16.gmra.mxu0 %v8850
    %v9104 = vpop.f32.mrf.mxu0
    %v9105 = vadd.f32 %v8748, %v9104
    %v9106 = vpop.f32.mrf.mxu0
    %v9107 = vpop.f32.mrf.mxu0
    %v9108 = vadd.f32 %v8748, %v9107
    %v9109 = vpop.f32.mrf.mxu0
    %9110 = vmatprep.mubr.bf16.mxu0 0
    %9111 = vmatmul.mubr.bf16.gmra.mxu0 %v8853
    %v9112 = vpop.f32.mrf.mxu0
    %v9113 = vadd.f32 %v8748, %v9112
    %v9114 = vpop.f32.mrf.mxu0
    %v9115 = vpop.f32.mrf.mxu0
    %v9116 = vadd.f32 %v8748, %v9115
    %v9117 = vpop.f32.mrf.mxu0
    %9118 = vmatprep.mubr.bf16.mxu0 0
    %9119 = vmatmul.mubr.bf16.gmra.mxu0 %v8856
    %v9120 = vpop.f32.mrf.mxu0
    %v9121 = vadd.f32 %v8748, %v9120
    %v9122 = vpop.f32.mrf.mxu0
    %v9123 = vpop.f32.mrf.mxu0
    %v9124 = vadd.f32 %v8748, %v9123
    %v9125 = vpop.f32.mrf.mxu0
    %9126 = vmatprep.mubr.bf16.mxu0 0
    %9127 = vmatmul.mubr.bf16.gmra.mxu0 %v8859
    %v9128 = vpop.f32.mrf.mxu0
    %v9129 = vadd.f32 %v8748, %v9128
    %v9130 = vpop.f32.mrf.mxu0
    %v9131 = vpop.f32.mrf.mxu0
    %v9132 = vadd.f32 %v8748, %v9131
    %v9133 = vpop.f32.mrf.mxu0
    %9134 = vmatprep.mubr.bf16.mxu0 0
    %9135 = vmatmul.mubr.bf16.gmra.mxu0 %v8862
    %v9136 = vpop.f32.mrf.mxu0
    %v9137 = vadd.f32 %v8748, %v9136
    %v9138 = vpop.f32.mrf.mxu0
    %v9139 = vpop.f32.mrf.mxu0
    %v9140 = vadd.f32 %v8748, %v9139
    %v9141 = vpop.f32.mrf.mxu0
    %9142 = vmatprep.mubr.bf16.mxu0 0
    %9143 = vmatmul.mubr.bf16.gmra.mxu0 %v8865
    %v9144 = vpop.f32.mrf.mxu0
    %v9145 = vadd.f32 %v8748, %v9144
    %v9146 = vpop.f32.mrf.mxu0
    %v9147 = vpop.f32.mrf.mxu0
    %v9148 = vadd.f32 %v8748, %v9147
    %v9149 = vpop.f32.mrf.mxu0
    %9150 = vmatprep.mubr.bf16.mxu0 0
    %9151 = vmatmul.mubr.bf16.gmra.mxu0 %v8868
    %v9152 = vpop.f32.mrf.mxu0
    %v9153 = vadd.f32 %v8748, %v9152
    %v9154 = vpop.f32.mrf.mxu0
    %v9155 = vpop.f32.mrf.mxu0
    %v9156 = vadd.f32 %v8748, %v9155
    %v9157 = vpop.f32.mrf.mxu0
    %9158 = vdwg.mxu0
    %vm9159 = vcmask 261120
    %9160 = vst.msk [vmem:[%s9] sm:$0xff] %vm9159, %v8905
    %9161 = vst.msk [vmem:[%s9 + $0x8] sm:$0xff] %vm9159, %v8908
    %9162 = vst.msk [vmem:[%s9 + $0x10] sm:$0xff] %vm9159, %v8913
    %9163 = vst.msk [vmem:[%s9 + $0x18] sm:$0xff] %vm9159, %v8916
    %9164 = vst.msk [vmem:[%s9 + $0x20] sm:$0xff] %vm9159, %v8921
    %9165 = vst.msk [vmem:[%s9 + $0x28] sm:$0xff] %vm9159, %v8924
    %9166 = vst.msk [vmem:[%s9 + $0x30] sm:$0xff] %vm9159, %v8929
    %9167 = vst.msk [vmem:[%s9 + $0x38] sm:$0xff] %vm9159, %v8932
    %9168 = vst.msk [vmem:[%s9 + $0x40] sm:$0xff] %vm9159, %v8937
    %9169 = vst.msk [vmem:[%s9 + $0x48] sm:$0xff] %vm9159, %v8940
    %9170 = vst.msk [vmem:[%s9 + $0x50] sm:$0xff] %vm9159, %v8945
    %9171 = vst.msk [vmem:[%s9 + $0x58] sm:$0xff] %vm9159, %v8948
    %9172 = vst.msk [vmem:[%s9 + $0x60] sm:$0xff] %vm9159, %v8953
    %9173 = vst.msk [vmem:[%s9 + $0x68] sm:$0xff] %vm9159, %v8956
    %9174 = vst.msk [vmem:[%s9 + $0x70] sm:$0xff] %vm9159, %v8961
    %9175 = vst.msk [vmem:[%s9 + $0x78] sm:$0xff] %vm9159, %v8964
    %9176 = vst.msk [vmem:[%s9 + $0x80] sm:$0xff] %vm9159, %v8969
    %9177 = vst.msk [vmem:[%s9 + $0x88] sm:$0xff] %vm9159, %v8972
    %9178 = vst.msk [vmem:[%s9 + $0x90] sm:$0xff] %vm9159, %v8977
    %9179 = vst.msk [vmem:[%s9 + $0x98] sm:$0xff] %vm9159, %v8980
    %9180 = vst.msk [vmem:[%s9 + $0xa0] sm:$0xff] %vm9159, %v8985
    %9181 = vst.msk [vmem:[%s9 + $0xa8] sm:$0xff] %vm9159, %v8988
    %9182 = vst.msk [vmem:[%s9 + $0xb0] sm:$0xff] %vm9159, %v8993
    %9183 = vst.msk [vmem:[%s9 + $0xb8] sm:$0xff] %vm9159, %v8996
    %9184 = vst.msk [vmem:[%s9 + $0xc0] sm:$0xff] %vm9159, %v9001
    %9185 = vst.msk [vmem:[%s9 + $0xc8] sm:$0xff] %vm9159, %v9004
    %9186 = vst.msk [vmem:[%s9 + $0xd0] sm:$0xff] %vm9159, %v9009
    %9187 = vst.msk [vmem:[%s9 + $0xd8] sm:$0xff] %vm9159, %v9012
    %9188 = vst.msk [vmem:[%s9 + $0xe0] sm:$0xff] %vm9159, %v9017
    %9189 = vst.msk [vmem:[%s9 + $0xe8] sm:$0xff] %vm9159, %v9020
    %9190 = vst.msk [vmem:[%s9 + $0xf0] sm:$0xff] %vm9159, %v9025
    %9191 = vst.msk [vmem:[%s9 + $0xf8] sm:$0xff] %vm9159, %v9028
    %9192 = vst.msk [vmem:[%s9 + $0x100] sm:$0xff] %vm9159, %v9033
    %9193 = vst.msk [vmem:[%s9 + $0x108] sm:$0xff] %vm9159, %v9036
    %9194 = vst.msk [vmem:[%s9 + $0x110] sm:$0xff] %vm9159, %v9041
    %9195 = vst.msk [vmem:[%s9 + $0x118] sm:$0xff] %vm9159, %v9044
    %9196 = vst.msk [vmem:[%s9 + $0x120] sm:$0xff] %vm9159, %v9049
    %9197 = vst.msk [vmem:[%s9 + $0x128] sm:$0xff] %vm9159, %v9052
    %9198 = vst.msk [vmem:[%s9 + $0x130] sm:$0xff] %vm9159, %v9057
    %9199 = vst.msk [vmem:[%s9 + $0x138] sm:$0xff] %vm9159, %v9060
    %9200 = vst.msk [vmem:[%s9 + $0x140] sm:$0xff] %vm9159, %v9065
    %9201 = vst.msk [vmem:[%s9 + $0x148] sm:$0xff] %vm9159, %v9068
    %9202 = vst.msk [vmem:[%s9 + $0x150] sm:$0xff] %vm9159, %v9073
    %9203 = vst.msk [vmem:[%s9 + $0x158] sm:$0xff] %vm9159, %v9076
    %9204 = vst.msk [vmem:[%s9 + $0x160] sm:$0xff] %vm9159, %v9081
    %9205 = vst.msk [vmem:[%s9 + $0x168] sm:$0xff] %vm9159, %v9084
    %9206 = vst.msk [vmem:[%s9 + $0x170] sm:$0xff] %vm9159, %v9089
    %9207 = vst.msk [vmem:[%s9 + $0x178] sm:$0xff] %vm9159, %v9092
    %9208 = vst.msk [vmem:[%s9 + $0x180] sm:$0xff] %vm9159, %v9097
    %9209 = vst.msk [vmem:[%s9 + $0x188] sm:$0xff] %vm9159, %v9100
    %9210 = vst.msk [vmem:[%s9 + $0x190] sm:$0xff] %vm9159, %v9105
    %9211 = vst.msk [vmem:[%s9 + $0x198] sm:$0xff] %vm9159, %v9108
    %9212 = vst.msk [vmem:[%s9 + $0x1a0] sm:$0xff] %vm9159, %v9113
    %9213 = vst.msk [vmem:[%s9 + $0x1a8] sm:$0xff] %vm9159, %v9116
    %9214 = vst.msk [vmem:[%s9 + $0x1b0] sm:$0xff] %vm9159, %v9121
    %9215 = vst.msk [vmem:[%s9 + $0x1b8] sm:$0xff] %vm9159, %v9124
    %9216 = vst.msk [vmem:[%s9 + $0x1c0] sm:$0xff] %vm9159, %v9129
    %9217 = vst.msk [vmem:[%s9 + $0x1c8] sm:$0xff] %vm9159, %v9132
    %9218 = vst.msk [vmem:[%s9 + $0x1d0] sm:$0xff] %vm9159, %v9137
    %9219 = vst.msk [vmem:[%s9 + $0x1d8] sm:$0xff] %vm9159, %v9140
    %9220 = vst.msk [vmem:[%s9 + $0x1e0] sm:$0xff] %vm9159, %v9145
    %9221 = vst.msk [vmem:[%s9 + $0x1e8] sm:$0xff] %vm9159, %v9148
    %9222 = vst.msk [vmem:[%s9 + $0x1f0] sm:$0xff] %vm9159, %v9153
    %9223 = vst.msk [vmem:[%s9 + $0x1f8] sm:$0xff] %vm9159, %v9156
    // Predicated region
    $region62: #{tpu_custom_call.1} parent=1 // pred_check
      _
    $region63: #{tpu_custom_call.1} parent=1 // pred_check_branch
      %9225 = sbr.rel (0) target = $region65
    $region64: #{tpu_custom_call.1} parent=1 // pred_region
      _
    $region65: #{tpu_custom_call.1} parent=1 // pred_fallthru
      _
    // Predicated region
    $region66: #{tpu_custom_call.1} parent=1 // pred_check
      _
    $region67: #{tpu_custom_call.1} parent=1 // pred_check_branch
      %9227 = sbr.rel (0) target = $region69
    $region68: #{tpu_custom_call.1} parent=1 // pred_region
      _
    $region69: #{tpu_custom_call.1} parent=1 // pred_fallthru
      _
    %9228 = vsyncpa [#allocation4], 1
    %9229 = vsyncpa [#allocation6], 1
    %9230 = vsyncpa [#allocation9], 1
    %9231 = vsyncpa [#allocation12], 1

</llo_original>
